<compile_context>
chip_gen: v6e
topology: v6e:2x2x1
jax: 0.10.0
libtpu: 0.0.40
codegen_flags: <defaults>
</compile_context>

<pallas_src>
import functools
import math

import numpy as np
import jax
import jax.numpy as jnp
from jax import lax
from jax.experimental import pallas as pl
from jax.experimental.pallas import tpu as pltpu

EPS = 1e-5                     # torch.nn.InstanceNorm2d default
LANE = 128
NORM_TILE_C = 128              # channel tile for instance-norm kernels
TILE_MAX = 256                 # K / N tile target for the 256-wide MXU (v6e/v7x)
COMPUTE_DTYPE = jnp.bfloat16   # MXU input dtype
WEIGHT_RESIDENT_BYTES = 2 * 1024 * 1024


def _default_vmem_limit():
    try:
        cap = int(pltpu.get_tpu_info().vmem_capacity_bytes)
        return min(int(cap * 3 // 4), 100 * 1024 * 1024)
    except Exception:
        return 48 * 1024 * 1024


VMEM_LIMIT = _default_vmem_limit()


# ----------------------------------------------------------------------------
# helpers
# ----------------------------------------------------------------------------
def _rup(n, m=LANE):
    return ((n + m - 1) // m) * m


def _pad_last(a, target):
    pad = target - a.shape[-1]
    if pad == 0:
        return a
    return jnp.pad(a, [(0, 0)] * (a.ndim - 1) + [(0, pad)])


def _pad_conv_w(w, cin_p, cout_p):
    _, _, cin, cout = w.shape
    return jnp.pad(w, ((0, 0), (0, 0), (0, cin_p - cin), (0, cout_p - cout)))


def _pick_tile_h(h, w, max_rows=2048, max_tile=64):
    cap = max(2, min(max_tile, max_rows // max(w, 1)))
    if h <= cap:
        return h
    for t in range(cap, 1, -1):
        if h % t == 0:
            return t
    return h   # TODO(synk): remainder tile for prime H


def _slab_from_padded(w_p, tile_max=TILE_MAX, dtype=COMPUTE_DTYPE):
    """(3,3,Cin,Cout) padded weight -> (n_co, 3, n_k, 3*TK, TCO) MXU slab.

    Row dx*TK + a of slab[co, dy, k] is w[dy, dx, k*TK + a, co*TCO : ...],
    matching the in-kernel [left | mid | right] lane-axis concat.
    """
    _, _, cin, cout = w_p.shape
    tk = min(tile_max, cin)
    tco = min(tile_max, cout)
    assert cin % tk == 0 and cout % tco == 0
    nk, nco = cin // tk, cout // tco
    w = w_p.astype(dtype).reshape(3, 3, nk, tk, nco, tco)
    w = jnp.transpose(w, (4, 0, 2, 1, 3, 5))       # (nco, dy, nk, dx, tk, tco)
    return w.reshape(nco, 3, nk, 3 * tk, tco)


def prep_conv3x3_w(w, cin_p, cout_p):
    return _slab_from_padded(_pad_conv_w(w, cin_p, cout_p))


# ----------------------------------------------------------------------------
# 3x3 "same" conv (padding folded in-kernel) with fused linear epilogue
# ----------------------------------------------------------------------------
def _make_conv3x3_kernel(TH, W, TK, TCO, n_k, pad_mode, relu, res_mode,
                         w_resident, compute_dtype):
    M = TH * W

    def kernel(*refs):
        refs = list(refs)
        xm_ref = refs.pop(0)
        xa_ref = refs.pop(0)
        xb_ref = refs.pop(0)
        w_ref = refs.pop(0)
        b_ref = refs.pop(0)
        xin_ref = refs.pop(0) if res_mode is not None else None
        wsc_ref = refs.pop(0) if res_mode == "matmul" else None
        o_ref = refs.pop(0)
        acc_ref = refs.pop(0) if n_k > 1 else None

        ih = pl.program_id(1)
        cc = pl.program_id(2)
        kk = pl.program_id(3)
        n_h = pl.num_programs(1)

        # f32 working copy of the bf16 tile (rolls / masks on 32-bit layout).
        xf = xm_ref[0].astype(jnp.float32).reshape(M, TK)
        row_a = xa_ref[0, 0].astype(jnp.float32)     # (W, TK) row above tile
        row_b = xb_ref[0, 0].astype(jnp.float32)     # (W, TK) row below tile

        # H-boundary handling (reflect or zero), blended with a 0/1 scalar so
        # interior tiles keep the true halo rows (halo index maps are clamped).
        a_in = (ih > 0).astype(jnp.float32)
        b_in = (ih < n_h - 1).astype(jnp.float32)
        if pad_mode == "reflect":
            row_a = row_a * a_in + xf[W:2 * W] * (1.0 - a_in)
            row_b = row_b * b_in + xf[(TH - 2) * W:(TH - 1) * W] * (1.0 - b_in)
        else:  # constant / zero padding
            row_a = row_a * a_in
            row_b = row_b * b_in

        # dy-shifted row strips of the flattened (M, TK) tile.
        up = jnp.concatenate([row_a, xf[:M - W]], axis=0)   # x[h-1, w]
        dn = jnp.concatenate([xf[W:], row_b], axis=0)       # x[h+1, w]
        strips = (up, xf, dn)

        # W-edge masks over the flattened sublane index.
        w_idx = lax.broadcasted_iota(jnp.int32, (TH, W, 1), 1).reshape(M, 1)
        is_w0 = w_idx == 0
        is_wl = w_idx == (W - 1)

        part = None
        for dy in range(3):
            s = strips[dy]
            # dx taps via sublane rotation (XLU); wrapped columns fixed below.
            r_p = pltpu.roll(s, shift=1, axis=0)      # x[.., w-1] (wraps at w==0)
            r_m = pltpu.roll(s, shift=M - 1, axis=0)  # x[.., w+1] (wraps at w==W-1)
            if pad_mode == "reflect":
                left = jnp.where(is_w0, r_m, r_p)     # reflect -> x[.., 1]
                right = jnp.where(is_wl, r_p, r_m)    # reflect -> x[.., W-2]
            else:
                zeros = jnp.zeros_like(s)
                left = jnp.where(is_w0, zeros, r_p)
                right = jnp.where(is_wl, zeros, r_m)
            # Fuse the three dx taps into ONE MXU push: (M,3TK) x (3TK,TCO).
            cat = jnp.concatenate([left.astype(compute_dtype),
                                   s.astype(compute_dtype),
                                   right.astype(compute_dtype)], axis=1)
            if w_resident:
                w_dy = w_ref[cc, dy, kk]          # weight slab fully resident
            else:
                w_dy = w_ref[0, dy, 0]
            d = jnp.dot(cat, w_dy, preferred_element_type=jnp.float32)
            part = d if part is None else part + d

        def init_val():  # bias (+ residual / fused 1x1 shortcut), linear epilogue
            base = b_ref[...].astype(jnp.float32)                  # (1, TCO)
            if res_mode == "add":
                base = base + xin_ref[0].reshape(M, TCO).astype(jnp.float32)
            elif res_mode == "matmul":
                xin = xin_ref[0].reshape(M, xin_ref.shape[-1])
                base = base + jnp.dot(xin, wsc_ref[...],
                                      preferred_element_type=jnp.float32)
            return base

        def finalize(out):
            if relu:
                out = jnp.maximum(out, 0.0)
            o_ref[...] = out.reshape(1, TH, W, TCO).astype(o_ref.dtype)

        if n_k == 1:
            # Whole reduction in a single step: no scratch traffic at all.
            finalize(init_val() + part)
        else:
            @pl.when(kk == 0)
            def _():
                acc_ref[...] = init_val() + part

            @pl.when(kk > 0)
            def _():
                acc_ref[...] = acc_ref[...] + part

            @pl.when(kk == n_k - 1)
            def _():
                finalize(acc_ref[...])

    return kernel


def conv3x3(x, w_slab, b, *, pad_mode="reflect", relu=False,
            residual=None, shortcut_w=None, tile_h=None, out_dtype=None):
    """3x3 stride-1 'same' conv with padding folded into the kernel.

    w_slab: (n_co, 3, n_k, 3*TK, TCO) slab from prep_conv3x3_w.
    Optional fused linear epilogue (requires relu=False):
      residual only             -> out += residual            (identity shortcut)
      residual + shortcut_w     -> out += residual @ shortcut_w (1x1 conv)
    """
    N, H, W, Cin = x.shape
    n_co, three, n_k, three_tk, TCO = w_slab.shape
    assert three == 3
    TK = three_tk // 3
    assert n_k * TK == Cin, (n_k, TK, Cin)
    Cout = n_co * TCO
    assert b.shape == (1, Cout)
    assert H >= 2 and W >= 2
    if relu:
        assert residual is None, "fused residual requires a linear epilogue"

    if tile_h is None or tile_h > H or H % tile_h != 0 or tile_h < 2:
        tile_h = _pick_tile_h(H, W)
    TH = tile_h
    assert TH >= 2
    n_h = H // TH
    M = TH * W
    out_dtype = out_dtype or x.dtype

    res_mode = None
    if residual is not None:
        if shortcut_w is not None:
            assert shortcut_w.shape == (residual.shape[-1], Cout)
            res_mode = "matmul"
        else:
            assert residual.shape[-1] == Cout
            res_mode = "add"

    w_bytes = w_slab.size * w_slab.dtype.itemsize
    w_resident = w_bytes <= WEIGHT_RESIDENT_BYTES

    kern = _make_conv3x3_kernel(TH, W, TK, TCO, n_k, pad_mode, relu, res_mode,
                                w_resident, w_slab.dtype)

    x_spec = pl.BlockSpec((1, TH, W, TK), lambda n, ih, co, k: (n, ih, 0, k))
    # halo rows (1 row each), H block index clamped into range; the in-kernel
    # scalar blend overrides them with the reflect / zero boundary value.
    x_above = pl.BlockSpec(
        (1, 1, W, TK),
        lambda n, ih, co, k: (n, jnp.maximum(ih * TH - 1, 0), 0, k))
    x_below = pl.BlockSpec(
        (1, 1, W, TK),
        lambda n, ih, co, k: (n, jnp.minimum((ih + 1) * TH, H - 1), 0, k))
    if w_resident:
        # full slab resident in VMEM for the whole kernel; co/k picked in-kernel.
        w_spec = pl.BlockSpec((n_co, 3, n_k, 3 * TK, TCO),
                              lambda n, ih, co, k: (0, 0, 0, 0, 0))
    else:
        w_spec = pl.BlockSpec((1, 3, 1, 3 * TK, TCO),
                              lambda n, ih, co, k: (co, 0, k, 0, 0))
    b_spec = pl.BlockSpec((1, TCO), lambda n, ih, co, k: (0, co))

    in_specs = [x_spec, x_above, x_below, w_spec, b_spec]
    inputs = [x, x, x, w_slab, b]
    if res_mode == "add":
        in_specs.append(pl.BlockSpec((1, TH, W, TCO),
                                     lambda n, ih, co, k: (n, ih, 0, co)))
        inputs.append(residual)
    elif res_mode == "matmul":
        c_sc = residual.shape[-1]
        in_specs.append(pl.BlockSpec((1, TH, W, c_sc),
                                     lambda n, ih, co, k: (n, ih, 0, 0)))
        in_specs.append(pl.BlockSpec((c_sc, TCO),
                                     lambda n, ih, co, k: (0, co)))
        inputs.extend([residual, shortcut_w])

    out_spec = pl.BlockSpec((1, TH, W, TCO), lambda n, ih, co, k: (n, ih, 0, co))
    scratch = [pltpu.VMEM((M, TCO), jnp.float32)] if n_k > 1 else []

    # NOTE: the reduction axis k MUST stay the innermost grid axis (the output
    # block index is constant along it and init/finalize key off it).
    return pl.pallas_call(
        kern,
        out_shape=jax.ShapeDtypeStruct((N, H, W, Cout), out_dtype),
        grid=(N, n_h, n_co, n_k),
        in_specs=in_specs,
        out_specs=out_spec,
        scratch_shapes=scratch,
        compiler_params=pltpu.CompilerParams(
            dimension_semantics=("parallel", "parallel", "parallel", "arbitrary"),
            vmem_limit_bytes=VMEM_LIMIT),
    )(*inputs)


# ----------------------------------------------------------------------------
# Instance-norm statistics (spatially tiled reduction) + SPADE apply
# ----------------------------------------------------------------------------
def _in_stats_kernel(x_ref, o_ref):
    h = pl.program_id(2)
    _, th, w, tc = x_ref.shape
    x = x_ref[0].astype(jnp.float32).reshape(th * w, tc)
    s1 = jnp.sum(x, axis=0, keepdims=True)
    s2 = jnp.sum(x * x, axis=0, keepdims=True)
    stats = jnp.concatenate([s1, s2], axis=0).reshape(1, 2, tc)

    @pl.when(h == 0)
    def _():
        o_ref[...] = jnp.zeros_like(o_ref)

    o_ref[...] += stats


def instance_stats(x, *, tile_h=None, tile_c=NORM_TILE_C):
    """Per (n, c) sum and sum-of-squares over H*W, tiled over H.  -> (N, 2, C)."""
    N, H, W, C = x.shape
    assert C % tile_c == 0
    if tile_h is None or tile_h > H or H % tile_h != 0:
        tile_h = _pick_tile_h(H, W)
    n_h, n_c = H // tile_h, C // tile_c
    return pl.pallas_call(
        _in_stats_kernel,
        out_shape=jax.ShapeDtypeStruct((N, 2, C), jnp.float32),
        grid=(N, n_c, n_h),
        in_specs=[pl.BlockSpec((1, tile_h, W, tile_c),
                               lambda n, c, h: (n, h, 0, c))],
        out_specs=pl.BlockSpec((1, 2, tile_c), lambda n, c, h: (n, 0, c)),
        compiler_params=pltpu.CompilerParams(
            dimension_semantics=("parallel", "parallel", "arbitrary"),
            vmem_limit_bytes=VMEM_LIMIT),
    )(x)


def _spade_apply_kernel(x_ref, gb_ref, st_ref, o_ref, *, inv_hw, leaky_slope):
    tc = x_ref.shape[-1]
    x = x_ref[0].astype(jnp.float32)               # (TH, W, TC)
    st = st_ref[0]                                 # (2, TC) f32
    mean = (st[0:1, :] * inv_hw).reshape(1, 1, tc)
    # TODO(synk): single-pass E[x^2]-mean^2 variance; switch to a centered
    #             second pass if catastrophic cancellation ever matters.
    var = jnp.maximum(st[1:2, :] * inv_hw - mean.reshape(1, tc) ** 2,
                      0.0).reshape(1, 1, tc)
    inv_std = lax.rsqrt(var + EPS)
    gb = gb_ref[0].astype(jnp.float32)             # (TH, W, 2*TC) [gamma | beta]
    gamma = gb[..., :tc]
    beta = gb[..., tc:]
    y = (x - mean) * inv_std * (1.0 + gamma) + beta
    if leaky_slope is not None:
        y = jnp.where(y >= 0, y, leaky_slope * y)
    o_ref[...] = y.reshape(o_ref.shape).astype(o_ref.dtype)


def spade_apply(x, gb, stats, *, leaky_slope=None, tile_h=None,
                tile_c=NORM_TILE_C, out_dtype=None):
    """x: (N,H,W,C); gb: (N,H,W,2C) tile-interleaved [gamma_t | beta_t]."""
    N, H, W, C = x.shape
    assert gb.shape == (N, H, W, 2 * C) and C % tile_c == 0
    if tile_h is None or tile_h > H or H % tile_h != 0:
        tile_h = _pick_tile_h(H, W)
    n_h, n_c = H // tile_h, C // tile_c
    kern = functools.partial(_spade_apply_kernel, inv_hw=1.0 / (H * W),
                             leaky_slope=leaky_slope)
    return pl.pallas_call(
        kern,
        out_shape=jax.ShapeDtypeStruct((N, H, W, C), out_dtype or x.dtype),
        grid=(N, n_h, n_c),
        in_specs=[pl.BlockSpec((1, tile_h, W, tile_c),
                               lambda n, h, c: (n, h, 0, c)),
                  pl.BlockSpec((1, tile_h, W, 2 * tile_c),
                               lambda n, h, c: (n, h, 0, c)),
                  pl.BlockSpec((1, 2, tile_c), lambda n, h, c: (n, 0, c))],
        out_specs=pl.BlockSpec((1, tile_h, W, tile_c),
                               lambda n, h, c: (n, h, 0, c)),
        compiler_params=pltpu.CompilerParams(
            dimension_semantics=("parallel", "parallel", "parallel"),
            vmem_limit_bytes=VMEM_LIMIT),
    )(x, gb, stats)


# ----------------------------------------------------------------------------
# Plain-JAX glue: area-resize of the condition (identity at the test shapes)
# ----------------------------------------------------------------------------
def diff_resize_area(cond, new_hw):
    new_h, new_w = new_hw
    N, curr_h, curr_w, C = cond.shape
    l_h = int(np.lcm(curr_h, new_h))
    l_w = int(np.lcm(curr_w, new_w))
    if l_h == curr_h and l_w == curr_w:
        im = cond
    elif l_h < 10 * new_h and l_w < 10 * new_w:
        im = jax.image.resize(cond, (N, l_h, l_w, C), method="bilinear")
    else:
        raise RuntimeError("DifferentiableResizeArea is memory inefficient for "
                           f"resizing from ({curr_h}, {curr_w}) -> ({new_h}, {new_w})")
    fh, fw = l_h // new_h, l_w // new_w
    if fh == 1 and fw == 1:
        return im
    return im.reshape(N, new_h, fh, new_w, fw, C).mean(axis=(2, 4))


# ----------------------------------------------------------------------------
# Parameter setup (raw, PyTorch-like) + packed / fused variant
# ----------------------------------------------------------------------------
def init_conv(key, cin, cout, k, bias=True):
    kw, kb = jax.random.split(key)
    fan_in = cin * k * k
    w = jax.random.normal(kw, (k, k, cin, cout), jnp.float32) / math.sqrt(fan_in)
    b = jax.random.normal(kb, (1, cout), jnp.float32) * 0.01 if bias else None
    return w, b


def init_spade(key, channel_size, in_channel, num_hidden):
    k0, k1, k2 = jax.random.split(key, 3)
    w_c, b_c = init_conv(k0, in_channel, num_hidden, 3)
    w_g, b_g = init_conv(k1, num_hidden, channel_size, 3)
    w_b, b_b = init_conv(k2, num_hidden, channel_size, 3)
    return dict(w_cond=w_c, b_cond=b_c, w_gamma=w_g, b_gamma=b_g,
                w_beta=w_b, b_beta=b_b)


def init_spade_resblock(key, channel_in, channel_out, in_channel, num_hidden):
    channel_middle = min(channel_in, channel_out)
    keys = jax.random.split(key, 6)
    params = dict(
        spade_0=init_spade(keys[0], channel_in, in_channel, num_hidden),
        spade_1=init_spade(keys[1], channel_middle, in_channel, num_hidden),
    )
    params["conv_0_w"], params["conv_0_b"] = init_conv(keys[2], channel_in,
                                                       channel_middle, 3)
    params["conv_1_w"], params["conv_1_b"] = init_conv(keys[3], channel_middle,
                                                       channel_middle, 3)
    if channel_in != channel_out:
        params["shortcut_spade"] = init_spade(keys[4], channel_in, in_channel,
                                              num_hidden)
        w, _ = init_conv(keys[5], channel_in, channel_out, 1, bias=False)
        params["shortcut_conv_w"] = w.reshape(channel_in, channel_out)
    return params


def pad_spade_params(p, channel_size, in_channel, num_hidden):
    cp, hp, ip = _rup(channel_size), _rup(num_hidden), _rup(in_channel)
    # gamma & beta convs fused into one conv; output channels tile-interleaved
    # [gamma_t | beta_t] so the SPADE apply kernel reads a single gb stream.
    n_t = cp // NORM_TILE_C
    wg = _pad_conv_w(p["w_gamma"], hp, cp).reshape(3, 3, hp, n_t, NORM_TILE_C)
    wb = _pad_conv_w(p["w_beta"], hp, cp).reshape(3, 3, hp, n_t, NORM_TILE_C)
    w_gb = jnp.stack([wg, wb], axis=4).reshape(3, 3, hp, 2 * cp)
    bg = _pad_last(p["b_gamma"], cp).reshape(1, n_t, NORM_TILE_C)
    bb = _pad_last(p["b_beta"], cp).reshape(1, n_t, NORM_TILE_C)
    b_gb = jnp.stack([bg, bb], axis=2).reshape(1, 2 * cp)
    return dict(
        w_cond=prep_conv3x3_w(p["w_cond"], ip, hp),
        b_cond=_pad_last(p["b_cond"], hp).astype(jnp.float32),
        w_gb=_slab_from_padded(w_gb),
        b_gb=b_gb.astype(jnp.float32),
    )


def pad_resblock_params(p, channel_in, channel_out, in_channel, num_hidden):
    channel_middle = min(channel_in, channel_out)
    cin_p, cmid_p, cout_p = _rup(channel_in), _rup(channel_middle), _rup(channel_out)
    out = dict(
        spade_0=pad_spade_params(p["spade_0"], channel_in, in_channel, num_hidden),
        spade_1=pad_spade_params(p["spade_1"], channel_middle, in_channel, num_hidden),
        conv_0_w=prep_conv3x3_w(p["conv_0_w"], cin_p, cmid_p),
        conv_0_b=_pad_last(p["conv_0_b"], cmid_p).astype(jnp.float32),
        conv_1_w=prep_conv3x3_w(p["conv_1_w"], cmid_p, cmid_p),
        conv_1_b=_pad_last(p["conv_1_b"], cmid_p).astype(jnp.float32),
    )
    if channel_in != channel_out:
        out["shortcut_spade"] = pad_spade_params(p["shortcut_spade"], channel_in,
                                                 in_channel, num_hidden)
        out["shortcut_conv_w"] = jnp.pad(
            p["shortcut_conv_w"],
            ((0, cin_p - channel_in), (0, cout_p - channel_out))
        ).astype(COMPUTE_DTYPE)
    return out


# ----------------------------------------------------------------------------
# Pallas forward
# ----------------------------------------------------------------------------
def spade_forward_pallas(pp, x_p, cond_p, *, leaky_slope=None, tile_h=None):
    h = conv3x3(cond_p, pp["w_cond"], pp["b_cond"], pad_mode="reflect",
                relu=True, tile_h=tile_h, out_dtype=COMPUTE_DTYPE)
    gb = conv3x3(h, pp["w_gb"], pp["b_gb"], pad_mode="constant",
                 tile_h=tile_h, out_dtype=COMPUTE_DTYPE)
    stats = instance_stats(x_p, tile_h=tile_h)
    return spade_apply(x_p, gb, stats, leaky_slope=leaky_slope,
                       tile_h=tile_h, out_dtype=COMPUTE_DTYPE)


def spade_resblock_forward(pp, tensor, condition, *, channel_in, channel_out,
                           tile_h=None):
    channel_middle = min(channel_in, channel_out)
    assert channel_middle == channel_out or channel_in == channel_out, \
        "residual add requires channel_out <= channel_in (as in the reference)"
    N, H, W, _ = tensor.shape
    x_p = _pad_last(tensor, _rup(channel_in)).astype(COMPUTE_DTYPE)
    cond = diff_resize_area(condition, (H, W))
    cond_p = _pad_last(cond, _rup(cond.shape[-1])).astype(COMPUTE_DTYPE)

    x = spade_forward_pallas(pp["spade_0"], x_p, cond_p, leaky_slope=0.2,
                             tile_h=tile_h)
    x = conv3x3(x, pp["conv_0_w"], pp["conv_0_b"], pad_mode="reflect",
                tile_h=tile_h, out_dtype=COMPUTE_DTYPE)
    x = spade_forward_pallas(pp["spade_1"], x, cond_p, leaky_slope=0.2,
                             tile_h=tile_h)
    if channel_in != channel_out:
        x_in = spade_forward_pallas(pp["shortcut_spade"], x_p, cond_p,
                                    leaky_slope=None, tile_h=tile_h)
        out_p = conv3x3(x, pp["conv_1_w"], pp["conv_1_b"], pad_mode="reflect",
                        residual=x_in, shortcut_w=pp["shortcut_conv_w"],
                        tile_h=tile_h, out_dtype=jnp.float32)
    else:
        out_p = conv3x3(x, pp["conv_1_w"], pp["conv_1_b"], pad_mode="reflect",
                        residual=x_p, tile_h=tile_h, out_dtype=jnp.float32)
    return out_p[..., :channel_out]


# ----------------------------------------------------------------------------
# Pure-JAX reference (unpadded f32 params) for the correctness check
# ----------------------------------------------------------------------------
def _conv2d_ref(x, w, b=None, pad=0, mode="reflect"):
    if pad > 0:
        x = jnp.pad(x, ((0, 0), (pad, pad), (pad, pad), (0, 0)),
                    mode=("reflect" if mode == "reflect" else "constant"))
    y = lax.conv_general_dilated(x, w, (1, 1), "VALID",
                                 dimension_numbers=("NHWC", "HWIO", "NHWC"))
    if b is not None:
        y = y + b.reshape(1, 1, 1, -1)
    return y


def _instance_norm_ref(x):
    mean = jnp.mean(x, axis=(1, 2), keepdims=True)
    var = jnp.mean((x - mean) ** 2, axis=(1, 2), keepdims=True)
    return (x - mean) * lax.rsqrt(var + EPS)


def spade_ref(p, x, condition):
    H, W = x.shape[1:3]
    cond = diff_resize_area(condition, (H, W))
    h = jax.nn.relu(_conv2d_ref(cond, p["w_cond"], p["b_cond"], 1, "reflect"))
    gamma = _conv2d_ref(h, p["w_gamma"], p["b_gamma"], 1, "constant")
    beta = _conv2d_ref(h, p["w_beta"], p["b_beta"], 1, "constant")
    return _instance_norm_ref(x) * (1.0 + gamma) + beta


def spade_resblock_ref(p, tensor, condition, channel_in, channel_out):
    x = jax.nn.leaky_relu(spade_ref(p["spade_0"], tensor, condition), 0.2)
    x = _conv2d_ref(x, p["conv_0_w"], p["conv_0_b"], 1, "reflect")
    x = jax.nn.leaky_relu(spade_ref(p["spade_1"], x, condition), 0.2)
    x = _conv2d_ref(x, p["conv_1_w"], p["conv_1_b"], 1, "reflect")
    if channel_in != channel_out:
        x_in = spade_ref(p["shortcut_spade"], tensor, condition)
        x_in = jnp.einsum("nhwc,cd->nhwd", x_in, p["shortcut_conv_w"])
    else:
        x_in = tensor
    return x + x_in


# ----------------------------------------------------------------------------
if __name__ == "__main__":
    N, H, W = 2, 16, 16
    in_channel = 5
    num_hidden = 32     # args.num_hidden

    key = jax.random.PRNGKey(0)
    k_x, k_c, k_p1, k_p2 = jax.random.split(key, 4)
    tensor = jax.random.normal(k_x, (N, H, W, 8), jnp.float32)        # NHWC
    condition = jax.random.normal(k_c, (N, H, W, in_channel), jnp.float32)

    # two configs: (a) cin != cout -> fused 1x1-shortcut path,
    #              (b) cin == cout -> fused identity-residual path.
    for channel_in, channel_out, kp in ((8, 4, k_p1), (8, 8, k_p2)):
        raw = init_spade_resblock(kp, channel_in, channel_out, in_channel,
                                  num_hidden)
        padded = pad_resblock_params(raw, channel_in, channel_out, in_channel,
                                     num_hidden)
        fwd = jax.jit(functools.partial(spade_resblock_forward,
                                        channel_in=channel_in,
                                        channel_out=channel_out,
                                        tile_h=8))
        out = jax.block_until_ready(fwd(padded, tensor, condition))
        assert out.shape == (N, H, W, channel_out)
        assert bool(jnp.all(jnp.isfinite(out)))
        ref = spade_resblock_ref(raw, tensor, condition, channel_in, channel_out)
        # bf16 MXU path vs f32 reference -> looser tolerance than pure f32.
        np.testing.assert_allclose(np.asarray(out), np.asarray(ref),
                                   rtol=1e-1, atol=1e-1)
    print("KERNEL_OK")
</pallas_src>

<mosaic_0001>
module attributes {stable_mosaic.version = 11 : i64} {
  func.func @_in_stats_kernel(%arg0: i32, %arg1: i32, %arg2: i32, %arg3: memref<1x8x16x128xbf16, #tpu.memory_space<vmem>>, %arg4: memref<1x2x128xf32, #tpu.memory_space<vmem>>) attributes {dimension_semantics = [#tpu.dimension_semantics<parallel>, #tpu.dimension_semantics<parallel>, #tpu.dimension_semantics<arbitrary>], iteration_bounds = array<i64: 2, 1, 2>, scalar_prefetch = 0 : i64, scratch_operands = 0 : i64, tpu.core_type = #tpu.core_type<tc>, window_params = [{transform_indices = @transform_0, window_bounds = array<i64: 1, 8, 16, 128>}, {transform_indices = @transform_1, window_bounds = array<i64: 1, 2, 128>}]} {
    %c0 = arith.constant 0 : index
    %c0_0 = arith.constant 0 : index
    %c0_1 = arith.constant 0 : index
    %c0_2 = arith.constant 0 : index
    %0 = vector.load %arg3[%c0, %c0_0, %c0_1, %c0_2] : memref<1x8x16x128xbf16, #tpu.memory_space<vmem>>, vector<1x8x16x128xbf16>
    %1 = vector.shape_cast %0 : vector<1x8x16x128xbf16> to vector<8x16x128xbf16>
    %2 = arith.extf %1 : vector<8x16x128xbf16> to vector<8x16x128xf32>
    %3 = vector.shape_cast %2 : vector<8x16x128xf32> to vector<128x128xf32>
    %cst = arith.constant dense<0.000000e+00> : vector<128xf32>
    %4 = vector.multi_reduction <add>, %3, %cst [0] : vector<128x128xf32> to vector<128xf32>
    %5 = vector.shape_cast %4 : vector<128xf32> to vector<1x128xf32>
    %6 = arith.mulf %3, %3 : vector<128x128xf32>
    %cst_3 = arith.constant dense<0.000000e+00> : vector<128xf32>
    %7 = vector.multi_reduction <add>, %6, %cst_3 [0] : vector<128x128xf32> to vector<128xf32>
    %8 = vector.shape_cast %7 : vector<128xf32> to vector<1x128xf32>
    %9 = tpu.concatenate %5, %8 in 0 : vector<1x128xf32>, vector<1x128xf32> -> vector<2x128xf32>
    %10 = vector.shape_cast %9 : vector<2x128xf32> to vector<1x2x128xf32>
    %c0_i32 = arith.constant 0 : i32
    %11 = arith.cmpi eq, %arg2, %c0_i32 : i32
    %12 = arith.extui %11 : i1 to i32
    %c0_i32_4 = arith.constant 0 : i32
    %13 = arith.cmpi ne, %12, %c0_i32_4 : i32
    scf.if %13 {
      %cst_11 = arith.constant 0.000000e+00 : f32
      %17 = vector.broadcast %cst_11 : f32 to vector<1x2x128xf32>
      %c0_12 = arith.constant 0 : index
      %c0_13 = arith.constant 0 : index
      %c0_14 = arith.constant 0 : index
      %18 = vector.load %arg4[%c0_12, %c0_13, %c0_14] : memref<1x2x128xf32, #tpu.memory_space<vmem>>, vector<1x2x128xf32>
      tpu.vector_store %arg4[%c0_12, %c0_13, %c0_14], %17 {strides = array<i32>} : memref<1x2x128xf32, #tpu.memory_space<vmem>>, vector<1x2x128xf32>,
    } else {
    }
    %c0_5 = arith.constant 0 : index
    %c0_6 = arith.constant 0 : index
    %c0_7 = arith.constant 0 : index
    %14 = vector.load %arg4[%c0_5, %c0_6, %c0_7] : memref<1x2x128xf32, #tpu.memory_space<vmem>>, vector<1x2x128xf32>
    %15 = arith.addf %14, %10 : vector<1x2x128xf32>
    %c0_8 = arith.constant 0 : index
    %c0_9 = arith.constant 0 : index
    %c0_10 = arith.constant 0 : index
    %16 = vector.load %arg4[%c0_8, %c0_9, %c0_10] : memref<1x2x128xf32, #tpu.memory_space<vmem>>, vector<1x2x128xf32>
    tpu.vector_store %arg4[%c0_8, %c0_9, %c0_10], %15 {strides = array<i32>} : memref<1x2x128xf32, #tpu.memory_space<vmem>>, vector<1x2x128xf32>,
    return
  }
  func.func @transform_0(%arg0: i32, %arg1: i32, %arg2: i32) -> (i32, i32, i32, i32) {
    %c0_i32 = arith.constant 0 : i32
    %c0_i32_0 = arith.constant 0 : i32
    return %arg0, %arg2, %c0_i32, %arg1 : i32, i32, i32, i32
  }
  func.func @transform_1(%arg0: i32, %arg1: i32, %arg2: i32) -> (i32, i32, i32) {
    %c0_i32 = arith.constant 0 : i32
    %c0_i32_0 = arith.constant 0 : i32
    return %arg0, %c0_i32, %arg1 : i32, i32, i32
  }
}

module attributes {stable_mosaic.version = 11 : i64} {
  func.func @kernel(%arg0: i32, %arg1: i32, %arg2: i32, %arg3: i32, %arg4: memref<1x8x16x128xbf16, #tpu.memory_space<vmem>>, %arg5: memref<1x1x16x128xbf16, #tpu.memory_space<vmem>>, %arg6: memref<1x1x16x128xbf16, #tpu.memory_space<vmem>>, %arg7: memref<1x3x1x384x128xbf16, #tpu.memory_space<vmem>>, %arg8: memref<1x128xf32, #tpu.memory_space<vmem>>, %arg9: memref<1x8x16x128xbf16, #tpu.memory_space<vmem>>) attributes {dimension_semantics = [#tpu.dimension_semantics<parallel>, #tpu.dimension_semantics<parallel>, #tpu.dimension_semantics<parallel>, #tpu.dimension_semantics<arbitrary>], iteration_bounds = array<i64: 2, 2, 1, 1>, scalar_prefetch = 0 : i64, scratch_operands = 0 : i64, tpu.core_type = #tpu.core_type<tc>, window_params = [{transform_indices = @transform_0, window_bounds = array<i64: 1, 8, 16, 128>}, {transform_indices = @transform_1, window_bounds = array<i64: 1, 1, 16, 128>}, {transform_indices = @transform_2, window_bounds = array<i64: 1, 1, 16, 128>}, {pipeline_mode = #tpu.pipeline_mode<synchronous>, transform_indices = @transform_3, window_bounds = array<i64: 1, 3, 1, 384, 128>}, {transform_indices = @transform_4, window_bounds = array<i64: 1, 128>}, {transform_indices = @transform_5, window_bounds = array<i64: 1, 8, 16, 128>}]} {
    %c0 = arith.constant 0 : index
    %c0_0 = arith.constant 0 : index
    %c0_1 = arith.constant 0 : index
    %c0_2 = arith.constant 0 : index
    %0 = vector.load %arg4[%c0, %c0_0, %c0_1, %c0_2] : memref<1x8x16x128xbf16, #tpu.memory_space<vmem>>, vector<1x8x16x128xbf16>
    %1 = vector.shape_cast %0 : vector<1x8x16x128xbf16> to vector<8x16x128xbf16>
    %2 = arith.extf %1 : vector<8x16x128xbf16> to vector<8x16x128xf32>
    %3 = vector.shape_cast %2 : vector<8x16x128xf32> to vector<128x128xf32>
    %c0_3 = arith.constant 0 : index
    %c0_4 = arith.constant 0 : index
    %c0_5 = arith.constant 0 : index
    %c0_6 = arith.constant 0 : index
    %4 = vector.load %arg5[%c0_3, %c0_4, %c0_5, %c0_6] : memref<1x1x16x128xbf16, #tpu.memory_space<vmem>>, vector<1x1x16x128xbf16>
    %5 = vector.shape_cast %4 : vector<1x1x16x128xbf16> to vector<16x128xbf16>
    %6 = arith.extf %5 : vector<16x128xbf16> to vector<16x128xf32>
    %c0_7 = arith.constant 0 : index
    %c0_8 = arith.constant 0 : index
    %c0_9 = arith.constant 0 : index
    %c0_10 = arith.constant 0 : index
    %7 = vector.load %arg6[%c0_7, %c0_8, %c0_9, %c0_10] : memref<1x1x16x128xbf16, #tpu.memory_space<vmem>>, vector<1x1x16x128xbf16>
    %8 = vector.shape_cast %7 : vector<1x1x16x128xbf16> to vector<16x128xbf16>
    %9 = arith.extf %8 : vector<16x128xbf16> to vector<16x128xf32>
    %c0_i32 = arith.constant 0 : i32
    %10 = arith.cmpi sgt, %arg1, %c0_i32 : i32
    %11 = arith.extui %10 : i1 to i32
    %12 = arith.sitofp %11 : i32 to f32
    %c1_i32 = arith.constant 1 : i32
    %13 = arith.cmpi slt, %arg1, %c1_i32 : i32
    %14 = arith.extui %13 : i1 to i32
    %15 = arith.sitofp %14 : i32 to f32
    %16 = vector.broadcast %12 : f32 to vector<16x128xf32>
    %17 = arith.mulf %6, %16 : vector<16x128xf32>
    %18 = vector.extract_strided_slice %3 {offsets = [16, 0], sizes = [16, 128], strides = [1, 1]} : vector<128x128xf32> to vector<16x128xf32>
    %cst = arith.constant 1.000000e+00 : f32
    %19 = arith.subf %cst, %12 : f32
    %20 = vector.broadcast %19 : f32 to vector<16x128xf32>
    %21 = arith.mulf %18, %20 : vector<16x128xf32>
    %22 = arith.addf %17, %21 : vector<16x128xf32>
    %23 = vector.broadcast %15 : f32 to vector<16x128xf32>
    %24 = arith.mulf %9, %23 : vector<16x128xf32>
    %25 = vector.extract_strided_slice %3 {offsets = [96, 0], sizes = [16, 128], strides = [1, 1]} : vector<128x128xf32> to vector<16x128xf32>
    %cst_11 = arith.constant 1.000000e+00 : f32
    %26 = arith.subf %cst_11, %15 : f32
    %27 = vector.broadcast %26 : f32 to vector<16x128xf32>
    %28 = arith.mulf %25, %27 : vector<16x128xf32>
    %29 = arith.addf %24, %28 : vector<16x128xf32>
    %30 = vector.extract_strided_slice %3 {offsets = [0, 0], sizes = [112, 128], strides = [1, 1]} : vector<128x128xf32> to vector<112x128xf32>
    %31 = tpu.concatenate %22, %30 in 0 : vector<16x128xf32>, vector<112x128xf32> -> vector<128x128xf32>
    %32 = vector.extract_strided_slice %3 {offsets = [16, 0], sizes = [112, 128], strides = [1, 1]} : vector<128x128xf32> to vector<112x128xf32>
    %33 = tpu.concatenate %32, %29 in 0 : vector<112x128xf32>, vector<16x128xf32> -> vector<128x128xf32>
    %34 = tpu.iota {dimensions = array<i32: 1>} : vector<8x16x1xi32>
    %35 = vector.shape_cast %34 : vector<8x16x1xi32> to vector<128x1xi32>
    %c0_i32_12 = arith.constant 0 : i32
    %36 = vector.broadcast %c0_i32_12 : i32 to vector<128x1xi32>
    %37 = arith.cmpi eq, %35, %36 : vector<128x1xi32>
    %c15_i32 = arith.constant 15 : i32
    %38 = vector.broadcast %c15_i32 : i32 to vector<128x1xi32>
    %39 = arith.cmpi eq, %35, %38 : vector<128x1xi32>
    %c1_i32_13 = arith.constant 1 : i32
    %40 = tpu.dynamic_rotate %31 by %c1_i32_13 dim 0 : vector<128x128xf32>, i32 -> vector<128x128xf32>
    %c127_i32 = arith.constant 127 : i32
    %41 = tpu.dynamic_rotate %31 by %c127_i32 dim 0 : vector<128x128xf32>, i32 -> vector<128x128xf32>
    %42 = vector.shape_cast %37 : vector<128x1xi1> to vector<128x1xi1>
    %43 = vector.broadcast %42 : vector<128x1xi1> to vector<128x128xi1>
    %44 = arith.select %43, %41, %40 : vector<128x128xi1>, vector<128x128xf32>
    %45 = vector.shape_cast %39 : vector<128x1xi1> to vector<128x1xi1>
    %46 = vector.broadcast %45 : vector<128x1xi1> to vector<128x128xi1>
    %47 = arith.select %46, %40, %41 : vector<128x128xi1>, vector<128x128xf32>
    %48 = arith.truncf %44 : vector<128x128xf32> to vector<128x128xbf16>
    %49 = arith.truncf %31 : vector<128x128xf32> to vector<128x128xbf16>
    %50 = arith.truncf %47 : vector<128x128xf32> to vector<128x128xbf16>
    %51 = tpu.concatenate %48, %49, %50 in 1 : vector<128x128xbf16>, vector<128x128xbf16>, vector<128x128xbf16> -> vector<128x384xbf16>
    %52 = arith.index_cast %arg2 : i32 to index
    %c0_14 = arith.constant 0 : index
    %53 = arith.index_cast %arg3 : i32 to index
    %c0_15 = arith.constant 0 : index
    %c0_16 = arith.constant 0 : index
    %54 = vector.load %arg7[%52, %c0_14, %53, %c0_15, %c0_16] : memref<1x3x1x384x128xbf16, #tpu.memory_space<vmem>>, vector<1x1x1x384x128xbf16>
    %55 = vector.shape_cast %54 : vector<1x1x1x384x128xbf16> to vector<384x128xbf16>
    %cst_17 = arith.constant dense<0.000000e+00> : vector<128x128xf32>
    %56 = tpu.matmul %51, %55, %cst_17 {dimension_numbers = #tpu.dot_dimension_numbers<[1], [0], [0], [1], [0, 0, 1, 1], [], []>} : vector<128x384xbf16>, vector<384x128xbf16>, vector<128x128xf32> -> vector<128x128xf32>
    %c1_i32_18 = arith.constant 1 : i32
    %57 = tpu.dynamic_rotate %3 by %c1_i32_18 dim 0 : vector<128x128xf32>, i32 -> vector<128x128xf32>
    %c127_i32_19 = arith.constant 127 : i32
    %58 = tpu.dynamic_rotate %3 by %c127_i32_19 dim 0 : vector<128x128xf32>, i32 -> vector<128x128xf32>
    %59 = vector.shape_cast %37 : vector<128x1xi1> to vector<128x1xi1>
    %60 = vector.broadcast %59 : vector<128x1xi1> to vector<128x128xi1>
    %61 = arith.select %60, %58, %57 : vector<128x128xi1>, vector<128x128xf32>
    %62 = vector.shape_cast %39 : vector<128x1xi1> to vector<128x1xi1>
    %63 = vector.broadcast %62 : vector<128x1xi1> to vector<128x128xi1>
    %64 = arith.select %63, %57, %58 : vector<128x128xi1>, vector<128x128xf32>
    %65 = arith.truncf %61 : vector<128x128xf32> to vector<128x128xbf16>
    %66 = arith.truncf %3 : vector<128x128xf32> to vector<128x128xbf16>
    %67 = arith.truncf %64 : vector<128x128xf32> to vector<128x128xbf16>
    %68 = tpu.concatenate %65, %66, %67 in 1 : vector<128x128xbf16>, vector<128x128xbf16>, vector<128x128xbf16> -> vector<128x384xbf16>
    %69 = arith.index_cast %arg2 : i32 to index
    %c1 = arith.constant 1 : index
    %70 = arith.index_cast %arg3 : i32 to index
    %c0_20 = arith.constant 0 : index
    %c0_21 = arith.constant 0 : index
    %71 = vector.load %arg7[%69, %c1, %70, %c0_20, %c0_21] : memref<1x3x1x384x128xbf16, #tpu.memory_space<vmem>>, vector<1x1x1x384x128xbf16>
    %72 = vector.shape_cast %71 : vector<1x1x1x384x128xbf16> to vector<384x128xbf16>
    %cst_22 = arith.constant dense<0.000000e+00> : vector<128x128xf32>
    %73 = tpu.matmul %68, %72, %cst_22 {dimension_numbers = #tpu.dot_dimension_numbers<[1], [0], [0], [1], [0, 0, 1, 1], [], []>} : vector<128x384xbf16>, vector<384x128xbf16>, vector<128x128xf32> -> vector<128x128xf32>
    %74 = arith.addf %56, %73 : vector<128x128xf32>
    %c1_i32_23 = arith.constant 1 : i32
    %75 = tpu.dynamic_rotate %33 by %c1_i32_23 dim 0 : vector<128x128xf32>, i32 -> vector<128x128xf32>
    %c127_i32_24 = arith.constant 127 : i32
    %76 = tpu.dynamic_rotate %33 by %c127_i32_24 dim 0 : vector<128x128xf32>, i32 -> vector<128x128xf32>
    %77 = vector.shape_cast %37 : vector<128x1xi1> to vector<128x1xi1>
    %78 = vector.broadcast %77 : vector<128x1xi1> to vector<128x128xi1>
    %79 = arith.select %78, %76, %75 : vector<128x128xi1>, vector<128x128xf32>
    %80 = vector.shape_cast %39 : vector<128x1xi1> to vector<128x1xi1>
    %81 = vector.broadcast %80 : vector<128x1xi1> to vector<128x128xi1>
    %82 = arith.select %81, %75, %76 : vector<128x128xi1>, vector<128x128xf32>
    %83 = arith.truncf %79 : vector<128x128xf32> to vector<128x128xbf16>
    %84 = arith.truncf %33 : vector<128x128xf32> to vector<128x128xbf16>
    %85 = arith.truncf %82 : vector<128x128xf32> to vector<128x128xbf16>
    %86 = tpu.concatenate %83, %84, %85 in 1 : vector<128x128xbf16>, vector<128x128xbf16>, vector<128x128xbf16> -> vector<128x384xbf16>
    %87 = arith.index_cast %arg2 : i32 to index
    %c2 = arith.constant 2 : index
    %88 = arith.index_cast %arg3 : i32 to index
    %c0_25 = arith.constant 0 : index
    %c0_26 = arith.constant 0 : index
    %89 = vector.load %arg7[%87, %c2, %88, %c0_25, %c0_26] : memref<1x3x1x384x128xbf16, #tpu.memory_space<vmem>>, vector<1x1x1x384x128xbf16>
    %90 = vector.shape_cast %89 : vector<1x1x1x384x128xbf16> to vector<384x128xbf16>
    %cst_27 = arith.constant dense<0.000000e+00> : vector<128x128xf32>
    %91 = tpu.matmul %86, %90, %cst_27 {dimension_numbers = #tpu.dot_dimension_numbers<[1], [0], [0], [1], [0, 0, 1, 1], [], []>} : vector<128x384xbf16>, vector<384x128xbf16>, vector<128x128xf32> -> vector<128x128xf32>
    %92 = arith.addf %74, %91 : vector<128x128xf32>
    %c0_28 = arith.constant 0 : index
    %c0_29 = arith.constant 0 : index
    %93 = vector.load %arg8[%c0_28, %c0_29] : memref<1x128xf32, #tpu.memory_space<vmem>>, vector<1x128xf32>
    %94 = vector.broadcast %93 : vector<1x128xf32> to vector<128x128xf32>
    %95 = arith.addf %94, %92 : vector<128x128xf32>
    %cst_30 = arith.constant 0.000000e+00 : f32
    %96 = vector.broadcast %cst_30 : f32 to vector<128x128xf32>
    %97 = arith.maximumf %95, %96 : vector<128x128xf32>
    %98 = vector.shape_cast %97 : vector<128x128xf32> to vector<1x8x16x128xf32>
    %99 = arith.truncf %98 : vector<1x8x16x128xf32> to vector<1x8x16x128xbf16>
    %c0_31 = arith.constant 0 : index
    %c0_32 = arith.constant 0 : index
    %c0_33 = arith.constant 0 : index
    %c0_34 = arith.constant 0 : index
    %100 = vector.load %arg9[%c0_31, %c0_32, %c0_33, %c0_34] : memref<1x8x16x128xbf16, #tpu.memory_space<vmem>>, vector<1x8x16x128xbf16>
    tpu.vector_store %arg9[%c0_31, %c0_32, %c0_33, %c0_34], %99 {strides = array<i32>} : memref<1x8x16x128xbf16, #tpu.memory_space<vmem>>, vector<1x8x16x128xbf16>,
    return
  }
  func.func @transform_0(%arg0: i32, %arg1: i32, %arg2: i32, %arg3: i32) -> (i32, i32, i32, i32) {
    %c0_i32 = arith.constant 0 : i32
    %c0_i32_0 = arith.constant 0 : i32
    return %arg0, %arg1, %c0_i32, %arg3 : i32, i32, i32, i32
  }
  func.func @transform_1(%arg0: i32, %arg1: i32, %arg2: i32, %arg3: i32) -> (i32, i32, i32, i32) {
    %c8_i32 = arith.constant 8 : i32
    %0 = arith.muli %arg1, %c8_i32 : i32
    %c1_i32 = arith.constant 1 : i32
    %1 = arith.subi %0, %c1_i32 : i32
    %c0_i32 = arith.constant 0 : i32
    %2 = arith.maxsi %1, %c0_i32 : i32
    %c0_i32_0 = arith.constant 0 : i32
    %c0_i32_1 = arith.constant 0 : i32
    return %arg0, %2, %c0_i32_0, %arg3 : i32, i32, i32, i32
  }
  func.func @transform_2(%arg0: i32, %arg1: i32, %arg2: i32, %arg3: i32) -> (i32, i32, i32, i32) {
    %c1_i32 = arith.constant 1 : i32
    %0 = arith.addi %arg1, %c1_i32 : i32
    %c8_i32 = arith.constant 8 : i32
    %1 = arith.muli %0, %c8_i32 : i32
    %c15_i32 = arith.constant 15 : i32
    %2 = arith.minsi %1, %c15_i32 : i32
    %c0_i32 = arith.constant 0 : i32
    %c0_i32_0 = arith.constant 0 : i32
    return %arg0, %2, %c0_i32, %arg3 : i32, i32, i32, i32
  }
  func.func @transform_3(%arg0: i32, %arg1: i32, %arg2: i32, %arg3: i32) -> (i32, i32, i32, i32, i32) {
    %c0_i32 = arith.constant 0 : i32
    %c0_i32_0 = arith.constant 0 : i32
    %c0_i32_1 = arith.constant 0 : i32
    %c0_i32_2 = arith.constant 0 : i32
    %c0_i32_3 = arith.constant 0 : i32
    %c0_i32_4 = arith.constant 0 : i32
    return %c0_i32, %c0_i32_0, %c0_i32_1, %c0_i32_2, %c0_i32_3 : i32, i32, i32, i32, i32
  }
  func.func @transform_4(%arg0: i32, %arg1: i32, %arg2: i32, %arg3: i32) -> (i32, i32) {
    %c0_i32 = arith.constant 0 : i32
    %c0_i32_0 = arith.constant 0 : i32
    return %c0_i32, %arg2 : i32, i32
  }
  func.func @transform_5(%arg0: i32, %arg1: i32, %arg2: i32, %arg3: i32) -> (i32, i32, i32, i32) {
    %c0_i32 = arith.constant 0 : i32
    %c0_i32_0 = arith.constant 0 : i32
    return %arg0, %arg1, %c0_i32, %arg2 : i32, i32, i32, i32
  }
}

module attributes {stable_mosaic.version = 11 : i64} {
  func.func @kernel(%arg0: i32, %arg1: i32, %arg2: i32, %arg3: i32, %arg4: memref<1x8x16x128xbf16, #tpu.memory_space<vmem>>, %arg5: memref<1x1x16x128xbf16, #tpu.memory_space<vmem>>, %arg6: memref<1x1x16x128xbf16, #tpu.memory_space<vmem>>, %arg7: memref<1x3x1x384x256xbf16, #tpu.memory_space<vmem>>, %arg8: memref<1x256xf32, #tpu.memory_space<vmem>>, %arg9: memref<1x8x16x256xbf16, #tpu.memory_space<vmem>>) attributes {dimension_semantics = [#tpu.dimension_semantics<parallel>, #tpu.dimension_semantics<parallel>, #tpu.dimension_semantics<parallel>, #tpu.dimension_semantics<arbitrary>], iteration_bounds = array<i64: 2, 2, 1, 1>, scalar_prefetch = 0 : i64, scratch_operands = 0 : i64, tpu.core_type = #tpu.core_type<tc>, window_params = [{transform_indices = @transform_0, window_bounds = array<i64: 1, 8, 16, 128>}, {transform_indices = @transform_1, window_bounds = array<i64: 1, 1, 16, 128>}, {transform_indices = @transform_2, window_bounds = array<i64: 1, 1, 16, 128>}, {pipeline_mode = #tpu.pipeline_mode<synchronous>, transform_indices = @transform_3, window_bounds = array<i64: 1, 3, 1, 384, 256>}, {transform_indices = @transform_4, window_bounds = array<i64: 1, 256>}, {transform_indices = @transform_5, window_bounds = array<i64: 1, 8, 16, 256>}]} {
    %c0 = arith.constant 0 : index
    %c0_0 = arith.constant 0 : index
    %c0_1 = arith.constant 0 : index
    %c0_2 = arith.constant 0 : index
    %0 = vector.load %arg4[%c0, %c0_0, %c0_1, %c0_2] : memref<1x8x16x128xbf16, #tpu.memory_space<vmem>>, vector<1x8x16x128xbf16>
    %1 = vector.shape_cast %0 : vector<1x8x16x128xbf16> to vector<8x16x128xbf16>
    %2 = arith.extf %1 : vector<8x16x128xbf16> to vector<8x16x128xf32>
    %3 = vector.shape_cast %2 : vector<8x16x128xf32> to vector<128x128xf32>
    %c0_3 = arith.constant 0 : index
    %c0_4 = arith.constant 0 : index
    %c0_5 = arith.constant 0 : index
    %c0_6 = arith.constant 0 : index
    %4 = vector.load %arg5[%c0_3, %c0_4, %c0_5, %c0_6] : memref<1x1x16x128xbf16, #tpu.memory_space<vmem>>, vector<1x1x16x128xbf16>
    %5 = vector.shape_cast %4 : vector<1x1x16x128xbf16> to vector<16x128xbf16>
    %6 = arith.extf %5 : vector<16x128xbf16> to vector<16x128xf32>
    %c0_7 = arith.constant 0 : index
    %c0_8 = arith.constant 0 : index
    %c0_9 = arith.constant 0 : index
    %c0_10 = arith.constant 0 : index
    %7 = vector.load %arg6[%c0_7, %c0_8, %c0_9, %c0_10] : memref<1x1x16x128xbf16, #tpu.memory_space<vmem>>, vector<1x1x16x128xbf16>
    %8 = vector.shape_cast %7 : vector<1x1x16x128xbf16> to vector<16x128xbf16>
    %9 = arith.extf %8 : vector<16x128xbf16> to vector<16x128xf32>
    %c0_i32 = arith.constant 0 : i32
    %10 = arith.cmpi sgt, %arg1, %c0_i32 : i32
    %11 = arith.extui %10 : i1 to i32
    %12 = arith.sitofp %11 : i32 to f32
    %c1_i32 = arith.constant 1 : i32
    %13 = arith.cmpi slt, %arg1, %c1_i32 : i32
    %14 = arith.extui %13 : i1 to i32
    %15 = arith.sitofp %14 : i32 to f32
    %16 = vector.broadcast %12 : f32 to vector<16x128xf32>
    %17 = arith.mulf %6, %16 : vector<16x128xf32>
    %18 = vector.broadcast %15 : f32 to vector<16x128xf32>
    %19 = arith.mulf %9, %18 : vector<16x128xf32>
    %20 = vector.extract_strided_slice %3 {offsets = [0, 0], sizes = [112, 128], strides = [1, 1]} : vector<128x128xf32> to vector<112x128xf32>
    %21 = tpu.concatenate %17, %20 in 0 : vector<16x128xf32>, vector<112x128xf32> -> vector<128x128xf32>
    %22 = vector.extract_strided_slice %3 {offsets = [16, 0], sizes = [112, 128], strides = [1, 1]} : vector<128x128xf32> to vector<112x128xf32>
    %23 = tpu.concatenate %22, %19 in 0 : vector<112x128xf32>, vector<16x128xf32> -> vector<128x128xf32>
    %24 = tpu.iota {dimensions = array<i32: 1>} : vector<8x16x1xi32>
    %25 = vector.shape_cast %24 : vector<8x16x1xi32> to vector<128x1xi32>
    %c0_i32_11 = arith.constant 0 : i32
    %26 = vector.broadcast %c0_i32_11 : i32 to vector<128x1xi32>
    %27 = arith.cmpi eq, %25, %26 : vector<128x1xi32>
    %c15_i32 = arith.constant 15 : i32
    %28 = vector.broadcast %c15_i32 : i32 to vector<128x1xi32>
    %29 = arith.cmpi eq, %25, %28 : vector<128x1xi32>
    %c1_i32_12 = arith.constant 1 : i32
    %30 = tpu.dynamic_rotate %21 by %c1_i32_12 dim 0 : vector<128x128xf32>, i32 -> vector<128x128xf32>
    %c127_i32 = arith.constant 127 : i32
    %31 = tpu.dynamic_rotate %21 by %c127_i32 dim 0 : vector<128x128xf32>, i32 -> vector<128x128xf32>
    %cst = arith.constant 0.000000e+00 : f32
    %32 = vector.broadcast %cst : f32 to vector<128x128xf32>
    %33 = vector.shape_cast %27 : vector<128x1xi1> to vector<128x1xi1>
    %34 = vector.broadcast %33 : vector<128x1xi1> to vector<128x128xi1>
    %35 = arith.select %34, %32, %30 : vector<128x128xi1>, vector<128x128xf32>
    %36 = vector.shape_cast %29 : vector<128x1xi1> to vector<128x1xi1>
    %37 = vector.broadcast %36 : vector<128x1xi1> to vector<128x128xi1>
    %38 = arith.select %37, %32, %31 : vector<128x128xi1>, vector<128x128xf32>
    %39 = arith.truncf %35 : vector<128x128xf32> to vector<128x128xbf16>
    %40 = arith.truncf %21 : vector<128x128xf32> to vector<128x128xbf16>
    %41 = arith.truncf %38 : vector<128x128xf32> to vector<128x128xbf16>
    %42 = tpu.concatenate %39, %40, %41 in 1 : vector<128x128xbf16>, vector<128x128xbf16>, vector<128x128xbf16> -> vector<128x384xbf16>
    %43 = arith.index_cast %arg2 : i32 to index
    %c0_13 = arith.constant 0 : index
    %44 = arith.index_cast %arg3 : i32 to index
    %c0_14 = arith.constant 0 : index
    %c0_15 = arith.constant 0 : index
    %45 = vector.load %arg7[%43, %c0_13, %44, %c0_14, %c0_15] : memref<1x3x1x384x256xbf16, #tpu.memory_space<vmem>>, vector<1x1x1x384x256xbf16>
    %46 = vector.shape_cast %45 : vector<1x1x1x384x256xbf16> to vector<384x256xbf16>
    %cst_16 = arith.constant dense<0.000000e+00> : vector<128x256xf32>
    %47 = tpu.matmul %42, %46, %cst_16 {dimension_numbers = #tpu.dot_dimension_numbers<[1], [0], [0], [1], [0, 0, 1, 1], [], []>} : vector<128x384xbf16>, vector<384x256xbf16>, vector<128x256xf32> -> vector<128x256xf32>
    %c1_i32_17 = arith.constant 1 : i32
    %48 = tpu.dynamic_rotate %3 by %c1_i32_17 dim 0 : vector<128x128xf32>, i32 -> vector<128x128xf32>
    %c127_i32_18 = arith.constant 127 : i32
    %49 = tpu.dynamic_rotate %3 by %c127_i32_18 dim 0 : vector<128x128xf32>, i32 -> vector<128x128xf32>
    %cst_19 = arith.constant 0.000000e+00 : f32
    %50 = vector.broadcast %cst_19 : f32 to vector<128x128xf32>
    %51 = vector.shape_cast %27 : vector<128x1xi1> to vector<128x1xi1>
    %52 = vector.broadcast %51 : vector<128x1xi1> to vector<128x128xi1>
    %53 = arith.select %52, %50, %48 : vector<128x128xi1>, vector<128x128xf32>
    %54 = vector.shape_cast %29 : vector<128x1xi1> to vector<128x1xi1>
    %55 = vector.broadcast %54 : vector<128x1xi1> to vector<128x128xi1>
    %56 = arith.select %55, %50, %49 : vector<128x128xi1>, vector<128x128xf32>
    %57 = arith.truncf %53 : vector<128x128xf32> to vector<128x128xbf16>
    %58 = arith.truncf %3 : vector<128x128xf32> to vector<128x128xbf16>
    %59 = arith.truncf %56 : vector<128x128xf32> to vector<128x128xbf16>
    %60 = tpu.concatenate %57, %58, %59 in 1 : vector<128x128xbf16>, vector<128x128xbf16>, vector<128x128xbf16> -> vector<128x384xbf16>
    %61 = arith.index_cast %arg2 : i32 to index
    %c1 = arith.constant 1 : index
    %62 = arith.index_cast %arg3 : i32 to index
    %c0_20 = arith.constant 0 : index
    %c0_21 = arith.constant 0 : index
    %63 = vector.load %arg7[%61, %c1, %62, %c0_20, %c0_21] : memref<1x3x1x384x256xbf16, #tpu.memory_space<vmem>>, vector<1x1x1x384x256xbf16>
    %64 = vector.shape_cast %63 : vector<1x1x1x384x256xbf16> to vector<384x256xbf16>
    %cst_22 = arith.constant dense<0.000000e+00> : vector<128x256xf32>
    %65 = tpu.matmul %60, %64, %cst_22 {dimension_numbers = #tpu.dot_dimension_numbers<[1], [0], [0], [1], [0, 0, 1, 1], [], []>} : vector<128x384xbf16>, vector<384x256xbf16>, vector<128x256xf32> -> vector<128x256xf32>
    %66 = arith.addf %47, %65 : vector<128x256xf32>
    %c1_i32_23 = arith.constant 1 : i32
    %67 = tpu.dynamic_rotate %23 by %c1_i32_23 dim 0 : vector<128x128xf32>, i32 -> vector<128x128xf32>
    %c127_i32_24 = arith.constant 127 : i32
    %68 = tpu.dynamic_rotate %23 by %c127_i32_24 dim 0 : vector<128x128xf32>, i32 -> vector<128x128xf32>
    %cst_25 = arith.constant 0.000000e+00 : f32
    %69 = vector.broadcast %cst_25 : f32 to vector<128x128xf32>
    %70 = vector.shape_cast %27 : vector<128x1xi1> to vector<128x1xi1>
    %71 = vector.broadcast %70 : vector<128x1xi1> to vector<128x128xi1>
    %72 = arith.select %71, %69, %67 : vector<128x128xi1>, vector<128x128xf32>
    %73 = vector.shape_cast %29 : vector<128x1xi1> to vector<128x1xi1>
    %74 = vector.broadcast %73 : vector<128x1xi1> to vector<128x128xi1>
    %75 = arith.select %74, %69, %68 : vector<128x128xi1>, vector<128x128xf32>
    %76 = arith.truncf %72 : vector<128x128xf32> to vector<128x128xbf16>
    %77 = arith.truncf %23 : vector<128x128xf32> to vector<128x128xbf16>
    %78 = arith.truncf %75 : vector<128x128xf32> to vector<128x128xbf16>
    %79 = tpu.concatenate %76, %77, %78 in 1 : vector<128x128xbf16>, vector<128x128xbf16>, vector<128x128xbf16> -> vector<128x384xbf16>
    %80 = arith.index_cast %arg2 : i32 to index
    %c2 = arith.constant 2 : index
    %81 = arith.index_cast %arg3 : i32 to index
    %c0_26 = arith.constant 0 : index
    %c0_27 = arith.constant 0 : index
    %82 = vector.load %arg7[%80, %c2, %81, %c0_26, %c0_27] : memref<1x3x1x384x256xbf16, #tpu.memory_space<vmem>>, vector<1x1x1x384x256xbf16>
    %83 = vector.shape_cast %82 : vector<1x1x1x384x256xbf16> to vector<384x256xbf16>
    %cst_28 = arith.constant dense<0.000000e+00> : vector<128x256xf32>
    %84 = tpu.matmul %79, %83, %cst_28 {dimension_numbers = #tpu.dot_dimension_numbers<[1], [0], [0], [1], [0, 0, 1, 1], [], []>} : vector<128x384xbf16>, vector<384x256xbf16>, vector<128x256xf32> -> vector<128x256xf32>
    %85 = arith.addf %66, %84 : vector<128x256xf32>
    %c0_29 = arith.constant 0 : index
    %c0_30 = arith.constant 0 : index
    %86 = vector.load %arg8[%c0_29, %c0_30] : memref<1x256xf32, #tpu.memory_space<vmem>>, vector<1x256xf32>
    %87 = vector.broadcast %86 : vector<1x256xf32> to vector<128x256xf32>
    %88 = arith.addf %87, %85 : vector<128x256xf32>
    %89 = vector.shape_cast %88 : vector<128x256xf32> to vector<1x8x16x256xf32>
    %90 = arith.truncf %89 : vector<1x8x16x256xf32> to vector<1x8x16x256xbf16>
    %c0_31 = arith.constant 0 : index
    %c0_32 = arith.constant 0 : index
    %c0_33 = arith.constant 0 : index
    %c0_34 = arith.constant 0 : index
    %91 = vector.load %arg9[%c0_31, %c0_32, %c0_33, %c0_34] : memref<1x8x16x256xbf16, #tpu.memory_space<vmem>>, vector<1x8x16x256xbf16>
    tpu.vector_store %arg9[%c0_31, %c0_32, %c0_33, %c0_34], %90 {strides = array<i32>} : memref<1x8x16x256xbf16, #tpu.memory_space<vmem>>, vector<1x8x16x256xbf16>,
    return
  }
  func.func @transform_0(%arg0: i32, %arg1: i32, %arg2: i32, %arg3: i32) -> (i32, i32, i32, i32) {
    %c0_i32 = arith.constant 0 : i32
    %c0_i32_0 = arith.constant 0 : i32
    return %arg0, %arg1, %c0_i32, %arg3 : i32, i32, i32, i32
  }
  func.func @transform_1(%arg0: i32, %arg1: i32, %arg2: i32, %arg3: i32) -> (i32, i32, i32, i32) {
    %c8_i32 = arith.constant 8 : i32
    %0 = arith.muli %arg1, %c8_i32 : i32
    %c1_i32 = arith.constant 1 : i32
    %1 = arith.subi %0, %c1_i32 : i32
    %c0_i32 = arith.constant 0 : i32
    %2 = arith.maxsi %1, %c0_i32 : i32
    %c0_i32_0 = arith.constant 0 : i32
    %c0_i32_1 = arith.constant 0 : i32
    return %arg0, %2, %c0_i32_0, %arg3 : i32, i32, i32, i32
  }
  func.func @transform_2(%arg0: i32, %arg1: i32, %arg2: i32, %arg3: i32) -> (i32, i32, i32, i32) {
    %c1_i32 = arith.constant 1 : i32
    %0 = arith.addi %arg1, %c1_i32 : i32
    %c8_i32 = arith.constant 8 : i32
    %1 = arith.muli %0, %c8_i32 : i32
    %c15_i32 = arith.constant 15 : i32
    %2 = arith.minsi %1, %c15_i32 : i32
    %c0_i32 = arith.constant 0 : i32
    %c0_i32_0 = arith.constant 0 : i32
    return %arg0, %2, %c0_i32, %arg3 : i32, i32, i32, i32
  }
  func.func @transform_3(%arg0: i32, %arg1: i32, %arg2: i32, %arg3: i32) -> (i32, i32, i32, i32, i32) {
    %c0_i32 = arith.constant 0 : i32
    %c0_i32_0 = arith.constant 0 : i32
    %c0_i32_1 = arith.constant 0 : i32
    %c0_i32_2 = arith.constant 0 : i32
    %c0_i32_3 = arith.constant 0 : i32
    %c0_i32_4 = arith.constant 0 : i32
    return %c0_i32, %c0_i32_0, %c0_i32_1, %c0_i32_2, %c0_i32_3 : i32, i32, i32, i32, i32
  }
  func.func @transform_4(%arg0: i32, %arg1: i32, %arg2: i32, %arg3: i32) -> (i32, i32) {
    %c0_i32 = arith.constant 0 : i32
    %c0_i32_0 = arith.constant 0 : i32
    return %c0_i32, %arg2 : i32, i32
  }
  func.func @transform_5(%arg0: i32, %arg1: i32, %arg2: i32, %arg3: i32) -> (i32, i32, i32, i32) {
    %c0_i32 = arith.constant 0 : i32
    %c0_i32_0 = arith.constant 0 : i32
    return %arg0, %arg1, %c0_i32, %arg2 : i32, i32, i32, i32
  }
}

module attributes {stable_mosaic.version = 11 : i64} {
  func.func @_spade_apply_kernel(%arg0: i32, %arg1: i32, %arg2: i32, %arg3: memref<1x8x16x128xbf16, #tpu.memory_space<vmem>>, %arg4: memref<1x8x16x256xbf16, #tpu.memory_space<vmem>>, %arg5: memref<1x2x128xf32, #tpu.memory_space<vmem>>, %arg6: memref<1x8x16x128xbf16, #tpu.memory_space<vmem>>) attributes {dimension_semantics = [#tpu.dimension_semantics<parallel>, #tpu.dimension_semantics<parallel>, #tpu.dimension_semantics<parallel>], iteration_bounds = array<i64: 2, 2, 1>, scalar_prefetch = 0 : i64, scratch_operands = 0 : i64, tpu.core_type = #tpu.core_type<tc>, window_params = [{transform_indices = @transform_0, window_bounds = array<i64: 1, 8, 16, 128>}, {transform_indices = @transform_1, window_bounds = array<i64: 1, 8, 16, 256>}, {transform_indices = @transform_2, window_bounds = array<i64: 1, 2, 128>}, {transform_indices = @transform_3, window_bounds = array<i64: 1, 8, 16, 128>}]} {
    %c0 = arith.constant 0 : index
    %c0_0 = arith.constant 0 : index
    %c0_1 = arith.constant 0 : index
    %c0_2 = arith.constant 0 : index
    %0 = vector.load %arg3[%c0, %c0_0, %c0_1, %c0_2] : memref<1x8x16x128xbf16, #tpu.memory_space<vmem>>, vector<1x8x16x128xbf16>
    %1 = vector.shape_cast %0 : vector<1x8x16x128xbf16> to vector<8x16x128xbf16>
    %2 = arith.extf %1 : vector<8x16x128xbf16> to vector<8x16x128xf32>
    %c0_3 = arith.constant 0 : index
    %c0_4 = arith.constant 0 : index
    %c0_5 = arith.constant 0 : index
    %3 = vector.load %arg5[%c0_3, %c0_4, %c0_5] : memref<1x2x128xf32, #tpu.memory_space<vmem>>, vector<1x2x128xf32>
    %4 = vector.shape_cast %3 : vector<1x2x128xf32> to vector<2x128xf32>
    %5 = vector.extract_strided_slice %4 {offsets = [0, 0], sizes = [1, 128], strides = [1, 1]} : vector<2x128xf32> to vector<1x128xf32>
    %cst = arith.constant 3.906250e-03 : f32
    %6 = vector.broadcast %cst : f32 to vector<1x128xf32>
    %7 = arith.mulf %5, %6 : vector<1x128xf32>
    %8 = vector.shape_cast %7 : vector<1x128xf32> to vector<1x1x128xf32>
    %9 = vector.extract_strided_slice %4 {offsets = [1, 0], sizes = [1, 128], strides = [1, 1]} : vector<2x128xf32> to vector<1x128xf32>
    %cst_6 = arith.constant 3.906250e-03 : f32
    %10 = vector.broadcast %cst_6 : f32 to vector<1x128xf32>
    %11 = arith.mulf %9, %10 : vector<1x128xf32>
    %12 = vector.shape_cast %8 : vector<1x1x128xf32> to vector<1x128xf32>
    %13 = arith.mulf %12, %12 : vector<1x128xf32>
    %14 = arith.subf %11, %13 : vector<1x128xf32>
    %cst_7 = arith.constant 0.000000e+00 : f32
    %15 = vector.broadcast %cst_7 : f32 to vector<1x128xf32>
    %16 = arith.maximumf %14, %15 : vector<1x128xf32>
    %17 = vector.shape_cast %16 : vector<1x128xf32> to vector<1x1x128xf32>
    %cst_8 = arith.constant 9.99999974E-6 : f32
    %18 = vector.broadcast %cst_8 : f32 to vector<1x1x128xf32>
    %19 = arith.addf %17, %18 : vector<1x1x128xf32>
    %20 = math.rsqrt %19 : vector<1x1x128xf32>
    %c0_9 = arith.constant 0 : index
    %c0_10 = arith.constant 0 : index
    %c0_11 = arith.constant 0 : index
    %c0_12 = arith.constant 0 : index
    %21 = vector.load %arg4[%c0_9, %c0_10, %c0_11, %c0_12] : memref<1x8x16x256xbf16, #tpu.memory_space<vmem>>, vector<1x8x16x256xbf16>
    %22 = vector.shape_cast %21 : vector<1x8x16x256xbf16> to vector<8x16x256xbf16>
    %23 = arith.extf %22 : vector<8x16x256xbf16> to vector<8x16x256xf32>
    %24 = vector.extract_strided_slice %23 {offsets = [0, 0, 0], sizes = [8, 16, 128], strides = [1, 1, 1]} : vector<8x16x256xf32> to vector<8x16x128xf32>
    %25 = vector.extract_strided_slice %23 {offsets = [0, 0, 128], sizes = [8, 16, 128], strides = [1, 1, 1]} : vector<8x16x256xf32> to vector<8x16x128xf32>
    %26 = vector.broadcast %8 : vector<1x1x128xf32> to vector<8x16x128xf32>
    %27 = arith.subf %2, %26 : vector<8x16x128xf32>
    %28 = vector.broadcast %20 : vector<1x1x128xf32> to vector<8x16x128xf32>
    %29 = arith.mulf %27, %28 : vector<8x16x128xf32>
    %cst_13 = arith.constant 1.000000e+00 : f32
    %30 = vector.broadcast %cst_13 : f32 to vector<8x16x128xf32>
    %31 = arith.addf %30, %24 : vector<8x16x128xf32>
    %32 = arith.mulf %29, %31 : vector<8x16x128xf32>
    %33 = arith.addf %32, %25 : vector<8x16x128xf32>
    %34 = vector.shape_cast %33 : vector<8x16x128xf32> to vector<1x8x16x128xf32>
    %35 = arith.truncf %34 : vector<1x8x16x128xf32> to vector<1x8x16x128xbf16>
    %c0_14 = arith.constant 0 : index
    %c0_15 = arith.constant 0 : index
    %c0_16 = arith.constant 0 : index
    %c0_17 = arith.constant 0 : index
    %36 = vector.load %arg6[%c0_14, %c0_15, %c0_16, %c0_17] : memref<1x8x16x128xbf16, #tpu.memory_space<vmem>>, vector<1x8x16x128xbf16>
    tpu.vector_store %arg6[%c0_14, %c0_15, %c0_16, %c0_17], %35 {strides = array<i32>} : memref<1x8x16x128xbf16, #tpu.memory_space<vmem>>, vector<1x8x16x128xbf16>,
    return
  }
  func.func @transform_0(%arg0: i32, %arg1: i32, %arg2: i32) -> (i32, i32, i32, i32) {
    %c0_i32 = arith.constant 0 : i32
    %c0_i32_0 = arith.constant 0 : i32
    return %arg0, %arg1, %c0_i32, %arg2 : i32, i32, i32, i32
  }
  func.func @transform_1(%arg0: i32, %arg1: i32, %arg2: i32) -> (i32, i32, i32, i32) {
    %c0_i32 = arith.constant 0 : i32
    %c0_i32_0 = arith.constant 0 : i32
    return %arg0, %arg1, %c0_i32, %arg2 : i32, i32, i32, i32
  }
  func.func @transform_2(%arg0: i32, %arg1: i32, %arg2: i32) -> (i32, i32, i32) {
    %c0_i32 = arith.constant 0 : i32
    %c0_i32_0 = arith.constant 0 : i32
    return %arg0, %c0_i32, %arg2 : i32, i32, i32
  }
  func.func @transform_3(%arg0: i32, %arg1: i32, %arg2: i32) -> (i32, i32, i32, i32) {
    %c0_i32 = arith.constant 0 : i32
    %c0_i32_0 = arith.constant 0 : i32
    return %arg0, %arg1, %c0_i32, %arg2 : i32, i32, i32, i32
  }
}

module attributes {stable_mosaic.version = 11 : i64} {
  func.func @_spade_apply_kernel(%arg0: i32, %arg1: i32, %arg2: i32, %arg3: memref<1x8x16x128xbf16, #tpu.memory_space<vmem>>, %arg4: memref<1x8x16x256xbf16, #tpu.memory_space<vmem>>, %arg5: memref<1x2x128xf32, #tpu.memory_space<vmem>>, %arg6: memref<1x8x16x128xbf16, #tpu.memory_space<vmem>>) attributes {dimension_semantics = [#tpu.dimension_semantics<parallel>, #tpu.dimension_semantics<parallel>, #tpu.dimension_semantics<parallel>], iteration_bounds = array<i64: 2, 2, 1>, scalar_prefetch = 0 : i64, scratch_operands = 0 : i64, tpu.core_type = #tpu.core_type<tc>, window_params = [{transform_indices = @transform_0, window_bounds = array<i64: 1, 8, 16, 128>}, {transform_indices = @transform_1, window_bounds = array<i64: 1, 8, 16, 256>}, {transform_indices = @transform_2, window_bounds = array<i64: 1, 2, 128>}, {transform_indices = @transform_3, window_bounds = array<i64: 1, 8, 16, 128>}]} {
    %c0 = arith.constant 0 : index
    %c0_0 = arith.constant 0 : index
    %c0_1 = arith.constant 0 : index
    %c0_2 = arith.constant 0 : index
    %0 = vector.load %arg3[%c0, %c0_0, %c0_1, %c0_2] : memref<1x8x16x128xbf16, #tpu.memory_space<vmem>>, vector<1x8x16x128xbf16>
    %1 = vector.shape_cast %0 : vector<1x8x16x128xbf16> to vector<8x16x128xbf16>
    %2 = arith.extf %1 : vector<8x16x128xbf16> to vector<8x16x128xf32>
    %c0_3 = arith.constant 0 : index
    %c0_4 = arith.constant 0 : index
    %c0_5 = arith.constant 0 : index
    %3 = vector.load %arg5[%c0_3, %c0_4, %c0_5] : memref<1x2x128xf32, #tpu.memory_space<vmem>>, vector<1x2x128xf32>
    %4 = vector.shape_cast %3 : vector<1x2x128xf32> to vector<2x128xf32>
    %5 = vector.extract_strided_slice %4 {offsets = [0, 0], sizes = [1, 128], strides = [1, 1]} : vector<2x128xf32> to vector<1x128xf32>
    %cst = arith.constant 3.906250e-03 : f32
    %6 = vector.broadcast %cst : f32 to vector<1x128xf32>
    %7 = arith.mulf %5, %6 : vector<1x128xf32>
    %8 = vector.shape_cast %7 : vector<1x128xf32> to vector<1x1x128xf32>
    %9 = vector.extract_strided_slice %4 {offsets = [1, 0], sizes = [1, 128], strides = [1, 1]} : vector<2x128xf32> to vector<1x128xf32>
    %cst_6 = arith.constant 3.906250e-03 : f32
    %10 = vector.broadcast %cst_6 : f32 to vector<1x128xf32>
    %11 = arith.mulf %9, %10 : vector<1x128xf32>
    %12 = vector.shape_cast %8 : vector<1x1x128xf32> to vector<1x128xf32>
    %13 = arith.mulf %12, %12 : vector<1x128xf32>
    %14 = arith.subf %11, %13 : vector<1x128xf32>
    %cst_7 = arith.constant 0.000000e+00 : f32
    %15 = vector.broadcast %cst_7 : f32 to vector<1x128xf32>
    %16 = arith.maximumf %14, %15 : vector<1x128xf32>
    %17 = vector.shape_cast %16 : vector<1x128xf32> to vector<1x1x128xf32>
    %cst_8 = arith.constant 9.99999974E-6 : f32
    %18 = vector.broadcast %cst_8 : f32 to vector<1x1x128xf32>
    %19 = arith.addf %17, %18 : vector<1x1x128xf32>
    %20 = math.rsqrt %19 : vector<1x1x128xf32>
    %c0_9 = arith.constant 0 : index
    %c0_10 = arith.constant 0 : index
    %c0_11 = arith.constant 0 : index
    %c0_12 = arith.constant 0 : index
    %21 = vector.load %arg4[%c0_9, %c0_10, %c0_11, %c0_12] : memref<1x8x16x256xbf16, #tpu.memory_space<vmem>>, vector<1x8x16x256xbf16>
    %22 = vector.shape_cast %21 : vector<1x8x16x256xbf16> to vector<8x16x256xbf16>
    %23 = arith.extf %22 : vector<8x16x256xbf16> to vector<8x16x256xf32>
    %24 = vector.extract_strided_slice %23 {offsets = [0, 0, 0], sizes = [8, 16, 128], strides = [1, 1, 1]} : vector<8x16x256xf32> to vector<8x16x128xf32>
    %25 = vector.extract_strided_slice %23 {offsets = [0, 0, 128], sizes = [8, 16, 128], strides = [1, 1, 1]} : vector<8x16x256xf32> to vector<8x16x128xf32>
    %26 = vector.broadcast %8 : vector<1x1x128xf32> to vector<8x16x128xf32>
    %27 = arith.subf %2, %26 : vector<8x16x128xf32>
    %28 = vector.broadcast %20 : vector<1x1x128xf32> to vector<8x16x128xf32>
    %29 = arith.mulf %27, %28 : vector<8x16x128xf32>
    %cst_13 = arith.constant 1.000000e+00 : f32
    %30 = vector.broadcast %cst_13 : f32 to vector<8x16x128xf32>
    %31 = arith.addf %30, %24 : vector<8x16x128xf32>
    %32 = arith.mulf %29, %31 : vector<8x16x128xf32>
    %33 = arith.addf %32, %25 : vector<8x16x128xf32>
    %cst_14 = arith.constant 0.000000e+00 : f32
    %34 = vector.broadcast %cst_14 : f32 to vector<8x16x128xf32>
    %35 = arith.cmpf oge, %33, %34 : vector<8x16x128xf32>
    %cst_15 = arith.constant 2.000000e-01 : f32
    %36 = vector.broadcast %cst_15 : f32 to vector<8x16x128xf32>
    %37 = arith.mulf %36, %33 : vector<8x16x128xf32>
    %38 = arith.select %35, %33, %37 : vector<8x16x128xi1>, vector<8x16x128xf32>
    %39 = vector.shape_cast %38 : vector<8x16x128xf32> to vector<1x8x16x128xf32>
    %40 = arith.truncf %39 : vector<1x8x16x128xf32> to vector<1x8x16x128xbf16>
    %c0_16 = arith.constant 0 : index
    %c0_17 = arith.constant 0 : index
    %c0_18 = arith.constant 0 : index
    %c0_19 = arith.constant 0 : index
    %41 = vector.load %arg6[%c0_16, %c0_17, %c0_18, %c0_19] : memref<1x8x16x128xbf16, #tpu.memory_space<vmem>>, vector<1x8x16x128xbf16>
    tpu.vector_store %arg6[%c0_16, %c0_17, %c0_18, %c0_19], %40 {strides = array<i32>} : memref<1x8x16x128xbf16, #tpu.memory_space<vmem>>, vector<1x8x16x128xbf16>,
    return
  }
  func.func @transform_0(%arg0: i32, %arg1: i32, %arg2: i32) -> (i32, i32, i32, i32) {
    %c0_i32 = arith.constant 0 : i32
    %c0_i32_0 = arith.constant 0 : i32
    return %arg0, %arg1, %c0_i32, %arg2 : i32, i32, i32, i32
  }
  func.func @transform_1(%arg0: i32, %arg1: i32, %arg2: i32) -> (i32, i32, i32, i32) {
    %c0_i32 = arith.constant 0 : i32
    %c0_i32_0 = arith.constant 0 : i32
    return %arg0, %arg1, %c0_i32, %arg2 : i32, i32, i32, i32
  }
  func.func @transform_2(%arg0: i32, %arg1: i32, %arg2: i32) -> (i32, i32, i32) {
    %c0_i32 = arith.constant 0 : i32
    %c0_i32_0 = arith.constant 0 : i32
    return %arg0, %c0_i32, %arg2 : i32, i32, i32
  }
  func.func @transform_3(%arg0: i32, %arg1: i32, %arg2: i32) -> (i32, i32, i32, i32) {
    %c0_i32 = arith.constant 0 : i32
    %c0_i32_0 = arith.constant 0 : i32
    return %arg0, %arg1, %c0_i32, %arg2 : i32, i32, i32, i32
  }
}

module attributes {stable_mosaic.version = 11 : i64} {
  func.func @kernel(%arg0: i32, %arg1: i32, %arg2: i32, %arg3: i32, %arg4: memref<1x8x16x128xbf16, #tpu.memory_space<vmem>>, %arg5: memref<1x1x16x128xbf16, #tpu.memory_space<vmem>>, %arg6: memref<1x1x16x128xbf16, #tpu.memory_space<vmem>>, %arg7: memref<1x3x1x384x128xbf16, #tpu.memory_space<vmem>>, %arg8: memref<1x128xf32, #tpu.memory_space<vmem>>, %arg9: memref<1x8x16x128xbf16, #tpu.memory_space<vmem>>) attributes {dimension_semantics = [#tpu.dimension_semantics<parallel>, #tpu.dimension_semantics<parallel>, #tpu.dimension_semantics<parallel>, #tpu.dimension_semantics<arbitrary>], iteration_bounds = array<i64: 2, 2, 1, 1>, scalar_prefetch = 0 : i64, scratch_operands = 0 : i64, tpu.core_type = #tpu.core_type<tc>, window_params = [{transform_indices = @transform_0, window_bounds = array<i64: 1, 8, 16, 128>}, {transform_indices = @transform_1, window_bounds = array<i64: 1, 1, 16, 128>}, {transform_indices = @transform_2, window_bounds = array<i64: 1, 1, 16, 128>}, {pipeline_mode = #tpu.pipeline_mode<synchronous>, transform_indices = @transform_3, window_bounds = array<i64: 1, 3, 1, 384, 128>}, {transform_indices = @transform_4, window_bounds = array<i64: 1, 128>}, {transform_indices = @transform_5, window_bounds = array<i64: 1, 8, 16, 128>}]} {
    %c0 = arith.constant 0 : index
    %c0_0 = arith.constant 0 : index
    %c0_1 = arith.constant 0 : index
    %c0_2 = arith.constant 0 : index
    %0 = vector.load %arg4[%c0, %c0_0, %c0_1, %c0_2] : memref<1x8x16x128xbf16, #tpu.memory_space<vmem>>, vector<1x8x16x128xbf16>
    %1 = vector.shape_cast %0 : vector<1x8x16x128xbf16> to vector<8x16x128xbf16>
    %2 = arith.extf %1 : vector<8x16x128xbf16> to vector<8x16x128xf32>
    %3 = vector.shape_cast %2 : vector<8x16x128xf32> to vector<128x128xf32>
    %c0_3 = arith.constant 0 : index
    %c0_4 = arith.constant 0 : index
    %c0_5 = arith.constant 0 : index
    %c0_6 = arith.constant 0 : index
    %4 = vector.load %arg5[%c0_3, %c0_4, %c0_5, %c0_6] : memref<1x1x16x128xbf16, #tpu.memory_space<vmem>>, vector<1x1x16x128xbf16>
    %5 = vector.shape_cast %4 : vector<1x1x16x128xbf16> to vector<16x128xbf16>
    %6 = arith.extf %5 : vector<16x128xbf16> to vector<16x128xf32>
    %c0_7 = arith.constant 0 : index
    %c0_8 = arith.constant 0 : index
    %c0_9 = arith.constant 0 : index
    %c0_10 = arith.constant 0 : index
    %7 = vector.load %arg6[%c0_7, %c0_8, %c0_9, %c0_10] : memref<1x1x16x128xbf16, #tpu.memory_space<vmem>>, vector<1x1x16x128xbf16>
    %8 = vector.shape_cast %7 : vector<1x1x16x128xbf16> to vector<16x128xbf16>
    %9 = arith.extf %8 : vector<16x128xbf16> to vector<16x128xf32>
    %c0_i32 = arith.constant 0 : i32
    %10 = arith.cmpi sgt, %arg1, %c0_i32 : i32
    %11 = arith.extui %10 : i1 to i32
    %12 = arith.sitofp %11 : i32 to f32
    %c1_i32 = arith.constant 1 : i32
    %13 = arith.cmpi slt, %arg1, %c1_i32 : i32
    %14 = arith.extui %13 : i1 to i32
    %15 = arith.sitofp %14 : i32 to f32
    %16 = vector.broadcast %12 : f32 to vector<16x128xf32>
    %17 = arith.mulf %6, %16 : vector<16x128xf32>
    %18 = vector.extract_strided_slice %3 {offsets = [16, 0], sizes = [16, 128], strides = [1, 1]} : vector<128x128xf32> to vector<16x128xf32>
    %cst = arith.constant 1.000000e+00 : f32
    %19 = arith.subf %cst, %12 : f32
    %20 = vector.broadcast %19 : f32 to vector<16x128xf32>
    %21 = arith.mulf %18, %20 : vector<16x128xf32>
    %22 = arith.addf %17, %21 : vector<16x128xf32>
    %23 = vector.broadcast %15 : f32 to vector<16x128xf32>
    %24 = arith.mulf %9, %23 : vector<16x128xf32>
    %25 = vector.extract_strided_slice %3 {offsets = [96, 0], sizes = [16, 128], strides = [1, 1]} : vector<128x128xf32> to vector<16x128xf32>
    %cst_11 = arith.constant 1.000000e+00 : f32
    %26 = arith.subf %cst_11, %15 : f32
    %27 = vector.broadcast %26 : f32 to vector<16x128xf32>
    %28 = arith.mulf %25, %27 : vector<16x128xf32>
    %29 = arith.addf %24, %28 : vector<16x128xf32>
    %30 = vector.extract_strided_slice %3 {offsets = [0, 0], sizes = [112, 128], strides = [1, 1]} : vector<128x128xf32> to vector<112x128xf32>
    %31 = tpu.concatenate %22, %30 in 0 : vector<16x128xf32>, vector<112x128xf32> -> vector<128x128xf32>
    %32 = vector.extract_strided_slice %3 {offsets = [16, 0], sizes = [112, 128], strides = [1, 1]} : vector<128x128xf32> to vector<112x128xf32>
    %33 = tpu.concatenate %32, %29 in 0 : vector<112x128xf32>, vector<16x128xf32> -> vector<128x128xf32>
    %34 = tpu.iota {dimensions = array<i32: 1>} : vector<8x16x1xi32>
    %35 = vector.shape_cast %34 : vector<8x16x1xi32> to vector<128x1xi32>
    %c0_i32_12 = arith.constant 0 : i32
    %36 = vector.broadcast %c0_i32_12 : i32 to vector<128x1xi32>
    %37 = arith.cmpi eq, %35, %36 : vector<128x1xi32>
    %c15_i32 = arith.constant 15 : i32
    %38 = vector.broadcast %c15_i32 : i32 to vector<128x1xi32>
    %39 = arith.cmpi eq, %35, %38 : vector<128x1xi32>
    %c1_i32_13 = arith.constant 1 : i32
    %40 = tpu.dynamic_rotate %31 by %c1_i32_13 dim 0 : vector<128x128xf32>, i32 -> vector<128x128xf32>
    %c127_i32 = arith.constant 127 : i32
    %41 = tpu.dynamic_rotate %31 by %c127_i32 dim 0 : vector<128x128xf32>, i32 -> vector<128x128xf32>
    %42 = vector.shape_cast %37 : vector<128x1xi1> to vector<128x1xi1>
    %43 = vector.broadcast %42 : vector<128x1xi1> to vector<128x128xi1>
    %44 = arith.select %43, %41, %40 : vector<128x128xi1>, vector<128x128xf32>
    %45 = vector.shape_cast %39 : vector<128x1xi1> to vector<128x1xi1>
    %46 = vector.broadcast %45 : vector<128x1xi1> to vector<128x128xi1>
    %47 = arith.select %46, %40, %41 : vector<128x128xi1>, vector<128x128xf32>
    %48 = arith.truncf %44 : vector<128x128xf32> to vector<128x128xbf16>
    %49 = arith.truncf %31 : vector<128x128xf32> to vector<128x128xbf16>
    %50 = arith.truncf %47 : vector<128x128xf32> to vector<128x128xbf16>
    %51 = tpu.concatenate %48, %49, %50 in 1 : vector<128x128xbf16>, vector<128x128xbf16>, vector<128x128xbf16> -> vector<128x384xbf16>
    %52 = arith.index_cast %arg2 : i32 to index
    %c0_14 = arith.constant 0 : index
    %53 = arith.index_cast %arg3 : i32 to index
    %c0_15 = arith.constant 0 : index
    %c0_16 = arith.constant 0 : index
    %54 = vector.load %arg7[%52, %c0_14, %53, %c0_15, %c0_16] : memref<1x3x1x384x128xbf16, #tpu.memory_space<vmem>>, vector<1x1x1x384x128xbf16>
    %55 = vector.shape_cast %54 : vector<1x1x1x384x128xbf16> to vector<384x128xbf16>
    %cst_17 = arith.constant dense<0.000000e+00> : vector<128x128xf32>
    %56 = tpu.matmul %51, %55, %cst_17 {dimension_numbers = #tpu.dot_dimension_numbers<[1], [0], [0], [1], [0, 0, 1, 1], [], []>} : vector<128x384xbf16>, vector<384x128xbf16>, vector<128x128xf32> -> vector<128x128xf32>
    %c1_i32_18 = arith.constant 1 : i32
    %57 = tpu.dynamic_rotate %3 by %c1_i32_18 dim 0 : vector<128x128xf32>, i32 -> vector<128x128xf32>
    %c127_i32_19 = arith.constant 127 : i32
    %58 = tpu.dynamic_rotate %3 by %c127_i32_19 dim 0 : vector<128x128xf32>, i32 -> vector<128x128xf32>
    %59 = vector.shape_cast %37 : vector<128x1xi1> to vector<128x1xi1>
    %60 = vector.broadcast %59 : vector<128x1xi1> to vector<128x128xi1>
    %61 = arith.select %60, %58, %57 : vector<128x128xi1>, vector<128x128xf32>
    %62 = vector.shape_cast %39 : vector<128x1xi1> to vector<128x1xi1>
    %63 = vector.broadcast %62 : vector<128x1xi1> to vector<128x128xi1>
    %64 = arith.select %63, %57, %58 : vector<128x128xi1>, vector<128x128xf32>
    %65 = arith.truncf %61 : vector<128x128xf32> to vector<128x128xbf16>
    %66 = arith.truncf %3 : vector<128x128xf32> to vector<128x128xbf16>
    %67 = arith.truncf %64 : vector<128x128xf32> to vector<128x128xbf16>
    %68 = tpu.concatenate %65, %66, %67 in 1 : vector<128x128xbf16>, vector<128x128xbf16>, vector<128x128xbf16> -> vector<128x384xbf16>
    %69 = arith.index_cast %arg2 : i32 to index
    %c1 = arith.constant 1 : index
    %70 = arith.index_cast %arg3 : i32 to index
    %c0_20 = arith.constant 0 : index
    %c0_21 = arith.constant 0 : index
    %71 = vector.load %arg7[%69, %c1, %70, %c0_20, %c0_21] : memref<1x3x1x384x128xbf16, #tpu.memory_space<vmem>>, vector<1x1x1x384x128xbf16>
    %72 = vector.shape_cast %71 : vector<1x1x1x384x128xbf16> to vector<384x128xbf16>
    %cst_22 = arith.constant dense<0.000000e+00> : vector<128x128xf32>
    %73 = tpu.matmul %68, %72, %cst_22 {dimension_numbers = #tpu.dot_dimension_numbers<[1], [0], [0], [1], [0, 0, 1, 1], [], []>} : vector<128x384xbf16>, vector<384x128xbf16>, vector<128x128xf32> -> vector<128x128xf32>
    %74 = arith.addf %56, %73 : vector<128x128xf32>
    %c1_i32_23 = arith.constant 1 : i32
    %75 = tpu.dynamic_rotate %33 by %c1_i32_23 dim 0 : vector<128x128xf32>, i32 -> vector<128x128xf32>
    %c127_i32_24 = arith.constant 127 : i32
    %76 = tpu.dynamic_rotate %33 by %c127_i32_24 dim 0 : vector<128x128xf32>, i32 -> vector<128x128xf32>
    %77 = vector.shape_cast %37 : vector<128x1xi1> to vector<128x1xi1>
    %78 = vector.broadcast %77 : vector<128x1xi1> to vector<128x128xi1>
    %79 = arith.select %78, %76, %75 : vector<128x128xi1>, vector<128x128xf32>
    %80 = vector.shape_cast %39 : vector<128x1xi1> to vector<128x1xi1>
    %81 = vector.broadcast %80 : vector<128x1xi1> to vector<128x128xi1>
    %82 = arith.select %81, %75, %76 : vector<128x128xi1>, vector<128x128xf32>
    %83 = arith.truncf %79 : vector<128x128xf32> to vector<128x128xbf16>
    %84 = arith.truncf %33 : vector<128x128xf32> to vector<128x128xbf16>
    %85 = arith.truncf %82 : vector<128x128xf32> to vector<128x128xbf16>
    %86 = tpu.concatenate %83, %84, %85 in 1 : vector<128x128xbf16>, vector<128x128xbf16>, vector<128x128xbf16> -> vector<128x384xbf16>
    %87 = arith.index_cast %arg2 : i32 to index
    %c2 = arith.constant 2 : index
    %88 = arith.index_cast %arg3 : i32 to index
    %c0_25 = arith.constant 0 : index
    %c0_26 = arith.constant 0 : index
    %89 = vector.load %arg7[%87, %c2, %88, %c0_25, %c0_26] : memref<1x3x1x384x128xbf16, #tpu.memory_space<vmem>>, vector<1x1x1x384x128xbf16>
    %90 = vector.shape_cast %89 : vector<1x1x1x384x128xbf16> to vector<384x128xbf16>
    %cst_27 = arith.constant dense<0.000000e+00> : vector<128x128xf32>
    %91 = tpu.matmul %86, %90, %cst_27 {dimension_numbers = #tpu.dot_dimension_numbers<[1], [0], [0], [1], [0, 0, 1, 1], [], []>} : vector<128x384xbf16>, vector<384x128xbf16>, vector<128x128xf32> -> vector<128x128xf32>
    %92 = arith.addf %74, %91 : vector<128x128xf32>
    %c0_28 = arith.constant 0 : index
    %c0_29 = arith.constant 0 : index
    %93 = vector.load %arg8[%c0_28, %c0_29] : memref<1x128xf32, #tpu.memory_space<vmem>>, vector<1x128xf32>
    %94 = vector.broadcast %93 : vector<1x128xf32> to vector<128x128xf32>
    %95 = arith.addf %94, %92 : vector<128x128xf32>
    %96 = vector.shape_cast %95 : vector<128x128xf32> to vector<1x8x16x128xf32>
    %97 = arith.truncf %96 : vector<1x8x16x128xf32> to vector<1x8x16x128xbf16>
    %c0_30 = arith.constant 0 : index
    %c0_31 = arith.constant 0 : index
    %c0_32 = arith.constant 0 : index
    %c0_33 = arith.constant 0 : index
    %98 = vector.load %arg9[%c0_30, %c0_31, %c0_32, %c0_33] : memref<1x8x16x128xbf16, #tpu.memory_space<vmem>>, vector<1x8x16x128xbf16>
    tpu.vector_store %arg9[%c0_30, %c0_31, %c0_32, %c0_33], %97 {strides = array<i32>} : memref<1x8x16x128xbf16, #tpu.memory_space<vmem>>, vector<1x8x16x128xbf16>,
    return
  }
  func.func @transform_0(%arg0: i32, %arg1: i32, %arg2: i32, %arg3: i32) -> (i32, i32, i32, i32) {
    %c0_i32 = arith.constant 0 : i32
    %c0_i32_0 = arith.constant 0 : i32
    return %arg0, %arg1, %c0_i32, %arg3 : i32, i32, i32, i32
  }
  func.func @transform_1(%arg0: i32, %arg1: i32, %arg2: i32, %arg3: i32) -> (i32, i32, i32, i32) {
    %c8_i32 = arith.constant 8 : i32
    %0 = arith.muli %arg1, %c8_i32 : i32
    %c1_i32 = arith.constant 1 : i32
    %1 = arith.subi %0, %c1_i32 : i32
    %c0_i32 = arith.constant 0 : i32
    %2 = arith.maxsi %1, %c0_i32 : i32
    %c0_i32_0 = arith.constant 0 : i32
    %c0_i32_1 = arith.constant 0 : i32
    return %arg0, %2, %c0_i32_0, %arg3 : i32, i32, i32, i32
  }
  func.func @transform_2(%arg0: i32, %arg1: i32, %arg2: i32, %arg3: i32) -> (i32, i32, i32, i32) {
    %c1_i32 = arith.constant 1 : i32
    %0 = arith.addi %arg1, %c1_i32 : i32
    %c8_i32 = arith.constant 8 : i32
    %1 = arith.muli %0, %c8_i32 : i32
    %c15_i32 = arith.constant 15 : i32
    %2 = arith.minsi %1, %c15_i32 : i32
    %c0_i32 = arith.constant 0 : i32
    %c0_i32_0 = arith.constant 0 : i32
    return %arg0, %2, %c0_i32, %arg3 : i32, i32, i32, i32
  }
  func.func @transform_3(%arg0: i32, %arg1: i32, %arg2: i32, %arg3: i32) -> (i32, i32, i32, i32, i32) {
    %c0_i32 = arith.constant 0 : i32
    %c0_i32_0 = arith.constant 0 : i32
    %c0_i32_1 = arith.constant 0 : i32
    %c0_i32_2 = arith.constant 0 : i32
    %c0_i32_3 = arith.constant 0 : i32
    %c0_i32_4 = arith.constant 0 : i32
    return %c0_i32, %c0_i32_0, %c0_i32_1, %c0_i32_2, %c0_i32_3 : i32, i32, i32, i32, i32
  }
  func.func @transform_4(%arg0: i32, %arg1: i32, %arg2: i32, %arg3: i32) -> (i32, i32) {
    %c0_i32 = arith.constant 0 : i32
    %c0_i32_0 = arith.constant 0 : i32
    return %c0_i32, %arg2 : i32, i32
  }
  func.func @transform_5(%arg0: i32, %arg1: i32, %arg2: i32, %arg3: i32) -> (i32, i32, i32, i32) {
    %c0_i32 = arith.constant 0 : i32
    %c0_i32_0 = arith.constant 0 : i32
    return %arg0, %arg1, %c0_i32, %arg2 : i32, i32, i32, i32
  }
}

module attributes {stable_mosaic.version = 11 : i64} {
  func.func @kernel(%arg0: i32, %arg1: i32, %arg2: i32, %arg3: i32, %arg4: memref<1x8x16x128xbf16, #tpu.memory_space<vmem>>, %arg5: memref<1x1x16x128xbf16, #tpu.memory_space<vmem>>, %arg6: memref<1x1x16x128xbf16, #tpu.memory_space<vmem>>, %arg7: memref<1x3x1x384x128xbf16, #tpu.memory_space<vmem>>, %arg8: memref<1x128xf32, #tpu.memory_space<vmem>>, %arg9: memref<1x8x16x128xbf16, #tpu.memory_space<vmem>>, %arg10: memref<128x128xbf16, #tpu.memory_space<vmem>>, %arg11: memref<1x8x16x128xf32, #tpu.memory_space<vmem>>) attributes {dimension_semantics = [#tpu.dimension_semantics<parallel>, #tpu.dimension_semantics<parallel>, #tpu.dimension_semantics<parallel>, #tpu.dimension_semantics<arbitrary>], iteration_bounds = array<i64: 2, 2, 1, 1>, scalar_prefetch = 0 : i64, scratch_operands = 0 : i64, tpu.core_type = #tpu.core_type<tc>, window_params = [{transform_indices = @transform_0, window_bounds = array<i64: 1, 8, 16, 128>}, {transform_indices = @transform_1, window_bounds = array<i64: 1, 1, 16, 128>}, {transform_indices = @transform_2, window_bounds = array<i64: 1, 1, 16, 128>}, {pipeline_mode = #tpu.pipeline_mode<synchronous>, transform_indices = @transform_3, window_bounds = array<i64: 1, 3, 1, 384, 128>}, {transform_indices = @transform_4, window_bounds = array<i64: 1, 128>}, {transform_indices = @transform_5, window_bounds = array<i64: 1, 8, 16, 128>}, {transform_indices = @transform_6, window_bounds = array<i64: 128, 128>}, {transform_indices = @transform_7, window_bounds = array<i64: 1, 8, 16, 128>}]} {
    %c0 = arith.constant 0 : index
    %c0_0 = arith.constant 0 : index
    %c0_1 = arith.constant 0 : index
    %c0_2 = arith.constant 0 : index
    %0 = vector.load %arg4[%c0, %c0_0, %c0_1, %c0_2] : memref<1x8x16x128xbf16, #tpu.memory_space<vmem>>, vector<1x8x16x128xbf16>
    %1 = vector.shape_cast %0 : vector<1x8x16x128xbf16> to vector<8x16x128xbf16>
    %2 = arith.extf %1 : vector<8x16x128xbf16> to vector<8x16x128xf32>
    %3 = vector.shape_cast %2 : vector<8x16x128xf32> to vector<128x128xf32>
    %c0_3 = arith.constant 0 : index
    %c0_4 = arith.constant 0 : index
    %c0_5 = arith.constant 0 : index
    %c0_6 = arith.constant 0 : index
    %4 = vector.load %arg5[%c0_3, %c0_4, %c0_5, %c0_6] : memref<1x1x16x128xbf16, #tpu.memory_space<vmem>>, vector<1x1x16x128xbf16>
    %5 = vector.shape_cast %4 : vector<1x1x16x128xbf16> to vector<16x128xbf16>
    %6 = arith.extf %5 : vector<16x128xbf16> to vector<16x128xf32>
    %c0_7 = arith.constant 0 : index
    %c0_8 = arith.constant 0 : index
    %c0_9 = arith.constant 0 : index
    %c0_10 = arith.constant 0 : index
    %7 = vector.load %arg6[%c0_7, %c0_8, %c0_9, %c0_10] : memref<1x1x16x128xbf16, #tpu.memory_space<vmem>>, vector<1x1x16x128xbf16>
    %8 = vector.shape_cast %7 : vector<1x1x16x128xbf16> to vector<16x128xbf16>
    %9 = arith.extf %8 : vector<16x128xbf16> to vector<16x128xf32>
    %c0_i32 = arith.constant 0 : i32
    %10 = arith.cmpi sgt, %arg1, %c0_i32 : i32
    %11 = arith.extui %10 : i1 to i32
    %12 = arith.sitofp %11 : i32 to f32
    %c1_i32 = arith.constant 1 : i32
    %13 = arith.cmpi slt, %arg1, %c1_i32 : i32
    %14 = arith.extui %13 : i1 to i32
    %15 = arith.sitofp %14 : i32 to f32
    %16 = vector.broadcast %12 : f32 to vector<16x128xf32>
    %17 = arith.mulf %6, %16 : vector<16x128xf32>
    %18 = vector.extract_strided_slice %3 {offsets = [16, 0], sizes = [16, 128], strides = [1, 1]} : vector<128x128xf32> to vector<16x128xf32>
    %cst = arith.constant 1.000000e+00 : f32
    %19 = arith.subf %cst, %12 : f32
    %20 = vector.broadcast %19 : f32 to vector<16x128xf32>
    %21 = arith.mulf %18, %20 : vector<16x128xf32>
    %22 = arith.addf %17, %21 : vector<16x128xf32>
    %23 = vector.broadcast %15 : f32 to vector<16x128xf32>
    %24 = arith.mulf %9, %23 : vector<16x128xf32>
    %25 = vector.extract_strided_slice %3 {offsets = [96, 0], sizes = [16, 128], strides = [1, 1]} : vector<128x128xf32> to vector<16x128xf32>
    %cst_11 = arith.constant 1.000000e+00 : f32
    %26 = arith.subf %cst_11, %15 : f32
    %27 = vector.broadcast %26 : f32 to vector<16x128xf32>
    %28 = arith.mulf %25, %27 : vector<16x128xf32>
    %29 = arith.addf %24, %28 : vector<16x128xf32>
    %30 = vector.extract_strided_slice %3 {offsets = [0, 0], sizes = [112, 128], strides = [1, 1]} : vector<128x128xf32> to vector<112x128xf32>
    %31 = tpu.concatenate %22, %30 in 0 : vector<16x128xf32>, vector<112x128xf32> -> vector<128x128xf32>
    %32 = vector.extract_strided_slice %3 {offsets = [16, 0], sizes = [112, 128], strides = [1, 1]} : vector<128x128xf32> to vector<112x128xf32>
    %33 = tpu.concatenate %32, %29 in 0 : vector<112x128xf32>, vector<16x128xf32> -> vector<128x128xf32>
    %34 = tpu.iota {dimensions = array<i32: 1>} : vector<8x16x1xi32>
    %35 = vector.shape_cast %34 : vector<8x16x1xi32> to vector<128x1xi32>
    %c0_i32_12 = arith.constant 0 : i32
    %36 = vector.broadcast %c0_i32_12 : i32 to vector<128x1xi32>
    %37 = arith.cmpi eq, %35, %36 : vector<128x1xi32>
    %c15_i32 = arith.constant 15 : i32
    %38 = vector.broadcast %c15_i32 : i32 to vector<128x1xi32>
    %39 = arith.cmpi eq, %35, %38 : vector<128x1xi32>
    %c1_i32_13 = arith.constant 1 : i32
    %40 = tpu.dynamic_rotate %31 by %c1_i32_13 dim 0 : vector<128x128xf32>, i32 -> vector<128x128xf32>
    %c127_i32 = arith.constant 127 : i32
    %41 = tpu.dynamic_rotate %31 by %c127_i32 dim 0 : vector<128x128xf32>, i32 -> vector<128x128xf32>
    %42 = vector.shape_cast %37 : vector<128x1xi1> to vector<128x1xi1>
    %43 = vector.broadcast %42 : vector<128x1xi1> to vector<128x128xi1>
    %44 = arith.select %43, %41, %40 : vector<128x128xi1>, vector<128x128xf32>
    %45 = vector.shape_cast %39 : vector<128x1xi1> to vector<128x1xi1>
    %46 = vector.broadcast %45 : vector<128x1xi1> to vector<128x128xi1>
    %47 = arith.select %46, %40, %41 : vector<128x128xi1>, vector<128x128xf32>
    %48 = arith.truncf %44 : vector<128x128xf32> to vector<128x128xbf16>
    %49 = arith.truncf %31 : vector<128x128xf32> to vector<128x128xbf16>
    %50 = arith.truncf %47 : vector<128x128xf32> to vector<128x128xbf16>
    %51 = tpu.concatenate %48, %49, %50 in 1 : vector<128x128xbf16>, vector<128x128xbf16>, vector<128x128xbf16> -> vector<128x384xbf16>
    %52 = arith.index_cast %arg2 : i32 to index
    %c0_14 = arith.constant 0 : index
    %53 = arith.index_cast %arg3 : i32 to index
    %c0_15 = arith.constant 0 : index
    %c0_16 = arith.constant 0 : index
    %54 = vector.load %arg7[%52, %c0_14, %53, %c0_15, %c0_16] : memref<1x3x1x384x128xbf16, #tpu.memory_space<vmem>>, vector<1x1x1x384x128xbf16>
    %55 = vector.shape_cast %54 : vector<1x1x1x384x128xbf16> to vector<384x128xbf16>
    %cst_17 = arith.constant dense<0.000000e+00> : vector<128x128xf32>
    %56 = tpu.matmul %51, %55, %cst_17 {dimension_numbers = #tpu.dot_dimension_numbers<[1], [0], [0], [1], [0, 0, 1, 1], [], []>} : vector<128x384xbf16>, vector<384x128xbf16>, vector<128x128xf32> -> vector<128x128xf32>
    %c1_i32_18 = arith.constant 1 : i32
    %57 = tpu.dynamic_rotate %3 by %c1_i32_18 dim 0 : vector<128x128xf32>, i32 -> vector<128x128xf32>
    %c127_i32_19 = arith.constant 127 : i32
    %58 = tpu.dynamic_rotate %3 by %c127_i32_19 dim 0 : vector<128x128xf32>, i32 -> vector<128x128xf32>
    %59 = vector.shape_cast %37 : vector<128x1xi1> to vector<128x1xi1>
    %60 = vector.broadcast %59 : vector<128x1xi1> to vector<128x128xi1>
    %61 = arith.select %60, %58, %57 : vector<128x128xi1>, vector<128x128xf32>
    %62 = vector.shape_cast %39 : vector<128x1xi1> to vector<128x1xi1>
    %63 = vector.broadcast %62 : vector<128x1xi1> to vector<128x128xi1>
    %64 = arith.select %63, %57, %58 : vector<128x128xi1>, vector<128x128xf32>
    %65 = arith.truncf %61 : vector<128x128xf32> to vector<128x128xbf16>
    %66 = arith.truncf %3 : vector<128x128xf32> to vector<128x128xbf16>
    %67 = arith.truncf %64 : vector<128x128xf32> to vector<128x128xbf16>
    %68 = tpu.concatenate %65, %66, %67 in 1 : vector<128x128xbf16>, vector<128x128xbf16>, vector<128x128xbf16> -> vector<128x384xbf16>
    %69 = arith.index_cast %arg2 : i32 to index
    %c1 = arith.constant 1 : index
    %70 = arith.index_cast %arg3 : i32 to index
    %c0_20 = arith.constant 0 : index
    %c0_21 = arith.constant 0 : index
    %71 = vector.load %arg7[%69, %c1, %70, %c0_20, %c0_21] : memref<1x3x1x384x128xbf16, #tpu.memory_space<vmem>>, vector<1x1x1x384x128xbf16>
    %72 = vector.shape_cast %71 : vector<1x1x1x384x128xbf16> to vector<384x128xbf16>
    %cst_22 = arith.constant dense<0.000000e+00> : vector<128x128xf32>
    %73 = tpu.matmul %68, %72, %cst_22 {dimension_numbers = #tpu.dot_dimension_numbers<[1], [0], [0], [1], [0, 0, 1, 1], [], []>} : vector<128x384xbf16>, vector<384x128xbf16>, vector<128x128xf32> -> vector<128x128xf32>
    %74 = arith.addf %56, %73 : vector<128x128xf32>
    %c1_i32_23 = arith.constant 1 : i32
    %75 = tpu.dynamic_rotate %33 by %c1_i32_23 dim 0 : vector<128x128xf32>, i32 -> vector<128x128xf32>
    %c127_i32_24 = arith.constant 127 : i32
    %76 = tpu.dynamic_rotate %33 by %c127_i32_24 dim 0 : vector<128x128xf32>, i32 -> vector<128x128xf32>
    %77 = vector.shape_cast %37 : vector<128x1xi1> to vector<128x1xi1>
    %78 = vector.broadcast %77 : vector<128x1xi1> to vector<128x128xi1>
    %79 = arith.select %78, %76, %75 : vector<128x128xi1>, vector<128x128xf32>
    %80 = vector.shape_cast %39 : vector<128x1xi1> to vector<128x1xi1>
    %81 = vector.broadcast %80 : vector<128x1xi1> to vector<128x128xi1>
    %82 = arith.select %81, %75, %76 : vector<128x128xi1>, vector<128x128xf32>
    %83 = arith.truncf %79 : vector<128x128xf32> to vector<128x128xbf16>
    %84 = arith.truncf %33 : vector<128x128xf32> to vector<128x128xbf16>
    %85 = arith.truncf %82 : vector<128x128xf32> to vector<128x128xbf16>
    %86 = tpu.concatenate %83, %84, %85 in 1 : vector<128x128xbf16>, vector<128x128xbf16>, vector<128x128xbf16> -> vector<128x384xbf16>
    %87 = arith.index_cast %arg2 : i32 to index
    %c2 = arith.constant 2 : index
    %88 = arith.index_cast %arg3 : i32 to index
    %c0_25 = arith.constant 0 : index
    %c0_26 = arith.constant 0 : index
    %89 = vector.load %arg7[%87, %c2, %88, %c0_25, %c0_26] : memref<1x3x1x384x128xbf16, #tpu.memory_space<vmem>>, vector<1x1x1x384x128xbf16>
    %90 = vector.shape_cast %89 : vector<1x1x1x384x128xbf16> to vector<384x128xbf16>
    %cst_27 = arith.constant dense<0.000000e+00> : vector<128x128xf32>
    %91 = tpu.matmul %86, %90, %cst_27 {dimension_numbers = #tpu.dot_dimension_numbers<[1], [0], [0], [1], [0, 0, 1, 1], [], []>} : vector<128x384xbf16>, vector<384x128xbf16>, vector<128x128xf32> -> vector<128x128xf32>
    %92 = arith.addf %74, %91 : vector<128x128xf32>
    %c0_28 = arith.constant 0 : index
    %c0_29 = arith.constant 0 : index
    %93 = vector.load %arg8[%c0_28, %c0_29] : memref<1x128xf32, #tpu.memory_space<vmem>>, vector<1x128xf32>
    %c0_30 = arith.constant 0 : index
    %c0_31 = arith.constant 0 : index
    %c0_32 = arith.constant 0 : index
    %c0_33 = arith.constant 0 : index
    %94 = vector.load %arg9[%c0_30, %c0_31, %c0_32, %c0_33] : memref<1x8x16x128xbf16, #tpu.memory_space<vmem>>, vector<1x8x16x128xbf16>
    %95 = vector.shape_cast %94 : vector<1x8x16x128xbf16> to vector<8x16x128xbf16>
    %96 = vector.shape_cast %95 : vector<8x16x128xbf16> to vector<128x128xbf16>
    %c0_34 = arith.constant 0 : index
    %c0_35 = arith.constant 0 : index
    %97 = vector.load %arg10[%c0_34, %c0_35] : memref<128x128xbf16, #tpu.memory_space<vmem>>, vector<128x128xbf16>
    %cst_36 = arith.constant dense<0.000000e+00> : vector<128x128xf32>
    %98 = tpu.matmul %96, %97, %cst_36 {dimension_numbers = #tpu.dot_dimension_numbers<[1], [0], [0], [1], [0, 0, 1, 1], [], []>} : vector<128x128xbf16>, vector<128x128xbf16>, vector<128x128xf32> -> vector<128x128xf32>
    %99 = vector.broadcast %93 : vector<1x128xf32> to vector<128x128xf32>
    %100 = arith.addf %99, %98 : vector<128x128xf32>
    %101 = arith.addf %100, %92 : vector<128x128xf32>
    %102 = vector.shape_cast %101 : vector<128x128xf32> to vector<1x8x16x128xf32>
    %c0_37 = arith.constant 0 : index
    %c0_38 = arith.constant 0 : index
    %c0_39 = arith.constant 0 : index
    %c0_40 = arith.constant 0 : index
    %103 = vector.load %arg11[%c0_37, %c0_38, %c0_39, %c0_40] : memref<1x8x16x128xf32, #tpu.memory_space<vmem>>, vector<1x8x16x128xf32>
    tpu.vector_store %arg11[%c0_37, %c0_38, %c0_39, %c0_40], %102 {strides = array<i32>} : memref<1x8x16x128xf32, #tpu.memory_space<vmem>>, vector<1x8x16x128xf32>,
    return
  }
  func.func @transform_0(%arg0: i32, %arg1: i32, %arg2: i32, %arg3: i32) -> (i32, i32, i32, i32) {
    %c0_i32 = arith.constant 0 : i32
    %c0_i32_0 = arith.constant 0 : i32
    return %arg0, %arg1, %c0_i32, %arg3 : i32, i32, i32, i32
  }
  func.func @transform_1(%arg0: i32, %arg1: i32, %arg2: i32, %arg3: i32) -> (i32, i32, i32, i32) {
    %c8_i32 = arith.constant 8 : i32
    %0 = arith.muli %arg1, %c8_i32 : i32
    %c1_i32 = arith.constant 1 : i32
    %1 = arith.subi %0, %c1_i32 : i32
    %c0_i32 = arith.constant 0 : i32
    %2 = arith.maxsi %1, %c0_i32 : i32
    %c0_i32_0 = arith.constant 0 : i32
    %c0_i32_1 = arith.constant 0 : i32
    return %arg0, %2, %c0_i32_0, %arg3 : i32, i32, i32, i32
  }
  func.func @transform_2(%arg0: i32, %arg1: i32, %arg2: i32, %arg3: i32) -> (i32, i32, i32, i32) {
    %c1_i32 = arith.constant 1 : i32
    %0 = arith.addi %arg1, %c1_i32 : i32
    %c8_i32 = arith.constant 8 : i32
    %1 = arith.muli %0, %c8_i32 : i32
    %c15_i32 = arith.constant 15 : i32
    %2 = arith.minsi %1, %c15_i32 : i32
    %c0_i32 = arith.constant 0 : i32
    %c0_i32_0 = arith.constant 0 : i32
    return %arg0, %2, %c0_i32, %arg3 : i32, i32, i32, i32
  }
  func.func @transform_3(%arg0: i32, %arg1: i32, %arg2: i32, %arg3: i32) -> (i32, i32, i32, i32, i32) {
    %c0_i32 = arith.constant 0 : i32
    %c0_i32_0 = arith.constant 0 : i32
    %c0_i32_1 = arith.constant 0 : i32
    %c0_i32_2 = arith.constant 0 : i32
    %c0_i32_3 = arith.constant 0 : i32
    %c0_i32_4 = arith.constant 0 : i32
    return %c0_i32, %c0_i32_0, %c0_i32_1, %c0_i32_2, %c0_i32_3 : i32, i32, i32, i32, i32
  }
  func.func @transform_4(%arg0: i32, %arg1: i32, %arg2: i32, %arg3: i32) -> (i32, i32) {
    %c0_i32 = arith.constant 0 : i32
    %c0_i32_0 = arith.constant 0 : i32
    return %c0_i32, %arg2 : i32, i32
  }
  func.func @transform_5(%arg0: i32, %arg1: i32, %arg2: i32, %arg3: i32) -> (i32, i32, i32, i32) {
    %c0_i32 = arith.constant 0 : i32
    %c0_i32_0 = arith.constant 0 : i32
    %c0_i32_1 = arith.constant 0 : i32
    return %arg0, %arg1, %c0_i32, %c0_i32_0 : i32, i32, i32, i32
  }
  func.func @transform_6(%arg0: i32, %arg1: i32, %arg2: i32, %arg3: i32) -> (i32, i32) {
    %c0_i32 = arith.constant 0 : i32
    %c0_i32_0 = arith.constant 0 : i32
    return %c0_i32, %arg2 : i32, i32
  }
  func.func @transform_7(%arg0: i32, %arg1: i32, %arg2: i32, %arg3: i32) -> (i32, i32, i32, i32) {
    %c0_i32 = arith.constant 0 : i32
    %c0_i32_0 = arith.constant 0 : i32
    return %arg0, %arg1, %c0_i32, %arg2 : i32, i32, i32, i32
  }
}

</mosaic_0001>

<llo_original>
// kernel: spade_resblock_forward.16
$region0: #{spade_resblock_forward.16}
  #allocation0 [shape = 'u32[]', space=smem, size = 0x4, offset = 0x4, fixed_abs, tag = 'smem constant byte address 0x4 - core index']
  #allocation1 [shape = 'u32[144,128]{1,0:T(1,128)}', space=vmem, size = 0x12000, scoped, tag = 'internal scratch']
  %s0 = inlined_call_operand.vmem [shape: bf16[2,16,16,128], index: 0, kind: input, shape index: {}]
  %s1 = inlined_call_operand.vmem [shape: f32[2,2,128], index: 1, kind: output, shape index: {}]
  %s2 = sld [smem:[#allocation0]]
  $region41: #{spade_resblock_forward.16} parent=0
    _
  %s4 = ssub.s32 1, %s2
  %s5 = scalar_select 0, %s4, %s2
  loop: start=0, step=1, limit=6
  $region2: #{spade_resblock_forward.16} parent=0 // loop_pre_header
    _
  $region3: #{spade_resblock_forward.16} parent=0 // loop_header
    %s7 = sphi 0, %s11
    %p8 = scmp.ge.s32.totalorder %s7, 6
    %s14 = sphi 0, %s33
    %s15 = sphi 0, %s29
    %s16 = sphi 0, %s25
    %s17 = sphi 0, %s14
    %s18 = sphi 0, %s15
    %s19 = sphi 0, %s16
    %s20 = sphi 0, %s17
    %s21 = sphi 0, %s18
    %s22 = sphi 0, %s19
    %s40 = sphi 0, %s42
    %s43 = sphi 0, %s40
    %s44 = sphi 0, %s43
    %s60 = sphi 0, %s44
    %s68 = sphi 0, %s70
    %s71 = sphi 0, %s68
    %s72 = sphi 0, %s71
    %s88 = sphi 0, %s72
  $region4: #{spade_resblock_forward.16} parent=0 // loop_header_branch
    %10 = sbr.rel (%p8) target = $region8
  $region5: #{spade_resblock_forward.16} parent=0 // loop_body
    %s12 = ssub.s32 %s7, 1
    %s13 = ssub.s32 %s7, 2
    %s23 = sadd.s32 1, %s16
    %p24 = scmp.ge.s32.totalorder %s23, 2
    %s25 = scalar_select %p24, 0, %s23
    %s26 = sadd.s32 1, %s15
    %s27 = scalar_select %p24, %s26, %s15
    %p28 = scmp.ge.s32.totalorder %s27, 1
    %s29 = scalar_select %p28, 0, %s27
    %s30 = sadd.s32 1, %s14
    %s31 = scalar_select %p28, %s30, %s14
    %p32 = scmp.ge.s32.totalorder %s31, 2
    %s33 = scalar_select %p32, 0, %s31
    %s34 = ssub.s32 %s14, %s33
    %s35 = ssub.s32 %s16, %s25
    %s36 = sor.u32 %s34, %s35
    %s37 = ssub.s32 %s15, %s29
    %s38 = sor.u32 %s36, %s37
    %p39 = scmp.eq.s32.totalorder %s38, 0
    %s41 = sadd.s32 %s40, 1
    %s42 = scalar_select %p39, %s40, %s41
    %p45 = pneg %p39
    %p46 = scmp.eq.s32.totalorder %s7, 3
    %p47 = por %p45, %p46
    %p48 = scmp.ne.s32.totalorder %s40, %s43
    %p49 = scmp.eq.s32.totalorder %s7, 0
    %p50 = por %p48, %p49
    %p51 = scmp.ne.s32.totalorder %s40, %s43
    %p52 = scmp.eq.s32.totalorder %s12, 3
    %p53 = por %p51, %p52
    %p54 = scmp.ne.s32.totalorder %s43, %s44
    %p55 = scmp.eq.s32.totalorder %s12, 0
    %p56 = por %p54, %p55
    %p57 = scmp.ne.s32.totalorder %s43, %s44
    %p58 = scmp.eq.s32.totalorder %s13, 3
    %p59 = por %p57, %p58
    %p61 = scmp.ne.s32.totalorder %s44, %s60
    %p62 = scmp.eq.s32.totalorder %s13, 0
    %p63 = por %p61, %p62
    %s64 = ssub.s32 %s14, %s33
    %s65 = ssub.s32 %s15, %s29
    %s66 = sor.u32 %s64, %s65
    %p67 = scmp.eq.s32.totalorder %s66, 0
    %s69 = sadd.s32 %s68, 1
    %s70 = scalar_select %p67, %s68, %s69
    %p73 = pneg %p67
    %p74 = scmp.eq.s32.totalorder %s7, 3
    %p75 = por %p73, %p74
    %p76 = scmp.ne.s32.totalorder %s68, %s71
    %p77 = scmp.eq.s32.totalorder %s7, 0
    %p78 = por %p76, %p77
    %p79 = scmp.ne.s32.totalorder %s68, %s71
    %p80 = scmp.eq.s32.totalorder %s12, 3
    %p81 = por %p79, %p80
    %p82 = scmp.ne.s32.totalorder %s71, %s72
    %p83 = scmp.eq.s32.totalorder %s12, 0
    %p84 = por %p82, %p83
    %p85 = scmp.ne.s32.totalorder %s71, %s72
    %p86 = scmp.eq.s32.totalorder %s13, 3
    %p87 = por %p85, %p86
    %p89 = scmp.ne.s32.totalorder %s72, %s88
    %p90 = scmp.eq.s32.totalorder %s13, 0
    %p91 = por %p89, %p90
    %p92 = scmp.le.s32.totalorder 1, %s7
    %p93 = scmp.lt.s32.totalorder %s7, 5
    %p94 = pnand %p92, %p93
    %p95 = pneg %p94
    // Predicated region
    $region9: #{spade_resblock_forward.16} parent=5 // pred_check
      _
    $region10: #{spade_resblock_forward.16} parent=5 // pred_check_branch
      %97 = sbr.rel (%p94) target = $region12
    $region11: #{spade_resblock_forward.16} parent=5 // pred_region
      %s98 = ssub.s32 %s7, 1
    $region12: #{spade_resblock_forward.16} parent=5 // pred_fallthru
      _
    %p99 = scmp.lt.s32.totalorder %s7, 4
    // Predicated region
    $region13: #{spade_resblock_forward.16} parent=5 // pred_check
      %p100 = pneg %p99
    $region14: #{spade_resblock_forward.16} parent=5 // pred_check_branch
      %102 = sbr.rel (%p100) target = $region16
    $region15: #{spade_resblock_forward.16} parent=5 // pred_region
      // Predicated region
      $region17: #{spade_resblock_forward.16} parent=15 // pred_check
        %p103 = pneg %p50
      $region18: #{spade_resblock_forward.16} parent=15 // pred_check_branch
        %105 = sbr.rel (%p103) target = $region20
      $region19: #{spade_resblock_forward.16} parent=15 // pred_region
        %s106 = smul.u32 8, %s16
        %p107 = scmp.lt.s32.totalorder %s14, 1
        %s108 = scalar_select %p107, %s14, 1
        %p109 = scmp.lt.s32.totalorder %s106, 15
        %s110 = scalar_select %p109, %s106, 15
        %p111 = scmp.lt.s32.totalorder %s15, 0
        %s112 = scalar_select %p111, %s15, 0
        %s113 = smul.addr %s110, 2
        %s114 = sadd.s32 %s112, %s113
        %s115 = smul.addr %s108, 32
        %s116 = sadd.s32 %s114, %s115
        %s117 = smul.addr %s116, 4
        %s118 = scalar_lea.vmem %s0, %s117
        %s119 = smul.u32 8, %s16
      $region20: #{spade_resblock_forward.16} parent=15 // pred_fallthru
        _
    $region16: #{spade_resblock_forward.16} parent=5 // pred_fallthru
      _
    %p120 = scmp.le.s32.totalorder 1, %s7
    %p121 = scmp.lt.s32.totalorder %s7, 5
    %p122 = pnand %p120, %p121
    %p123 = pneg %p122
    // Predicated region
    $region21: #{spade_resblock_forward.16} parent=5 // pred_check
      _
    $region22: #{spade_resblock_forward.16} parent=5 // pred_check_branch
      %125 = sbr.rel (%p122) target = $region24
    $region23: #{spade_resblock_forward.16} parent=5 // pred_region
      %s126 = ssub.s32 %s7, 1
      %s127 = smul.u32 8, %s19
      %p128 = scmp.lt.s32.totalorder %s17, 1
      %s129 = scalar_select %p128, %s17, 1
      %p130 = scmp.lt.s32.totalorder %s127, 15
      %s131 = scalar_select %p130, %s127, 15
      %p132 = scmp.lt.s32.totalorder %s18, 0
      %s133 = scalar_select %p132, %s18, 0
      %s134 = smul.addr %s131, 2
      %s135 = sadd.s32 %s133, %s134
      %s136 = smul.addr %s129, 32
      %s137 = sadd.s32 %s135, %s136
      %s138 = smul.addr %s137, 4
      %s139 = scalar_lea.vmem %s0, %s138
      %p140 = pneg %p56
      %p141 = pneg %p53
      %p142 = pneg %p84
      %p143 = pneg %p81
      %p144 = scmp.lt.s32.totalorder %s17, 1
      %s145 = scalar_select %p144, %s17, 1
      %p146 = scmp.lt.s32.totalorder %s18, 0
      %s147 = scalar_select %p146, %s18, 0
      %s148 = sadd.s32 %s147, %s145
      %s149 = smul.addr %s148, 2
      %s150 = scalar_lea.vmem %s1, %s149
      %s151 = smul.u32 8, %s19
      %p152 = scmp.lt.s32.totalorder %s17, 1
      %s153 = scalar_select %p152, %s17, 1
      %p154 = scmp.lt.s32.totalorder %s151, 15
      %s155 = scalar_select %p154, %s151, 15
      %p156 = scmp.lt.s32.totalorder %s18, 0
      %s157 = scalar_select %p156, %s18, 0
      %s158 = smul.addr %s155, 2
      %s159 = sadd.s32 %s157, %s158
      %s160 = smul.addr %s153, 32
      %s161 = sadd.s32 %s159, %s160
      %s162 = smul.addr %s161, 4
      %s163 = scalar_lea.vmem %s0, %s162
      %s164 = smul.u32 8, %s19
      %p165 = scmp.lt.s32.totalorder %s17, 1
      %s166 = scalar_select %p165, %s17, 1
      %p167 = scmp.lt.s32.totalorder %s18, 0
      %s168 = scalar_select %p167, %s18, 0
      %s169 = sadd.s32 %s168, %s166
      %s170 = smul.addr %s169, 2
      %s171 = scalar_lea.vmem %s1, %s170
      %v172 = vld [vmem:[%s163] sm:$0xf]
      %v173 = vld [vmem:[%s163 + $0x4] sm:$0xf]
      %v174 = vld [vmem:[%s163 + $0x8] sm:$0xf]
      %v175 = vld [vmem:[%s163 + $0xc] sm:$0xf]
      %v176 = vld [vmem:[%s163 + $0x10] sm:$0xf]
      %v177 = vld [vmem:[%s163 + $0x14] sm:$0xf]
      %v178 = vld [vmem:[%s163 + $0x18] sm:$0xf]
      %v179 = vld [vmem:[%s163 + $0x1c] sm:$0xf]
      %v180 = vld [vmem:[%s163 + $0x20] sm:$0xf]
      %v181 = vld [vmem:[%s163 + $0x24] sm:$0xf]
      %v182 = vld [vmem:[%s163 + $0x28] sm:$0xf]
      %v183 = vld [vmem:[%s163 + $0x2c] sm:$0xf]
      %v184 = vld [vmem:[%s163 + $0x30] sm:$0xf]
      %v185 = vld [vmem:[%s163 + $0x34] sm:$0xf]
      %v186 = vld [vmem:[%s163 + $0x38] sm:$0xf]
      %v187 = vld [vmem:[%s163 + $0x3c] sm:$0xf]
      %v188 = vunpack.c.l.bf16 %v172
      %v189 = vunpack.c.l.bf16 %v173
      %v190 = vunpack.c.l.bf16 %v174
      %v191 = vunpack.c.l.bf16 %v175
      %v192 = vunpack.c.l.bf16 %v176
      %v193 = vunpack.c.l.bf16 %v177
      %v194 = vunpack.c.l.bf16 %v178
      %v195 = vunpack.c.l.bf16 %v179
      %v196 = vunpack.c.l.bf16 %v180
      %v197 = vunpack.c.l.bf16 %v181
      %v198 = vunpack.c.l.bf16 %v182
      %v199 = vunpack.c.l.bf16 %v183
      %v200 = vunpack.c.l.bf16 %v184
      %v201 = vunpack.c.l.bf16 %v185
      %v202 = vunpack.c.l.bf16 %v186
      %v203 = vunpack.c.l.bf16 %v187
      %v204 = vadd.f32 %v188, %v189
      %v205 = vadd.f32 %v204, %v190
      %v206 = vadd.f32 %v205, %v191
      %v207 = vadd.f32 %v206, %v192
      %v208 = vadd.f32 %v207, %v193
      %v209 = vadd.f32 %v208, %v194
      %v210 = vadd.f32 %v209, %v195
      %v211 = vadd.f32 %v210, %v196
      %v212 = vadd.f32 %v211, %v197
      %v213 = vadd.f32 %v212, %v198
      %v214 = vadd.f32 %v213, %v199
      %v215 = vadd.f32 %v214, %v200
      %v216 = vadd.f32 %v215, %v201
      %v217 = vadd.f32 %v216, %v202
      %v218 = vadd.f32 %v217, %v203
      %v219 = vrot.slane %v218, 4
      %v220 = vadd.f32 %v218, %v219
      %v221 = vrot.slane %v220, 2
      %v222 = vadd.f32 %v220, %v221
      %v223 = vrot.slane %v222, 1
      %v224 = vadd.f32 %v222, %v223
      %v225 = vmul.f32 %v188, %v188
      %v226 = vmul.f32 %v189, %v189
      %v227 = vmul.f32 %v190, %v190
      %v228 = vmul.f32 %v191, %v191
      %v229 = vmul.f32 %v192, %v192
      %v230 = vmul.f32 %v193, %v193
      %v231 = vmul.f32 %v194, %v194
      %v232 = vmul.f32 %v195, %v195
      %v233 = vmul.f32 %v196, %v196
      %v234 = vmul.f32 %v197, %v197
      %v235 = vmul.f32 %v198, %v198
      %v236 = vmul.f32 %v199, %v199
      %v237 = vmul.f32 %v200, %v200
      %v238 = vmul.f32 %v201, %v201
      %v239 = vmul.f32 %v202, %v202
      %v240 = vmul.f32 %v203, %v203
      %v241 = vadd.f32 %v225, %v226
      %v242 = vadd.f32 %v241, %v227
      %v243 = vadd.f32 %v242, %v228
      %v244 = vadd.f32 %v243, %v229
      %v245 = vadd.f32 %v244, %v230
      %v246 = vadd.f32 %v245, %v231
      %v247 = vadd.f32 %v246, %v232
      %v248 = vadd.f32 %v247, %v233
      %v249 = vadd.f32 %v248, %v234
      %v250 = vadd.f32 %v249, %v235
      %v251 = vadd.f32 %v250, %v236
      %v252 = vadd.f32 %v251, %v237
      %v253 = vadd.f32 %v252, %v238
      %v254 = vadd.f32 %v253, %v239
      %v255 = vadd.f32 %v254, %v240
      %v256 = vrot.slane %v255, 4
      %v257 = vadd.f32 %v255, %v256
      %v258 = vrot.slane %v257, 2
      %v259 = vadd.f32 %v257, %v258
      %v260 = vrot.slane %v259, 1
      %v261 = vadd.f32 %v259, %v260
      %vm262 = vcmask 1040384
      %v263 = vsel %vm262, %v224, %v261
      %p264 = scmp.eq.s32.totalorder %s19, 0
      // Predicated region
      $region25: #{spade_resblock_forward.16} parent=23 // pred_check
        %p265 = pneg %p264
      $region26: #{spade_resblock_forward.16} parent=23 // pred_check_branch
        %267 = sbr.rel (%p265) target = $region28
      $region27: #{spade_resblock_forward.16} parent=23 // pred_region
        %268 = vst [vmem:[%s171] sm:$0x3] 0.0
      $region28: #{spade_resblock_forward.16} parent=23 // pred_fallthru
        _
      %v269 = vld [vmem:[%s171] sm:$0x3]
      %v270 = vadd.f32 %v269, %v263
      %271 = vst [vmem:[%s171] sm:$0x3] %v270
      %p272 = scmp.lt.s32.totalorder %s17, 1
      %s273 = scalar_select %p272, %s17, 1
      %p274 = scmp.lt.s32.totalorder %s18, 0
      %s275 = scalar_select %p274, %s18, 0
      %s276 = sadd.s32 %s275, %s273
      %s277 = smul.addr %s276, 2
      %s278 = scalar_lea.vmem %s1, %s277
      // Predicated region
      $region29: #{spade_resblock_forward.16} parent=23 // pred_check
        %p279 = pneg %p81
      $region30: #{spade_resblock_forward.16} parent=23 // pred_check_branch
        %281 = sbr.rel (%p279) target = $region32
      $region31: #{spade_resblock_forward.16} parent=23 // pred_region
        _
      $region32: #{spade_resblock_forward.16} parent=23 // pred_fallthru
        _
    $region24: #{spade_resblock_forward.16} parent=5 // pred_fallthru
      _
    %p282 = scmp.le.s32.totalorder 2, %s7
    // Predicated region
    $region33: #{spade_resblock_forward.16} parent=5 // pred_check
      %p283 = pneg %p282
    $region34: #{spade_resblock_forward.16} parent=5 // pred_check_branch
      %285 = sbr.rel (%p283) target = $region36
    $region35: #{spade_resblock_forward.16} parent=5 // pred_region
      %s286 = ssub.s32 %s7, 2
      // Predicated region
      $region37: #{spade_resblock_forward.16} parent=35 // pred_check
        %p287 = pneg %p87
      $region38: #{spade_resblock_forward.16} parent=35 // pred_check_branch
        %289 = sbr.rel (%p287) target = $region40
      $region39: #{spade_resblock_forward.16} parent=35 // pred_region
        %p290 = scmp.lt.s32.totalorder %s20, 1
        %s291 = scalar_select %p290, %s20, 1
        %p292 = scmp.lt.s32.totalorder %s21, 0
        %s293 = scalar_select %p292, %s21, 0
        %s294 = sadd.s32 %s293, %s291
        %s295 = smul.addr %s294, 2
        %s296 = scalar_lea.vmem %s1, %s295
      $region40: #{spade_resblock_forward.16} parent=35 // pred_fallthru
        _
    $region36: #{spade_resblock_forward.16} parent=5 // pred_fallthru
      _
  $region6: #{spade_resblock_forward.16} parent=0 // loop_footer
    %s11 = sadd.s32 1, %s7
  $region7: #{spade_resblock_forward.16} parent=0 // loop_footer_branch
    %6 = sbr.rel target = $region3
  $region8: #{spade_resblock_forward.16} parent=0 // loop_exit
    _

// kernel: spade_resblock_forward.25
$region0: #{spade_resblock_forward.25}
  #allocation0 [shape = 'u32[]', space=smem, size = 0x4, offset = 0x4, fixed_abs, tag = 'smem constant byte address 0x4 - core index']
  #allocation1 [shape = 'u32[144,128]{1,0:T(1,128)}', space=vmem, size = 0x12000, scoped, tag = 'internal scratch']
  %s0 = inlined_call_operand.vmem [shape: bf16[2,16,16,128], index: 0, kind: input, shape index: {}]
  %s1 = inlined_call_operand.vmem [shape: bf16[2,16,16,256], index: 1, kind: input, shape index: {}]
  %s2 = inlined_call_operand.vmem [shape: f32[2,2,128], index: 2, kind: input, shape index: {}]
  %s3 = inlined_call_operand.vmem [shape: bf16[2,16,16,128], index: 3, kind: output, shape index: {}]
  %s4 = sld [smem:[#allocation0]]
  $region45: #{spade_resblock_forward.25} parent=0
    _
  %s6 = ssub.s32 1, %s4
  %s7 = scalar_select 0, %s6, %s4
  loop: start=0, step=1, limit=6
  $region2: #{spade_resblock_forward.25} parent=0 // loop_pre_header
    _
  $region3: #{spade_resblock_forward.25} parent=0 // loop_header
    %s9 = sphi 0, %s13
    %p10 = scmp.ge.s32.totalorder %s9, 6
    %s16 = sphi 0, %s35
    %s17 = sphi 0, %s31
    %s18 = sphi 0, %s27
    %s19 = sphi 0, %s16
    %s20 = sphi 0, %s17
    %s21 = sphi 0, %s18
    %s22 = sphi 0, %s19
    %s23 = sphi 0, %s20
    %s24 = sphi 0, %s21
    %s42 = sphi 0, %s44
    %s45 = sphi 0, %s42
    %s46 = sphi 0, %s45
    %s62 = sphi 0, %s46
    %s72 = sphi 0, %s74
    %s75 = sphi 0, %s72
    %s76 = sphi 0, %s75
    %s92 = sphi 0, %s76
    %s100 = sphi 0, %s102
    %s103 = sphi 0, %s100
    %s104 = sphi 0, %s103
    %s120 = sphi 0, %s104
    %s130 = sphi 0, %s132
    %s133 = sphi 0, %s130
    %s134 = sphi 0, %s133
    %s150 = sphi 0, %s134
  $region4: #{spade_resblock_forward.25} parent=0 // loop_header_branch
    %12 = sbr.rel (%p10) target = $region8
  $region5: #{spade_resblock_forward.25} parent=0 // loop_body
    %s14 = ssub.s32 %s9, 1
    %s15 = ssub.s32 %s9, 2
    %s25 = sadd.s32 1, %s18
    %p26 = scmp.ge.s32.totalorder %s25, 1
    %s27 = scalar_select %p26, 0, %s25
    %s28 = sadd.s32 1, %s17
    %s29 = scalar_select %p26, %s28, %s17
    %p30 = scmp.ge.s32.totalorder %s29, 2
    %s31 = scalar_select %p30, 0, %s29
    %s32 = sadd.s32 1, %s16
    %s33 = scalar_select %p30, %s32, %s16
    %p34 = scmp.ge.s32.totalorder %s33, 2
    %s35 = scalar_select %p34, 0, %s33
    %s36 = ssub.s32 %s16, %s35
    %s37 = ssub.s32 %s17, %s31
    %s38 = sor.u32 %s36, %s37
    %s39 = ssub.s32 %s18, %s27
    %s40 = sor.u32 %s38, %s39
    %p41 = scmp.eq.s32.totalorder %s40, 0
    %s43 = sadd.s32 %s42, 1
    %s44 = scalar_select %p41, %s42, %s43
    %p47 = pneg %p41
    %p48 = scmp.eq.s32.totalorder %s9, 3
    %p49 = por %p47, %p48
    %p50 = scmp.ne.s32.totalorder %s42, %s45
    %p51 = scmp.eq.s32.totalorder %s9, 0
    %p52 = por %p50, %p51
    %p53 = scmp.ne.s32.totalorder %s42, %s45
    %p54 = scmp.eq.s32.totalorder %s14, 3
    %p55 = por %p53, %p54
    %p56 = scmp.ne.s32.totalorder %s45, %s46
    %p57 = scmp.eq.s32.totalorder %s14, 0
    %p58 = por %p56, %p57
    %p59 = scmp.ne.s32.totalorder %s45, %s46
    %p60 = scmp.eq.s32.totalorder %s15, 3
    %p61 = por %p59, %p60
    %p63 = scmp.ne.s32.totalorder %s46, %s62
    %p64 = scmp.eq.s32.totalorder %s15, 0
    %p65 = por %p63, %p64
    %s66 = ssub.s32 %s16, %s35
    %s67 = ssub.s32 %s17, %s31
    %s68 = sor.u32 %s66, %s67
    %s69 = ssub.s32 %s18, %s27
    %s70 = sor.u32 %s68, %s69
    %p71 = scmp.eq.s32.totalorder %s70, 0
    %s73 = sadd.s32 %s72, 1
    %s74 = scalar_select %p71, %s72, %s73
    %p77 = pneg %p71
    %p78 = scmp.eq.s32.totalorder %s9, 3
    %p79 = por %p77, %p78
    %p80 = scmp.ne.s32.totalorder %s72, %s75
    %p81 = scmp.eq.s32.totalorder %s9, 0
    %p82 = por %p80, %p81
    %p83 = scmp.ne.s32.totalorder %s72, %s75
    %p84 = scmp.eq.s32.totalorder %s14, 3
    %p85 = por %p83, %p84
    %p86 = scmp.ne.s32.totalorder %s75, %s76
    %p87 = scmp.eq.s32.totalorder %s14, 0
    %p88 = por %p86, %p87
    %p89 = scmp.ne.s32.totalorder %s75, %s76
    %p90 = scmp.eq.s32.totalorder %s15, 3
    %p91 = por %p89, %p90
    %p93 = scmp.ne.s32.totalorder %s76, %s92
    %p94 = scmp.eq.s32.totalorder %s15, 0
    %p95 = por %p93, %p94
    %s96 = ssub.s32 %s16, %s35
    %s97 = ssub.s32 %s18, %s27
    %s98 = sor.u32 %s96, %s97
    %p99 = scmp.eq.s32.totalorder %s98, 0
    %s101 = sadd.s32 %s100, 1
    %s102 = scalar_select %p99, %s100, %s101
    %p105 = pneg %p99
    %p106 = scmp.eq.s32.totalorder %s9, 3
    %p107 = por %p105, %p106
    %p108 = scmp.ne.s32.totalorder %s100, %s103
    %p109 = scmp.eq.s32.totalorder %s9, 0
    %p110 = por %p108, %p109
    %p111 = scmp.ne.s32.totalorder %s100, %s103
    %p112 = scmp.eq.s32.totalorder %s14, 3
    %p113 = por %p111, %p112
    %p114 = scmp.ne.s32.totalorder %s103, %s104
    %p115 = scmp.eq.s32.totalorder %s14, 0
    %p116 = por %p114, %p115
    %p117 = scmp.ne.s32.totalorder %s103, %s104
    %p118 = scmp.eq.s32.totalorder %s15, 3
    %p119 = por %p117, %p118
    %p121 = scmp.ne.s32.totalorder %s104, %s120
    %p122 = scmp.eq.s32.totalorder %s15, 0
    %p123 = por %p121, %p122
    %s124 = ssub.s32 %s16, %s35
    %s125 = ssub.s32 %s17, %s31
    %s126 = sor.u32 %s124, %s125
    %s127 = ssub.s32 %s18, %s27
    %s128 = sor.u32 %s126, %s127
    %p129 = scmp.eq.s32.totalorder %s128, 0
    %s131 = sadd.s32 %s130, 1
    %s132 = scalar_select %p129, %s130, %s131
    %p135 = pneg %p129
    %p136 = scmp.eq.s32.totalorder %s9, 3
    %p137 = por %p135, %p136
    %p138 = scmp.ne.s32.totalorder %s130, %s133
    %p139 = scmp.eq.s32.totalorder %s9, 0
    %p140 = por %p138, %p139
    %p141 = scmp.ne.s32.totalorder %s130, %s133
    %p142 = scmp.eq.s32.totalorder %s14, 3
    %p143 = por %p141, %p142
    %p144 = scmp.ne.s32.totalorder %s133, %s134
    %p145 = scmp.eq.s32.totalorder %s14, 0
    %p146 = por %p144, %p145
    %p147 = scmp.ne.s32.totalorder %s133, %s134
    %p148 = scmp.eq.s32.totalorder %s15, 3
    %p149 = por %p147, %p148
    %p151 = scmp.ne.s32.totalorder %s134, %s150
    %p152 = scmp.eq.s32.totalorder %s15, 0
    %p153 = por %p151, %p152
    %p154 = scmp.le.s32.totalorder 1, %s9
    %p155 = scmp.lt.s32.totalorder %s9, 5
    %p156 = pnand %p154, %p155
    %p157 = pneg %p156
    // Predicated region
    $region9: #{spade_resblock_forward.25} parent=5 // pred_check
      _
    $region10: #{spade_resblock_forward.25} parent=5 // pred_check_branch
      %159 = sbr.rel (%p156) target = $region12
    $region11: #{spade_resblock_forward.25} parent=5 // pred_region
      %s160 = ssub.s32 %s9, 1
    $region12: #{spade_resblock_forward.25} parent=5 // pred_fallthru
      _
    %p161 = scmp.lt.s32.totalorder %s9, 4
    // Predicated region
    $region13: #{spade_resblock_forward.25} parent=5 // pred_check
      %p162 = pneg %p161
    $region14: #{spade_resblock_forward.25} parent=5 // pred_check_branch
      %164 = sbr.rel (%p162) target = $region16
    $region15: #{spade_resblock_forward.25} parent=5 // pred_region
      // Predicated region
      $region17: #{spade_resblock_forward.25} parent=15 // pred_check
        %p165 = pneg %p52
      $region18: #{spade_resblock_forward.25} parent=15 // pred_check_branch
        %167 = sbr.rel (%p165) target = $region20
      $region19: #{spade_resblock_forward.25} parent=15 // pred_region
        %s168 = smul.u32 8, %s17
        %p169 = scmp.lt.s32.totalorder %s16, 1
        %s170 = scalar_select %p169, %s16, 1
        %p171 = scmp.lt.s32.totalorder %s168, 15
        %s172 = scalar_select %p171, %s168, 15
        %p173 = scmp.lt.s32.totalorder %s18, 0
        %s174 = scalar_select %p173, %s18, 0
        %s175 = smul.addr %s172, 2
        %s176 = sadd.s32 %s174, %s175
        %s177 = smul.addr %s170, 32
        %s178 = sadd.s32 %s176, %s177
        %s179 = smul.addr %s178, 4
        %s180 = scalar_lea.vmem %s0, %s179
        %s181 = smul.u32 8, %s17
      $region20: #{spade_resblock_forward.25} parent=15 // pred_fallthru
        _
      // Predicated region
      $region21: #{spade_resblock_forward.25} parent=15 // pred_check
        %p182 = pneg %p82
      $region22: #{spade_resblock_forward.25} parent=15 // pred_check_branch
        %184 = sbr.rel (%p182) target = $region24
      $region23: #{spade_resblock_forward.25} parent=15 // pred_region
        %s185 = smul.u32 8, %s17
        %s186 = smul.u32 2, %s18
        %p187 = scmp.lt.s32.totalorder %s16, 1
        %s188 = scalar_select %p187, %s16, 1
        %p189 = scmp.lt.s32.totalorder %s185, 15
        %s190 = scalar_select %p189, %s185, 15
        %p191 = scmp.lt.s32.totalorder %s186, 1
        %s192 = scalar_select %p191, %s186, 1
        %s193 = smul.addr %s190, 4
        %s194 = sadd.s32 %s192, %s193
        %s195 = smul.addr %s188, 64
        %s196 = sadd.s32 %s194, %s195
        %s197 = smul.addr %s196, 4
        %s198 = scalar_lea.vmem %s1, %s197
        %s199 = smul.u32 8, %s17
        %s200 = smul.u32 2, %s18
      $region24: #{spade_resblock_forward.25} parent=15 // pred_fallthru
        _
      // Predicated region
      $region25: #{spade_resblock_forward.25} parent=15 // pred_check
        %p201 = pneg %p110
      $region26: #{spade_resblock_forward.25} parent=15 // pred_check_branch
        %203 = sbr.rel (%p201) target = $region28
      $region27: #{spade_resblock_forward.25} parent=15 // pred_region
        %p204 = scmp.lt.s32.totalorder %s16, 1
        %s205 = scalar_select %p204, %s16, 1
        %p206 = scmp.lt.s32.totalorder %s18, 0
        %s207 = scalar_select %p206, %s18, 0
        %s208 = sadd.s32 %s207, %s205
        %s209 = smul.addr %s208, 2
        %s210 = scalar_lea.vmem %s2, %s209
      $region28: #{spade_resblock_forward.25} parent=15 // pred_fallthru
        _
    $region16: #{spade_resblock_forward.25} parent=5 // pred_fallthru
      _
    %p211 = scmp.le.s32.totalorder 1, %s9
    %p212 = scmp.lt.s32.totalorder %s9, 5
    %p213 = pnand %p211, %p212
    %p214 = pneg %p213
    // Predicated region
    $region29: #{spade_resblock_forward.25} parent=5 // pred_check
      _
    $region30: #{spade_resblock_forward.25} parent=5 // pred_check_branch
      %216 = sbr.rel (%p213) target = $region32
    $region31: #{spade_resblock_forward.25} parent=5 // pred_region
      %s217 = ssub.s32 %s9, 1
      %s218 = smul.u32 8, %s20
      %p219 = scmp.lt.s32.totalorder %s19, 1
      %s220 = scalar_select %p219, %s19, 1
      %p221 = scmp.lt.s32.totalorder %s218, 15
      %s222 = scalar_select %p221, %s218, 15
      %p223 = scmp.lt.s32.totalorder %s21, 0
      %s224 = scalar_select %p223, %s21, 0
      %s225 = smul.addr %s222, 2
      %s226 = sadd.s32 %s224, %s225
      %s227 = smul.addr %s220, 32
      %s228 = sadd.s32 %s226, %s227
      %s229 = smul.addr %s228, 4
      %s230 = scalar_lea.vmem %s0, %s229
      %p231 = pneg %p58
      %p232 = pneg %p55
      %s233 = smul.u32 8, %s20
      %s234 = smul.u32 2, %s21
      %p235 = scmp.lt.s32.totalorder %s19, 1
      %s236 = scalar_select %p235, %s19, 1
      %p237 = scmp.lt.s32.totalorder %s233, 15
      %s238 = scalar_select %p237, %s233, 15
      %p239 = scmp.lt.s32.totalorder %s234, 1
      %s240 = scalar_select %p239, %s234, 1
      %s241 = smul.addr %s238, 4
      %s242 = sadd.s32 %s240, %s241
      %s243 = smul.addr %s236, 64
      %s244 = sadd.s32 %s242, %s243
      %s245 = smul.addr %s244, 4
      %s246 = scalar_lea.vmem %s1, %s245
      %p247 = pneg %p88
      %p248 = pneg %p85
      %p249 = scmp.lt.s32.totalorder %s19, 1
      %s250 = scalar_select %p249, %s19, 1
      %p251 = scmp.lt.s32.totalorder %s21, 0
      %s252 = scalar_select %p251, %s21, 0
      %s253 = sadd.s32 %s252, %s250
      %s254 = smul.addr %s253, 2
      %s255 = scalar_lea.vmem %s2, %s254
      %p256 = pneg %p116
      %p257 = pneg %p113
      %p258 = pneg %p146
      %p259 = pneg %p143
      %s260 = smul.u32 8, %s20
      %p261 = scmp.lt.s32.totalorder %s19, 1
      %s262 = scalar_select %p261, %s19, 1
      %p263 = scmp.lt.s32.totalorder %s260, 15
      %s264 = scalar_select %p263, %s260, 15
      %p265 = scmp.lt.s32.totalorder %s21, 0
      %s266 = scalar_select %p265, %s21, 0
      %s267 = smul.addr %s264, 2
      %s268 = sadd.s32 %s266, %s267
      %s269 = smul.addr %s262, 32
      %s270 = sadd.s32 %s268, %s269
      %s271 = smul.addr %s270, 4
      %s272 = scalar_lea.vmem %s3, %s271
      %s273 = smul.u32 8, %s20
      %p274 = scmp.lt.s32.totalorder %s19, 1
      %s275 = scalar_select %p274, %s19, 1
      %p276 = scmp.lt.s32.totalorder %s273, 15
      %s277 = scalar_select %p276, %s273, 15
      %p278 = scmp.lt.s32.totalorder %s21, 0
      %s279 = scalar_select %p278, %s21, 0
      %s280 = smul.addr %s277, 2
      %s281 = sadd.s32 %s279, %s280
      %s282 = smul.addr %s275, 32
      %s283 = sadd.s32 %s281, %s282
      %s284 = smul.addr %s283, 4
      %s285 = scalar_lea.vmem %s0, %s284
      %s286 = smul.u32 8, %s20
      %s287 = smul.u32 8, %s20
      %s288 = smul.u32 2, %s21
      %p289 = scmp.lt.s32.totalorder %s19, 1
      %s290 = scalar_select %p289, %s19, 1
      %p291 = scmp.lt.s32.totalorder %s287, 15
      %s292 = scalar_select %p291, %s287, 15
      %p293 = scmp.lt.s32.totalorder %s288, 1
      %s294 = scalar_select %p293, %s288, 1
      %s295 = smul.addr %s292, 4
      %s296 = sadd.s32 %s294, %s295
      %s297 = smul.addr %s290, 64
      %s298 = sadd.s32 %s296, %s297
      %s299 = smul.addr %s298, 4
      %s300 = scalar_lea.vmem %s1, %s299
      %s301 = smul.u32 8, %s20
      %s302 = smul.u32 2, %s21
      %p303 = scmp.lt.s32.totalorder %s19, 1
      %s304 = scalar_select %p303, %s19, 1
      %p305 = scmp.lt.s32.totalorder %s21, 0
      %s306 = scalar_select %p305, %s21, 0
      %s307 = sadd.s32 %s306, %s304
      %s308 = smul.addr %s307, 2
      %s309 = scalar_lea.vmem %s2, %s308
      %s310 = smul.u32 8, %s20
      %p311 = scmp.lt.s32.totalorder %s19, 1
      %s312 = scalar_select %p311, %s19, 1
      %p313 = scmp.lt.s32.totalorder %s310, 15
      %s314 = scalar_select %p313, %s310, 15
      %p315 = scmp.lt.s32.totalorder %s21, 0
      %s316 = scalar_select %p315, %s21, 0
      %s317 = smul.addr %s314, 2
      %s318 = sadd.s32 %s316, %s317
      %s319 = smul.addr %s312, 32
      %s320 = sadd.s32 %s318, %s319
      %s321 = smul.addr %s320, 4
      %s322 = scalar_lea.vmem %s3, %s321
      %s323 = smul.u32 8, %s20
      %v324 = vld [vmem:[%s285] sm:$0xf]
      %v325 = vld [vmem:[%s285 + $0x4] sm:$0xf]
      %v326 = vld [vmem:[%s285 + $0x8] sm:$0xf]
      %v327 = vld [vmem:[%s285 + $0xc] sm:$0xf]
      %v328 = vld [vmem:[%s285 + $0x10] sm:$0xf]
      %v329 = vld [vmem:[%s285 + $0x14] sm:$0xf]
      %v330 = vld [vmem:[%s285 + $0x18] sm:$0xf]
      %v331 = vld [vmem:[%s285 + $0x1c] sm:$0xf]
      %v332 = vld [vmem:[%s285 + $0x20] sm:$0xf]
      %v333 = vld [vmem:[%s285 + $0x24] sm:$0xf]
      %v334 = vld [vmem:[%s285 + $0x28] sm:$0xf]
      %v335 = vld [vmem:[%s285 + $0x2c] sm:$0xf]
      %v336 = vld [vmem:[%s285 + $0x30] sm:$0xf]
      %v337 = vld [vmem:[%s285 + $0x34] sm:$0xf]
      %v338 = vld [vmem:[%s285 + $0x38] sm:$0xf]
      %v339 = vld [vmem:[%s285 + $0x3c] sm:$0xf]
      %v340 = vunpack.c.l.bf16 %v324
      %v341 = vunpack.c.l.bf16 %v325
      %v342 = vunpack.c.l.bf16 %v326
      %v343 = vunpack.c.l.bf16 %v327
      %v344 = vunpack.c.l.bf16 %v328
      %v345 = vunpack.c.l.bf16 %v329
      %v346 = vunpack.c.l.bf16 %v330
      %v347 = vunpack.c.l.bf16 %v331
      %v348 = vunpack.c.l.bf16 %v332
      %v349 = vunpack.c.l.bf16 %v333
      %v350 = vunpack.c.l.bf16 %v334
      %v351 = vunpack.c.l.bf16 %v335
      %v352 = vunpack.c.l.bf16 %v336
      %v353 = vunpack.c.l.bf16 %v337
      %v354 = vunpack.c.l.bf16 %v338
      %v355 = vunpack.c.l.bf16 %v339
      %v356 = vld [vmem:[%s309] sm:$0x3]
      %v357 = vmul.f32 %v356, 0.00390625
      %v358 = vmul.f32 %v357, %v357
      %v360 = vrot.slane %v358, 7
      %v362 = vsub.f32 %v357, %v360
      %v363 = vmax.f32 %v362, 0.0
      %v364 = vadd.f32 %v363, 1e-05
      %v365 = vrsqrt.pop %v364
      %v366 = vld [vmem:[%s300] sm:$0xff]
      %v367 = vld [vmem:[%s300 + $0x8] sm:$0xff]
      %v368 = vld [vmem:[%s300 + $0x10] sm:$0xff]
      %v369 = vld [vmem:[%s300 + $0x18] sm:$0xff]
      %v370 = vld [vmem:[%s300 + $0x20] sm:$0xff]
      %v371 = vld [vmem:[%s300 + $0x28] sm:$0xff]
      %v372 = vld [vmem:[%s300 + $0x30] sm:$0xff]
      %v373 = vld [vmem:[%s300 + $0x38] sm:$0xff]
      %v374 = vld [vmem:[%s300 + $0x40] sm:$0xff]
      %v375 = vld [vmem:[%s300 + $0x48] sm:$0xff]
      %v376 = vld [vmem:[%s300 + $0x50] sm:$0xff]
      %v377 = vld [vmem:[%s300 + $0x58] sm:$0xff]
      %v378 = vld [vmem:[%s300 + $0x60] sm:$0xff]
      %v379 = vld [vmem:[%s300 + $0x68] sm:$0xff]
      %v380 = vld [vmem:[%s300 + $0x70] sm:$0xff]
      %v381 = vld [vmem:[%s300 + $0x78] sm:$0xff]
      %v382 = vunpack.c.l.bf16 %v366
      %v383 = vunpack.c.h.bf16 %v366
      %v384 = vunpack.c.l.bf16 %v367
      %v385 = vunpack.c.h.bf16 %v367
      %v386 = vunpack.c.l.bf16 %v368
      %v387 = vunpack.c.h.bf16 %v368
      %v388 = vunpack.c.l.bf16 %v369
      %v389 = vunpack.c.h.bf16 %v369
      %v390 = vunpack.c.l.bf16 %v370
      %v391 = vunpack.c.h.bf16 %v370
      %v392 = vunpack.c.l.bf16 %v371
      %v393 = vunpack.c.h.bf16 %v371
      %v394 = vunpack.c.l.bf16 %v372
      %v395 = vunpack.c.h.bf16 %v372
      %v396 = vunpack.c.l.bf16 %v373
      %v397 = vunpack.c.h.bf16 %v373
      %v398 = vunpack.c.l.bf16 %v374
      %v399 = vunpack.c.h.bf16 %v374
      %v400 = vunpack.c.l.bf16 %v375
      %v401 = vunpack.c.h.bf16 %v375
      %v402 = vunpack.c.l.bf16 %v376
      %v403 = vunpack.c.h.bf16 %v376
      %v404 = vunpack.c.l.bf16 %v377
      %v405 = vunpack.c.h.bf16 %v377
      %v406 = vunpack.c.l.bf16 %v378
      %v407 = vunpack.c.h.bf16 %v378
      %v408 = vunpack.c.l.bf16 %v379
      %v409 = vunpack.c.h.bf16 %v379
      %v410 = vunpack.c.l.bf16 %v380
      %v411 = vunpack.c.h.bf16 %v380
      %v412 = vunpack.c.l.bf16 %v381
      %v413 = vunpack.c.h.bf16 %v381
      %v414 = vlaneseq
      %v415 = vshrl.u32 %v414, 7
      %v416 = vsub.s32 0, %v415
      %v417 = vrot.slane %v357, %v416
      %v418 = vsub.f32 %v340, %v417
      %v419 = vsub.f32 %v341, %v417
      %v420 = vsub.f32 %v342, %v417
      %v421 = vsub.f32 %v343, %v417
      %v422 = vsub.f32 %v344, %v417
      %v423 = vsub.f32 %v345, %v417
      %v424 = vsub.f32 %v346, %v417
      %v425 = vsub.f32 %v347, %v417
      %v426 = vsub.f32 %v348, %v417
      %v427 = vsub.f32 %v349, %v417
      %v428 = vsub.f32 %v350, %v417
      %v429 = vsub.f32 %v351, %v417
      %v430 = vsub.f32 %v352, %v417
      %v431 = vsub.f32 %v353, %v417
      %v432 = vsub.f32 %v354, %v417
      %v433 = vsub.f32 %v355, %v417
      %v434 = vlaneseq
      %v435 = vshrl.u32 %v434, 7
      %v436 = vsub.s32 1, %v435
      %v437 = vrot.slane %v365, %v436
      %v438 = vmul.f32 %v418, %v437
      %v439 = vmul.f32 %v419, %v437
      %v440 = vmul.f32 %v420, %v437
      %v441 = vmul.f32 %v421, %v437
      %v442 = vmul.f32 %v422, %v437
      %v443 = vmul.f32 %v423, %v437
      %v444 = vmul.f32 %v424, %v437
      %v445 = vmul.f32 %v425, %v437
      %v446 = vmul.f32 %v426, %v437
      %v447 = vmul.f32 %v427, %v437
      %v448 = vmul.f32 %v428, %v437
      %v449 = vmul.f32 %v429, %v437
      %v450 = vmul.f32 %v430, %v437
      %v451 = vmul.f32 %v431, %v437
      %v452 = vmul.f32 %v432, %v437
      %v453 = vmul.f32 %v433, %v437
      %v454 = vadd.f32 %v382, 1.0
      %v455 = vadd.f32 %v384, 1.0
      %v456 = vadd.f32 %v386, 1.0
      %v457 = vadd.f32 %v388, 1.0
      %v458 = vadd.f32 %v390, 1.0
      %v459 = vadd.f32 %v392, 1.0
      %v460 = vadd.f32 %v394, 1.0
      %v461 = vadd.f32 %v396, 1.0
      %v462 = vadd.f32 %v398, 1.0
      %v463 = vadd.f32 %v400, 1.0
      %v464 = vadd.f32 %v402, 1.0
      %v465 = vadd.f32 %v404, 1.0
      %v466 = vadd.f32 %v406, 1.0
      %v467 = vadd.f32 %v408, 1.0
      %v468 = vadd.f32 %v410, 1.0
      %v469 = vadd.f32 %v412, 1.0
      %v470 = vmul.f32 %v438, %v454
      %v471 = vmul.f32 %v439, %v455
      %v472 = vmul.f32 %v440, %v456
      %v473 = vmul.f32 %v441, %v457
      %v474 = vmul.f32 %v442, %v458
      %v475 = vmul.f32 %v443, %v459
      %v476 = vmul.f32 %v444, %v460
      %v477 = vmul.f32 %v445, %v461
      %v478 = vmul.f32 %v446, %v462
      %v479 = vmul.f32 %v447, %v463
      %v480 = vmul.f32 %v448, %v464
      %v481 = vmul.f32 %v449, %v465
      %v482 = vmul.f32 %v450, %v466
      %v483 = vmul.f32 %v451, %v467
      %v484 = vmul.f32 %v452, %v468
      %v485 = vmul.f32 %v453, %v469
      %v486 = vadd.f32 %v470, %v383
      %v487 = vadd.f32 %v471, %v385
      %v488 = vadd.f32 %v472, %v387
      %v489 = vadd.f32 %v473, %v389
      %v490 = vadd.f32 %v474, %v391
      %v491 = vadd.f32 %v475, %v393
      %v492 = vadd.f32 %v476, %v395
      %v493 = vadd.f32 %v477, %v397
      %v494 = vadd.f32 %v478, %v399
      %v495 = vadd.f32 %v479, %v401
      %v496 = vadd.f32 %v480, %v403
      %v497 = vadd.f32 %v481, %v405
      %v498 = vadd.f32 %v482, %v407
      %v499 = vadd.f32 %v483, %v409
      %v500 = vadd.f32 %v484, %v411
      %v501 = vadd.f32 %v485, %v413
      %v502 = vpack.c.bf16 %v487, %v486
      %v503 = vpack.c.bf16 %v489, %v488
      %v504 = vpack.c.bf16 %v491, %v490
      %v505 = vpack.c.bf16 %v493, %v492
      %v506 = vpack.c.bf16 %v495, %v494
      %v507 = vpack.c.bf16 %v497, %v496
      %v508 = vpack.c.bf16 %v499, %v498
      %v509 = vpack.c.bf16 %v501, %v500
      %v518 = vunpack.c.l.b16 %v502
      %v519 = vunpack.c.h.b16 %v502
      %v520 = vunpack.c.l.b16 %v503
      %v521 = vunpack.c.h.b16 %v503
      %v522 = vunpack.c.l.b16 %v504
      %v523 = vunpack.c.h.b16 %v504
      %v524 = vunpack.c.l.b16 %v505
      %v525 = vunpack.c.h.b16 %v505
      %v526 = vunpack.c.l.b16 %v506
      %v527 = vunpack.c.h.b16 %v506
      %v528 = vunpack.c.l.b16 %v507
      %v529 = vunpack.c.h.b16 %v507
      %v530 = vunpack.c.l.b16 %v508
      %v531 = vunpack.c.h.b16 %v508
      %v532 = vunpack.c.l.b16 %v509
      %v533 = vunpack.c.h.b16 %v509
      %v534 = vpack.c.b16 %v518, %v518
      %v535 = vpack.c.b16 %v519, %v519
      %v536 = vpack.c.b16 %v520, %v520
      %v537 = vpack.c.b16 %v521, %v521
      %v538 = vpack.c.b16 %v522, %v522
      %v539 = vpack.c.b16 %v523, %v523
      %v540 = vpack.c.b16 %v524, %v524
      %v541 = vpack.c.b16 %v525, %v525
      %v542 = vpack.c.b16 %v526, %v526
      %v543 = vpack.c.b16 %v527, %v527
      %v544 = vpack.c.b16 %v528, %v528
      %v545 = vpack.c.b16 %v529, %v529
      %v546 = vpack.c.b16 %v530, %v530
      %v547 = vpack.c.b16 %v531, %v531
      %v548 = vpack.c.b16 %v532, %v532
      %v549 = vpack.c.b16 %v533, %v533
      %566 = vst [vmem:[%s322] sm:$0xf] %v534
      %567 = vst [vmem:[%s322 + $0x4] sm:$0xf] %v535
      %568 = vst [vmem:[%s322 + $0x8] sm:$0xf] %v536
      %569 = vst [vmem:[%s322 + $0xc] sm:$0xf] %v537
      %570 = vst [vmem:[%s322 + $0x10] sm:$0xf] %v538
      %571 = vst [vmem:[%s322 + $0x14] sm:$0xf] %v539
      %572 = vst [vmem:[%s322 + $0x18] sm:$0xf] %v540
      %573 = vst [vmem:[%s322 + $0x1c] sm:$0xf] %v541
      %574 = vst [vmem:[%s322 + $0x20] sm:$0xf] %v542
      %575 = vst [vmem:[%s322 + $0x24] sm:$0xf] %v543
      %576 = vst [vmem:[%s322 + $0x28] sm:$0xf] %v544
      %577 = vst [vmem:[%s322 + $0x2c] sm:$0xf] %v545
      %578 = vst [vmem:[%s322 + $0x30] sm:$0xf] %v546
      %579 = vst [vmem:[%s322 + $0x34] sm:$0xf] %v547
      %580 = vst [vmem:[%s322 + $0x38] sm:$0xf] %v548
      %581 = vst [vmem:[%s322 + $0x3c] sm:$0xf] %v549
      %s582 = smul.u32 8, %s20
      %p583 = scmp.lt.s32.totalorder %s19, 1
      %s584 = scalar_select %p583, %s19, 1
      %p585 = scmp.lt.s32.totalorder %s582, 15
      %s586 = scalar_select %p585, %s582, 15
      %p587 = scmp.lt.s32.totalorder %s21, 0
      %s588 = scalar_select %p587, %s21, 0
      %s589 = smul.addr %s586, 2
      %s590 = sadd.s32 %s588, %s589
      %s591 = smul.addr %s584, 32
      %s592 = sadd.s32 %s590, %s591
      %s593 = smul.addr %s592, 4
      %s594 = scalar_lea.vmem %s3, %s593
      // Predicated region
      $region33: #{spade_resblock_forward.25} parent=31 // pred_check
        %p595 = pneg %p143
      $region34: #{spade_resblock_forward.25} parent=31 // pred_check_branch
        %597 = sbr.rel (%p595) target = $region36
      $region35: #{spade_resblock_forward.25} parent=31 // pred_region
        %s598 = smul.u32 8, %s20
      $region36: #{spade_resblock_forward.25} parent=31 // pred_fallthru
        _
    $region32: #{spade_resblock_forward.25} parent=5 // pred_fallthru
      _
    %p599 = scmp.le.s32.totalorder 2, %s9
    // Predicated region
    $region37: #{spade_resblock_forward.25} parent=5 // pred_check
      %p600 = pneg %p599
    $region38: #{spade_resblock_forward.25} parent=5 // pred_check_branch
      %602 = sbr.rel (%p600) target = $region40
    $region39: #{spade_resblock_forward.25} parent=5 // pred_region
      %s603 = ssub.s32 %s9, 2
      // Predicated region
      $region41: #{spade_resblock_forward.25} parent=39 // pred_check
        %p604 = pneg %p149
      $region42: #{spade_resblock_forward.25} parent=39 // pred_check_branch
        %606 = sbr.rel (%p604) target = $region44
      $region43: #{spade_resblock_forward.25} parent=39 // pred_region
        %s607 = smul.u32 8, %s23
        %p608 = scmp.lt.s32.totalorder %s22, 1
        %s609 = scalar_select %p608, %s22, 1
        %p610 = scmp.lt.s32.totalorder %s607, 15
        %s611 = scalar_select %p610, %s607, 15
        %p612 = scmp.lt.s32.totalorder %s24, 0
        %s613 = scalar_select %p612, %s24, 0
        %s614 = smul.addr %s611, 2
        %s615 = sadd.s32 %s613, %s614
        %s616 = smul.addr %s609, 32
        %s617 = sadd.s32 %s615, %s616
        %s618 = smul.addr %s617, 4
        %s619 = scalar_lea.vmem %s3, %s618
      $region44: #{spade_resblock_forward.25} parent=39 // pred_fallthru
        _
    $region40: #{spade_resblock_forward.25} parent=5 // pred_fallthru
      _
  $region6: #{spade_resblock_forward.25} parent=0 // loop_footer
    %s13 = sadd.s32 1, %s9
  $region7: #{spade_resblock_forward.25} parent=0 // loop_footer_branch
    %8 = sbr.rel target = $region3
  $region8: #{spade_resblock_forward.25} parent=0 // loop_exit
    _

// kernel: spade_resblock_forward.17
$region0: #{spade_resblock_forward.17}
  #allocation0 [shape = 'u32[]', space=smem, size = 0x4, offset = 0x4, fixed_abs, tag = 'smem constant byte address 0x4 - core index']
  #allocation1 [shape = 'u32[144,128]{1,0:T(1,128)}', space=vmem, size = 0x12000, scoped, tag = 'internal scratch']
  %s0 = inlined_call_operand.vmem [shape: bf16[2,16,16,128], index: 0, kind: input, shape index: {}]
  %s1 = inlined_call_operand.vmem [shape: bf16[2,16,16,256], index: 1, kind: input, shape index: {}]
  %s2 = inlined_call_operand.vmem [shape: f32[2,2,128], index: 2, kind: input, shape index: {}]
  %s3 = inlined_call_operand.vmem [shape: bf16[2,16,16,128], index: 3, kind: output, shape index: {}]
  %s4 = sld [smem:[#allocation0]]
  $region45: #{spade_resblock_forward.17} parent=0
    _
  %s6 = ssub.s32 1, %s4
  %s7 = scalar_select 0, %s6, %s4
  loop: start=0, step=1, limit=6
  $region2: #{spade_resblock_forward.17} parent=0 // loop_pre_header
    _
  $region3: #{spade_resblock_forward.17} parent=0 // loop_header
    %s9 = sphi 0, %s13
    %p10 = scmp.ge.s32.totalorder %s9, 6
    %s16 = sphi 0, %s35
    %s17 = sphi 0, %s31
    %s18 = sphi 0, %s27
    %s19 = sphi 0, %s16
    %s20 = sphi 0, %s17
    %s21 = sphi 0, %s18
    %s22 = sphi 0, %s19
    %s23 = sphi 0, %s20
    %s24 = sphi 0, %s21
    %s42 = sphi 0, %s44
    %s45 = sphi 0, %s42
    %s46 = sphi 0, %s45
    %s62 = sphi 0, %s46
    %s72 = sphi 0, %s74
    %s75 = sphi 0, %s72
    %s76 = sphi 0, %s75
    %s92 = sphi 0, %s76
    %s100 = sphi 0, %s102
    %s103 = sphi 0, %s100
    %s104 = sphi 0, %s103
    %s120 = sphi 0, %s104
    %s130 = sphi 0, %s132
    %s133 = sphi 0, %s130
    %s134 = sphi 0, %s133
    %s150 = sphi 0, %s134
  $region4: #{spade_resblock_forward.17} parent=0 // loop_header_branch
    %12 = sbr.rel (%p10) target = $region8
  $region5: #{spade_resblock_forward.17} parent=0 // loop_body
    %s14 = ssub.s32 %s9, 1
    %s15 = ssub.s32 %s9, 2
    %s25 = sadd.s32 1, %s18
    %p26 = scmp.ge.s32.totalorder %s25, 1
    %s27 = scalar_select %p26, 0, %s25
    %s28 = sadd.s32 1, %s17
    %s29 = scalar_select %p26, %s28, %s17
    %p30 = scmp.ge.s32.totalorder %s29, 2
    %s31 = scalar_select %p30, 0, %s29
    %s32 = sadd.s32 1, %s16
    %s33 = scalar_select %p30, %s32, %s16
    %p34 = scmp.ge.s32.totalorder %s33, 2
    %s35 = scalar_select %p34, 0, %s33
    %s36 = ssub.s32 %s16, %s35
    %s37 = ssub.s32 %s17, %s31
    %s38 = sor.u32 %s36, %s37
    %s39 = ssub.s32 %s18, %s27
    %s40 = sor.u32 %s38, %s39
    %p41 = scmp.eq.s32.totalorder %s40, 0
    %s43 = sadd.s32 %s42, 1
    %s44 = scalar_select %p41, %s42, %s43
    %p47 = pneg %p41
    %p48 = scmp.eq.s32.totalorder %s9, 3
    %p49 = por %p47, %p48
    %p50 = scmp.ne.s32.totalorder %s42, %s45
    %p51 = scmp.eq.s32.totalorder %s9, 0
    %p52 = por %p50, %p51
    %p53 = scmp.ne.s32.totalorder %s42, %s45
    %p54 = scmp.eq.s32.totalorder %s14, 3
    %p55 = por %p53, %p54
    %p56 = scmp.ne.s32.totalorder %s45, %s46
    %p57 = scmp.eq.s32.totalorder %s14, 0
    %p58 = por %p56, %p57
    %p59 = scmp.ne.s32.totalorder %s45, %s46
    %p60 = scmp.eq.s32.totalorder %s15, 3
    %p61 = por %p59, %p60
    %p63 = scmp.ne.s32.totalorder %s46, %s62
    %p64 = scmp.eq.s32.totalorder %s15, 0
    %p65 = por %p63, %p64
    %s66 = ssub.s32 %s16, %s35
    %s67 = ssub.s32 %s17, %s31
    %s68 = sor.u32 %s66, %s67
    %s69 = ssub.s32 %s18, %s27
    %s70 = sor.u32 %s68, %s69
    %p71 = scmp.eq.s32.totalorder %s70, 0
    %s73 = sadd.s32 %s72, 1
    %s74 = scalar_select %p71, %s72, %s73
    %p77 = pneg %p71
    %p78 = scmp.eq.s32.totalorder %s9, 3
    %p79 = por %p77, %p78
    %p80 = scmp.ne.s32.totalorder %s72, %s75
    %p81 = scmp.eq.s32.totalorder %s9, 0
    %p82 = por %p80, %p81
    %p83 = scmp.ne.s32.totalorder %s72, %s75
    %p84 = scmp.eq.s32.totalorder %s14, 3
    %p85 = por %p83, %p84
    %p86 = scmp.ne.s32.totalorder %s75, %s76
    %p87 = scmp.eq.s32.totalorder %s14, 0
    %p88 = por %p86, %p87
    %p89 = scmp.ne.s32.totalorder %s75, %s76
    %p90 = scmp.eq.s32.totalorder %s15, 3
    %p91 = por %p89, %p90
    %p93 = scmp.ne.s32.totalorder %s76, %s92
    %p94 = scmp.eq.s32.totalorder %s15, 0
    %p95 = por %p93, %p94
    %s96 = ssub.s32 %s16, %s35
    %s97 = ssub.s32 %s18, %s27
    %s98 = sor.u32 %s96, %s97
    %p99 = scmp.eq.s32.totalorder %s98, 0
    %s101 = sadd.s32 %s100, 1
    %s102 = scalar_select %p99, %s100, %s101
    %p105 = pneg %p99
    %p106 = scmp.eq.s32.totalorder %s9, 3
    %p107 = por %p105, %p106
    %p108 = scmp.ne.s32.totalorder %s100, %s103
    %p109 = scmp.eq.s32.totalorder %s9, 0
    %p110 = por %p108, %p109
    %p111 = scmp.ne.s32.totalorder %s100, %s103
    %p112 = scmp.eq.s32.totalorder %s14, 3
    %p113 = por %p111, %p112
    %p114 = scmp.ne.s32.totalorder %s103, %s104
    %p115 = scmp.eq.s32.totalorder %s14, 0
    %p116 = por %p114, %p115
    %p117 = scmp.ne.s32.totalorder %s103, %s104
    %p118 = scmp.eq.s32.totalorder %s15, 3
    %p119 = por %p117, %p118
    %p121 = scmp.ne.s32.totalorder %s104, %s120
    %p122 = scmp.eq.s32.totalorder %s15, 0
    %p123 = por %p121, %p122
    %s124 = ssub.s32 %s16, %s35
    %s125 = ssub.s32 %s17, %s31
    %s126 = sor.u32 %s124, %s125
    %s127 = ssub.s32 %s18, %s27
    %s128 = sor.u32 %s126, %s127
    %p129 = scmp.eq.s32.totalorder %s128, 0
    %s131 = sadd.s32 %s130, 1
    %s132 = scalar_select %p129, %s130, %s131
    %p135 = pneg %p129
    %p136 = scmp.eq.s32.totalorder %s9, 3
    %p137 = por %p135, %p136
    %p138 = scmp.ne.s32.totalorder %s130, %s133
    %p139 = scmp.eq.s32.totalorder %s9, 0
    %p140 = por %p138, %p139
    %p141 = scmp.ne.s32.totalorder %s130, %s133
    %p142 = scmp.eq.s32.totalorder %s14, 3
    %p143 = por %p141, %p142
    %p144 = scmp.ne.s32.totalorder %s133, %s134
    %p145 = scmp.eq.s32.totalorder %s14, 0
    %p146 = por %p144, %p145
    %p147 = scmp.ne.s32.totalorder %s133, %s134
    %p148 = scmp.eq.s32.totalorder %s15, 3
    %p149 = por %p147, %p148
    %p151 = scmp.ne.s32.totalorder %s134, %s150
    %p152 = scmp.eq.s32.totalorder %s15, 0
    %p153 = por %p151, %p152
    %p154 = scmp.le.s32.totalorder 1, %s9
    %p155 = scmp.lt.s32.totalorder %s9, 5
    %p156 = pnand %p154, %p155
    %p157 = pneg %p156
    // Predicated region
    $region9: #{spade_resblock_forward.17} parent=5 // pred_check
      _
    $region10: #{spade_resblock_forward.17} parent=5 // pred_check_branch
      %159 = sbr.rel (%p156) target = $region12
    $region11: #{spade_resblock_forward.17} parent=5 // pred_region
      %s160 = ssub.s32 %s9, 1
    $region12: #{spade_resblock_forward.17} parent=5 // pred_fallthru
      _
    %p161 = scmp.lt.s32.totalorder %s9, 4
    // Predicated region
    $region13: #{spade_resblock_forward.17} parent=5 // pred_check
      %p162 = pneg %p161
    $region14: #{spade_resblock_forward.17} parent=5 // pred_check_branch
      %164 = sbr.rel (%p162) target = $region16
    $region15: #{spade_resblock_forward.17} parent=5 // pred_region
      // Predicated region
      $region17: #{spade_resblock_forward.17} parent=15 // pred_check
        %p165 = pneg %p52
      $region18: #{spade_resblock_forward.17} parent=15 // pred_check_branch
        %167 = sbr.rel (%p165) target = $region20
      $region19: #{spade_resblock_forward.17} parent=15 // pred_region
        %s168 = smul.u32 8, %s17
        %p169 = scmp.lt.s32.totalorder %s16, 1
        %s170 = scalar_select %p169, %s16, 1
        %p171 = scmp.lt.s32.totalorder %s168, 15
        %s172 = scalar_select %p171, %s168, 15
        %p173 = scmp.lt.s32.totalorder %s18, 0
        %s174 = scalar_select %p173, %s18, 0
        %s175 = smul.addr %s172, 2
        %s176 = sadd.s32 %s174, %s175
        %s177 = smul.addr %s170, 32
        %s178 = sadd.s32 %s176, %s177
        %s179 = smul.addr %s178, 4
        %s180 = scalar_lea.vmem %s0, %s179
        %s181 = smul.u32 8, %s17
      $region20: #{spade_resblock_forward.17} parent=15 // pred_fallthru
        _
      // Predicated region
      $region21: #{spade_resblock_forward.17} parent=15 // pred_check
        %p182 = pneg %p82
      $region22: #{spade_resblock_forward.17} parent=15 // pred_check_branch
        %184 = sbr.rel (%p182) target = $region24
      $region23: #{spade_resblock_forward.17} parent=15 // pred_region
        %s185 = smul.u32 8, %s17
        %s186 = smul.u32 2, %s18
        %p187 = scmp.lt.s32.totalorder %s16, 1
        %s188 = scalar_select %p187, %s16, 1
        %p189 = scmp.lt.s32.totalorder %s185, 15
        %s190 = scalar_select %p189, %s185, 15
        %p191 = scmp.lt.s32.totalorder %s186, 1
        %s192 = scalar_select %p191, %s186, 1
        %s193 = smul.addr %s190, 4
        %s194 = sadd.s32 %s192, %s193
        %s195 = smul.addr %s188, 64
        %s196 = sadd.s32 %s194, %s195
        %s197 = smul.addr %s196, 4
        %s198 = scalar_lea.vmem %s1, %s197
        %s199 = smul.u32 8, %s17
        %s200 = smul.u32 2, %s18
      $region24: #{spade_resblock_forward.17} parent=15 // pred_fallthru
        _
      // Predicated region
      $region25: #{spade_resblock_forward.17} parent=15 // pred_check
        %p201 = pneg %p110
      $region26: #{spade_resblock_forward.17} parent=15 // pred_check_branch
        %203 = sbr.rel (%p201) target = $region28
      $region27: #{spade_resblock_forward.17} parent=15 // pred_region
        %p204 = scmp.lt.s32.totalorder %s16, 1
        %s205 = scalar_select %p204, %s16, 1
        %p206 = scmp.lt.s32.totalorder %s18, 0
        %s207 = scalar_select %p206, %s18, 0
        %s208 = sadd.s32 %s207, %s205
        %s209 = smul.addr %s208, 2
        %s210 = scalar_lea.vmem %s2, %s209
      $region28: #{spade_resblock_forward.17} parent=15 // pred_fallthru
        _
    $region16: #{spade_resblock_forward.17} parent=5 // pred_fallthru
      _
    %p211 = scmp.le.s32.totalorder 1, %s9
    %p212 = scmp.lt.s32.totalorder %s9, 5
    %p213 = pnand %p211, %p212
    %p214 = pneg %p213
    // Predicated region
    $region29: #{spade_resblock_forward.17} parent=5 // pred_check
      _
    $region30: #{spade_resblock_forward.17} parent=5 // pred_check_branch
      %216 = sbr.rel (%p213) target = $region32
    $region31: #{spade_resblock_forward.17} parent=5 // pred_region
      %s217 = ssub.s32 %s9, 1
      %s218 = smul.u32 8, %s20
      %p219 = scmp.lt.s32.totalorder %s19, 1
      %s220 = scalar_select %p219, %s19, 1
      %p221 = scmp.lt.s32.totalorder %s218, 15
      %s222 = scalar_select %p221, %s218, 15
      %p223 = scmp.lt.s32.totalorder %s21, 0
      %s224 = scalar_select %p223, %s21, 0
      %s225 = smul.addr %s222, 2
      %s226 = sadd.s32 %s224, %s225
      %s227 = smul.addr %s220, 32
      %s228 = sadd.s32 %s226, %s227
      %s229 = smul.addr %s228, 4
      %s230 = scalar_lea.vmem %s0, %s229
      %p231 = pneg %p58
      %p232 = pneg %p55
      %s233 = smul.u32 8, %s20
      %s234 = smul.u32 2, %s21
      %p235 = scmp.lt.s32.totalorder %s19, 1
      %s236 = scalar_select %p235, %s19, 1
      %p237 = scmp.lt.s32.totalorder %s233, 15
      %s238 = scalar_select %p237, %s233, 15
      %p239 = scmp.lt.s32.totalorder %s234, 1
      %s240 = scalar_select %p239, %s234, 1
      %s241 = smul.addr %s238, 4
      %s242 = sadd.s32 %s240, %s241
      %s243 = smul.addr %s236, 64
      %s244 = sadd.s32 %s242, %s243
      %s245 = smul.addr %s244, 4
      %s246 = scalar_lea.vmem %s1, %s245
      %p247 = pneg %p88
      %p248 = pneg %p85
      %p249 = scmp.lt.s32.totalorder %s19, 1
      %s250 = scalar_select %p249, %s19, 1
      %p251 = scmp.lt.s32.totalorder %s21, 0
      %s252 = scalar_select %p251, %s21, 0
      %s253 = sadd.s32 %s252, %s250
      %s254 = smul.addr %s253, 2
      %s255 = scalar_lea.vmem %s2, %s254
      %p256 = pneg %p116
      %p257 = pneg %p113
      %p258 = pneg %p146
      %p259 = pneg %p143
      %s260 = smul.u32 8, %s20
      %p261 = scmp.lt.s32.totalorder %s19, 1
      %s262 = scalar_select %p261, %s19, 1
      %p263 = scmp.lt.s32.totalorder %s260, 15
      %s264 = scalar_select %p263, %s260, 15
      %p265 = scmp.lt.s32.totalorder %s21, 0
      %s266 = scalar_select %p265, %s21, 0
      %s267 = smul.addr %s264, 2
      %s268 = sadd.s32 %s266, %s267
      %s269 = smul.addr %s262, 32
      %s270 = sadd.s32 %s268, %s269
      %s271 = smul.addr %s270, 4
      %s272 = scalar_lea.vmem %s3, %s271
      %s273 = smul.u32 8, %s20
      %p274 = scmp.lt.s32.totalorder %s19, 1
      %s275 = scalar_select %p274, %s19, 1
      %p276 = scmp.lt.s32.totalorder %s273, 15
      %s277 = scalar_select %p276, %s273, 15
      %p278 = scmp.lt.s32.totalorder %s21, 0
      %s279 = scalar_select %p278, %s21, 0
      %s280 = smul.addr %s277, 2
      %s281 = sadd.s32 %s279, %s280
      %s282 = smul.addr %s275, 32
      %s283 = sadd.s32 %s281, %s282
      %s284 = smul.addr %s283, 4
      %s285 = scalar_lea.vmem %s0, %s284
      %s286 = smul.u32 8, %s20
      %s287 = smul.u32 8, %s20
      %s288 = smul.u32 2, %s21
      %p289 = scmp.lt.s32.totalorder %s19, 1
      %s290 = scalar_select %p289, %s19, 1
      %p291 = scmp.lt.s32.totalorder %s287, 15
      %s292 = scalar_select %p291, %s287, 15
      %p293 = scmp.lt.s32.totalorder %s288, 1
      %s294 = scalar_select %p293, %s288, 1
      %s295 = smul.addr %s292, 4
      %s296 = sadd.s32 %s294, %s295
      %s297 = smul.addr %s290, 64
      %s298 = sadd.s32 %s296, %s297
      %s299 = smul.addr %s298, 4
      %s300 = scalar_lea.vmem %s1, %s299
      %s301 = smul.u32 8, %s20
      %s302 = smul.u32 2, %s21
      %p303 = scmp.lt.s32.totalorder %s19, 1
      %s304 = scalar_select %p303, %s19, 1
      %p305 = scmp.lt.s32.totalorder %s21, 0
      %s306 = scalar_select %p305, %s21, 0
      %s307 = sadd.s32 %s306, %s304
      %s308 = smul.addr %s307, 2
      %s309 = scalar_lea.vmem %s2, %s308
      %s310 = smul.u32 8, %s20
      %p311 = scmp.lt.s32.totalorder %s19, 1
      %s312 = scalar_select %p311, %s19, 1
      %p313 = scmp.lt.s32.totalorder %s310, 15
      %s314 = scalar_select %p313, %s310, 15
      %p315 = scmp.lt.s32.totalorder %s21, 0
      %s316 = scalar_select %p315, %s21, 0
      %s317 = smul.addr %s314, 2
      %s318 = sadd.s32 %s316, %s317
      %s319 = smul.addr %s312, 32
      %s320 = sadd.s32 %s318, %s319
      %s321 = smul.addr %s320, 4
      %s322 = scalar_lea.vmem %s3, %s321
      %s323 = smul.u32 8, %s20
      %v324 = vld [vmem:[%s285] sm:$0xf]
      %v325 = vld [vmem:[%s285 + $0x4] sm:$0xf]
      %v326 = vld [vmem:[%s285 + $0x8] sm:$0xf]
      %v327 = vld [vmem:[%s285 + $0xc] sm:$0xf]
      %v328 = vld [vmem:[%s285 + $0x10] sm:$0xf]
      %v329 = vld [vmem:[%s285 + $0x14] sm:$0xf]
      %v330 = vld [vmem:[%s285 + $0x18] sm:$0xf]
      %v331 = vld [vmem:[%s285 + $0x1c] sm:$0xf]
      %v332 = vld [vmem:[%s285 + $0x20] sm:$0xf]
      %v333 = vld [vmem:[%s285 + $0x24] sm:$0xf]
      %v334 = vld [vmem:[%s285 + $0x28] sm:$0xf]
      %v335 = vld [vmem:[%s285 + $0x2c] sm:$0xf]
      %v336 = vld [vmem:[%s285 + $0x30] sm:$0xf]
      %v337 = vld [vmem:[%s285 + $0x34] sm:$0xf]
      %v338 = vld [vmem:[%s285 + $0x38] sm:$0xf]
      %v339 = vld [vmem:[%s285 + $0x3c] sm:$0xf]
      %v340 = vunpack.c.l.bf16 %v324
      %v341 = vunpack.c.l.bf16 %v325
      %v342 = vunpack.c.l.bf16 %v326
      %v343 = vunpack.c.l.bf16 %v327
      %v344 = vunpack.c.l.bf16 %v328
      %v345 = vunpack.c.l.bf16 %v329
      %v346 = vunpack.c.l.bf16 %v330
      %v347 = vunpack.c.l.bf16 %v331
      %v348 = vunpack.c.l.bf16 %v332
      %v349 = vunpack.c.l.bf16 %v333
      %v350 = vunpack.c.l.bf16 %v334
      %v351 = vunpack.c.l.bf16 %v335
      %v352 = vunpack.c.l.bf16 %v336
      %v353 = vunpack.c.l.bf16 %v337
      %v354 = vunpack.c.l.bf16 %v338
      %v355 = vunpack.c.l.bf16 %v339
      %v356 = vld [vmem:[%s309] sm:$0x3]
      %v357 = vmul.f32 %v356, 0.00390625
      %v358 = vmul.f32 %v357, %v357
      %v360 = vrot.slane %v358, 7
      %v362 = vsub.f32 %v357, %v360
      %v363 = vmax.f32 %v362, 0.0
      %v364 = vadd.f32 %v363, 1e-05
      %v365 = vrsqrt.pop %v364
      %v366 = vld [vmem:[%s300] sm:$0xff]
      %v367 = vld [vmem:[%s300 + $0x8] sm:$0xff]
      %v368 = vld [vmem:[%s300 + $0x10] sm:$0xff]
      %v369 = vld [vmem:[%s300 + $0x18] sm:$0xff]
      %v370 = vld [vmem:[%s300 + $0x20] sm:$0xff]
      %v371 = vld [vmem:[%s300 + $0x28] sm:$0xff]
      %v372 = vld [vmem:[%s300 + $0x30] sm:$0xff]
      %v373 = vld [vmem:[%s300 + $0x38] sm:$0xff]
      %v374 = vld [vmem:[%s300 + $0x40] sm:$0xff]
      %v375 = vld [vmem:[%s300 + $0x48] sm:$0xff]
      %v376 = vld [vmem:[%s300 + $0x50] sm:$0xff]
      %v377 = vld [vmem:[%s300 + $0x58] sm:$0xff]
      %v378 = vld [vmem:[%s300 + $0x60] sm:$0xff]
      %v379 = vld [vmem:[%s300 + $0x68] sm:$0xff]
      %v380 = vld [vmem:[%s300 + $0x70] sm:$0xff]
      %v381 = vld [vmem:[%s300 + $0x78] sm:$0xff]
      %v382 = vunpack.c.l.bf16 %v366
      %v383 = vunpack.c.h.bf16 %v366
      %v384 = vunpack.c.l.bf16 %v367
      %v385 = vunpack.c.h.bf16 %v367
      %v386 = vunpack.c.l.bf16 %v368
      %v387 = vunpack.c.h.bf16 %v368
      %v388 = vunpack.c.l.bf16 %v369
      %v389 = vunpack.c.h.bf16 %v369
      %v390 = vunpack.c.l.bf16 %v370
      %v391 = vunpack.c.h.bf16 %v370
      %v392 = vunpack.c.l.bf16 %v371
      %v393 = vunpack.c.h.bf16 %v371
      %v394 = vunpack.c.l.bf16 %v372
      %v395 = vunpack.c.h.bf16 %v372
      %v396 = vunpack.c.l.bf16 %v373
      %v397 = vunpack.c.h.bf16 %v373
      %v398 = vunpack.c.l.bf16 %v374
      %v399 = vunpack.c.h.bf16 %v374
      %v400 = vunpack.c.l.bf16 %v375
      %v401 = vunpack.c.h.bf16 %v375
      %v402 = vunpack.c.l.bf16 %v376
      %v403 = vunpack.c.h.bf16 %v376
      %v404 = vunpack.c.l.bf16 %v377
      %v405 = vunpack.c.h.bf16 %v377
      %v406 = vunpack.c.l.bf16 %v378
      %v407 = vunpack.c.h.bf16 %v378
      %v408 = vunpack.c.l.bf16 %v379
      %v409 = vunpack.c.h.bf16 %v379
      %v410 = vunpack.c.l.bf16 %v380
      %v411 = vunpack.c.h.bf16 %v380
      %v412 = vunpack.c.l.bf16 %v381
      %v413 = vunpack.c.h.bf16 %v381
      %v414 = vlaneseq
      %v415 = vshrl.u32 %v414, 7
      %v416 = vsub.s32 0, %v415
      %v417 = vrot.slane %v357, %v416
      %v418 = vsub.f32 %v340, %v417
      %v419 = vsub.f32 %v341, %v417
      %v420 = vsub.f32 %v342, %v417
      %v421 = vsub.f32 %v343, %v417
      %v422 = vsub.f32 %v344, %v417
      %v423 = vsub.f32 %v345, %v417
      %v424 = vsub.f32 %v346, %v417
      %v425 = vsub.f32 %v347, %v417
      %v426 = vsub.f32 %v348, %v417
      %v427 = vsub.f32 %v349, %v417
      %v428 = vsub.f32 %v350, %v417
      %v429 = vsub.f32 %v351, %v417
      %v430 = vsub.f32 %v352, %v417
      %v431 = vsub.f32 %v353, %v417
      %v432 = vsub.f32 %v354, %v417
      %v433 = vsub.f32 %v355, %v417
      %v434 = vlaneseq
      %v435 = vshrl.u32 %v434, 7
      %v436 = vsub.s32 1, %v435
      %v437 = vrot.slane %v365, %v436
      %v438 = vmul.f32 %v418, %v437
      %v439 = vmul.f32 %v419, %v437
      %v440 = vmul.f32 %v420, %v437
      %v441 = vmul.f32 %v421, %v437
      %v442 = vmul.f32 %v422, %v437
      %v443 = vmul.f32 %v423, %v437
      %v444 = vmul.f32 %v424, %v437
      %v445 = vmul.f32 %v425, %v437
      %v446 = vmul.f32 %v426, %v437
      %v447 = vmul.f32 %v427, %v437
      %v448 = vmul.f32 %v428, %v437
      %v449 = vmul.f32 %v429, %v437
      %v450 = vmul.f32 %v430, %v437
      %v451 = vmul.f32 %v431, %v437
      %v452 = vmul.f32 %v432, %v437
      %v453 = vmul.f32 %v433, %v437
      %v454 = vadd.f32 %v382, 1.0
      %v455 = vadd.f32 %v384, 1.0
      %v456 = vadd.f32 %v386, 1.0
      %v457 = vadd.f32 %v388, 1.0
      %v458 = vadd.f32 %v390, 1.0
      %v459 = vadd.f32 %v392, 1.0
      %v460 = vadd.f32 %v394, 1.0
      %v461 = vadd.f32 %v396, 1.0
      %v462 = vadd.f32 %v398, 1.0
      %v463 = vadd.f32 %v400, 1.0
      %v464 = vadd.f32 %v402, 1.0
      %v465 = vadd.f32 %v404, 1.0
      %v466 = vadd.f32 %v406, 1.0
      %v467 = vadd.f32 %v408, 1.0
      %v468 = vadd.f32 %v410, 1.0
      %v469 = vadd.f32 %v412, 1.0
      %v470 = vmul.f32 %v438, %v454
      %v471 = vmul.f32 %v439, %v455
      %v472 = vmul.f32 %v440, %v456
      %v473 = vmul.f32 %v441, %v457
      %v474 = vmul.f32 %v442, %v458
      %v475 = vmul.f32 %v443, %v459
      %v476 = vmul.f32 %v444, %v460
      %v477 = vmul.f32 %v445, %v461
      %v478 = vmul.f32 %v446, %v462
      %v479 = vmul.f32 %v447, %v463
      %v480 = vmul.f32 %v448, %v464
      %v481 = vmul.f32 %v449, %v465
      %v482 = vmul.f32 %v450, %v466
      %v483 = vmul.f32 %v451, %v467
      %v484 = vmul.f32 %v452, %v468
      %v485 = vmul.f32 %v453, %v469
      %v486 = vadd.f32 %v470, %v383
      %v487 = vadd.f32 %v471, %v385
      %v488 = vadd.f32 %v472, %v387
      %v489 = vadd.f32 %v473, %v389
      %v490 = vadd.f32 %v474, %v391
      %v491 = vadd.f32 %v475, %v393
      %v492 = vadd.f32 %v476, %v395
      %v493 = vadd.f32 %v477, %v397
      %v494 = vadd.f32 %v478, %v399
      %v495 = vadd.f32 %v479, %v401
      %v496 = vadd.f32 %v480, %v403
      %v497 = vadd.f32 %v481, %v405
      %v498 = vadd.f32 %v482, %v407
      %v499 = vadd.f32 %v483, %v409
      %v500 = vadd.f32 %v484, %v411
      %v501 = vadd.f32 %v485, %v413
      %vm502 = vcmp.ge.f32.partialorder %v486, 0.0
      %vm503 = vcmp.ge.f32.partialorder %v487, 0.0
      %vm504 = vcmp.ge.f32.partialorder %v488, 0.0
      %vm505 = vcmp.ge.f32.partialorder %v489, 0.0
      %vm506 = vcmp.ge.f32.partialorder %v490, 0.0
      %vm507 = vcmp.ge.f32.partialorder %v491, 0.0
      %vm508 = vcmp.ge.f32.partialorder %v492, 0.0
      %vm509 = vcmp.ge.f32.partialorder %v493, 0.0
      %vm510 = vcmp.ge.f32.partialorder %v494, 0.0
      %vm511 = vcmp.ge.f32.partialorder %v495, 0.0
      %vm512 = vcmp.ge.f32.partialorder %v496, 0.0
      %vm513 = vcmp.ge.f32.partialorder %v497, 0.0
      %vm514 = vcmp.ge.f32.partialorder %v498, 0.0
      %vm515 = vcmp.ge.f32.partialorder %v499, 0.0
      %vm516 = vcmp.ge.f32.partialorder %v500, 0.0
      %vm517 = vcmp.ge.f32.partialorder %v501, 0.0
      %v518 = vmul.f32 %v486, 0.2
      %v519 = vmul.f32 %v487, 0.2
      %v520 = vmul.f32 %v488, 0.2
      %v521 = vmul.f32 %v489, 0.2
      %v522 = vmul.f32 %v490, 0.2
      %v523 = vmul.f32 %v491, 0.2
      %v524 = vmul.f32 %v492, 0.2
      %v525 = vmul.f32 %v493, 0.2
      %v526 = vmul.f32 %v494, 0.2
      %v527 = vmul.f32 %v495, 0.2
      %v528 = vmul.f32 %v496, 0.2
      %v529 = vmul.f32 %v497, 0.2
      %v530 = vmul.f32 %v498, 0.2
      %v531 = vmul.f32 %v499, 0.2
      %v532 = vmul.f32 %v500, 0.2
      %v533 = vmul.f32 %v501, 0.2
      %v534 = vsel %vm502, %v486, %v518
      %v535 = vsel %vm503, %v487, %v519
      %v536 = vsel %vm504, %v488, %v520
      %v537 = vsel %vm505, %v489, %v521
      %v538 = vsel %vm506, %v490, %v522
      %v539 = vsel %vm507, %v491, %v523
      %v540 = vsel %vm508, %v492, %v524
      %v541 = vsel %vm509, %v493, %v525
      %v542 = vsel %vm510, %v494, %v526
      %v543 = vsel %vm511, %v495, %v527
      %v544 = vsel %vm512, %v496, %v528
      %v545 = vsel %vm513, %v497, %v529
      %v546 = vsel %vm514, %v498, %v530
      %v547 = vsel %vm515, %v499, %v531
      %v548 = vsel %vm516, %v500, %v532
      %v549 = vsel %vm517, %v501, %v533
      %v550 = vpack.c.bf16 %v535, %v534
      %v551 = vpack.c.bf16 %v537, %v536
      %v552 = vpack.c.bf16 %v539, %v538
      %v553 = vpack.c.bf16 %v541, %v540
      %v554 = vpack.c.bf16 %v543, %v542
      %v555 = vpack.c.bf16 %v545, %v544
      %v556 = vpack.c.bf16 %v547, %v546
      %v557 = vpack.c.bf16 %v549, %v548
      %v566 = vunpack.c.l.b16 %v550
      %v567 = vunpack.c.h.b16 %v550
      %v568 = vunpack.c.l.b16 %v551
      %v569 = vunpack.c.h.b16 %v551
      %v570 = vunpack.c.l.b16 %v552
      %v571 = vunpack.c.h.b16 %v552
      %v572 = vunpack.c.l.b16 %v553
      %v573 = vunpack.c.h.b16 %v553
      %v574 = vunpack.c.l.b16 %v554
      %v575 = vunpack.c.h.b16 %v554
      %v576 = vunpack.c.l.b16 %v555
      %v577 = vunpack.c.h.b16 %v555
      %v578 = vunpack.c.l.b16 %v556
      %v579 = vunpack.c.h.b16 %v556
      %v580 = vunpack.c.l.b16 %v557
      %v581 = vunpack.c.h.b16 %v557
      %v582 = vpack.c.b16 %v566, %v566
      %v583 = vpack.c.b16 %v567, %v567
      %v584 = vpack.c.b16 %v568, %v568
      %v585 = vpack.c.b16 %v569, %v569
      %v586 = vpack.c.b16 %v570, %v570
      %v587 = vpack.c.b16 %v571, %v571
      %v588 = vpack.c.b16 %v572, %v572
      %v589 = vpack.c.b16 %v573, %v573
      %v590 = vpack.c.b16 %v574, %v574
      %v591 = vpack.c.b16 %v575, %v575
      %v592 = vpack.c.b16 %v576, %v576
      %v593 = vpack.c.b16 %v577, %v577
      %v594 = vpack.c.b16 %v578, %v578
      %v595 = vpack.c.b16 %v579, %v579
      %v596 = vpack.c.b16 %v580, %v580
      %v597 = vpack.c.b16 %v581, %v581
      %614 = vst [vmem:[%s322] sm:$0xf] %v582
      %615 = vst [vmem:[%s322 + $0x4] sm:$0xf] %v583
      %616 = vst [vmem:[%s322 + $0x8] sm:$0xf] %v584
      %617 = vst [vmem:[%s322 + $0xc] sm:$0xf] %v585
      %618 = vst [vmem:[%s322 + $0x10] sm:$0xf] %v586
      %619 = vst [vmem:[%s322 + $0x14] sm:$0xf] %v587
      %620 = vst [vmem:[%s322 + $0x18] sm:$0xf] %v588
      %621 = vst [vmem:[%s322 + $0x1c] sm:$0xf] %v589
      %622 = vst [vmem:[%s322 + $0x20] sm:$0xf] %v590
      %623 = vst [vmem:[%s322 + $0x24] sm:$0xf] %v591
      %624 = vst [vmem:[%s322 + $0x28] sm:$0xf] %v592
      %625 = vst [vmem:[%s322 + $0x2c] sm:$0xf] %v593
      %626 = vst [vmem:[%s322 + $0x30] sm:$0xf] %v594
      %627 = vst [vmem:[%s322 + $0x34] sm:$0xf] %v595
      %628 = vst [vmem:[%s322 + $0x38] sm:$0xf] %v596
      %629 = vst [vmem:[%s322 + $0x3c] sm:$0xf] %v597
      %s630 = smul.u32 8, %s20
      %p631 = scmp.lt.s32.totalorder %s19, 1
      %s632 = scalar_select %p631, %s19, 1
      %p633 = scmp.lt.s32.totalorder %s630, 15
      %s634 = scalar_select %p633, %s630, 15
      %p635 = scmp.lt.s32.totalorder %s21, 0
      %s636 = scalar_select %p635, %s21, 0
      %s637 = smul.addr %s634, 2
      %s638 = sadd.s32 %s636, %s637
      %s639 = smul.addr %s632, 32
      %s640 = sadd.s32 %s638, %s639
      %s641 = smul.addr %s640, 4
      %s642 = scalar_lea.vmem %s3, %s641
      // Predicated region
      $region33: #{spade_resblock_forward.17} parent=31 // pred_check
        %p643 = pneg %p143
      $region34: #{spade_resblock_forward.17} parent=31 // pred_check_branch
        %645 = sbr.rel (%p643) target = $region36
      $region35: #{spade_resblock_forward.17} parent=31 // pred_region
        %s646 = smul.u32 8, %s20
      $region36: #{spade_resblock_forward.17} parent=31 // pred_fallthru
        _
    $region32: #{spade_resblock_forward.17} parent=5 // pred_fallthru
      _
    %p647 = scmp.le.s32.totalorder 2, %s9
    // Predicated region
    $region37: #{spade_resblock_forward.17} parent=5 // pred_check
      %p648 = pneg %p647
    $region38: #{spade_resblock_forward.17} parent=5 // pred_check_branch
      %650 = sbr.rel (%p648) target = $region40
    $region39: #{spade_resblock_forward.17} parent=5 // pred_region
      %s651 = ssub.s32 %s9, 2
      // Predicated region
      $region41: #{spade_resblock_forward.17} parent=39 // pred_check
        %p652 = pneg %p149
      $region42: #{spade_resblock_forward.17} parent=39 // pred_check_branch
        %654 = sbr.rel (%p652) target = $region44
      $region43: #{spade_resblock_forward.17} parent=39 // pred_region
        %s655 = smul.u32 8, %s23
        %p656 = scmp.lt.s32.totalorder %s22, 1
        %s657 = scalar_select %p656, %s22, 1
        %p658 = scmp.lt.s32.totalorder %s655, 15
        %s659 = scalar_select %p658, %s655, 15
        %p660 = scmp.lt.s32.totalorder %s24, 0
        %s661 = scalar_select %p660, %s24, 0
        %s662 = smul.addr %s659, 2
        %s663 = sadd.s32 %s661, %s662
        %s664 = smul.addr %s657, 32
        %s665 = sadd.s32 %s663, %s664
        %s666 = smul.addr %s665, 4
        %s667 = scalar_lea.vmem %s3, %s666
      $region44: #{spade_resblock_forward.17} parent=39 // pred_fallthru
        _
    $region40: #{spade_resblock_forward.17} parent=5 // pred_fallthru
      _
  $region6: #{spade_resblock_forward.17} parent=0 // loop_footer
    %s13 = sadd.s32 1, %s9
  $region7: #{spade_resblock_forward.17} parent=0 // loop_footer_branch
    %8 = sbr.rel target = $region3
  $region8: #{spade_resblock_forward.17} parent=0 // loop_exit
    _

// kernel: spade_resblock_forward.23
$region0: #{spade_resblock_forward.23}
  #allocation0 [shape = 'u32[]', space=smem, size = 0x4, offset = 0x4, fixed_abs, tag = 'smem constant byte address 0x4 - core index']
  #allocation1 [shape = 'u32[144,128]{1,0:T(1,128)}', space=vmem, size = 0x12000, scoped, tag = 'internal scratch']
  %s0 = inlined_call_operand.vmem [shape: bf16[2,16,16,128], index: 0, kind: input, shape index: {}, may-alias: {0,1,2}]
  %s1 = inlined_call_operand.vmem [shape: bf16[2,16,16,128], index: 1, kind: input, shape index: {}, may-alias: {0,1,2}]
  %s2 = inlined_call_operand.vmem [shape: bf16[2,16,16,128], index: 2, kind: input, shape index: {}, may-alias: {0,1,2}]
  %s3 = inlined_call_operand.vmem [shape: bf16[1,3,1,384,128], index: 3, kind: input, shape index: {}]
  %s4 = inlined_call_operand.vmem [shape: f32[1,128], index: 4, kind: input, shape index: {}]
  %s5 = inlined_call_operand.vmem [shape: bf16[2,16,16,128], index: 5, kind: output, shape index: {}]
  %s6 = sld [smem:[#allocation0]]
  $region53: #{spade_resblock_forward.23} parent=0
    _
  %s8 = ssub.s32 1, %s6
  %s9 = scalar_select 0, %s8, %s6
  loop: start=0, step=1, limit=6
  $region2: #{spade_resblock_forward.23} parent=0 // loop_pre_header
    _
  $region3: #{spade_resblock_forward.23} parent=0 // loop_header
    %s11 = sphi 0, %s15
    %p12 = scmp.ge.s32.totalorder %s11, 6
    %s18 = sphi 0, %s44
    %s19 = sphi 0, %s40
    %s20 = sphi 0, %s36
    %s21 = sphi 0, %s32
    %s22 = sphi 0, %s18
    %s23 = sphi 0, %s19
    %s24 = sphi 0, %s20
    %s25 = sphi 0, %s21
    %s26 = sphi 0, %s22
    %s27 = sphi 0, %s23
    %s28 = sphi 0, %s24
    %s29 = sphi 0, %s25
    %s51 = sphi 0, %s53
    %s54 = sphi 0, %s51
    %s55 = sphi 0, %s54
    %s71 = sphi 0, %s55
    %s89 = sphi 0, %s91
    %s92 = sphi 0, %s89
    %s93 = sphi 0, %s92
    %s109 = sphi 0, %s93
    %s127 = sphi 0, %s129
    %s130 = sphi 0, %s127
    %s131 = sphi 0, %s130
    %s147 = sphi 0, %s131
    %s151 = sphi 0, %s151
    %s153 = sphi 0, %s151
    %s154 = sphi 0, %s153
    %s168 = sphi 0, %s154
    %s174 = sphi 0, %s176
    %s177 = sphi 0, %s174
    %s178 = sphi 0, %s177
    %s194 = sphi 0, %s178
    %s204 = sphi 0, %s206
    %s207 = sphi 0, %s204
    %s208 = sphi 0, %s207
    %s224 = sphi 0, %s208
  $region4: #{spade_resblock_forward.23} parent=0 // loop_header_branch
    %14 = sbr.rel (%p12) target = $region8
  $region5: #{spade_resblock_forward.23} parent=0 // loop_body
    %s16 = ssub.s32 %s11, 1
    %s17 = ssub.s32 %s11, 2
    %s30 = sadd.s32 1, %s21
    %p31 = scmp.ge.s32.totalorder %s30, 1
    %s32 = scalar_select %p31, 0, %s30
    %s33 = sadd.s32 1, %s20
    %s34 = scalar_select %p31, %s33, %s20
    %p35 = scmp.ge.s32.totalorder %s34, 1
    %s36 = scalar_select %p35, 0, %s34
    %s37 = sadd.s32 1, %s19
    %s38 = scalar_select %p35, %s37, %s19
    %p39 = scmp.ge.s32.totalorder %s38, 2
    %s40 = scalar_select %p39, 0, %s38
    %s41 = sadd.s32 1, %s18
    %s42 = scalar_select %p39, %s41, %s18
    %p43 = scmp.ge.s32.totalorder %s42, 2
    %s44 = scalar_select %p43, 0, %s42
    %s45 = ssub.s32 %s18, %s44
    %s46 = ssub.s32 %s19, %s40
    %s47 = sor.u32 %s45, %s46
    %s48 = ssub.s32 %s21, %s32
    %s49 = sor.u32 %s47, %s48
    %p50 = scmp.eq.s32.totalorder %s49, 0
    %s52 = sadd.s32 %s51, 1
    %s53 = scalar_select %p50, %s51, %s52
    %p56 = pneg %p50
    %p57 = scmp.eq.s32.totalorder %s11, 3
    %p58 = por %p56, %p57
    %p59 = scmp.ne.s32.totalorder %s51, %s54
    %p60 = scmp.eq.s32.totalorder %s11, 0
    %p61 = por %p59, %p60
    %p62 = scmp.ne.s32.totalorder %s51, %s54
    %p63 = scmp.eq.s32.totalorder %s16, 3
    %p64 = por %p62, %p63
    %p65 = scmp.ne.s32.totalorder %s54, %s55
    %p66 = scmp.eq.s32.totalorder %s16, 0
    %p67 = por %p65, %p66
    %p68 = scmp.ne.s32.totalorder %s54, %s55
    %p69 = scmp.eq.s32.totalorder %s17, 3
    %p70 = por %p68, %p69
    %p72 = scmp.ne.s32.totalorder %s55, %s71
    %p73 = scmp.eq.s32.totalorder %s17, 0
    %p74 = por %p72, %p73
    %s75 = smul.u32 %s19, 8
    %s76 = ssub.s32 %s75, 1
    %p77 = scmp.gt.s32.totalorder %s76, 0
    %s78 = scalar_select %p77, %s76, 0
    %s79 = smul.u32 %s40, 8
    %s80 = ssub.s32 %s79, 1
    %p81 = scmp.gt.s32.totalorder %s80, 0
    %s82 = scalar_select %p81, %s80, 0
    %s83 = ssub.s32 %s18, %s44
    %s84 = ssub.s32 %s78, %s82
    %s85 = sor.u32 %s83, %s84
    %s86 = ssub.s32 %s21, %s32
    %s87 = sor.u32 %s85, %s86
    %p88 = scmp.eq.s32.totalorder %s87, 0
    %s90 = sadd.s32 %s89, 1
    %s91 = scalar_select %p88, %s89, %s90
    %p94 = pneg %p88
    %p95 = scmp.eq.s32.totalorder %s11, 3
    %p96 = por %p94, %p95
    %p97 = scmp.ne.s32.totalorder %s89, %s92
    %p98 = scmp.eq.s32.totalorder %s11, 0
    %p99 = por %p97, %p98
    %p100 = scmp.ne.s32.totalorder %s89, %s92
    %p101 = scmp.eq.s32.totalorder %s16, 3
    %p102 = por %p100, %p101
    %p103 = scmp.ne.s32.totalorder %s92, %s93
    %p104 = scmp.eq.s32.totalorder %s16, 0
    %p105 = por %p103, %p104
    %p106 = scmp.ne.s32.totalorder %s92, %s93
    %p107 = scmp.eq.s32.totalorder %s17, 3
    %p108 = por %p106, %p107
    %p110 = scmp.ne.s32.totalorder %s93, %s109
    %p111 = scmp.eq.s32.totalorder %s17, 0
    %p112 = por %p110, %p111
    %s113 = sadd.s32 %s19, 1
    %s114 = smul.u32 %s113, 8
    %p115 = scmp.lt.s32.totalorder %s114, 15
    %s116 = scalar_select %p115, %s114, 15
    %s117 = sadd.s32 %s40, 1
    %s118 = smul.u32 %s117, 8
    %p119 = scmp.lt.s32.totalorder %s118, 15
    %s120 = scalar_select %p119, %s118, 15
    %s121 = ssub.s32 %s18, %s44
    %s122 = ssub.s32 %s116, %s120
    %s123 = sor.u32 %s121, %s122
    %s124 = ssub.s32 %s21, %s32
    %s125 = sor.u32 %s123, %s124
    %p126 = scmp.eq.s32.totalorder %s125, 0
    %s128 = sadd.s32 %s127, 1
    %s129 = scalar_select %p126, %s127, %s128
    %p132 = pneg %p126
    %p133 = scmp.eq.s32.totalorder %s11, 3
    %p134 = por %p132, %p133
    %p135 = scmp.ne.s32.totalorder %s127, %s130
    %p136 = scmp.eq.s32.totalorder %s11, 0
    %p137 = por %p135, %p136
    %p138 = scmp.ne.s32.totalorder %s127, %s130
    %p139 = scmp.eq.s32.totalorder %s16, 3
    %p140 = por %p138, %p139
    %p141 = scmp.ne.s32.totalorder %s130, %s131
    %p142 = scmp.eq.s32.totalorder %s16, 0
    %p143 = por %p141, %p142
    %p144 = scmp.ne.s32.totalorder %s130, %s131
    %p145 = scmp.eq.s32.totalorder %s17, 3
    %p146 = por %p144, %p145
    %p148 = scmp.ne.s32.totalorder %s131, %s147
    %p149 = scmp.eq.s32.totalorder %s17, 0
    %p150 = por %p148, %p149
    %s152 = sadd.s32 %s151, 1
    %p155 = scmp.eq.s32.totalorder %s11, 3
    %p156 = scmp.ne.s32.totalorder %s151, %s153
    %p157 = scmp.eq.s32.totalorder %s11, 0
    %p158 = por %p156, %p157
    %p159 = scmp.ne.s32.totalorder %s151, %s153
    %p160 = scmp.eq.s32.totalorder %s16, 3
    %p161 = por %p159, %p160
    %p162 = scmp.ne.s32.totalorder %s153, %s154
    %p163 = scmp.eq.s32.totalorder %s16, 0
    %p164 = por %p162, %p163
    %p165 = scmp.ne.s32.totalorder %s153, %s154
    %p166 = scmp.eq.s32.totalorder %s17, 3
    %p167 = por %p165, %p166
    %p169 = scmp.ne.s32.totalorder %s154, %s168
    %p170 = scmp.eq.s32.totalorder %s17, 0
    %p171 = por %p169, %p170
    %s172 = ssub.s32 %s20, %s36
    %p173 = scmp.eq.s32.totalorder %s172, 0
    %s175 = sadd.s32 %s174, 1
    %s176 = scalar_select %p173, %s174, %s175
    %p179 = pneg %p173
    %p180 = scmp.eq.s32.totalorder %s11, 3
    %p181 = por %p179, %p180
    %p182 = scmp.ne.s32.totalorder %s174, %s177
    %p183 = scmp.eq.s32.totalorder %s11, 0
    %p184 = por %p182, %p183
    %p185 = scmp.ne.s32.totalorder %s174, %s177
    %p186 = scmp.eq.s32.totalorder %s16, 3
    %p187 = por %p185, %p186
    %p188 = scmp.ne.s32.totalorder %s177, %s178
    %p189 = scmp.eq.s32.totalorder %s16, 0
    %p190 = por %p188, %p189
    %p191 = scmp.ne.s32.totalorder %s177, %s178
    %p192 = scmp.eq.s32.totalorder %s17, 3
    %p193 = por %p191, %p192
    %p195 = scmp.ne.s32.totalorder %s178, %s194
    %p196 = scmp.eq.s32.totalorder %s17, 0
    %p197 = por %p195, %p196
    %s198 = ssub.s32 %s18, %s44
    %s199 = ssub.s32 %s19, %s40
    %s200 = sor.u32 %s198, %s199
    %s201 = ssub.s32 %s20, %s36
    %s202 = sor.u32 %s200, %s201
    %p203 = scmp.eq.s32.totalorder %s202, 0
    %s205 = sadd.s32 %s204, 1
    %s206 = scalar_select %p203, %s204, %s205
    %p209 = pneg %p203
    %p210 = scmp.eq.s32.totalorder %s11, 3
    %p211 = por %p209, %p210
    %p212 = scmp.ne.s32.totalorder %s204, %s207
    %p213 = scmp.eq.s32.totalorder %s11, 0
    %p214 = por %p212, %p213
    %p215 = scmp.ne.s32.totalorder %s204, %s207
    %p216 = scmp.eq.s32.totalorder %s16, 3
    %p217 = por %p215, %p216
    %p218 = scmp.ne.s32.totalorder %s207, %s208
    %p219 = scmp.eq.s32.totalorder %s16, 0
    %p220 = por %p218, %p219
    %p221 = scmp.ne.s32.totalorder %s207, %s208
    %p222 = scmp.eq.s32.totalorder %s17, 3
    %p223 = por %p221, %p222
    %p225 = scmp.ne.s32.totalorder %s208, %s224
    %p226 = scmp.eq.s32.totalorder %s17, 0
    %p227 = por %p225, %p226
    %p228 = scmp.le.s32.totalorder 1, %s11
    %p229 = scmp.lt.s32.totalorder %s11, 5
    %p230 = pnand %p228, %p229
    %p231 = pneg %p230
    // Predicated region
    $region9: #{spade_resblock_forward.23} parent=5 // pred_check
      _
    $region10: #{spade_resblock_forward.23} parent=5 // pred_check_branch
      %233 = sbr.rel (%p230) target = $region12
    $region11: #{spade_resblock_forward.23} parent=5 // pred_region
      %s234 = ssub.s32 %s11, 1
      // Predicated region
      $region13: #{spade_resblock_forward.23} parent=11 // pred_check
        %p235 = pneg %p164
      $region14: #{spade_resblock_forward.23} parent=11 // pred_check_branch
        %237 = sbr.rel (%p235) target = $region16
      $region15: #{spade_resblock_forward.23} parent=11 // pred_region
        _
      $region16: #{spade_resblock_forward.23} parent=11 // pred_fallthru
        _
      // Predicated region
      $region17: #{spade_resblock_forward.23} parent=11 // pred_check
        %p238 = pneg %p190
      $region18: #{spade_resblock_forward.23} parent=11 // pred_check_branch
        %240 = sbr.rel (%p238) target = $region20
      $region19: #{spade_resblock_forward.23} parent=11 // pred_region
        %p241 = scmp.lt.s32.totalorder %s24, 0
        %s242 = scalar_select %p241, %s24, 0
        %s243 = scalar_lea.vmem %s4, %s242
      $region20: #{spade_resblock_forward.23} parent=11 // pred_fallthru
        _
    $region12: #{spade_resblock_forward.23} parent=5 // pred_fallthru
      _
    %p244 = scmp.lt.s32.totalorder %s11, 4
    // Predicated region
    $region21: #{spade_resblock_forward.23} parent=5 // pred_check
      %p245 = pneg %p244
    $region22: #{spade_resblock_forward.23} parent=5 // pred_check_branch
      %247 = sbr.rel (%p245) target = $region24
    $region23: #{spade_resblock_forward.23} parent=5 // pred_region
      // Predicated region
      $region25: #{spade_resblock_forward.23} parent=23 // pred_check
        %p248 = pneg %p61
      $region26: #{spade_resblock_forward.23} parent=23 // pred_check_branch
        %250 = sbr.rel (%p248) target = $region28
      $region27: #{spade_resblock_forward.23} parent=23 // pred_region
        %s251 = smul.u32 8, %s19
        %p252 = scmp.lt.s32.totalorder %s18, 1
        %s253 = scalar_select %p252, %s18, 1
        %p254 = scmp.lt.s32.totalorder %s251, 15
        %s255 = scalar_select %p254, %s251, 15
        %p256 = scmp.lt.s32.totalorder %s21, 0
        %s257 = scalar_select %p256, %s21, 0
        %s258 = smul.addr %s255, 2
        %s259 = sadd.s32 %s257, %s258
        %s260 = smul.addr %s253, 32
        %s261 = sadd.s32 %s259, %s260
        %s262 = smul.addr %s261, 4
        %s263 = scalar_lea.vmem %s0, %s262
        %s264 = smul.u32 8, %s19
      $region28: #{spade_resblock_forward.23} parent=23 // pred_fallthru
        _
      // Predicated region
      $region29: #{spade_resblock_forward.23} parent=23 // pred_check
        %p265 = pneg %p99
      $region30: #{spade_resblock_forward.23} parent=23 // pred_check_branch
        %267 = sbr.rel (%p265) target = $region32
      $region31: #{spade_resblock_forward.23} parent=23 // pred_region
        %s268 = smul.u32 %s19, 8
        %s269 = ssub.s32 %s268, 1
        %p270 = scmp.gt.s32.totalorder %s269, 0
        %s271 = scalar_select %p270, %s269, 0
        %p272 = scmp.lt.s32.totalorder %s18, 1
        %s273 = scalar_select %p272, %s18, 1
        %p274 = scmp.lt.s32.totalorder %s271, 15
        %s275 = scalar_select %p274, %s271, 15
        %p276 = scmp.lt.s32.totalorder %s21, 0
        %s277 = scalar_select %p276, %s21, 0
        %s278 = smul.addr %s275, 2
        %s279 = sadd.s32 %s277, %s278
        %s280 = smul.addr %s273, 32
        %s281 = sadd.s32 %s279, %s280
        %s282 = smul.addr %s281, 4
        %s283 = scalar_lea.vmem %s1, %s282
        %s284 = smul.u32 %s19, 8
        %s285 = ssub.s32 %s284, 1
        %p286 = scmp.gt.s32.totalorder %s285, 0
        %s287 = scalar_select %p286, %s285, 0
      $region32: #{spade_resblock_forward.23} parent=23 // pred_fallthru
        _
      // Predicated region
      $region33: #{spade_resblock_forward.23} parent=23 // pred_check
        %p288 = pneg %p137
      $region34: #{spade_resblock_forward.23} parent=23 // pred_check_branch
        %290 = sbr.rel (%p288) target = $region36
      $region35: #{spade_resblock_forward.23} parent=23 // pred_region
        %s291 = sadd.s32 %s19, 1
        %s292 = smul.u32 %s291, 8
        %p293 = scmp.lt.s32.totalorder %s292, 15
        %s294 = scalar_select %p293, %s292, 15
        %p295 = scmp.lt.s32.totalorder %s18, 1
        %s296 = scalar_select %p295, %s18, 1
        %p297 = scmp.lt.s32.totalorder %s294, 15
        %s298 = scalar_select %p297, %s294, 15
        %p299 = scmp.lt.s32.totalorder %s21, 0
        %s300 = scalar_select %p299, %s21, 0
        %s301 = smul.addr %s298, 2
        %s302 = sadd.s32 %s300, %s301
        %s303 = smul.addr %s296, 32
        %s304 = sadd.s32 %s302, %s303
        %s305 = smul.addr %s304, 4
        %s306 = scalar_lea.vmem %s2, %s305
        %s307 = sadd.s32 %s19, 1
        %s308 = smul.u32 %s307, 8
        %p309 = scmp.lt.s32.totalorder %s308, 15
        %s310 = scalar_select %p309, %s308, 15
      $region36: #{spade_resblock_forward.23} parent=23 // pred_fallthru
        _
    $region24: #{spade_resblock_forward.23} parent=5 // pred_fallthru
      _
    %p311 = scmp.le.s32.totalorder 1, %s11
    %p312 = scmp.lt.s32.totalorder %s11, 5
    %p313 = pnand %p311, %p312
    %p314 = pneg %p313
    // Predicated region
    $region37: #{spade_resblock_forward.23} parent=5 // pred_check
      _
    $region38: #{spade_resblock_forward.23} parent=5 // pred_check_branch
      %316 = sbr.rel (%p313) target = $region40
    $region39: #{spade_resblock_forward.23} parent=5 // pred_region
      %s317 = ssub.s32 %s11, 1
      %s318 = smul.u32 8, %s23
      %p319 = scmp.lt.s32.totalorder %s22, 1
      %s320 = scalar_select %p319, %s22, 1
      %p321 = scmp.lt.s32.totalorder %s318, 15
      %s322 = scalar_select %p321, %s318, 15
      %p323 = scmp.lt.s32.totalorder %s25, 0
      %s324 = scalar_select %p323, %s25, 0
      %s325 = smul.addr %s322, 2
      %s326 = sadd.s32 %s324, %s325
      %s327 = smul.addr %s320, 32
      %s328 = sadd.s32 %s326, %s327
      %s329 = smul.addr %s328, 4
      %s330 = scalar_lea.vmem %s0, %s329
      %p331 = pneg %p67
      %p332 = pneg %p64
      %s333 = smul.u32 %s23, 8
      %s334 = ssub.s32 %s333, 1
      %p335 = scmp.gt.s32.totalorder %s334, 0
      %s336 = scalar_select %p335, %s334, 0
      %p337 = scmp.lt.s32.totalorder %s22, 1
      %s338 = scalar_select %p337, %s22, 1
      %p339 = scmp.lt.s32.totalorder %s336, 15
      %s340 = scalar_select %p339, %s336, 15
      %p341 = scmp.lt.s32.totalorder %s25, 0
      %s342 = scalar_select %p341, %s25, 0
      %s343 = smul.addr %s340, 2
      %s344 = sadd.s32 %s342, %s343
      %s345 = smul.addr %s338, 32
      %s346 = sadd.s32 %s344, %s345
      %s347 = smul.addr %s346, 4
      %s348 = scalar_lea.vmem %s1, %s347
      %p349 = pneg %p105
      %p350 = pneg %p102
      %s351 = sadd.s32 %s23, 1
      %s352 = smul.u32 %s351, 8
      %p353 = scmp.lt.s32.totalorder %s352, 15
      %s354 = scalar_select %p353, %s352, 15
      %p355 = scmp.lt.s32.totalorder %s22, 1
      %s356 = scalar_select %p355, %s22, 1
      %p357 = scmp.lt.s32.totalorder %s354, 15
      %s358 = scalar_select %p357, %s354, 15
      %p359 = scmp.lt.s32.totalorder %s25, 0
      %s360 = scalar_select %p359, %s25, 0
      %s361 = smul.addr %s358, 2
      %s362 = sadd.s32 %s360, %s361
      %s363 = smul.addr %s356, 32
      %s364 = sadd.s32 %s362, %s363
      %s365 = smul.addr %s364, 4
      %s366 = scalar_lea.vmem %s2, %s365
      %p367 = pneg %p143
      %p368 = pneg %p140
      %p369 = pneg %p164
      %p370 = pneg %p161
      %p371 = scmp.lt.s32.totalorder %s24, 0
      %s372 = scalar_select %p371, %s24, 0
      %s373 = scalar_lea.vmem %s4, %s372
      %p374 = pneg %p190
      %p375 = pneg %p187
      %p376 = pneg %p220
      %p377 = pneg %p217
      %s378 = smul.u32 8, %s23
      %p379 = scmp.lt.s32.totalorder %s22, 1
      %s380 = scalar_select %p379, %s22, 1
      %p381 = scmp.lt.s32.totalorder %s378, 15
      %s382 = scalar_select %p381, %s378, 15
      %p383 = scmp.lt.s32.totalorder %s24, 0
      %s384 = scalar_select %p383, %s24, 0
      %s385 = smul.addr %s382, 2
      %s386 = sadd.s32 %s384, %s385
      %s387 = smul.addr %s380, 32
      %s388 = sadd.s32 %s386, %s387
      %s389 = smul.addr %s388, 4
      %s390 = scalar_lea.vmem %s5, %s389
      %s391 = smul.u32 8, %s23
      %p392 = scmp.lt.s32.totalorder %s22, 1
      %s393 = scalar_select %p392, %s22, 1
      %p394 = scmp.lt.s32.totalorder %s391, 15
      %s395 = scalar_select %p394, %s391, 15
      %p396 = scmp.lt.s32.totalorder %s25, 0
      %s397 = scalar_select %p396, %s25, 0
      %s398 = smul.addr %s395, 2
      %s399 = sadd.s32 %s397, %s398
      %s400 = smul.addr %s393, 32
      %s401 = sadd.s32 %s399, %s400
      %s402 = smul.addr %s401, 4
      %s403 = scalar_lea.vmem %s0, %s402
      %s404 = smul.u32 8, %s23
      %s405 = smul.u32 %s23, 8
      %s406 = ssub.s32 %s405, 1
      %p407 = scmp.gt.s32.totalorder %s406, 0
      %s408 = scalar_select %p407, %s406, 0
      %p409 = scmp.lt.s32.totalorder %s22, 1
      %s410 = scalar_select %p409, %s22, 1
      %p411 = scmp.lt.s32.totalorder %s408, 15
      %s412 = scalar_select %p411, %s408, 15
      %p413 = scmp.lt.s32.totalorder %s25, 0
      %s414 = scalar_select %p413, %s25, 0
      %s415 = smul.addr %s412, 2
      %s416 = sadd.s32 %s414, %s415
      %s417 = smul.addr %s410, 32
      %s418 = sadd.s32 %s416, %s417
      %s419 = smul.addr %s418, 4
      %s420 = scalar_lea.vmem %s1, %s419
      %s421 = smul.u32 %s23, 8
      %s422 = ssub.s32 %s421, 1
      %p423 = scmp.gt.s32.totalorder %s422, 0
      %s424 = scalar_select %p423, %s422, 0
      %s425 = sadd.s32 %s23, 1
      %s426 = smul.u32 %s425, 8
      %p427 = scmp.lt.s32.totalorder %s426, 15
      %s428 = scalar_select %p427, %s426, 15
      %p429 = scmp.lt.s32.totalorder %s22, 1
      %s430 = scalar_select %p429, %s22, 1
      %p431 = scmp.lt.s32.totalorder %s428, 15
      %s432 = scalar_select %p431, %s428, 15
      %p433 = scmp.lt.s32.totalorder %s25, 0
      %s434 = scalar_select %p433, %s25, 0
      %s435 = smul.addr %s432, 2
      %s436 = sadd.s32 %s434, %s435
      %s437 = smul.addr %s430, 32
      %s438 = sadd.s32 %s436, %s437
      %s439 = smul.addr %s438, 4
      %s440 = scalar_lea.vmem %s2, %s439
      %s441 = sadd.s32 %s23, 1
      %s442 = smul.u32 %s441, 8
      %p443 = scmp.lt.s32.totalorder %s442, 15
      %s444 = scalar_select %p443, %s442, 15
      %p445 = scmp.lt.s32.totalorder %s24, 0
      %s446 = scalar_select %p445, %s24, 0
      %s447 = scalar_lea.vmem %s4, %s446
      %s448 = smul.u32 8, %s23
      %p449 = scmp.lt.s32.totalorder %s22, 1
      %s450 = scalar_select %p449, %s22, 1
      %p451 = scmp.lt.s32.totalorder %s448, 15
      %s452 = scalar_select %p451, %s448, 15
      %p453 = scmp.lt.s32.totalorder %s24, 0
      %s454 = scalar_select %p453, %s24, 0
      %s455 = smul.addr %s452, 2
      %s456 = sadd.s32 %s454, %s455
      %s457 = smul.addr %s450, 32
      %s458 = sadd.s32 %s456, %s457
      %s459 = smul.addr %s458, 4
      %s460 = scalar_lea.vmem %s5, %s459
      %s461 = smul.u32 8, %s23
      %v463 = vld [vmem:[%s403] sm:$0xf]
      %v464 = vld [vmem:[%s403 + $0x4] sm:$0xf]
      %v465 = vld [vmem:[%s403 + $0x8] sm:$0xf]
      %v466 = vld [vmem:[%s403 + $0xc] sm:$0xf]
      %v467 = vld [vmem:[%s403 + $0x10] sm:$0xf]
      %v468 = vld [vmem:[%s403 + $0x14] sm:$0xf]
      %v469 = vld [vmem:[%s403 + $0x18] sm:$0xf]
      %v470 = vld [vmem:[%s403 + $0x1c] sm:$0xf]
      %v471 = vld [vmem:[%s403 + $0x20] sm:$0xf]
      %v472 = vld [vmem:[%s403 + $0x24] sm:$0xf]
      %v473 = vld [vmem:[%s403 + $0x28] sm:$0xf]
      %v474 = vld [vmem:[%s403 + $0x2c] sm:$0xf]
      %v475 = vld [vmem:[%s403 + $0x30] sm:$0xf]
      %v476 = vld [vmem:[%s403 + $0x34] sm:$0xf]
      %v477 = vld [vmem:[%s403 + $0x38] sm:$0xf]
      %v478 = vld [vmem:[%s403 + $0x3c] sm:$0xf]
      %v479 = vunpack.c.l.bf16 %v463
      %v480 = vunpack.c.l.bf16 %v464
      %v481 = vunpack.c.l.bf16 %v465
      %v482 = vunpack.c.l.bf16 %v466
      %v483 = vunpack.c.l.bf16 %v467
      %v484 = vunpack.c.l.bf16 %v468
      %v485 = vunpack.c.l.bf16 %v469
      %v486 = vunpack.c.l.bf16 %v470
      %v487 = vunpack.c.l.bf16 %v471
      %v488 = vunpack.c.l.bf16 %v472
      %v489 = vunpack.c.l.bf16 %v473
      %v490 = vunpack.c.l.bf16 %v474
      %v491 = vunpack.c.l.bf16 %v475
      %v492 = vunpack.c.l.bf16 %v476
      %v493 = vunpack.c.l.bf16 %v477
      %v494 = vunpack.c.l.bf16 %v478
      %v495 = vld [vmem:[%s420] sm:$0xf]
      %v496 = vld [vmem:[%s420 + $0x4] sm:$0xf]
      %v497 = vunpack.c.l.bf16 %v495
      %v498 = vunpack.c.l.bf16 %v496
      %v499 = vld [vmem:[%s440] sm:$0xf]
      %v500 = vld [vmem:[%s440 + $0x4] sm:$0xf]
      %v501 = vunpack.c.l.bf16 %v499
      %v502 = vunpack.c.l.bf16 %v500
      %p503 = scmp.gt.s32.totalorder %s23, 0
      %s504 = scalar_select %p503, 1, 0
      %s505 = scvt.s32.f32 %s504
      %p506 = scmp.lt.s32.totalorder %s23, 1
      %s507 = scalar_select %p506, 1, 0
      %s508 = scvt.s32.f32 %s507
      %v509 = vstv %s505
      %v510 = vmul.f32 %v497, %v509
      %v511 = vmul.f32 %v498, %v509
      %s512 = ssub.f32 1.0, %s505
      %v513 = vstv %s512
      %v514 = vmul.f32 %v481, %v513
      %v515 = vmul.f32 %v482, %v513
      %v516 = vadd.f32 %v510, %v514
      %v517 = vadd.f32 %v511, %v515
      %v518 = vstv %s508
      %v519 = vmul.f32 %v501, %v518
      %v520 = vmul.f32 %v502, %v518
      %s521 = ssub.f32 1.0, %s508
      %v522 = vstv %s521
      %v523 = vmul.f32 %v491, %v522
      %v524 = vmul.f32 %v492, %v522
      %v525 = vadd.f32 %v519, %v523
      %v526 = vadd.f32 %v520, %v524
      %v527 = vlaneseq
      %v528 = vshrl.u32 %v527, 7
      %v529 = vadd.s32 %v528, 8
      %vm530 = vcmp.eq.s32.totalorder %v528, 0
      %vm531 = vcmp.eq.s32.totalorder %v529, 0
      %vm532 = vcmp.eq.s32.totalorder %v528, 15
      %vm533 = vcmp.eq.s32.totalorder %v529, 15
      %v534 = vrot.slane %v516, 7
      %v535 = vrot.slane %v517, 7
      %v536 = vrot.slane %v479, 7
      %v537 = vrot.slane %v480, 7
      %v538 = vrot.slane %v481, 7
      %v539 = vrot.slane %v482, 7
      %v540 = vrot.slane %v483, 7
      %v541 = vrot.slane %v484, 7
      %v542 = vrot.slane %v485, 7
      %v543 = vrot.slane %v486, 7
      %v544 = vrot.slane %v487, 7
      %v545 = vrot.slane %v488, 7
      %v546 = vrot.slane %v489, 7
      %v547 = vrot.slane %v490, 7
      %v548 = vrot.slane %v491, 7
      %v549 = vrot.slane %v492, 7
      %vm550 = vcmp.lt.s32.totalorder %v528, 1
      %v551 = vsel %vm550, %v548, %v549
      %v552 = vsel %vm550, %v547, %v548
      %v553 = vsel %vm550, %v546, %v547
      %v554 = vsel %vm550, %v545, %v546
      %v555 = vsel %vm550, %v544, %v545
      %v556 = vsel %vm550, %v543, %v544
      %v557 = vsel %vm550, %v542, %v543
      %v558 = vsel %vm550, %v541, %v542
      %v559 = vsel %vm550, %v540, %v541
      %v560 = vsel %vm550, %v539, %v540
      %v561 = vsel %vm550, %v538, %v539
      %v562 = vsel %vm550, %v537, %v538
      %v563 = vsel %vm550, %v536, %v537
      %v564 = vsel %vm550, %v535, %v536
      %v565 = vsel %vm550, %v534, %v535
      %v566 = vsel %vm550, %v549, %v534
      %v567 = vrot.slane %v516, 1
      %v568 = vrot.slane %v517, 1
      %v569 = vrot.slane %v479, 1
      %v570 = vrot.slane %v480, 1
      %v571 = vrot.slane %v481, 1
      %v572 = vrot.slane %v482, 1
      %v573 = vrot.slane %v483, 1
      %v574 = vrot.slane %v484, 1
      %v575 = vrot.slane %v485, 1
      %v576 = vrot.slane %v486, 1
      %v577 = vrot.slane %v487, 1
      %v578 = vrot.slane %v488, 1
      %v579 = vrot.slane %v489, 1
      %v580 = vrot.slane %v490, 1
      %v581 = vrot.slane %v491, 1
      %v582 = vrot.slane %v492, 1
      %vm583 = vcmp.lt.s32.totalorder %v528, 7
      %v584 = vsel %vm583, %v581, %v582
      %v585 = vsel %vm583, %v580, %v581
      %v586 = vsel %vm583, %v579, %v580
      %v587 = vsel %vm583, %v578, %v579
      %v588 = vsel %vm583, %v577, %v578
      %v589 = vsel %vm583, %v576, %v577
      %v590 = vsel %vm583, %v575, %v576
      %v591 = vsel %vm583, %v574, %v575
      %v592 = vsel %vm583, %v573, %v574
      %v593 = vsel %vm583, %v572, %v573
      %v594 = vsel %vm583, %v571, %v572
      %v595 = vsel %vm583, %v570, %v571
      %v596 = vsel %vm583, %v569, %v570
      %v597 = vsel %vm583, %v568, %v569
      %v598 = vsel %vm583, %v567, %v568
      %v599 = vsel %vm583, %v582, %v567
      %v600 = vsel %vm530, 1, 0
      %v601 = vsel %vm531, 1, 0
      %vm602 = vcmp.eq.s32.totalorder %v600, 1
      %vm603 = vcmp.eq.s32.totalorder %v601, 1
      %v604 = vsel %vm602, %v598, %v566
      %v605 = vsel %vm603, %v597, %v565
      %v606 = vsel %vm602, %v596, %v564
      %v607 = vsel %vm603, %v595, %v563
      %v608 = vsel %vm602, %v594, %v562
      %v609 = vsel %vm603, %v593, %v561
      %v610 = vsel %vm602, %v592, %v560
      %v611 = vsel %vm603, %v591, %v559
      %v612 = vsel %vm602, %v590, %v558
      %v613 = vsel %vm603, %v589, %v557
      %v614 = vsel %vm602, %v588, %v556
      %v615 = vsel %vm603, %v587, %v555
      %v616 = vsel %vm602, %v586, %v554
      %v617 = vsel %vm603, %v585, %v553
      %v618 = vsel %vm602, %v584, %v552
      %v619 = vsel %vm603, %v599, %v551
      %v620 = vsel %vm532, 1, 0
      %v621 = vsel %vm533, 1, 0
      %vm622 = vcmp.eq.s32.totalorder %v620, 1
      %vm623 = vcmp.eq.s32.totalorder %v621, 1
      %v624 = vsel %vm622, %v566, %v598
      %v625 = vsel %vm623, %v565, %v597
      %v626 = vsel %vm622, %v564, %v596
      %v627 = vsel %vm623, %v563, %v595
      %v628 = vsel %vm622, %v562, %v594
      %v629 = vsel %vm623, %v561, %v593
      %v630 = vsel %vm622, %v560, %v592
      %v631 = vsel %vm623, %v559, %v591
      %v632 = vsel %vm622, %v558, %v590
      %v633 = vsel %vm623, %v557, %v589
      %v634 = vsel %vm622, %v556, %v588
      %v635 = vsel %vm623, %v555, %v587
      %v636 = vsel %vm622, %v554, %v586
      %v637 = vsel %vm623, %v553, %v585
      %v638 = vsel %vm622, %v552, %v584
      %v639 = vsel %vm623, %v551, %v599
      %v640 = vpack.c.bf16 %v605, %v604
      %v641 = vpack.c.bf16 %v607, %v606
      %v642 = vpack.c.bf16 %v609, %v608
      %v643 = vpack.c.bf16 %v611, %v610
      %v644 = vpack.c.bf16 %v613, %v612
      %v645 = vpack.c.bf16 %v615, %v614
      %v646 = vpack.c.bf16 %v617, %v616
      %v647 = vpack.c.bf16 %v619, %v618
      %v648 = vpack.c.bf16 %v517, %v516
      %v649 = vpack.c.bf16 %v480, %v479
      %v650 = vpack.c.bf16 %v482, %v481
      %v651 = vpack.c.bf16 %v484, %v483
      %v652 = vpack.c.bf16 %v486, %v485
      %v653 = vpack.c.bf16 %v488, %v487
      %v654 = vpack.c.bf16 %v490, %v489
      %v655 = vpack.c.bf16 %v492, %v491
      %v656 = vpack.c.bf16 %v625, %v624
      %v657 = vpack.c.bf16 %v627, %v626
      %v658 = vpack.c.bf16 %v629, %v628
      %v659 = vpack.c.bf16 %v631, %v630
      %v660 = vpack.c.bf16 %v633, %v632
      %v661 = vpack.c.bf16 %v635, %v634
      %v662 = vpack.c.bf16 %v637, %v636
      %v663 = vpack.c.bf16 %v639, %v638
      %s664 = smul.u32 %s25, 48
      %s665 = smul.u32 %s24, 144
      %s666 = sadd.s32 %s664, %s665
      %s667 = smul.addr %s666, 4
      %s668 = scalar_lea.vmem %s3, %s667
      %v669 = vld [vmem:[%s668] sm:$0xf]
      %v670 = vld [vmem:[%s668 + $0x4] sm:$0xf]
      %v671 = vld [vmem:[%s668 + $0x8] sm:$0xf]
      %v672 = vld [vmem:[%s668 + $0xc] sm:$0xf]
      %v673 = vld [vmem:[%s668 + $0x10] sm:$0xf]
      %v674 = vld [vmem:[%s668 + $0x14] sm:$0xf]
      %v675 = vld [vmem:[%s668 + $0x18] sm:$0xf]
      %v676 = vld [vmem:[%s668 + $0x1c] sm:$0xf]
      %v677 = vld [vmem:[%s668 + $0x20] sm:$0xf]
      %v678 = vld [vmem:[%s668 + $0x24] sm:$0xf]
      %v679 = vld [vmem:[%s668 + $0x28] sm:$0xf]
      %v680 = vld [vmem:[%s668 + $0x2c] sm:$0xf]
      %v681 = vld [vmem:[%s668 + $0x30] sm:$0xf]
      %v682 = vld [vmem:[%s668 + $0x34] sm:$0xf]
      %v683 = vld [vmem:[%s668 + $0x38] sm:$0xf]
      %v684 = vld [vmem:[%s668 + $0x3c] sm:$0xf]
      %v685 = vld [vmem:[%s668 + $0x40] sm:$0xf]
      %v686 = vld [vmem:[%s668 + $0x44] sm:$0xf]
      %v687 = vld [vmem:[%s668 + $0x48] sm:$0xf]
      %v688 = vld [vmem:[%s668 + $0x4c] sm:$0xf]
      %v689 = vld [vmem:[%s668 + $0x50] sm:$0xf]
      %v690 = vld [vmem:[%s668 + $0x54] sm:$0xf]
      %v691 = vld [vmem:[%s668 + $0x58] sm:$0xf]
      %v692 = vld [vmem:[%s668 + $0x5c] sm:$0xf]
      %v693 = vld [vmem:[%s668 + $0x60] sm:$0xf]
      %v694 = vld [vmem:[%s668 + $0x64] sm:$0xf]
      %v695 = vld [vmem:[%s668 + $0x68] sm:$0xf]
      %v696 = vld [vmem:[%s668 + $0x6c] sm:$0xf]
      %v697 = vld [vmem:[%s668 + $0x70] sm:$0xf]
      %v698 = vld [vmem:[%s668 + $0x74] sm:$0xf]
      %v699 = vld [vmem:[%s668 + $0x78] sm:$0xf]
      %v700 = vld [vmem:[%s668 + $0x7c] sm:$0xf]
      %v701 = vld [vmem:[%s668 + $0x80] sm:$0xf]
      %v702 = vld [vmem:[%s668 + $0x84] sm:$0xf]
      %v703 = vld [vmem:[%s668 + $0x88] sm:$0xf]
      %v704 = vld [vmem:[%s668 + $0x8c] sm:$0xf]
      %v705 = vld [vmem:[%s668 + $0x90] sm:$0xf]
      %v706 = vld [vmem:[%s668 + $0x94] sm:$0xf]
      %v707 = vld [vmem:[%s668 + $0x98] sm:$0xf]
      %v708 = vld [vmem:[%s668 + $0x9c] sm:$0xf]
      %v709 = vld [vmem:[%s668 + $0xa0] sm:$0xf]
      %v710 = vld [vmem:[%s668 + $0xa4] sm:$0xf]
      %v711 = vld [vmem:[%s668 + $0xa8] sm:$0xf]
      %v712 = vld [vmem:[%s668 + $0xac] sm:$0xf]
      %v713 = vld [vmem:[%s668 + $0xb0] sm:$0xf]
      %v714 = vld [vmem:[%s668 + $0xb4] sm:$0xf]
      %v715 = vld [vmem:[%s668 + $0xb8] sm:$0xf]
      %v716 = vld [vmem:[%s668 + $0xbc] sm:$0xf]
      %v717 = vrot.slane %v493, 7
      %v718 = vrot.slane %v494, 7
      %v719 = vsel %vm550, %v717, %v718
      %v720 = vsel %vm550, %v549, %v717
      %v721 = vsel %vm550, %v718, %v536
      %v722 = vrot.slane %v493, 1
      %v723 = vrot.slane %v494, 1
      %v724 = vsel %vm583, %v722, %v723
      %v725 = vsel %vm583, %v582, %v722
      %v726 = vsel %vm583, %v723, %v569
      %v727 = vsel %vm602, %v596, %v721
      %v728 = vsel %vm603, %v725, %v551
      %v729 = vsel %vm602, %v724, %v720
      %v730 = vsel %vm603, %v726, %v719
      %v731 = vsel %vm622, %v721, %v596
      %v732 = vsel %vm623, %v551, %v725
      %v733 = vsel %vm622, %v720, %v724
      %v734 = vsel %vm623, %v719, %v726
      %v735 = vpack.c.bf16 %v607, %v727
      %v736 = vpack.c.bf16 %v728, %v618
      %v737 = vpack.c.bf16 %v730, %v729
      %v738 = vpack.c.bf16 %v494, %v493
      %v739 = vpack.c.bf16 %v627, %v731
      %v740 = vpack.c.bf16 %v732, %v638
      %v741 = vpack.c.bf16 %v734, %v733
      %s742 = sadd.s32 %s664, 48
      %s743 = sadd.s32 %s742, %s665
      %s744 = smul.addr %s743, 4
      %s745 = scalar_lea.vmem %s3, %s744
      %v746 = vld [vmem:[%s745] sm:$0xf]
      %v747 = vld [vmem:[%s745 + $0x4] sm:$0xf]
      %v748 = vld [vmem:[%s745 + $0x8] sm:$0xf]
      %v749 = vld [vmem:[%s745 + $0xc] sm:$0xf]
      %v750 = vld [vmem:[%s745 + $0x10] sm:$0xf]
      %v751 = vld [vmem:[%s745 + $0x14] sm:$0xf]
      %v752 = vld [vmem:[%s745 + $0x18] sm:$0xf]
      %v753 = vld [vmem:[%s745 + $0x1c] sm:$0xf]
      %v754 = vld [vmem:[%s745 + $0x20] sm:$0xf]
      %v755 = vld [vmem:[%s745 + $0x24] sm:$0xf]
      %v756 = vld [vmem:[%s745 + $0x28] sm:$0xf]
      %v757 = vld [vmem:[%s745 + $0x2c] sm:$0xf]
      %v758 = vld [vmem:[%s745 + $0x30] sm:$0xf]
      %v759 = vld [vmem:[%s745 + $0x34] sm:$0xf]
      %v760 = vld [vmem:[%s745 + $0x38] sm:$0xf]
      %v761 = vld [vmem:[%s745 + $0x3c] sm:$0xf]
      %v762 = vld [vmem:[%s745 + $0x40] sm:$0xf]
      %v763 = vld [vmem:[%s745 + $0x44] sm:$0xf]
      %v764 = vld [vmem:[%s745 + $0x48] sm:$0xf]
      %v765 = vld [vmem:[%s745 + $0x4c] sm:$0xf]
      %v766 = vld [vmem:[%s745 + $0x50] sm:$0xf]
      %v767 = vld [vmem:[%s745 + $0x54] sm:$0xf]
      %v768 = vld [vmem:[%s745 + $0x58] sm:$0xf]
      %v769 = vld [vmem:[%s745 + $0x5c] sm:$0xf]
      %v770 = vld [vmem:[%s745 + $0x60] sm:$0xf]
      %v771 = vld [vmem:[%s745 + $0x64] sm:$0xf]
      %v772 = vld [vmem:[%s745 + $0x68] sm:$0xf]
      %v773 = vld [vmem:[%s745 + $0x6c] sm:$0xf]
      %v774 = vld [vmem:[%s745 + $0x70] sm:$0xf]
      %v775 = vld [vmem:[%s745 + $0x74] sm:$0xf]
      %v776 = vld [vmem:[%s745 + $0x78] sm:$0xf]
      %v777 = vld [vmem:[%s745 + $0x7c] sm:$0xf]
      %v778 = vld [vmem:[%s745 + $0x80] sm:$0xf]
      %v779 = vld [vmem:[%s745 + $0x84] sm:$0xf]
      %v780 = vld [vmem:[%s745 + $0x88] sm:$0xf]
      %v781 = vld [vmem:[%s745 + $0x8c] sm:$0xf]
      %v782 = vld [vmem:[%s745 + $0x90] sm:$0xf]
      %v783 = vld [vmem:[%s745 + $0x94] sm:$0xf]
      %v784 = vld [vmem:[%s745 + $0x98] sm:$0xf]
      %v785 = vld [vmem:[%s745 + $0x9c] sm:$0xf]
      %v786 = vld [vmem:[%s745 + $0xa0] sm:$0xf]
      %v787 = vld [vmem:[%s745 + $0xa4] sm:$0xf]
      %v788 = vld [vmem:[%s745 + $0xa8] sm:$0xf]
      %v789 = vld [vmem:[%s745 + $0xac] sm:$0xf]
      %v790 = vld [vmem:[%s745 + $0xb0] sm:$0xf]
      %v791 = vld [vmem:[%s745 + $0xb4] sm:$0xf]
      %v792 = vld [vmem:[%s745 + $0xb8] sm:$0xf]
      %v793 = vld [vmem:[%s745 + $0xbc] sm:$0xf]
      %v842 = vunpack.c.l.b16 %v746
      %v843 = vunpack.c.l.b16 %v747
      %v844 = vunpack.c.l.b16 %v748
      %v845 = vunpack.c.l.b16 %v749
      %v846 = vunpack.c.l.b16 %v750
      %v847 = vunpack.c.l.b16 %v751
      %v848 = vunpack.c.l.b16 %v752
      %v849 = vunpack.c.l.b16 %v753
      %v850 = vunpack.c.l.b16 %v754
      %v851 = vunpack.c.l.b16 %v755
      %v852 = vunpack.c.l.b16 %v756
      %v853 = vunpack.c.l.b16 %v757
      %v854 = vunpack.c.l.b16 %v758
      %v855 = vunpack.c.l.b16 %v759
      %v856 = vunpack.c.l.b16 %v760
      %v857 = vunpack.c.l.b16 %v761
      %v858 = vunpack.c.l.b16 %v762
      %v859 = vunpack.c.l.b16 %v763
      %v860 = vunpack.c.l.b16 %v764
      %v861 = vunpack.c.l.b16 %v765
      %v862 = vunpack.c.l.b16 %v766
      %v863 = vunpack.c.l.b16 %v767
      %v864 = vunpack.c.l.b16 %v768
      %v865 = vunpack.c.l.b16 %v769
      %v866 = vunpack.c.l.b16 %v770
      %v867 = vunpack.c.l.b16 %v771
      %v868 = vunpack.c.l.b16 %v772
      %v869 = vunpack.c.l.b16 %v773
      %v870 = vunpack.c.l.b16 %v774
      %v871 = vunpack.c.l.b16 %v775
      %v872 = vunpack.c.l.b16 %v776
      %v873 = vunpack.c.l.b16 %v777
      %v874 = vunpack.c.l.b16 %v778
      %v875 = vunpack.c.l.b16 %v779
      %v876 = vunpack.c.l.b16 %v780
      %v877 = vunpack.c.l.b16 %v781
      %v878 = vunpack.c.l.b16 %v782
      %v879 = vunpack.c.l.b16 %v783
      %v880 = vunpack.c.l.b16 %v784
      %v881 = vunpack.c.l.b16 %v785
      %v882 = vunpack.c.l.b16 %v786
      %v883 = vunpack.c.l.b16 %v787
      %v884 = vunpack.c.l.b16 %v788
      %v885 = vunpack.c.l.b16 %v789
      %v886 = vunpack.c.l.b16 %v790
      %v887 = vunpack.c.l.b16 %v791
      %v888 = vunpack.c.l.b16 %v792
      %v889 = vunpack.c.l.b16 %v793
      %v890 = vpack.c.b16 %v843, %v842
      %v891 = vpack.c.b16 %v845, %v844
      %v892 = vpack.c.b16 %v847, %v846
      %v893 = vpack.c.b16 %v849, %v848
      %v894 = vpack.c.b16 %v851, %v850
      %v895 = vpack.c.b16 %v853, %v852
      %v896 = vpack.c.b16 %v855, %v854
      %v897 = vpack.c.b16 %v857, %v856
      %v898 = vpack.c.b16 %v859, %v858
      %v899 = vpack.c.b16 %v861, %v860
      %v900 = vpack.c.b16 %v863, %v862
      %v901 = vpack.c.b16 %v865, %v864
      %v902 = vpack.c.b16 %v867, %v866
      %v903 = vpack.c.b16 %v869, %v868
      %v904 = vpack.c.b16 %v871, %v870
      %v905 = vpack.c.b16 %v873, %v872
      %v906 = vpack.c.b16 %v875, %v874
      %v907 = vpack.c.b16 %v877, %v876
      %v908 = vpack.c.b16 %v879, %v878
      %v909 = vpack.c.b16 %v881, %v880
      %v910 = vpack.c.b16 %v883, %v882
      %v911 = vpack.c.b16 %v885, %v884
      %v912 = vpack.c.b16 %v887, %v886
      %v913 = vpack.c.b16 %v889, %v888
      %938 = vmatprep.subr.bf16.mxu0 0
      %939 = vmatpush1.bf16.msra.mxu0 %v897
      %940 = vmatprep.subr.bf16.mxu0 0
      %941 = vmatpush1.bf16.msra.mxu0 %v896
      %942 = vmatprep.subr.bf16.mxu0 0
      %943 = vmatpush1.bf16.msra.mxu0 %v895
      %944 = vmatprep.subr.bf16.mxu0 0
      %945 = vmatpush1.bf16.msra.mxu0 %v894
      %946 = vmatprep.subr.bf16.mxu0 0
      %947 = vmatpush1.bf16.msra.mxu0 %v893
      %948 = vmatprep.subr.bf16.mxu0 0
      %949 = vmatpush1.bf16.msra.mxu0 %v892
      %950 = vmatprep.subr.bf16.mxu0 0
      %951 = vmatpush1.bf16.msra.mxu0 %v891
      %952 = vmatprep.subr.bf16.mxu0 0
      %953 = vmatpush1.bf16.msra.mxu0 %v890
      %954 = vmatprep.subr.bf16.mxu0 0
      %955 = vmatpush2.bf16.msra.mxu0 %v905
      %956 = vmatprep.subr.bf16.mxu0 0
      %957 = vmatpush2.bf16.msra.mxu0 %v904
      %958 = vmatprep.subr.bf16.mxu0 0
      %959 = vmatpush2.bf16.msra.mxu0 %v903
      %960 = vmatprep.subr.bf16.mxu0 0
      %961 = vmatpush2.bf16.msra.mxu0 %v902
      %962 = vmatprep.subr.bf16.mxu0 0
      %963 = vmatpush2.bf16.msra.mxu0 %v901
      %964 = vmatprep.subr.bf16.mxu0 0
      %965 = vmatpush2.bf16.msra.mxu0 %v900
      %966 = vmatprep.subr.bf16.mxu0 0
      %967 = vmatpush2.bf16.msra.mxu0 %v899
      %968 = vmatprep.subr.bf16.mxu0 0
      %969 = vmatpush2.bf16.msra.mxu0 %v898
      %970 = vmatprep.mubr.bf16.mxu0 %v649
      %971 = vmatmul.mubr.bf16.gmra.mxu0 %v735
      %v972 = vpop.f32.mrf.mxu0
      %v973 = vadd.f32 0.0, %v972
      %v974 = vpop.f32.mrf.mxu0
      %v975 = vpop.f32.mrf.mxu0
      %v976 = vadd.f32 0.0, %v975
      %v977 = vpop.f32.mrf.mxu0
      %978 = vmatprep.mubr.bf16.mxu0 %v650
      %979 = vmatmul.mubr.bf16.gmra.mxu0 %v642
      %v980 = vpop.f32.mrf.mxu0
      %v981 = vadd.f32 0.0, %v980
      %v982 = vpop.f32.mrf.mxu0
      %v983 = vpop.f32.mrf.mxu0
      %v984 = vadd.f32 0.0, %v983
      %v985 = vpop.f32.mrf.mxu0
      %986 = vmatprep.mubr.bf16.mxu0 %v651
      %987 = vmatmul.mubr.bf16.gmra.mxu0 %v643
      %v988 = vpop.f32.mrf.mxu0
      %v989 = vadd.f32 0.0, %v988
      %v990 = vpop.f32.mrf.mxu0
      %v991 = vpop.f32.mrf.mxu0
      %v992 = vadd.f32 0.0, %v991
      %v993 = vpop.f32.mrf.mxu0
      %994 = vmatprep.mubr.bf16.mxu0 %v652
      %995 = vmatmul.mubr.bf16.gmra.mxu0 %v644
      %v996 = vpop.f32.mrf.mxu0
      %v997 = vadd.f32 0.0, %v996
      %v998 = vpop.f32.mrf.mxu0
      %v999 = vpop.f32.mrf.mxu0
      %v1000 = vadd.f32 0.0, %v999
      %v1001 = vpop.f32.mrf.mxu0
      %1002 = vmatprep.mubr.bf16.mxu0 %v653
      %1003 = vmatmul.mubr.bf16.gmra.mxu0 %v645
      %v1004 = vpop.f32.mrf.mxu0
      %v1005 = vadd.f32 0.0, %v1004
      %v1006 = vpop.f32.mrf.mxu0
      %v1007 = vpop.f32.mrf.mxu0
      %v1008 = vadd.f32 0.0, %v1007
      %v1009 = vpop.f32.mrf.mxu0
      %1010 = vmatprep.mubr.bf16.mxu0 %v654
      %1011 = vmatmul.mubr.bf16.gmra.mxu0 %v646
      %v1012 = vpop.f32.mrf.mxu0
      %v1013 = vadd.f32 0.0, %v1012
      %v1014 = vpop.f32.mrf.mxu0
      %v1015 = vpop.f32.mrf.mxu0
      %v1016 = vadd.f32 0.0, %v1015
      %v1017 = vpop.f32.mrf.mxu0
      %1018 = vmatprep.mubr.bf16.mxu0 %v655
      %1019 = vmatmul.mubr.bf16.gmra.mxu0 %v736
      %v1020 = vpop.f32.mrf.mxu0
      %v1021 = vadd.f32 0.0, %v1020
      %v1022 = vpop.f32.mrf.mxu0
      %v1023 = vpop.f32.mrf.mxu0
      %v1024 = vadd.f32 0.0, %v1023
      %v1025 = vpop.f32.mrf.mxu0
      %1026 = vmatprep.mubr.bf16.mxu0 %v738
      %1027 = vmatmul.mubr.bf16.gmra.mxu0 %v737
      %v1028 = vpop.f32.mrf.mxu0
      %v1029 = vadd.f32 0.0, %v1028
      %v1030 = vpop.f32.mrf.mxu0
      %v1031 = vpop.f32.mrf.mxu0
      %v1032 = vadd.f32 0.0, %v1031
      %v1033 = vpop.f32.mrf.mxu0
      %1034 = vdwg.mxu0
      %1035 = vmatprep.subr.bf16.mxu0 0
      %1036 = vmatpush1.bf16.msra.mxu0 %v913
      %1037 = vmatprep.subr.bf16.mxu0 0
      %1038 = vmatpush1.bf16.msra.mxu0 %v912
      %1039 = vmatprep.subr.bf16.mxu0 0
      %1040 = vmatpush1.bf16.msra.mxu0 %v911
      %1041 = vmatprep.subr.bf16.mxu0 0
      %1042 = vmatpush1.bf16.msra.mxu0 %v910
      %1043 = vmatprep.subr.bf16.mxu0 0
      %1044 = vmatpush1.bf16.msra.mxu0 %v909
      %1045 = vmatprep.subr.bf16.mxu0 0
      %1046 = vmatpush1.bf16.msra.mxu0 %v908
      %1047 = vmatprep.subr.bf16.mxu0 0
      %1048 = vmatpush1.bf16.msra.mxu0 %v907
      %1049 = vmatprep.subr.bf16.mxu0 0
      %1050 = vmatpush1.bf16.msra.mxu0 %v906
      %1051 = vmatprep.subr.bf16.mxu0 0
      %1052 = vmatpush2.bf16.msra.mxu0 0
      %1053 = vmatprep.subr.bf16.mxu0 0
      %1054 = vmatpush2.bf16.msra.mxu0 0
      %1055 = vmatprep.subr.bf16.mxu0 0
      %1056 = vmatpush2.bf16.msra.mxu0 0
      %1057 = vmatprep.subr.bf16.mxu0 0
      %1058 = vmatpush2.bf16.msra.mxu0 0
      %1059 = vmatprep.subr.bf16.mxu0 0
      %1060 = vmatpush2.bf16.msra.mxu0 0
      %1061 = vmatprep.subr.bf16.mxu0 0
      %1062 = vmatpush2.bf16.msra.mxu0 0
      %1063 = vmatprep.subr.bf16.mxu0 0
      %1064 = vmatpush2.bf16.msra.mxu0 0
      %1065 = vmatprep.subr.bf16.mxu0 0
      %1066 = vmatpush2.bf16.msra.mxu0 0
      %1067 = vmatprep.mubr.bf16.mxu0 0
      %1068 = vmatmul.mubr.bf16.gmra.mxu0 %v739
      %v1069 = vpop.f32.mrf.mxu0
      %v1070 = vadd.f32 %v973, %v1069
      %v1071 = vpop.f32.mrf.mxu0
      %v1072 = vpop.f32.mrf.mxu0
      %v1073 = vadd.f32 %v976, %v1072
      %v1074 = vpop.f32.mrf.mxu0
      %1075 = vmatprep.mubr.bf16.mxu0 0
      %1076 = vmatmul.mubr.bf16.gmra.mxu0 %v658
      %v1077 = vpop.f32.mrf.mxu0
      %v1078 = vadd.f32 %v981, %v1077
      %v1079 = vpop.f32.mrf.mxu0
      %v1080 = vpop.f32.mrf.mxu0
      %v1081 = vadd.f32 %v984, %v1080
      %v1082 = vpop.f32.mrf.mxu0
      %1083 = vmatprep.mubr.bf16.mxu0 0
      %1084 = vmatmul.mubr.bf16.gmra.mxu0 %v659
      %v1085 = vpop.f32.mrf.mxu0
      %v1086 = vadd.f32 %v989, %v1085
      %v1087 = vpop.f32.mrf.mxu0
      %v1088 = vpop.f32.mrf.mxu0
      %v1089 = vadd.f32 %v992, %v1088
      %v1090 = vpop.f32.mrf.mxu0
      %1091 = vmatprep.mubr.bf16.mxu0 0
      %1092 = vmatmul.mubr.bf16.gmra.mxu0 %v660
      %v1093 = vpop.f32.mrf.mxu0
      %v1094 = vadd.f32 %v997, %v1093
      %v1095 = vpop.f32.mrf.mxu0
      %v1096 = vpop.f32.mrf.mxu0
      %v1097 = vadd.f32 %v1000, %v1096
      %v1098 = vpop.f32.mrf.mxu0
      %1099 = vmatprep.mubr.bf16.mxu0 0
      %1100 = vmatmul.mubr.bf16.gmra.mxu0 %v661
      %v1101 = vpop.f32.mrf.mxu0
      %v1102 = vadd.f32 %v1005, %v1101
      %v1103 = vpop.f32.mrf.mxu0
      %v1104 = vpop.f32.mrf.mxu0
      %v1105 = vadd.f32 %v1008, %v1104
      %v1106 = vpop.f32.mrf.mxu0
      %1107 = vmatprep.mubr.bf16.mxu0 0
      %1108 = vmatmul.mubr.bf16.gmra.mxu0 %v662
      %v1109 = vpop.f32.mrf.mxu0
      %v1110 = vadd.f32 %v1013, %v1109
      %v1111 = vpop.f32.mrf.mxu0
      %v1112 = vpop.f32.mrf.mxu0
      %v1113 = vadd.f32 %v1016, %v1112
      %v1114 = vpop.f32.mrf.mxu0
      %1115 = vmatprep.mubr.bf16.mxu0 0
      %1116 = vmatmul.mubr.bf16.gmra.mxu0 %v740
      %v1117 = vpop.f32.mrf.mxu0
      %v1118 = vadd.f32 %v1021, %v1117
      %v1119 = vpop.f32.mrf.mxu0
      %v1120 = vpop.f32.mrf.mxu0
      %v1121 = vadd.f32 %v1024, %v1120
      %v1122 = vpop.f32.mrf.mxu0
      %1123 = vmatprep.mubr.bf16.mxu0 0
      %1124 = vmatmul.mubr.bf16.gmra.mxu0 %v741
      %v1125 = vpop.f32.mrf.mxu0
      %v1126 = vadd.f32 %v1029, %v1125
      %v1127 = vpop.f32.mrf.mxu0
      %v1128 = vpop.f32.mrf.mxu0
      %v1129 = vadd.f32 %v1032, %v1128
      %v1130 = vpop.f32.mrf.mxu0
      %1131 = vdwg.mxu0
      %v1180 = vunpack.c.l.b16 %v669
      %v1181 = vunpack.c.l.b16 %v670
      %v1182 = vunpack.c.l.b16 %v671
      %v1183 = vunpack.c.l.b16 %v672
      %v1184 = vunpack.c.l.b16 %v673
      %v1185 = vunpack.c.l.b16 %v674
      %v1186 = vunpack.c.l.b16 %v675
      %v1187 = vunpack.c.l.b16 %v676
      %v1188 = vunpack.c.l.b16 %v677
      %v1189 = vunpack.c.l.b16 %v678
      %v1190 = vunpack.c.l.b16 %v679
      %v1191 = vunpack.c.l.b16 %v680
      %v1192 = vunpack.c.l.b16 %v681
      %v1193 = vunpack.c.l.b16 %v682
      %v1194 = vunpack.c.l.b16 %v683
      %v1195 = vunpack.c.l.b16 %v684
      %v1196 = vunpack.c.l.b16 %v685
      %v1197 = vunpack.c.l.b16 %v686
      %v1198 = vunpack.c.l.b16 %v687
      %v1199 = vunpack.c.l.b16 %v688
      %v1200 = vunpack.c.l.b16 %v689
      %v1201 = vunpack.c.l.b16 %v690
      %v1202 = vunpack.c.l.b16 %v691
      %v1203 = vunpack.c.l.b16 %v692
      %v1204 = vunpack.c.l.b16 %v693
      %v1205 = vunpack.c.l.b16 %v694
      %v1206 = vunpack.c.l.b16 %v695
      %v1207 = vunpack.c.l.b16 %v696
      %v1208 = vunpack.c.l.b16 %v697
      %v1209 = vunpack.c.l.b16 %v698
      %v1210 = vunpack.c.l.b16 %v699
      %v1211 = vunpack.c.l.b16 %v700
      %v1212 = vunpack.c.l.b16 %v701
      %v1213 = vunpack.c.l.b16 %v702
      %v1214 = vunpack.c.l.b16 %v703
      %v1215 = vunpack.c.l.b16 %v704
      %v1216 = vunpack.c.l.b16 %v705
      %v1217 = vunpack.c.l.b16 %v706
      %v1218 = vunpack.c.l.b16 %v707
      %v1219 = vunpack.c.l.b16 %v708
      %v1220 = vunpack.c.l.b16 %v709
      %v1221 = vunpack.c.l.b16 %v710
      %v1222 = vunpack.c.l.b16 %v711
      %v1223 = vunpack.c.l.b16 %v712
      %v1224 = vunpack.c.l.b16 %v713
      %v1225 = vunpack.c.l.b16 %v714
      %v1226 = vunpack.c.l.b16 %v715
      %v1227 = vunpack.c.l.b16 %v716
      %v1228 = vpack.c.b16 %v1181, %v1180
      %v1229 = vpack.c.b16 %v1183, %v1182
      %v1230 = vpack.c.b16 %v1185, %v1184
      %v1231 = vpack.c.b16 %v1187, %v1186
      %v1232 = vpack.c.b16 %v1189, %v1188
      %v1233 = vpack.c.b16 %v1191, %v1190
      %v1234 = vpack.c.b16 %v1193, %v1192
      %v1235 = vpack.c.b16 %v1195, %v1194
      %v1236 = vpack.c.b16 %v1197, %v1196
      %v1237 = vpack.c.b16 %v1199, %v1198
      %v1238 = vpack.c.b16 %v1201, %v1200
      %v1239 = vpack.c.b16 %v1203, %v1202
      %v1240 = vpack.c.b16 %v1205, %v1204
      %v1241 = vpack.c.b16 %v1207, %v1206
      %v1242 = vpack.c.b16 %v1209, %v1208
      %v1243 = vpack.c.b16 %v1211, %v1210
      %v1244 = vpack.c.b16 %v1213, %v1212
      %v1245 = vpack.c.b16 %v1215, %v1214
      %v1246 = vpack.c.b16 %v1217, %v1216
      %v1247 = vpack.c.b16 %v1219, %v1218
      %v1248 = vpack.c.b16 %v1221, %v1220
      %v1249 = vpack.c.b16 %v1223, %v1222
      %v1250 = vpack.c.b16 %v1225, %v1224
      %v1251 = vpack.c.b16 %v1227, %v1226
      %1276 = vmatprep.subr.bf16.mxu0 0
      %1277 = vmatpush1.bf16.msra.mxu0 %v1235
      %1278 = vmatprep.subr.bf16.mxu0 0
      %1279 = vmatpush1.bf16.msra.mxu0 %v1234
      %1280 = vmatprep.subr.bf16.mxu0 0
      %1281 = vmatpush1.bf16.msra.mxu0 %v1233
      %1282 = vmatprep.subr.bf16.mxu0 0
      %1283 = vmatpush1.bf16.msra.mxu0 %v1232
      %1284 = vmatprep.subr.bf16.mxu0 0
      %1285 = vmatpush1.bf16.msra.mxu0 %v1231
      %1286 = vmatprep.subr.bf16.mxu0 0
      %1287 = vmatpush1.bf16.msra.mxu0 %v1230
      %1288 = vmatprep.subr.bf16.mxu0 0
      %1289 = vmatpush1.bf16.msra.mxu0 %v1229
      %1290 = vmatprep.subr.bf16.mxu0 0
      %1291 = vmatpush1.bf16.msra.mxu0 %v1228
      %1292 = vmatprep.subr.bf16.mxu0 0
      %1293 = vmatpush2.bf16.msra.mxu0 %v1243
      %1294 = vmatprep.subr.bf16.mxu0 0
      %1295 = vmatpush2.bf16.msra.mxu0 %v1242
      %1296 = vmatprep.subr.bf16.mxu0 0
      %1297 = vmatpush2.bf16.msra.mxu0 %v1241
      %1298 = vmatprep.subr.bf16.mxu0 0
      %1299 = vmatpush2.bf16.msra.mxu0 %v1240
      %1300 = vmatprep.subr.bf16.mxu0 0
      %1301 = vmatpush2.bf16.msra.mxu0 %v1239
      %1302 = vmatprep.subr.bf16.mxu0 0
      %1303 = vmatpush2.bf16.msra.mxu0 %v1238
      %1304 = vmatprep.subr.bf16.mxu0 0
      %1305 = vmatpush2.bf16.msra.mxu0 %v1237
      %1306 = vmatprep.subr.bf16.mxu0 0
      %1307 = vmatpush2.bf16.msra.mxu0 %v1236
      %1308 = vmatprep.mubr.bf16.mxu0 %v648
      %1309 = vmatmul.mubr.bf16.gmra.mxu0 %v640
      %v1310 = vpop.f32.mrf.mxu0
      %v1311 = vadd.f32 %v1070, %v1310
      %v1312 = vpop.f32.mrf.mxu0
      %v1313 = vpop.f32.mrf.mxu0
      %v1314 = vadd.f32 %v1073, %v1313
      %v1315 = vpop.f32.mrf.mxu0
      %1316 = vmatprep.mubr.bf16.mxu0 %v649
      %1317 = vmatmul.mubr.bf16.gmra.mxu0 %v641
      %v1318 = vpop.f32.mrf.mxu0
      %v1319 = vadd.f32 %v1078, %v1318
      %v1320 = vpop.f32.mrf.mxu0
      %v1321 = vpop.f32.mrf.mxu0
      %v1322 = vadd.f32 %v1081, %v1321
      %v1323 = vpop.f32.mrf.mxu0
      %1324 = vmatprep.mubr.bf16.mxu0 %v650
      %1325 = vmatmul.mubr.bf16.gmra.mxu0 %v642
      %v1326 = vpop.f32.mrf.mxu0
      %v1327 = vadd.f32 %v1086, %v1326
      %v1328 = vpop.f32.mrf.mxu0
      %v1329 = vpop.f32.mrf.mxu0
      %v1330 = vadd.f32 %v1089, %v1329
      %v1331 = vpop.f32.mrf.mxu0
      %1332 = vmatprep.mubr.bf16.mxu0 %v651
      %1333 = vmatmul.mubr.bf16.gmra.mxu0 %v643
      %v1334 = vpop.f32.mrf.mxu0
      %v1335 = vadd.f32 %v1094, %v1334
      %v1336 = vpop.f32.mrf.mxu0
      %v1337 = vpop.f32.mrf.mxu0
      %v1338 = vadd.f32 %v1097, %v1337
      %v1339 = vpop.f32.mrf.mxu0
      %1340 = vmatprep.mubr.bf16.mxu0 %v652
      %1341 = vmatmul.mubr.bf16.gmra.mxu0 %v644
      %v1342 = vpop.f32.mrf.mxu0
      %v1343 = vadd.f32 %v1102, %v1342
      %v1344 = vpop.f32.mrf.mxu0
      %v1345 = vpop.f32.mrf.mxu0
      %v1346 = vadd.f32 %v1105, %v1345
      %v1347 = vpop.f32.mrf.mxu0
      %1348 = vmatprep.mubr.bf16.mxu0 %v653
      %1349 = vmatmul.mubr.bf16.gmra.mxu0 %v645
      %v1350 = vpop.f32.mrf.mxu0
      %v1351 = vadd.f32 %v1110, %v1350
      %v1352 = vpop.f32.mrf.mxu0
      %v1353 = vpop.f32.mrf.mxu0
      %v1354 = vadd.f32 %v1113, %v1353
      %v1355 = vpop.f32.mrf.mxu0
      %1356 = vmatprep.mubr.bf16.mxu0 %v654
      %1357 = vmatmul.mubr.bf16.gmra.mxu0 %v646
      %v1358 = vpop.f32.mrf.mxu0
      %v1359 = vadd.f32 %v1118, %v1358
      %v1360 = vpop.f32.mrf.mxu0
      %v1361 = vpop.f32.mrf.mxu0
      %v1362 = vadd.f32 %v1121, %v1361
      %v1363 = vpop.f32.mrf.mxu0
      %1364 = vmatprep.mubr.bf16.mxu0 %v655
      %1365 = vmatmul.mubr.bf16.gmra.mxu0 %v647
      %v1366 = vpop.f32.mrf.mxu0
      %v1367 = vadd.f32 %v1126, %v1366
      %v1368 = vpop.f32.mrf.mxu0
      %v1369 = vpop.f32.mrf.mxu0
      %v1370 = vadd.f32 %v1129, %v1369
      %v1371 = vpop.f32.mrf.mxu0
      %1372 = vdwg.mxu0
      %1373 = vmatprep.subr.bf16.mxu0 0
      %1374 = vmatpush1.bf16.msra.mxu0 %v1251
      %1375 = vmatprep.subr.bf16.mxu0 0
      %1376 = vmatpush1.bf16.msra.mxu0 %v1250
      %1377 = vmatprep.subr.bf16.mxu0 0
      %1378 = vmatpush1.bf16.msra.mxu0 %v1249
      %1379 = vmatprep.subr.bf16.mxu0 0
      %1380 = vmatpush1.bf16.msra.mxu0 %v1248
      %1381 = vmatprep.subr.bf16.mxu0 0
      %1382 = vmatpush1.bf16.msra.mxu0 %v1247
      %1383 = vmatprep.subr.bf16.mxu0 0
      %1384 = vmatpush1.bf16.msra.mxu0 %v1246
      %1385 = vmatprep.subr.bf16.mxu0 0
      %1386 = vmatpush1.bf16.msra.mxu0 %v1245
      %1387 = vmatprep.subr.bf16.mxu0 0
      %1388 = vmatpush1.bf16.msra.mxu0 %v1244
      %1389 = vmatprep.subr.bf16.mxu0 0
      %1390 = vmatpush2.bf16.msra.mxu0 0
      %1391 = vmatprep.subr.bf16.mxu0 0
      %1392 = vmatpush2.bf16.msra.mxu0 0
      %1393 = vmatprep.subr.bf16.mxu0 0
      %1394 = vmatpush2.bf16.msra.mxu0 0
      %1395 = vmatprep.subr.bf16.mxu0 0
      %1396 = vmatpush2.bf16.msra.mxu0 0
      %1397 = vmatprep.subr.bf16.mxu0 0
      %1398 = vmatpush2.bf16.msra.mxu0 0
      %1399 = vmatprep.subr.bf16.mxu0 0
      %1400 = vmatpush2.bf16.msra.mxu0 0
      %1401 = vmatprep.subr.bf16.mxu0 0
      %1402 = vmatpush2.bf16.msra.mxu0 0
      %1403 = vmatprep.subr.bf16.mxu0 0
      %1404 = vmatpush2.bf16.msra.mxu0 0
      %1405 = vmatprep.mubr.bf16.mxu0 0
      %1406 = vmatmul.mubr.bf16.gmra.mxu0 %v656
      %v1407 = vpop.f32.mrf.mxu0
      %v1408 = vadd.f32 %v1311, %v1407
      %v1409 = vpop.f32.mrf.mxu0
      %v1410 = vpop.f32.mrf.mxu0
      %v1411 = vadd.f32 %v1314, %v1410
      %v1412 = vpop.f32.mrf.mxu0
      %1413 = vmatprep.mubr.bf16.mxu0 0
      %1414 = vmatmul.mubr.bf16.gmra.mxu0 %v657
      %v1415 = vpop.f32.mrf.mxu0
      %v1416 = vadd.f32 %v1319, %v1415
      %v1417 = vpop.f32.mrf.mxu0
      %v1418 = vpop.f32.mrf.mxu0
      %v1419 = vadd.f32 %v1322, %v1418
      %v1420 = vpop.f32.mrf.mxu0
      %1421 = vmatprep.mubr.bf16.mxu0 0
      %1422 = vmatmul.mubr.bf16.gmra.mxu0 %v658
      %v1423 = vpop.f32.mrf.mxu0
      %v1424 = vadd.f32 %v1327, %v1423
      %v1425 = vpop.f32.mrf.mxu0
      %v1426 = vpop.f32.mrf.mxu0
      %v1427 = vadd.f32 %v1330, %v1426
      %v1428 = vpop.f32.mrf.mxu0
      %1429 = vmatprep.mubr.bf16.mxu0 0
      %1430 = vmatmul.mubr.bf16.gmra.mxu0 %v659
      %v1431 = vpop.f32.mrf.mxu0
      %v1432 = vadd.f32 %v1335, %v1431
      %v1433 = vpop.f32.mrf.mxu0
      %v1434 = vpop.f32.mrf.mxu0
      %v1435 = vadd.f32 %v1338, %v1434
      %v1436 = vpop.f32.mrf.mxu0
      %1437 = vmatprep.mubr.bf16.mxu0 0
      %1438 = vmatmul.mubr.bf16.gmra.mxu0 %v660
      %v1439 = vpop.f32.mrf.mxu0
      %v1440 = vadd.f32 %v1343, %v1439
      %v1441 = vpop.f32.mrf.mxu0
      %v1442 = vpop.f32.mrf.mxu0
      %v1443 = vadd.f32 %v1346, %v1442
      %v1444 = vpop.f32.mrf.mxu0
      %1445 = vmatprep.mubr.bf16.mxu0 0
      %1446 = vmatmul.mubr.bf16.gmra.mxu0 %v661
      %v1447 = vpop.f32.mrf.mxu0
      %v1448 = vadd.f32 %v1351, %v1447
      %v1449 = vpop.f32.mrf.mxu0
      %v1450 = vpop.f32.mrf.mxu0
      %v1451 = vadd.f32 %v1354, %v1450
      %v1452 = vpop.f32.mrf.mxu0
      %1453 = vmatprep.mubr.bf16.mxu0 0
      %1454 = vmatmul.mubr.bf16.gmra.mxu0 %v662
      %v1455 = vpop.f32.mrf.mxu0
      %v1456 = vadd.f32 %v1359, %v1455
      %v1457 = vpop.f32.mrf.mxu0
      %v1458 = vpop.f32.mrf.mxu0
      %v1459 = vadd.f32 %v1362, %v1458
      %v1460 = vpop.f32.mrf.mxu0
      %1461 = vmatprep.mubr.bf16.mxu0 0
      %1462 = vmatmul.mubr.bf16.gmra.mxu0 %v663
      %v1463 = vpop.f32.mrf.mxu0
      %v1464 = vadd.f32 %v1367, %v1463
      %v1465 = vpop.f32.mrf.mxu0
      %v1466 = vpop.f32.mrf.mxu0
      %v1467 = vadd.f32 %v1370, %v1466
      %v1468 = vpop.f32.mrf.mxu0
      %1469 = vdwg.mxu0
      %v1470 = vrot.slane %v525, 7
      %v1471 = vrot.slane %v526, 7
      %v1472 = vsel %vm550, %v1470, %v1471
      %v1473 = vsel %vm550, %v718, %v1470
      %v1474 = vsel %vm550, %v1471, %v538
      %v1475 = vrot.slane %v525, 1
      %v1476 = vrot.slane %v526, 1
      %v1477 = vsel %vm583, %v1475, %v1476
      %v1478 = vsel %vm583, %v723, %v1475
      %v1479 = vsel %vm583, %v1476, %v571
      %v1480 = vsel %vm602, %v594, %v1474
      %v1481 = vsel %vm603, %v1478, %v719
      %v1482 = vsel %vm602, %v1477, %v1473
      %v1483 = vsel %vm603, %v1479, %v1472
      %v1484 = vsel %vm622, %v1474, %v594
      %v1485 = vsel %vm623, %v719, %v1478
      %v1486 = vsel %vm622, %v1473, %v1477
      %v1487 = vsel %vm623, %v1472, %v1479
      %v1488 = vpack.c.bf16 %v609, %v1480
      %v1489 = vpack.c.bf16 %v1481, %v729
      %v1490 = vpack.c.bf16 %v1483, %v1482
      %v1491 = vpack.c.bf16 %v526, %v525
      %v1492 = vpack.c.bf16 %v629, %v1484
      %v1493 = vpack.c.bf16 %v1485, %v733
      %v1494 = vpack.c.bf16 %v1487, %v1486
      %s1495 = sadd.s32 %s664, 96
      %s1496 = sadd.s32 %s1495, %s665
      %s1497 = smul.addr %s1496, 4
      %s1498 = scalar_lea.vmem %s3, %s1497
      %v1499 = vld [vmem:[%s1498] sm:$0xf]
      %v1500 = vld [vmem:[%s1498 + $0x4] sm:$0xf]
      %v1501 = vld [vmem:[%s1498 + $0x8] sm:$0xf]
      %v1502 = vld [vmem:[%s1498 + $0xc] sm:$0xf]
      %v1503 = vld [vmem:[%s1498 + $0x10] sm:$0xf]
      %v1504 = vld [vmem:[%s1498 + $0x14] sm:$0xf]
      %v1505 = vld [vmem:[%s1498 + $0x18] sm:$0xf]
      %v1506 = vld [vmem:[%s1498 + $0x1c] sm:$0xf]
      %v1507 = vld [vmem:[%s1498 + $0x20] sm:$0xf]
      %v1508 = vld [vmem:[%s1498 + $0x24] sm:$0xf]
      %v1509 = vld [vmem:[%s1498 + $0x28] sm:$0xf]
      %v1510 = vld [vmem:[%s1498 + $0x2c] sm:$0xf]
      %v1511 = vld [vmem:[%s1498 + $0x30] sm:$0xf]
      %v1512 = vld [vmem:[%s1498 + $0x34] sm:$0xf]
      %v1513 = vld [vmem:[%s1498 + $0x38] sm:$0xf]
      %v1514 = vld [vmem:[%s1498 + $0x3c] sm:$0xf]
      %v1515 = vld [vmem:[%s1498 + $0x40] sm:$0xf]
      %v1516 = vld [vmem:[%s1498 + $0x44] sm:$0xf]
      %v1517 = vld [vmem:[%s1498 + $0x48] sm:$0xf]
      %v1518 = vld [vmem:[%s1498 + $0x4c] sm:$0xf]
      %v1519 = vld [vmem:[%s1498 + $0x50] sm:$0xf]
      %v1520 = vld [vmem:[%s1498 + $0x54] sm:$0xf]
      %v1521 = vld [vmem:[%s1498 + $0x58] sm:$0xf]
      %v1522 = vld [vmem:[%s1498 + $0x5c] sm:$0xf]
      %v1523 = vld [vmem:[%s1498 + $0x60] sm:$0xf]
      %v1524 = vld [vmem:[%s1498 + $0x64] sm:$0xf]
      %v1525 = vld [vmem:[%s1498 + $0x68] sm:$0xf]
      %v1526 = vld [vmem:[%s1498 + $0x6c] sm:$0xf]
      %v1527 = vld [vmem:[%s1498 + $0x70] sm:$0xf]
      %v1528 = vld [vmem:[%s1498 + $0x74] sm:$0xf]
      %v1529 = vld [vmem:[%s1498 + $0x78] sm:$0xf]
      %v1530 = vld [vmem:[%s1498 + $0x7c] sm:$0xf]
      %v1531 = vld [vmem:[%s1498 + $0x80] sm:$0xf]
      %v1532 = vld [vmem:[%s1498 + $0x84] sm:$0xf]
      %v1533 = vld [vmem:[%s1498 + $0x88] sm:$0xf]
      %v1534 = vld [vmem:[%s1498 + $0x8c] sm:$0xf]
      %v1535 = vld [vmem:[%s1498 + $0x90] sm:$0xf]
      %v1536 = vld [vmem:[%s1498 + $0x94] sm:$0xf]
      %v1537 = vld [vmem:[%s1498 + $0x98] sm:$0xf]
      %v1538 = vld [vmem:[%s1498 + $0x9c] sm:$0xf]
      %v1539 = vld [vmem:[%s1498 + $0xa0] sm:$0xf]
      %v1540 = vld [vmem:[%s1498 + $0xa4] sm:$0xf]
      %v1541 = vld [vmem:[%s1498 + $0xa8] sm:$0xf]
      %v1542 = vld [vmem:[%s1498 + $0xac] sm:$0xf]
      %v1543 = vld [vmem:[%s1498 + $0xb0] sm:$0xf]
      %v1544 = vld [vmem:[%s1498 + $0xb4] sm:$0xf]
      %v1545 = vld [vmem:[%s1498 + $0xb8] sm:$0xf]
      %v1546 = vld [vmem:[%s1498 + $0xbc] sm:$0xf]
      %v1595 = vunpack.c.l.b16 %v1499
      %v1596 = vunpack.c.l.b16 %v1500
      %v1597 = vunpack.c.l.b16 %v1501
      %v1598 = vunpack.c.l.b16 %v1502
      %v1599 = vunpack.c.l.b16 %v1503
      %v1600 = vunpack.c.l.b16 %v1504
      %v1601 = vunpack.c.l.b16 %v1505
      %v1602 = vunpack.c.l.b16 %v1506
      %v1603 = vunpack.c.l.b16 %v1507
      %v1604 = vunpack.c.l.b16 %v1508
      %v1605 = vunpack.c.l.b16 %v1509
      %v1606 = vunpack.c.l.b16 %v1510
      %v1607 = vunpack.c.l.b16 %v1511
      %v1608 = vunpack.c.l.b16 %v1512
      %v1609 = vunpack.c.l.b16 %v1513
      %v1610 = vunpack.c.l.b16 %v1514
      %v1611 = vunpack.c.l.b16 %v1515
      %v1612 = vunpack.c.l.b16 %v1516
      %v1613 = vunpack.c.l.b16 %v1517
      %v1614 = vunpack.c.l.b16 %v1518
      %v1615 = vunpack.c.l.b16 %v1519
      %v1616 = vunpack.c.l.b16 %v1520
      %v1617 = vunpack.c.l.b16 %v1521
      %v1618 = vunpack.c.l.b16 %v1522
      %v1619 = vunpack.c.l.b16 %v1523
      %v1620 = vunpack.c.l.b16 %v1524
      %v1621 = vunpack.c.l.b16 %v1525
      %v1622 = vunpack.c.l.b16 %v1526
      %v1623 = vunpack.c.l.b16 %v1527
      %v1624 = vunpack.c.l.b16 %v1528
      %v1625 = vunpack.c.l.b16 %v1529
      %v1626 = vunpack.c.l.b16 %v1530
      %v1627 = vunpack.c.l.b16 %v1531
      %v1628 = vunpack.c.l.b16 %v1532
      %v1629 = vunpack.c.l.b16 %v1533
      %v1630 = vunpack.c.l.b16 %v1534
      %v1631 = vunpack.c.l.b16 %v1535
      %v1632 = vunpack.c.l.b16 %v1536
      %v1633 = vunpack.c.l.b16 %v1537
      %v1634 = vunpack.c.l.b16 %v1538
      %v1635 = vunpack.c.l.b16 %v1539
      %v1636 = vunpack.c.l.b16 %v1540
      %v1637 = vunpack.c.l.b16 %v1541
      %v1638 = vunpack.c.l.b16 %v1542
      %v1639 = vunpack.c.l.b16 %v1543
      %v1640 = vunpack.c.l.b16 %v1544
      %v1641 = vunpack.c.l.b16 %v1545
      %v1642 = vunpack.c.l.b16 %v1546
      %v1643 = vpack.c.b16 %v1596, %v1595
      %v1644 = vpack.c.b16 %v1598, %v1597
      %v1645 = vpack.c.b16 %v1600, %v1599
      %v1646 = vpack.c.b16 %v1602, %v1601
      %v1647 = vpack.c.b16 %v1604, %v1603
      %v1648 = vpack.c.b16 %v1606, %v1605
      %v1649 = vpack.c.b16 %v1608, %v1607
      %v1650 = vpack.c.b16 %v1610, %v1609
      %v1651 = vpack.c.b16 %v1612, %v1611
      %v1652 = vpack.c.b16 %v1614, %v1613
      %v1653 = vpack.c.b16 %v1616, %v1615
      %v1654 = vpack.c.b16 %v1618, %v1617
      %v1655 = vpack.c.b16 %v1620, %v1619
      %v1656 = vpack.c.b16 %v1622, %v1621
      %v1657 = vpack.c.b16 %v1624, %v1623
      %v1658 = vpack.c.b16 %v1626, %v1625
      %v1659 = vpack.c.b16 %v1628, %v1627
      %v1660 = vpack.c.b16 %v1630, %v1629
      %v1661 = vpack.c.b16 %v1632, %v1631
      %v1662 = vpack.c.b16 %v1634, %v1633
      %v1663 = vpack.c.b16 %v1636, %v1635
      %v1664 = vpack.c.b16 %v1638, %v1637
      %v1665 = vpack.c.b16 %v1640, %v1639
      %v1666 = vpack.c.b16 %v1642, %v1641
      %1691 = vmatprep.subr.bf16.mxu0 0
      %1692 = vmatpush1.bf16.msra.mxu0 %v1650
      %1693 = vmatprep.subr.bf16.mxu0 0
      %1694 = vmatpush1.bf16.msra.mxu0 %v1649
      %1695 = vmatprep.subr.bf16.mxu0 0
      %1696 = vmatpush1.bf16.msra.mxu0 %v1648
      %1697 = vmatprep.subr.bf16.mxu0 0
      %1698 = vmatpush1.bf16.msra.mxu0 %v1647
      %1699 = vmatprep.subr.bf16.mxu0 0
      %1700 = vmatpush1.bf16.msra.mxu0 %v1646
      %1701 = vmatprep.subr.bf16.mxu0 0
      %1702 = vmatpush1.bf16.msra.mxu0 %v1645
      %1703 = vmatprep.subr.bf16.mxu0 0
      %1704 = vmatpush1.bf16.msra.mxu0 %v1644
      %1705 = vmatprep.subr.bf16.mxu0 0
      %1706 = vmatpush1.bf16.msra.mxu0 %v1643
      %1707 = vmatprep.subr.bf16.mxu0 0
      %1708 = vmatpush2.bf16.msra.mxu0 %v1658
      %1709 = vmatprep.subr.bf16.mxu0 0
      %1710 = vmatpush2.bf16.msra.mxu0 %v1657
      %1711 = vmatprep.subr.bf16.mxu0 0
      %1712 = vmatpush2.bf16.msra.mxu0 %v1656
      %1713 = vmatprep.subr.bf16.mxu0 0
      %1714 = vmatpush2.bf16.msra.mxu0 %v1655
      %1715 = vmatprep.subr.bf16.mxu0 0
      %1716 = vmatpush2.bf16.msra.mxu0 %v1654
      %1717 = vmatprep.subr.bf16.mxu0 0
      %1718 = vmatpush2.bf16.msra.mxu0 %v1653
      %1719 = vmatprep.subr.bf16.mxu0 0
      %1720 = vmatpush2.bf16.msra.mxu0 %v1652
      %1721 = vmatprep.subr.bf16.mxu0 0
      %1722 = vmatpush2.bf16.msra.mxu0 %v1651
      %1723 = vmatprep.mubr.bf16.mxu0 %v650
      %1724 = vmatmul.mubr.bf16.gmra.mxu0 %v1488
      %v1725 = vpop.f32.mrf.mxu0
      %v1726 = vadd.f32 0.0, %v1725
      %v1727 = vpop.f32.mrf.mxu0
      %v1728 = vpop.f32.mrf.mxu0
      %v1729 = vadd.f32 0.0, %v1728
      %v1730 = vpop.f32.mrf.mxu0
      %1731 = vmatprep.mubr.bf16.mxu0 %v651
      %1732 = vmatmul.mubr.bf16.gmra.mxu0 %v643
      %v1733 = vpop.f32.mrf.mxu0
      %v1734 = vadd.f32 0.0, %v1733
      %v1735 = vpop.f32.mrf.mxu0
      %v1736 = vpop.f32.mrf.mxu0
      %v1737 = vadd.f32 0.0, %v1736
      %v1738 = vpop.f32.mrf.mxu0
      %1739 = vmatprep.mubr.bf16.mxu0 %v652
      %1740 = vmatmul.mubr.bf16.gmra.mxu0 %v644
      %v1741 = vpop.f32.mrf.mxu0
      %v1742 = vadd.f32 0.0, %v1741
      %v1743 = vpop.f32.mrf.mxu0
      %v1744 = vpop.f32.mrf.mxu0
      %v1745 = vadd.f32 0.0, %v1744
      %v1746 = vpop.f32.mrf.mxu0
      %1747 = vmatprep.mubr.bf16.mxu0 %v653
      %1748 = vmatmul.mubr.bf16.gmra.mxu0 %v645
      %v1749 = vpop.f32.mrf.mxu0
      %v1750 = vadd.f32 0.0, %v1749
      %v1751 = vpop.f32.mrf.mxu0
      %v1752 = vpop.f32.mrf.mxu0
      %v1753 = vadd.f32 0.0, %v1752
      %v1754 = vpop.f32.mrf.mxu0
      %1755 = vmatprep.mubr.bf16.mxu0 %v654
      %1756 = vmatmul.mubr.bf16.gmra.mxu0 %v646
      %v1757 = vpop.f32.mrf.mxu0
      %v1758 = vadd.f32 0.0, %v1757
      %v1759 = vpop.f32.mrf.mxu0
      %v1760 = vpop.f32.mrf.mxu0
      %v1761 = vadd.f32 0.0, %v1760
      %v1762 = vpop.f32.mrf.mxu0
      %1763 = vmatprep.mubr.bf16.mxu0 %v655
      %1764 = vmatmul.mubr.bf16.gmra.mxu0 %v736
      %v1765 = vpop.f32.mrf.mxu0
      %v1766 = vadd.f32 0.0, %v1765
      %v1767 = vpop.f32.mrf.mxu0
      %v1768 = vpop.f32.mrf.mxu0
      %v1769 = vadd.f32 0.0, %v1768
      %v1770 = vpop.f32.mrf.mxu0
      %1771 = vmatprep.mubr.bf16.mxu0 %v738
      %1772 = vmatmul.mubr.bf16.gmra.mxu0 %v1489
      %v1773 = vpop.f32.mrf.mxu0
      %v1774 = vadd.f32 0.0, %v1773
      %v1775 = vpop.f32.mrf.mxu0
      %v1776 = vpop.f32.mrf.mxu0
      %v1777 = vadd.f32 0.0, %v1776
      %v1778 = vpop.f32.mrf.mxu0
      %1779 = vmatprep.mubr.bf16.mxu0 %v1491
      %1780 = vmatmul.mubr.bf16.gmra.mxu0 %v1490
      %v1781 = vpop.f32.mrf.mxu0
      %v1782 = vadd.f32 0.0, %v1781
      %v1783 = vpop.f32.mrf.mxu0
      %v1784 = vpop.f32.mrf.mxu0
      %v1785 = vadd.f32 0.0, %v1784
      %v1786 = vpop.f32.mrf.mxu0
      %1787 = vdwg.mxu0
      %1788 = vmatprep.subr.bf16.mxu0 0
      %1789 = vmatpush1.bf16.msra.mxu0 %v1666
      %1790 = vmatprep.subr.bf16.mxu0 0
      %1791 = vmatpush1.bf16.msra.mxu0 %v1665
      %1792 = vmatprep.subr.bf16.mxu0 0
      %1793 = vmatpush1.bf16.msra.mxu0 %v1664
      %1794 = vmatprep.subr.bf16.mxu0 0
      %1795 = vmatpush1.bf16.msra.mxu0 %v1663
      %1796 = vmatprep.subr.bf16.mxu0 0
      %1797 = vmatpush1.bf16.msra.mxu0 %v1662
      %1798 = vmatprep.subr.bf16.mxu0 0
      %1799 = vmatpush1.bf16.msra.mxu0 %v1661
      %1800 = vmatprep.subr.bf16.mxu0 0
      %1801 = vmatpush1.bf16.msra.mxu0 %v1660
      %1802 = vmatprep.subr.bf16.mxu0 0
      %1803 = vmatpush1.bf16.msra.mxu0 %v1659
      %1804 = vmatprep.subr.bf16.mxu0 0
      %1805 = vmatpush2.bf16.msra.mxu0 0
      %1806 = vmatprep.subr.bf16.mxu0 0
      %1807 = vmatpush2.bf16.msra.mxu0 0
      %1808 = vmatprep.subr.bf16.mxu0 0
      %1809 = vmatpush2.bf16.msra.mxu0 0
      %1810 = vmatprep.subr.bf16.mxu0 0
      %1811 = vmatpush2.bf16.msra.mxu0 0
      %1812 = vmatprep.subr.bf16.mxu0 0
      %1813 = vmatpush2.bf16.msra.mxu0 0
      %1814 = vmatprep.subr.bf16.mxu0 0
      %1815 = vmatpush2.bf16.msra.mxu0 0
      %1816 = vmatprep.subr.bf16.mxu0 0
      %1817 = vmatpush2.bf16.msra.mxu0 0
      %1818 = vmatprep.subr.bf16.mxu0 0
      %1819 = vmatpush2.bf16.msra.mxu0 0
      %1820 = vmatprep.mubr.bf16.mxu0 0
      %1821 = vmatmul.mubr.bf16.gmra.mxu0 %v1492
      %v1822 = vpop.f32.mrf.mxu0
      %v1823 = vadd.f32 %v1726, %v1822
      %v1824 = vpop.f32.mrf.mxu0
      %v1825 = vpop.f32.mrf.mxu0
      %v1826 = vadd.f32 %v1729, %v1825
      %v1827 = vpop.f32.mrf.mxu0
      %1828 = vmatprep.mubr.bf16.mxu0 0
      %1829 = vmatmul.mubr.bf16.gmra.mxu0 %v659
      %v1830 = vpop.f32.mrf.mxu0
      %v1831 = vadd.f32 %v1734, %v1830
      %v1832 = vpop.f32.mrf.mxu0
      %v1833 = vpop.f32.mrf.mxu0
      %v1834 = vadd.f32 %v1737, %v1833
      %v1835 = vpop.f32.mrf.mxu0
      %1836 = vmatprep.mubr.bf16.mxu0 0
      %1837 = vmatmul.mubr.bf16.gmra.mxu0 %v660
      %v1838 = vpop.f32.mrf.mxu0
      %v1839 = vadd.f32 %v1742, %v1838
      %v1840 = vpop.f32.mrf.mxu0
      %v1841 = vpop.f32.mrf.mxu0
      %v1842 = vadd.f32 %v1745, %v1841
      %v1843 = vpop.f32.mrf.mxu0
      %1844 = vmatprep.mubr.bf16.mxu0 0
      %1845 = vmatmul.mubr.bf16.gmra.mxu0 %v661
      %v1846 = vpop.f32.mrf.mxu0
      %v1847 = vadd.f32 %v1750, %v1846
      %v1848 = vpop.f32.mrf.mxu0
      %v1849 = vpop.f32.mrf.mxu0
      %v1850 = vadd.f32 %v1753, %v1849
      %v1851 = vpop.f32.mrf.mxu0
      %1852 = vmatprep.mubr.bf16.mxu0 0
      %1853 = vmatmul.mubr.bf16.gmra.mxu0 %v662
      %v1854 = vpop.f32.mrf.mxu0
      %v1855 = vadd.f32 %v1758, %v1854
      %v1856 = vpop.f32.mrf.mxu0
      %v1857 = vpop.f32.mrf.mxu0
      %v1858 = vadd.f32 %v1761, %v1857
      %v1859 = vpop.f32.mrf.mxu0
      %1860 = vmatprep.mubr.bf16.mxu0 0
      %1861 = vmatmul.mubr.bf16.gmra.mxu0 %v740
      %v1862 = vpop.f32.mrf.mxu0
      %v1863 = vadd.f32 %v1766, %v1862
      %v1864 = vpop.f32.mrf.mxu0
      %v1865 = vpop.f32.mrf.mxu0
      %v1866 = vadd.f32 %v1769, %v1865
      %v1867 = vpop.f32.mrf.mxu0
      %1868 = vmatprep.mubr.bf16.mxu0 0
      %1869 = vmatmul.mubr.bf16.gmra.mxu0 %v1493
      %v1870 = vpop.f32.mrf.mxu0
      %v1871 = vadd.f32 %v1774, %v1870
      %v1872 = vpop.f32.mrf.mxu0
      %v1873 = vpop.f32.mrf.mxu0
      %v1874 = vadd.f32 %v1777, %v1873
      %v1875 = vpop.f32.mrf.mxu0
      %1876 = vmatprep.mubr.bf16.mxu0 0
      %1877 = vmatmul.mubr.bf16.gmra.mxu0 %v1494
      %v1878 = vpop.f32.mrf.mxu0
      %v1879 = vadd.f32 %v1782, %v1878
      %v1880 = vpop.f32.mrf.mxu0
      %v1881 = vpop.f32.mrf.mxu0
      %v1882 = vadd.f32 %v1785, %v1881
      %v1883 = vpop.f32.mrf.mxu0
      %1884 = vdwg.mxu0
      %v1885 = vadd.f32 %v1408, %v1823
      %v1886 = vadd.f32 %v1411, %v1826
      %v1887 = vadd.f32 %v1416, %v1831
      %v1888 = vadd.f32 %v1419, %v1834
      %v1889 = vadd.f32 %v1424, %v1839
      %v1890 = vadd.f32 %v1427, %v1842
      %v1891 = vadd.f32 %v1432, %v1847
      %v1892 = vadd.f32 %v1435, %v1850
      %v1893 = vadd.f32 %v1440, %v1855
      %v1894 = vadd.f32 %v1443, %v1858
      %v1895 = vadd.f32 %v1448, %v1863
      %v1896 = vadd.f32 %v1451, %v1866
      %v1897 = vadd.f32 %v1456, %v1871
      %v1898 = vadd.f32 %v1459, %v1874
      %v1899 = vadd.f32 %v1464, %v1879
      %v1900 = vadd.f32 %v1467, %v1882
      %v1901 = vld [vmem:[%s447] sm:$0x1]
      %v1903 = vlaneseq
      %v1904 = vshrl.u32 %v1903, 7
      %v1905 = vsub.s32 0, %v1904
      %v1906 = vrot.slane %v1901, %v1905
      %v1908 = vadd.f32 %v1906, %v1885
      %v1909 = vadd.f32 %v1906, %v1886
      %v1910 = vadd.f32 %v1906, %v1887
      %v1911 = vadd.f32 %v1906, %v1888
      %v1912 = vadd.f32 %v1906, %v1889
      %v1913 = vadd.f32 %v1906, %v1890
      %v1914 = vadd.f32 %v1906, %v1891
      %v1915 = vadd.f32 %v1906, %v1892
      %v1916 = vadd.f32 %v1906, %v1893
      %v1917 = vadd.f32 %v1906, %v1894
      %v1918 = vadd.f32 %v1906, %v1895
      %v1919 = vadd.f32 %v1906, %v1896
      %v1920 = vadd.f32 %v1906, %v1897
      %v1921 = vadd.f32 %v1906, %v1898
      %v1922 = vadd.f32 %v1906, %v1899
      %v1923 = vadd.f32 %v1906, %v1900
      %v1924 = vmax.f32 %v1908, 0.0
      %v1925 = vmax.f32 %v1909, 0.0
      %v1926 = vmax.f32 %v1910, 0.0
      %v1927 = vmax.f32 %v1911, 0.0
      %v1928 = vmax.f32 %v1912, 0.0
      %v1929 = vmax.f32 %v1913, 0.0
      %v1930 = vmax.f32 %v1914, 0.0
      %v1931 = vmax.f32 %v1915, 0.0
      %v1932 = vmax.f32 %v1916, 0.0
      %v1933 = vmax.f32 %v1917, 0.0
      %v1934 = vmax.f32 %v1918, 0.0
      %v1935 = vmax.f32 %v1919, 0.0
      %v1936 = vmax.f32 %v1920, 0.0
      %v1937 = vmax.f32 %v1921, 0.0
      %v1938 = vmax.f32 %v1922, 0.0
      %v1939 = vmax.f32 %v1923, 0.0
      %v1940 = vpack.c.bf16 %v1925, %v1924
      %v1941 = vpack.c.bf16 %v1927, %v1926
      %v1942 = vpack.c.bf16 %v1929, %v1928
      %v1943 = vpack.c.bf16 %v1931, %v1930
      %v1944 = vpack.c.bf16 %v1933, %v1932
      %v1945 = vpack.c.bf16 %v1935, %v1934
      %v1946 = vpack.c.bf16 %v1937, %v1936
      %v1947 = vpack.c.bf16 %v1939, %v1938
      %v1956 = vunpack.c.l.b16 %v1940
      %v1957 = vunpack.c.h.b16 %v1940
      %v1958 = vunpack.c.l.b16 %v1941
      %v1959 = vunpack.c.h.b16 %v1941
      %v1960 = vunpack.c.l.b16 %v1942
      %v1961 = vunpack.c.h.b16 %v1942
      %v1962 = vunpack.c.l.b16 %v1943
      %v1963 = vunpack.c.h.b16 %v1943
      %v1964 = vunpack.c.l.b16 %v1944
      %v1965 = vunpack.c.h.b16 %v1944
      %v1966 = vunpack.c.l.b16 %v1945
      %v1967 = vunpack.c.h.b16 %v1945
      %v1968 = vunpack.c.l.b16 %v1946
      %v1969 = vunpack.c.h.b16 %v1946
      %v1970 = vunpack.c.l.b16 %v1947
      %v1971 = vunpack.c.h.b16 %v1947
      %v1972 = vpack.c.b16 %v1956, %v1956
      %v1973 = vpack.c.b16 %v1957, %v1957
      %v1974 = vpack.c.b16 %v1958, %v1958
      %v1975 = vpack.c.b16 %v1959, %v1959
      %v1976 = vpack.c.b16 %v1960, %v1960
      %v1977 = vpack.c.b16 %v1961, %v1961
      %v1978 = vpack.c.b16 %v1962, %v1962
      %v1979 = vpack.c.b16 %v1963, %v1963
      %v1980 = vpack.c.b16 %v1964, %v1964
      %v1981 = vpack.c.b16 %v1965, %v1965
      %v1982 = vpack.c.b16 %v1966, %v1966
      %v1983 = vpack.c.b16 %v1967, %v1967
      %v1984 = vpack.c.b16 %v1968, %v1968
      %v1985 = vpack.c.b16 %v1969, %v1969
      %v1986 = vpack.c.b16 %v1970, %v1970
      %v1987 = vpack.c.b16 %v1971, %v1971
      %2004 = vst [vmem:[%s460] sm:$0xf] %v1972
      %2005 = vst [vmem:[%s460 + $0x4] sm:$0xf] %v1973
      %2006 = vst [vmem:[%s460 + $0x8] sm:$0xf] %v1974
      %2007 = vst [vmem:[%s460 + $0xc] sm:$0xf] %v1975
      %2008 = vst [vmem:[%s460 + $0x10] sm:$0xf] %v1976
      %2009 = vst [vmem:[%s460 + $0x14] sm:$0xf] %v1977
      %2010 = vst [vmem:[%s460 + $0x18] sm:$0xf] %v1978
      %2011 = vst [vmem:[%s460 + $0x1c] sm:$0xf] %v1979
      %2012 = vst [vmem:[%s460 + $0x20] sm:$0xf] %v1980
      %2013 = vst [vmem:[%s460 + $0x24] sm:$0xf] %v1981
      %2014 = vst [vmem:[%s460 + $0x28] sm:$0xf] %v1982
      %2015 = vst [vmem:[%s460 + $0x2c] sm:$0xf] %v1983
      %2016 = vst [vmem:[%s460 + $0x30] sm:$0xf] %v1984
      %2017 = vst [vmem:[%s460 + $0x34] sm:$0xf] %v1985
      %2018 = vst [vmem:[%s460 + $0x38] sm:$0xf] %v1986
      %2019 = vst [vmem:[%s460 + $0x3c] sm:$0xf] %v1987
      %s2020 = smul.u32 8, %s23
      %p2021 = scmp.lt.s32.totalorder %s22, 1
      %s2022 = scalar_select %p2021, %s22, 1
      %p2023 = scmp.lt.s32.totalorder %s2020, 15
      %s2024 = scalar_select %p2023, %s2020, 15
      %p2025 = scmp.lt.s32.totalorder %s24, 0
      %s2026 = scalar_select %p2025, %s24, 0
      %s2027 = smul.addr %s2024, 2
      %s2028 = sadd.s32 %s2026, %s2027
      %s2029 = smul.addr %s2022, 32
      %s2030 = sadd.s32 %s2028, %s2029
      %s2031 = smul.addr %s2030, 4
      %s2032 = scalar_lea.vmem %s5, %s2031
      // Predicated region
      $region41: #{spade_resblock_forward.23} parent=39 // pred_check
        %p2033 = pneg %p217
      $region42: #{spade_resblock_forward.23} parent=39 // pred_check_branch
        %2035 = sbr.rel (%p2033) target = $region44
      $region43: #{spade_resblock_forward.23} parent=39 // pred_region
        %s2036 = smul.u32 8, %s23
      $region44: #{spade_resblock_forward.23} parent=39 // pred_fallthru
        _
    $region40: #{spade_resblock_forward.23} parent=5 // pred_fallthru
      _
    %p2037 = scmp.le.s32.totalorder 2, %s11
    // Predicated region
    $region45: #{spade_resblock_forward.23} parent=5 // pred_check
      %p2038 = pneg %p2037
    $region46: #{spade_resblock_forward.23} parent=5 // pred_check_branch
      %2040 = sbr.rel (%p2038) target = $region48
    $region47: #{spade_resblock_forward.23} parent=5 // pred_region
      %s2041 = ssub.s32 %s11, 2
      // Predicated region
      $region49: #{spade_resblock_forward.23} parent=47 // pred_check
        %p2042 = pneg %p223
      $region50: #{spade_resblock_forward.23} parent=47 // pred_check_branch
        %2044 = sbr.rel (%p2042) target = $region52
      $region51: #{spade_resblock_forward.23} parent=47 // pred_region
        %s2045 = smul.u32 8, %s27
        %p2046 = scmp.lt.s32.totalorder %s26, 1
        %s2047 = scalar_select %p2046, %s26, 1
        %p2048 = scmp.lt.s32.totalorder %s2045, 15
        %s2049 = scalar_select %p2048, %s2045, 15
        %p2050 = scmp.lt.s32.totalorder %s28, 0
        %s2051 = scalar_select %p2050, %s28, 0
        %s2052 = smul.addr %s2049, 2
        %s2053 = sadd.s32 %s2051, %s2052
        %s2054 = smul.addr %s2047, 32
        %s2055 = sadd.s32 %s2053, %s2054
        %s2056 = smul.addr %s2055, 4
        %s2057 = scalar_lea.vmem %s5, %s2056
      $region52: #{spade_resblock_forward.23} parent=47 // pred_fallthru
        _
    $region48: #{spade_resblock_forward.23} parent=5 // pred_fallthru
      _
  $region6: #{spade_resblock_forward.23} parent=0 // loop_footer
    %s15 = sadd.s32 1, %s11
  $region7: #{spade_resblock_forward.23} parent=0 // loop_footer_branch
    %10 = sbr.rel target = $region3
  $region8: #{spade_resblock_forward.23} parent=0 // loop_exit
    _

// kernel: spade_resblock_forward.24
$region0: #{spade_resblock_forward.24}
  #allocation0 [shape = 'u32[]', space=smem, size = 0x4, offset = 0x4, fixed_abs, tag = 'smem constant byte address 0x4 - core index']
  #allocation1 [shape = 'u32[144,128]{1,0:T(1,128)}', space=vmem, size = 0x12000, scoped, tag = 'internal scratch']
  %s0 = inlined_call_operand.vmem [shape: bf16[2,16,16,128], index: 0, kind: input, shape index: {}, may-alias: {0,1,2}]
  %s1 = inlined_call_operand.vmem [shape: bf16[2,16,16,128], index: 1, kind: input, shape index: {}, may-alias: {0,1,2}]
  %s2 = inlined_call_operand.vmem [shape: bf16[2,16,16,128], index: 2, kind: input, shape index: {}, may-alias: {0,1,2}]
  %s3 = inlined_call_operand.vmem [shape: bf16[1,3,1,384,256], index: 3, kind: input, shape index: {}]
  %s4 = inlined_call_operand.vmem [shape: f32[1,256], index: 4, kind: input, shape index: {}]
  %s5 = inlined_call_operand.vmem [shape: bf16[2,16,16,256], index: 5, kind: output, shape index: {}]
  %s6 = sld [smem:[#allocation0]]
  $region53: #{spade_resblock_forward.24} parent=0
    _
  %s8 = ssub.s32 1, %s6
  %s9 = scalar_select 0, %s8, %s6
  loop: start=0, step=1, limit=6
  $region2: #{spade_resblock_forward.24} parent=0 // loop_pre_header
    _
  $region3: #{spade_resblock_forward.24} parent=0 // loop_header
    %s11 = sphi 0, %s15
    %p12 = scmp.ge.s32.totalorder %s11, 6
    %s18 = sphi 0, %s44
    %s19 = sphi 0, %s40
    %s20 = sphi 0, %s36
    %s21 = sphi 0, %s32
    %s22 = sphi 0, %s18
    %s23 = sphi 0, %s19
    %s24 = sphi 0, %s20
    %s25 = sphi 0, %s21
    %s26 = sphi 0, %s22
    %s27 = sphi 0, %s23
    %s28 = sphi 0, %s24
    %s29 = sphi 0, %s25
    %s51 = sphi 0, %s53
    %s54 = sphi 0, %s51
    %s55 = sphi 0, %s54
    %s71 = sphi 0, %s55
    %s89 = sphi 0, %s91
    %s92 = sphi 0, %s89
    %s93 = sphi 0, %s92
    %s109 = sphi 0, %s93
    %s127 = sphi 0, %s129
    %s130 = sphi 0, %s127
    %s131 = sphi 0, %s130
    %s147 = sphi 0, %s131
    %s151 = sphi 0, %s151
    %s153 = sphi 0, %s151
    %s154 = sphi 0, %s153
    %s168 = sphi 0, %s154
    %s174 = sphi 0, %s176
    %s177 = sphi 0, %s174
    %s178 = sphi 0, %s177
    %s194 = sphi 0, %s178
    %s204 = sphi 0, %s206
    %s207 = sphi 0, %s204
    %s208 = sphi 0, %s207
    %s224 = sphi 0, %s208
  $region4: #{spade_resblock_forward.24} parent=0 // loop_header_branch
    %14 = sbr.rel (%p12) target = $region8
  $region5: #{spade_resblock_forward.24} parent=0 // loop_body
    %s16 = ssub.s32 %s11, 1
    %s17 = ssub.s32 %s11, 2
    %s30 = sadd.s32 1, %s21
    %p31 = scmp.ge.s32.totalorder %s30, 1
    %s32 = scalar_select %p31, 0, %s30
    %s33 = sadd.s32 1, %s20
    %s34 = scalar_select %p31, %s33, %s20
    %p35 = scmp.ge.s32.totalorder %s34, 1
    %s36 = scalar_select %p35, 0, %s34
    %s37 = sadd.s32 1, %s19
    %s38 = scalar_select %p35, %s37, %s19
    %p39 = scmp.ge.s32.totalorder %s38, 2
    %s40 = scalar_select %p39, 0, %s38
    %s41 = sadd.s32 1, %s18
    %s42 = scalar_select %p39, %s41, %s18
    %p43 = scmp.ge.s32.totalorder %s42, 2
    %s44 = scalar_select %p43, 0, %s42
    %s45 = ssub.s32 %s18, %s44
    %s46 = ssub.s32 %s19, %s40
    %s47 = sor.u32 %s45, %s46
    %s48 = ssub.s32 %s21, %s32
    %s49 = sor.u32 %s47, %s48
    %p50 = scmp.eq.s32.totalorder %s49, 0
    %s52 = sadd.s32 %s51, 1
    %s53 = scalar_select %p50, %s51, %s52
    %p56 = pneg %p50
    %p57 = scmp.eq.s32.totalorder %s11, 3
    %p58 = por %p56, %p57
    %p59 = scmp.ne.s32.totalorder %s51, %s54
    %p60 = scmp.eq.s32.totalorder %s11, 0
    %p61 = por %p59, %p60
    %p62 = scmp.ne.s32.totalorder %s51, %s54
    %p63 = scmp.eq.s32.totalorder %s16, 3
    %p64 = por %p62, %p63
    %p65 = scmp.ne.s32.totalorder %s54, %s55
    %p66 = scmp.eq.s32.totalorder %s16, 0
    %p67 = por %p65, %p66
    %p68 = scmp.ne.s32.totalorder %s54, %s55
    %p69 = scmp.eq.s32.totalorder %s17, 3
    %p70 = por %p68, %p69
    %p72 = scmp.ne.s32.totalorder %s55, %s71
    %p73 = scmp.eq.s32.totalorder %s17, 0
    %p74 = por %p72, %p73
    %s75 = smul.u32 %s19, 8
    %s76 = ssub.s32 %s75, 1
    %p77 = scmp.gt.s32.totalorder %s76, 0
    %s78 = scalar_select %p77, %s76, 0
    %s79 = smul.u32 %s40, 8
    %s80 = ssub.s32 %s79, 1
    %p81 = scmp.gt.s32.totalorder %s80, 0
    %s82 = scalar_select %p81, %s80, 0
    %s83 = ssub.s32 %s18, %s44
    %s84 = ssub.s32 %s78, %s82
    %s85 = sor.u32 %s83, %s84
    %s86 = ssub.s32 %s21, %s32
    %s87 = sor.u32 %s85, %s86
    %p88 = scmp.eq.s32.totalorder %s87, 0
    %s90 = sadd.s32 %s89, 1
    %s91 = scalar_select %p88, %s89, %s90
    %p94 = pneg %p88
    %p95 = scmp.eq.s32.totalorder %s11, 3
    %p96 = por %p94, %p95
    %p97 = scmp.ne.s32.totalorder %s89, %s92
    %p98 = scmp.eq.s32.totalorder %s11, 0
    %p99 = por %p97, %p98
    %p100 = scmp.ne.s32.totalorder %s89, %s92
    %p101 = scmp.eq.s32.totalorder %s16, 3
    %p102 = por %p100, %p101
    %p103 = scmp.ne.s32.totalorder %s92, %s93
    %p104 = scmp.eq.s32.totalorder %s16, 0
    %p105 = por %p103, %p104
    %p106 = scmp.ne.s32.totalorder %s92, %s93
    %p107 = scmp.eq.s32.totalorder %s17, 3
    %p108 = por %p106, %p107
    %p110 = scmp.ne.s32.totalorder %s93, %s109
    %p111 = scmp.eq.s32.totalorder %s17, 0
    %p112 = por %p110, %p111
    %s113 = sadd.s32 %s19, 1
    %s114 = smul.u32 %s113, 8
    %p115 = scmp.lt.s32.totalorder %s114, 15
    %s116 = scalar_select %p115, %s114, 15
    %s117 = sadd.s32 %s40, 1
    %s118 = smul.u32 %s117, 8
    %p119 = scmp.lt.s32.totalorder %s118, 15
    %s120 = scalar_select %p119, %s118, 15
    %s121 = ssub.s32 %s18, %s44
    %s122 = ssub.s32 %s116, %s120
    %s123 = sor.u32 %s121, %s122
    %s124 = ssub.s32 %s21, %s32
    %s125 = sor.u32 %s123, %s124
    %p126 = scmp.eq.s32.totalorder %s125, 0
    %s128 = sadd.s32 %s127, 1
    %s129 = scalar_select %p126, %s127, %s128
    %p132 = pneg %p126
    %p133 = scmp.eq.s32.totalorder %s11, 3
    %p134 = por %p132, %p133
    %p135 = scmp.ne.s32.totalorder %s127, %s130
    %p136 = scmp.eq.s32.totalorder %s11, 0
    %p137 = por %p135, %p136
    %p138 = scmp.ne.s32.totalorder %s127, %s130
    %p139 = scmp.eq.s32.totalorder %s16, 3
    %p140 = por %p138, %p139
    %p141 = scmp.ne.s32.totalorder %s130, %s131
    %p142 = scmp.eq.s32.totalorder %s16, 0
    %p143 = por %p141, %p142
    %p144 = scmp.ne.s32.totalorder %s130, %s131
    %p145 = scmp.eq.s32.totalorder %s17, 3
    %p146 = por %p144, %p145
    %p148 = scmp.ne.s32.totalorder %s131, %s147
    %p149 = scmp.eq.s32.totalorder %s17, 0
    %p150 = por %p148, %p149
    %s152 = sadd.s32 %s151, 1
    %p155 = scmp.eq.s32.totalorder %s11, 3
    %p156 = scmp.ne.s32.totalorder %s151, %s153
    %p157 = scmp.eq.s32.totalorder %s11, 0
    %p158 = por %p156, %p157
    %p159 = scmp.ne.s32.totalorder %s151, %s153
    %p160 = scmp.eq.s32.totalorder %s16, 3
    %p161 = por %p159, %p160
    %p162 = scmp.ne.s32.totalorder %s153, %s154
    %p163 = scmp.eq.s32.totalorder %s16, 0
    %p164 = por %p162, %p163
    %p165 = scmp.ne.s32.totalorder %s153, %s154
    %p166 = scmp.eq.s32.totalorder %s17, 3
    %p167 = por %p165, %p166
    %p169 = scmp.ne.s32.totalorder %s154, %s168
    %p170 = scmp.eq.s32.totalorder %s17, 0
    %p171 = por %p169, %p170
    %s172 = ssub.s32 %s20, %s36
    %p173 = scmp.eq.s32.totalorder %s172, 0
    %s175 = sadd.s32 %s174, 1
    %s176 = scalar_select %p173, %s174, %s175
    %p179 = pneg %p173
    %p180 = scmp.eq.s32.totalorder %s11, 3
    %p181 = por %p179, %p180
    %p182 = scmp.ne.s32.totalorder %s174, %s177
    %p183 = scmp.eq.s32.totalorder %s11, 0
    %p184 = por %p182, %p183
    %p185 = scmp.ne.s32.totalorder %s174, %s177
    %p186 = scmp.eq.s32.totalorder %s16, 3
    %p187 = por %p185, %p186
    %p188 = scmp.ne.s32.totalorder %s177, %s178
    %p189 = scmp.eq.s32.totalorder %s16, 0
    %p190 = por %p188, %p189
    %p191 = scmp.ne.s32.totalorder %s177, %s178
    %p192 = scmp.eq.s32.totalorder %s17, 3
    %p193 = por %p191, %p192
    %p195 = scmp.ne.s32.totalorder %s178, %s194
    %p196 = scmp.eq.s32.totalorder %s17, 0
    %p197 = por %p195, %p196
    %s198 = ssub.s32 %s18, %s44
    %s199 = ssub.s32 %s19, %s40
    %s200 = sor.u32 %s198, %s199
    %s201 = ssub.s32 %s20, %s36
    %s202 = sor.u32 %s200, %s201
    %p203 = scmp.eq.s32.totalorder %s202, 0
    %s205 = sadd.s32 %s204, 1
    %s206 = scalar_select %p203, %s204, %s205
    %p209 = pneg %p203
    %p210 = scmp.eq.s32.totalorder %s11, 3
    %p211 = por %p209, %p210
    %p212 = scmp.ne.s32.totalorder %s204, %s207
    %p213 = scmp.eq.s32.totalorder %s11, 0
    %p214 = por %p212, %p213
    %p215 = scmp.ne.s32.totalorder %s204, %s207
    %p216 = scmp.eq.s32.totalorder %s16, 3
    %p217 = por %p215, %p216
    %p218 = scmp.ne.s32.totalorder %s207, %s208
    %p219 = scmp.eq.s32.totalorder %s16, 0
    %p220 = por %p218, %p219
    %p221 = scmp.ne.s32.totalorder %s207, %s208
    %p222 = scmp.eq.s32.totalorder %s17, 3
    %p223 = por %p221, %p222
    %p225 = scmp.ne.s32.totalorder %s208, %s224
    %p226 = scmp.eq.s32.totalorder %s17, 0
    %p227 = por %p225, %p226
    %p228 = scmp.le.s32.totalorder 1, %s11
    %p229 = scmp.lt.s32.totalorder %s11, 5
    %p230 = pnand %p228, %p229
    %p231 = pneg %p230
    // Predicated region
    $region9: #{spade_resblock_forward.24} parent=5 // pred_check
      _
    $region10: #{spade_resblock_forward.24} parent=5 // pred_check_branch
      %233 = sbr.rel (%p230) target = $region12
    $region11: #{spade_resblock_forward.24} parent=5 // pred_region
      %s234 = ssub.s32 %s11, 1
      // Predicated region
      $region13: #{spade_resblock_forward.24} parent=11 // pred_check
        %p235 = pneg %p164
      $region14: #{spade_resblock_forward.24} parent=11 // pred_check_branch
        %237 = sbr.rel (%p235) target = $region16
      $region15: #{spade_resblock_forward.24} parent=11 // pred_region
        _
      $region16: #{spade_resblock_forward.24} parent=11 // pred_fallthru
        _
      // Predicated region
      $region17: #{spade_resblock_forward.24} parent=11 // pred_check
        %p238 = pneg %p190
      $region18: #{spade_resblock_forward.24} parent=11 // pred_check_branch
        %240 = sbr.rel (%p238) target = $region20
      $region19: #{spade_resblock_forward.24} parent=11 // pred_region
        %s241 = smul.u32 2, %s24
        %p242 = scmp.lt.s32.totalorder %s241, 1
        %s243 = scalar_select %p242, %s241, 1
        %s244 = scalar_lea.vmem %s4, %s243
        %s245 = smul.u32 2, %s24
      $region20: #{spade_resblock_forward.24} parent=11 // pred_fallthru
        _
    $region12: #{spade_resblock_forward.24} parent=5 // pred_fallthru
      _
    %p246 = scmp.lt.s32.totalorder %s11, 4
    // Predicated region
    $region21: #{spade_resblock_forward.24} parent=5 // pred_check
      %p247 = pneg %p246
    $region22: #{spade_resblock_forward.24} parent=5 // pred_check_branch
      %249 = sbr.rel (%p247) target = $region24
    $region23: #{spade_resblock_forward.24} parent=5 // pred_region
      // Predicated region
      $region25: #{spade_resblock_forward.24} parent=23 // pred_check
        %p250 = pneg %p61
      $region26: #{spade_resblock_forward.24} parent=23 // pred_check_branch
        %252 = sbr.rel (%p250) target = $region28
      $region27: #{spade_resblock_forward.24} parent=23 // pred_region
        %s253 = smul.u32 8, %s19
        %p254 = scmp.lt.s32.totalorder %s18, 1
        %s255 = scalar_select %p254, %s18, 1
        %p256 = scmp.lt.s32.totalorder %s253, 15
        %s257 = scalar_select %p256, %s253, 15
        %p258 = scmp.lt.s32.totalorder %s21, 0
        %s259 = scalar_select %p258, %s21, 0
        %s260 = smul.addr %s257, 2
        %s261 = sadd.s32 %s259, %s260
        %s262 = smul.addr %s255, 32
        %s263 = sadd.s32 %s261, %s262
        %s264 = smul.addr %s263, 4
        %s265 = scalar_lea.vmem %s0, %s264
        %s266 = smul.u32 8, %s19
      $region28: #{spade_resblock_forward.24} parent=23 // pred_fallthru
        _
      // Predicated region
      $region29: #{spade_resblock_forward.24} parent=23 // pred_check
        %p267 = pneg %p99
      $region30: #{spade_resblock_forward.24} parent=23 // pred_check_branch
        %269 = sbr.rel (%p267) target = $region32
      $region31: #{spade_resblock_forward.24} parent=23 // pred_region
        %s270 = smul.u32 %s19, 8
        %s271 = ssub.s32 %s270, 1
        %p272 = scmp.gt.s32.totalorder %s271, 0
        %s273 = scalar_select %p272, %s271, 0
        %p274 = scmp.lt.s32.totalorder %s18, 1
        %s275 = scalar_select %p274, %s18, 1
        %p276 = scmp.lt.s32.totalorder %s273, 15
        %s277 = scalar_select %p276, %s273, 15
        %p278 = scmp.lt.s32.totalorder %s21, 0
        %s279 = scalar_select %p278, %s21, 0
        %s280 = smul.addr %s277, 2
        %s281 = sadd.s32 %s279, %s280
        %s282 = smul.addr %s275, 32
        %s283 = sadd.s32 %s281, %s282
        %s284 = smul.addr %s283, 4
        %s285 = scalar_lea.vmem %s1, %s284
        %s286 = smul.u32 %s19, 8
        %s287 = ssub.s32 %s286, 1
        %p288 = scmp.gt.s32.totalorder %s287, 0
        %s289 = scalar_select %p288, %s287, 0
      $region32: #{spade_resblock_forward.24} parent=23 // pred_fallthru
        _
      // Predicated region
      $region33: #{spade_resblock_forward.24} parent=23 // pred_check
        %p290 = pneg %p137
      $region34: #{spade_resblock_forward.24} parent=23 // pred_check_branch
        %292 = sbr.rel (%p290) target = $region36
      $region35: #{spade_resblock_forward.24} parent=23 // pred_region
        %s293 = sadd.s32 %s19, 1
        %s294 = smul.u32 %s293, 8
        %p295 = scmp.lt.s32.totalorder %s294, 15
        %s296 = scalar_select %p295, %s294, 15
        %p297 = scmp.lt.s32.totalorder %s18, 1
        %s298 = scalar_select %p297, %s18, 1
        %p299 = scmp.lt.s32.totalorder %s296, 15
        %s300 = scalar_select %p299, %s296, 15
        %p301 = scmp.lt.s32.totalorder %s21, 0
        %s302 = scalar_select %p301, %s21, 0
        %s303 = smul.addr %s300, 2
        %s304 = sadd.s32 %s302, %s303
        %s305 = smul.addr %s298, 32
        %s306 = sadd.s32 %s304, %s305
        %s307 = smul.addr %s306, 4
        %s308 = scalar_lea.vmem %s2, %s307
        %s309 = sadd.s32 %s19, 1
        %s310 = smul.u32 %s309, 8
        %p311 = scmp.lt.s32.totalorder %s310, 15
        %s312 = scalar_select %p311, %s310, 15
      $region36: #{spade_resblock_forward.24} parent=23 // pred_fallthru
        _
    $region24: #{spade_resblock_forward.24} parent=5 // pred_fallthru
      _
    %p313 = scmp.le.s32.totalorder 1, %s11
    %p314 = scmp.lt.s32.totalorder %s11, 5
    %p315 = pnand %p313, %p314
    %p316 = pneg %p315
    // Predicated region
    $region37: #{spade_resblock_forward.24} parent=5 // pred_check
      _
    $region38: #{spade_resblock_forward.24} parent=5 // pred_check_branch
      %318 = sbr.rel (%p315) target = $region40
    $region39: #{spade_resblock_forward.24} parent=5 // pred_region
      %s319 = ssub.s32 %s11, 1
      %s320 = smul.u32 8, %s23
      %p321 = scmp.lt.s32.totalorder %s22, 1
      %s322 = scalar_select %p321, %s22, 1
      %p323 = scmp.lt.s32.totalorder %s320, 15
      %s324 = scalar_select %p323, %s320, 15
      %p325 = scmp.lt.s32.totalorder %s25, 0
      %s326 = scalar_select %p325, %s25, 0
      %s327 = smul.addr %s324, 2
      %s328 = sadd.s32 %s326, %s327
      %s329 = smul.addr %s322, 32
      %s330 = sadd.s32 %s328, %s329
      %s331 = smul.addr %s330, 4
      %s332 = scalar_lea.vmem %s0, %s331
      %p333 = pneg %p67
      %p334 = pneg %p64
      %s335 = smul.u32 %s23, 8
      %s336 = ssub.s32 %s335, 1
      %p337 = scmp.gt.s32.totalorder %s336, 0
      %s338 = scalar_select %p337, %s336, 0
      %p339 = scmp.lt.s32.totalorder %s22, 1
      %s340 = scalar_select %p339, %s22, 1
      %p341 = scmp.lt.s32.totalorder %s338, 15
      %s342 = scalar_select %p341, %s338, 15
      %p343 = scmp.lt.s32.totalorder %s25, 0
      %s344 = scalar_select %p343, %s25, 0
      %s345 = smul.addr %s342, 2
      %s346 = sadd.s32 %s344, %s345
      %s347 = smul.addr %s340, 32
      %s348 = sadd.s32 %s346, %s347
      %s349 = smul.addr %s348, 4
      %s350 = scalar_lea.vmem %s1, %s349
      %p351 = pneg %p105
      %p352 = pneg %p102
      %s353 = sadd.s32 %s23, 1
      %s354 = smul.u32 %s353, 8
      %p355 = scmp.lt.s32.totalorder %s354, 15
      %s356 = scalar_select %p355, %s354, 15
      %p357 = scmp.lt.s32.totalorder %s22, 1
      %s358 = scalar_select %p357, %s22, 1
      %p359 = scmp.lt.s32.totalorder %s356, 15
      %s360 = scalar_select %p359, %s356, 15
      %p361 = scmp.lt.s32.totalorder %s25, 0
      %s362 = scalar_select %p361, %s25, 0
      %s363 = smul.addr %s360, 2
      %s364 = sadd.s32 %s362, %s363
      %s365 = smul.addr %s358, 32
      %s366 = sadd.s32 %s364, %s365
      %s367 = smul.addr %s366, 4
      %s368 = scalar_lea.vmem %s2, %s367
      %p369 = pneg %p143
      %p370 = pneg %p140
      %p371 = pneg %p164
      %p372 = pneg %p161
      %s373 = smul.u32 2, %s24
      %p374 = scmp.lt.s32.totalorder %s373, 1
      %s375 = scalar_select %p374, %s373, 1
      %s376 = scalar_lea.vmem %s4, %s375
      %p377 = pneg %p190
      %p378 = pneg %p187
      %p379 = pneg %p220
      %p380 = pneg %p217
      %s381 = smul.u32 8, %s23
      %s382 = smul.u32 2, %s24
      %p383 = scmp.lt.s32.totalorder %s22, 1
      %s384 = scalar_select %p383, %s22, 1
      %p385 = scmp.lt.s32.totalorder %s381, 15
      %s386 = scalar_select %p385, %s381, 15
      %p387 = scmp.lt.s32.totalorder %s382, 1
      %s388 = scalar_select %p387, %s382, 1
      %s389 = smul.addr %s386, 4
      %s390 = sadd.s32 %s388, %s389
      %s391 = smul.addr %s384, 64
      %s392 = sadd.s32 %s390, %s391
      %s393 = smul.addr %s392, 4
      %s394 = scalar_lea.vmem %s5, %s393
      %s395 = smul.u32 8, %s23
      %p396 = scmp.lt.s32.totalorder %s22, 1
      %s397 = scalar_select %p396, %s22, 1
      %p398 = scmp.lt.s32.totalorder %s395, 15
      %s399 = scalar_select %p398, %s395, 15
      %p400 = scmp.lt.s32.totalorder %s25, 0
      %s401 = scalar_select %p400, %s25, 0
      %s402 = smul.addr %s399, 2
      %s403 = sadd.s32 %s401, %s402
      %s404 = smul.addr %s397, 32
      %s405 = sadd.s32 %s403, %s404
      %s406 = smul.addr %s405, 4
      %s407 = scalar_lea.vmem %s0, %s406
      %s408 = smul.u32 8, %s23
      %s409 = smul.u32 %s23, 8
      %s410 = ssub.s32 %s409, 1
      %p411 = scmp.gt.s32.totalorder %s410, 0
      %s412 = scalar_select %p411, %s410, 0
      %p413 = scmp.lt.s32.totalorder %s22, 1
      %s414 = scalar_select %p413, %s22, 1
      %p415 = scmp.lt.s32.totalorder %s412, 15
      %s416 = scalar_select %p415, %s412, 15
      %p417 = scmp.lt.s32.totalorder %s25, 0
      %s418 = scalar_select %p417, %s25, 0
      %s419 = smul.addr %s416, 2
      %s420 = sadd.s32 %s418, %s419
      %s421 = smul.addr %s414, 32
      %s422 = sadd.s32 %s420, %s421
      %s423 = smul.addr %s422, 4
      %s424 = scalar_lea.vmem %s1, %s423
      %s425 = smul.u32 %s23, 8
      %s426 = ssub.s32 %s425, 1
      %p427 = scmp.gt.s32.totalorder %s426, 0
      %s428 = scalar_select %p427, %s426, 0
      %s429 = sadd.s32 %s23, 1
      %s430 = smul.u32 %s429, 8
      %p431 = scmp.lt.s32.totalorder %s430, 15
      %s432 = scalar_select %p431, %s430, 15
      %p433 = scmp.lt.s32.totalorder %s22, 1
      %s434 = scalar_select %p433, %s22, 1
      %p435 = scmp.lt.s32.totalorder %s432, 15
      %s436 = scalar_select %p435, %s432, 15
      %p437 = scmp.lt.s32.totalorder %s25, 0
      %s438 = scalar_select %p437, %s25, 0
      %s439 = smul.addr %s436, 2
      %s440 = sadd.s32 %s438, %s439
      %s441 = smul.addr %s434, 32
      %s442 = sadd.s32 %s440, %s441
      %s443 = smul.addr %s442, 4
      %s444 = scalar_lea.vmem %s2, %s443
      %s445 = sadd.s32 %s23, 1
      %s446 = smul.u32 %s445, 8
      %p447 = scmp.lt.s32.totalorder %s446, 15
      %s448 = scalar_select %p447, %s446, 15
      %s449 = smul.u32 2, %s24
      %p450 = scmp.lt.s32.totalorder %s449, 1
      %s451 = scalar_select %p450, %s449, 1
      %s452 = scalar_lea.vmem %s4, %s451
      %s453 = smul.u32 2, %s24
      %s454 = smul.u32 8, %s23
      %s455 = smul.u32 2, %s24
      %p456 = scmp.lt.s32.totalorder %s22, 1
      %s457 = scalar_select %p456, %s22, 1
      %p458 = scmp.lt.s32.totalorder %s454, 15
      %s459 = scalar_select %p458, %s454, 15
      %p460 = scmp.lt.s32.totalorder %s455, 1
      %s461 = scalar_select %p460, %s455, 1
      %s462 = smul.addr %s459, 4
      %s463 = sadd.s32 %s461, %s462
      %s464 = smul.addr %s457, 64
      %s465 = sadd.s32 %s463, %s464
      %s466 = smul.addr %s465, 4
      %s467 = scalar_lea.vmem %s5, %s466
      %s468 = smul.u32 8, %s23
      %s469 = smul.u32 2, %s24
      %v471 = vld [vmem:[%s407] sm:$0xf]
      %v472 = vld [vmem:[%s407 + $0x4] sm:$0xf]
      %v473 = vld [vmem:[%s407 + $0x8] sm:$0xf]
      %v474 = vld [vmem:[%s407 + $0xc] sm:$0xf]
      %v475 = vld [vmem:[%s407 + $0x10] sm:$0xf]
      %v476 = vld [vmem:[%s407 + $0x14] sm:$0xf]
      %v477 = vld [vmem:[%s407 + $0x18] sm:$0xf]
      %v478 = vld [vmem:[%s407 + $0x1c] sm:$0xf]
      %v479 = vld [vmem:[%s407 + $0x20] sm:$0xf]
      %v480 = vld [vmem:[%s407 + $0x24] sm:$0xf]
      %v481 = vld [vmem:[%s407 + $0x28] sm:$0xf]
      %v482 = vld [vmem:[%s407 + $0x2c] sm:$0xf]
      %v483 = vld [vmem:[%s407 + $0x30] sm:$0xf]
      %v484 = vld [vmem:[%s407 + $0x34] sm:$0xf]
      %v485 = vld [vmem:[%s407 + $0x38] sm:$0xf]
      %v486 = vld [vmem:[%s407 + $0x3c] sm:$0xf]
      %v487 = vunpack.c.l.bf16 %v471
      %v488 = vunpack.c.l.bf16 %v472
      %v489 = vunpack.c.l.bf16 %v473
      %v490 = vunpack.c.l.bf16 %v474
      %v491 = vunpack.c.l.bf16 %v475
      %v492 = vunpack.c.l.bf16 %v476
      %v493 = vunpack.c.l.bf16 %v477
      %v494 = vunpack.c.l.bf16 %v478
      %v495 = vunpack.c.l.bf16 %v479
      %v496 = vunpack.c.l.bf16 %v480
      %v497 = vunpack.c.l.bf16 %v481
      %v498 = vunpack.c.l.bf16 %v482
      %v499 = vunpack.c.l.bf16 %v483
      %v500 = vunpack.c.l.bf16 %v484
      %v501 = vunpack.c.l.bf16 %v485
      %v502 = vunpack.c.l.bf16 %v486
      %v503 = vld [vmem:[%s424] sm:$0xf]
      %v504 = vld [vmem:[%s424 + $0x4] sm:$0xf]
      %v505 = vunpack.c.l.bf16 %v503
      %v506 = vunpack.c.l.bf16 %v504
      %v507 = vld [vmem:[%s444] sm:$0xf]
      %v508 = vld [vmem:[%s444 + $0x4] sm:$0xf]
      %v509 = vunpack.c.l.bf16 %v507
      %v510 = vunpack.c.l.bf16 %v508
      %p511 = scmp.gt.s32.totalorder %s23, 0
      %s512 = scalar_select %p511, 1, 0
      %s513 = scvt.s32.f32 %s512
      %p514 = scmp.lt.s32.totalorder %s23, 1
      %s515 = scalar_select %p514, 1, 0
      %s516 = scvt.s32.f32 %s515
      %v517 = vstv %s513
      %v518 = vmul.f32 %v505, %v517
      %v519 = vmul.f32 %v506, %v517
      %v520 = vstv %s516
      %v521 = vmul.f32 %v509, %v520
      %v522 = vmul.f32 %v510, %v520
      %v523 = vlaneseq
      %v524 = vshrl.u32 %v523, 7
      %v525 = vadd.s32 %v524, 8
      %vm526 = vcmp.eq.s32.totalorder %v524, 0
      %vm527 = vcmp.eq.s32.totalorder %v525, 0
      %vm528 = vcmp.eq.s32.totalorder %v524, 15
      %vm529 = vcmp.eq.s32.totalorder %v525, 15
      %v530 = vrot.slane %v518, 7
      %v531 = vrot.slane %v519, 7
      %v532 = vrot.slane %v487, 7
      %v533 = vrot.slane %v488, 7
      %v534 = vrot.slane %v489, 7
      %v535 = vrot.slane %v490, 7
      %v536 = vrot.slane %v491, 7
      %v537 = vrot.slane %v492, 7
      %v538 = vrot.slane %v493, 7
      %v539 = vrot.slane %v494, 7
      %v540 = vrot.slane %v495, 7
      %v541 = vrot.slane %v496, 7
      %v542 = vrot.slane %v497, 7
      %v543 = vrot.slane %v498, 7
      %v544 = vrot.slane %v499, 7
      %v545 = vrot.slane %v500, 7
      %vm546 = vcmp.lt.s32.totalorder %v524, 1
      %v547 = vsel %vm546, %v544, %v545
      %v548 = vsel %vm546, %v543, %v544
      %v549 = vsel %vm546, %v542, %v543
      %v550 = vsel %vm546, %v541, %v542
      %v551 = vsel %vm546, %v540, %v541
      %v552 = vsel %vm546, %v539, %v540
      %v553 = vsel %vm546, %v538, %v539
      %v554 = vsel %vm546, %v537, %v538
      %v555 = vsel %vm546, %v536, %v537
      %v556 = vsel %vm546, %v535, %v536
      %v557 = vsel %vm546, %v534, %v535
      %v558 = vsel %vm546, %v533, %v534
      %v559 = vsel %vm546, %v532, %v533
      %v560 = vsel %vm546, %v531, %v532
      %v561 = vsel %vm546, %v530, %v531
      %v562 = vsel %vm546, %v545, %v530
      %v563 = vrot.slane %v518, 1
      %v564 = vrot.slane %v519, 1
      %v565 = vrot.slane %v487, 1
      %v566 = vrot.slane %v488, 1
      %v567 = vrot.slane %v489, 1
      %v568 = vrot.slane %v490, 1
      %v569 = vrot.slane %v491, 1
      %v570 = vrot.slane %v492, 1
      %v571 = vrot.slane %v493, 1
      %v572 = vrot.slane %v494, 1
      %v573 = vrot.slane %v495, 1
      %v574 = vrot.slane %v496, 1
      %v575 = vrot.slane %v497, 1
      %v576 = vrot.slane %v498, 1
      %v577 = vrot.slane %v499, 1
      %v578 = vrot.slane %v500, 1
      %vm579 = vcmp.lt.s32.totalorder %v524, 7
      %v580 = vsel %vm579, %v577, %v578
      %v581 = vsel %vm579, %v576, %v577
      %v582 = vsel %vm579, %v575, %v576
      %v583 = vsel %vm579, %v574, %v575
      %v584 = vsel %vm579, %v573, %v574
      %v585 = vsel %vm579, %v572, %v573
      %v586 = vsel %vm579, %v571, %v572
      %v587 = vsel %vm579, %v570, %v571
      %v588 = vsel %vm579, %v569, %v570
      %v589 = vsel %vm579, %v568, %v569
      %v590 = vsel %vm579, %v567, %v568
      %v591 = vsel %vm579, %v566, %v567
      %v592 = vsel %vm579, %v565, %v566
      %v593 = vsel %vm579, %v564, %v565
      %v594 = vsel %vm579, %v563, %v564
      %v595 = vsel %vm579, %v578, %v563
      %v596 = vsel %vm526, 1, 0
      %v597 = vsel %vm527, 1, 0
      %vm598 = vcmp.eq.s32.totalorder %v596, 1
      %vm599 = vcmp.eq.s32.totalorder %v597, 1
      %v600 = vsel %vm598, 0.0, %v562
      %v601 = vsel %vm599, 0.0, %v561
      %v602 = vsel %vm598, 0.0, %v560
      %v603 = vsel %vm599, 0.0, %v559
      %v604 = vsel %vm598, 0.0, %v558
      %v605 = vsel %vm599, 0.0, %v557
      %v606 = vsel %vm598, 0.0, %v556
      %v607 = vsel %vm599, 0.0, %v555
      %v608 = vsel %vm598, 0.0, %v554
      %v609 = vsel %vm599, 0.0, %v553
      %v610 = vsel %vm598, 0.0, %v552
      %v611 = vsel %vm599, 0.0, %v551
      %v612 = vsel %vm598, 0.0, %v550
      %v613 = vsel %vm599, 0.0, %v549
      %v614 = vsel %vm598, 0.0, %v548
      %v615 = vsel %vm599, 0.0, %v547
      %v616 = vsel %vm528, 1, 0
      %v617 = vsel %vm529, 1, 0
      %vm618 = vcmp.eq.s32.totalorder %v616, 1
      %vm619 = vcmp.eq.s32.totalorder %v617, 1
      %v620 = vsel %vm618, 0.0, %v594
      %v621 = vsel %vm619, 0.0, %v593
      %v622 = vsel %vm618, 0.0, %v592
      %v623 = vsel %vm619, 0.0, %v591
      %v624 = vsel %vm618, 0.0, %v590
      %v625 = vsel %vm619, 0.0, %v589
      %v626 = vsel %vm618, 0.0, %v588
      %v627 = vsel %vm619, 0.0, %v587
      %v628 = vsel %vm618, 0.0, %v586
      %v629 = vsel %vm619, 0.0, %v585
      %v630 = vsel %vm618, 0.0, %v584
      %v631 = vsel %vm619, 0.0, %v583
      %v632 = vsel %vm618, 0.0, %v582
      %v633 = vsel %vm619, 0.0, %v581
      %v634 = vsel %vm618, 0.0, %v580
      %v635 = vsel %vm619, 0.0, %v595
      %v636 = vpack.c.bf16 %v601, %v600
      %v637 = vpack.c.bf16 %v603, %v602
      %v638 = vpack.c.bf16 %v605, %v604
      %v639 = vpack.c.bf16 %v607, %v606
      %v640 = vpack.c.bf16 %v609, %v608
      %v641 = vpack.c.bf16 %v611, %v610
      %v642 = vpack.c.bf16 %v613, %v612
      %v643 = vpack.c.bf16 %v615, %v614
      %v644 = vpack.c.bf16 %v519, %v518
      %v645 = vpack.c.bf16 %v488, %v487
      %v646 = vpack.c.bf16 %v490, %v489
      %v647 = vpack.c.bf16 %v492, %v491
      %v648 = vpack.c.bf16 %v494, %v493
      %v649 = vpack.c.bf16 %v496, %v495
      %v650 = vpack.c.bf16 %v498, %v497
      %v651 = vpack.c.bf16 %v500, %v499
      %v652 = vpack.c.bf16 %v621, %v620
      %v653 = vpack.c.bf16 %v623, %v622
      %v654 = vpack.c.bf16 %v625, %v624
      %v655 = vpack.c.bf16 %v627, %v626
      %v656 = vpack.c.bf16 %v629, %v628
      %v657 = vpack.c.bf16 %v631, %v630
      %v658 = vpack.c.bf16 %v633, %v632
      %v659 = vpack.c.bf16 %v635, %v634
      %s660 = smul.u32 %s25, 96
      %s661 = smul.u32 %s24, 288
      %s662 = sadd.s32 %s660, %s661
      %s663 = smul.addr %s662, 4
      %s664 = scalar_lea.vmem %s3, %s663
      %v665 = vld [vmem:[%s664] sm:$0xff]
      %v666 = vld [vmem:[%s664 + $0x8] sm:$0xff]
      %v667 = vld [vmem:[%s664 + $0x10] sm:$0xff]
      %v668 = vld [vmem:[%s664 + $0x18] sm:$0xff]
      %v669 = vld [vmem:[%s664 + $0x20] sm:$0xff]
      %v670 = vld [vmem:[%s664 + $0x28] sm:$0xff]
      %v671 = vld [vmem:[%s664 + $0x30] sm:$0xff]
      %v672 = vld [vmem:[%s664 + $0x38] sm:$0xff]
      %v673 = vld [vmem:[%s664 + $0x40] sm:$0xff]
      %v674 = vld [vmem:[%s664 + $0x48] sm:$0xff]
      %v675 = vld [vmem:[%s664 + $0x50] sm:$0xff]
      %v676 = vld [vmem:[%s664 + $0x58] sm:$0xff]
      %v677 = vld [vmem:[%s664 + $0x60] sm:$0xff]
      %v678 = vld [vmem:[%s664 + $0x68] sm:$0xff]
      %v679 = vld [vmem:[%s664 + $0x70] sm:$0xff]
      %v680 = vld [vmem:[%s664 + $0x78] sm:$0xff]
      %v681 = vld [vmem:[%s664 + $0x80] sm:$0xff]
      %v682 = vld [vmem:[%s664 + $0x88] sm:$0xff]
      %v683 = vld [vmem:[%s664 + $0x90] sm:$0xff]
      %v684 = vld [vmem:[%s664 + $0x98] sm:$0xff]
      %v685 = vld [vmem:[%s664 + $0xa0] sm:$0xff]
      %v686 = vld [vmem:[%s664 + $0xa8] sm:$0xff]
      %v687 = vld [vmem:[%s664 + $0xb0] sm:$0xff]
      %v688 = vld [vmem:[%s664 + $0xb8] sm:$0xff]
      %v689 = vld [vmem:[%s664 + $0xc0] sm:$0xff]
      %v690 = vld [vmem:[%s664 + $0xc8] sm:$0xff]
      %v691 = vld [vmem:[%s664 + $0xd0] sm:$0xff]
      %v692 = vld [vmem:[%s664 + $0xd8] sm:$0xff]
      %v693 = vld [vmem:[%s664 + $0xe0] sm:$0xff]
      %v694 = vld [vmem:[%s664 + $0xe8] sm:$0xff]
      %v695 = vld [vmem:[%s664 + $0xf0] sm:$0xff]
      %v696 = vld [vmem:[%s664 + $0xf8] sm:$0xff]
      %v697 = vld [vmem:[%s664 + $0x100] sm:$0xff]
      %v698 = vld [vmem:[%s664 + $0x108] sm:$0xff]
      %v699 = vld [vmem:[%s664 + $0x110] sm:$0xff]
      %v700 = vld [vmem:[%s664 + $0x118] sm:$0xff]
      %v701 = vld [vmem:[%s664 + $0x120] sm:$0xff]
      %v702 = vld [vmem:[%s664 + $0x128] sm:$0xff]
      %v703 = vld [vmem:[%s664 + $0x130] sm:$0xff]
      %v704 = vld [vmem:[%s664 + $0x138] sm:$0xff]
      %v705 = vld [vmem:[%s664 + $0x140] sm:$0xff]
      %v706 = vld [vmem:[%s664 + $0x148] sm:$0xff]
      %v707 = vld [vmem:[%s664 + $0x150] sm:$0xff]
      %v708 = vld [vmem:[%s664 + $0x158] sm:$0xff]
      %v709 = vld [vmem:[%s664 + $0x160] sm:$0xff]
      %v710 = vld [vmem:[%s664 + $0x168] sm:$0xff]
      %v711 = vld [vmem:[%s664 + $0x170] sm:$0xff]
      %v712 = vld [vmem:[%s664 + $0x178] sm:$0xff]
      %v713 = vrot.slane %v501, 7
      %v714 = vrot.slane %v502, 7
      %v715 = vsel %vm546, %v713, %v714
      %v716 = vsel %vm546, %v545, %v713
      %v717 = vsel %vm546, %v714, %v532
      %v718 = vrot.slane %v501, 1
      %v719 = vrot.slane %v502, 1
      %v720 = vsel %vm579, %v718, %v719
      %v721 = vsel %vm579, %v578, %v718
      %v722 = vsel %vm579, %v719, %v565
      %v723 = vsel %vm598, 0.0, %v717
      %v724 = vsel %vm598, 0.0, %v716
      %v725 = vsel %vm599, 0.0, %v715
      %v726 = vsel %vm619, 0.0, %v721
      %v727 = vsel %vm618, 0.0, %v720
      %v728 = vsel %vm619, 0.0, %v722
      %v729 = vpack.c.bf16 %v603, %v723
      %v730 = vpack.c.bf16 %v725, %v724
      %v731 = vpack.c.bf16 %v502, %v501
      %v732 = vpack.c.bf16 %v726, %v634
      %v733 = vpack.c.bf16 %v728, %v727
      %s734 = sadd.s32 %s660, 96
      %s735 = sadd.s32 %s734, %s661
      %s736 = smul.addr %s735, 4
      %s737 = scalar_lea.vmem %s3, %s736
      %v738 = vld [vmem:[%s737] sm:$0xff]
      %v739 = vld [vmem:[%s737 + $0x8] sm:$0xff]
      %v740 = vld [vmem:[%s737 + $0x10] sm:$0xff]
      %v741 = vld [vmem:[%s737 + $0x18] sm:$0xff]
      %v742 = vld [vmem:[%s737 + $0x20] sm:$0xff]
      %v743 = vld [vmem:[%s737 + $0x28] sm:$0xff]
      %v744 = vld [vmem:[%s737 + $0x30] sm:$0xff]
      %v745 = vld [vmem:[%s737 + $0x38] sm:$0xff]
      %v746 = vld [vmem:[%s737 + $0x40] sm:$0xff]
      %v747 = vld [vmem:[%s737 + $0x48] sm:$0xff]
      %v748 = vld [vmem:[%s737 + $0x50] sm:$0xff]
      %v749 = vld [vmem:[%s737 + $0x58] sm:$0xff]
      %v750 = vld [vmem:[%s737 + $0x60] sm:$0xff]
      %v751 = vld [vmem:[%s737 + $0x68] sm:$0xff]
      %v752 = vld [vmem:[%s737 + $0x70] sm:$0xff]
      %v753 = vld [vmem:[%s737 + $0x78] sm:$0xff]
      %v754 = vld [vmem:[%s737 + $0x80] sm:$0xff]
      %v755 = vld [vmem:[%s737 + $0x88] sm:$0xff]
      %v756 = vld [vmem:[%s737 + $0x90] sm:$0xff]
      %v757 = vld [vmem:[%s737 + $0x98] sm:$0xff]
      %v758 = vld [vmem:[%s737 + $0xa0] sm:$0xff]
      %v759 = vld [vmem:[%s737 + $0xa8] sm:$0xff]
      %v760 = vld [vmem:[%s737 + $0xb0] sm:$0xff]
      %v761 = vld [vmem:[%s737 + $0xb8] sm:$0xff]
      %v762 = vld [vmem:[%s737 + $0xc0] sm:$0xff]
      %v763 = vld [vmem:[%s737 + $0xc8] sm:$0xff]
      %v764 = vld [vmem:[%s737 + $0xd0] sm:$0xff]
      %v765 = vld [vmem:[%s737 + $0xd8] sm:$0xff]
      %v766 = vld [vmem:[%s737 + $0xe0] sm:$0xff]
      %v767 = vld [vmem:[%s737 + $0xe8] sm:$0xff]
      %v768 = vld [vmem:[%s737 + $0xf0] sm:$0xff]
      %v769 = vld [vmem:[%s737 + $0xf8] sm:$0xff]
      %v770 = vld [vmem:[%s737 + $0x100] sm:$0xff]
      %v771 = vld [vmem:[%s737 + $0x108] sm:$0xff]
      %v772 = vld [vmem:[%s737 + $0x110] sm:$0xff]
      %v773 = vld [vmem:[%s737 + $0x118] sm:$0xff]
      %v774 = vld [vmem:[%s737 + $0x120] sm:$0xff]
      %v775 = vld [vmem:[%s737 + $0x128] sm:$0xff]
      %v776 = vld [vmem:[%s737 + $0x130] sm:$0xff]
      %v777 = vld [vmem:[%s737 + $0x138] sm:$0xff]
      %v778 = vld [vmem:[%s737 + $0x140] sm:$0xff]
      %v779 = vld [vmem:[%s737 + $0x148] sm:$0xff]
      %v780 = vld [vmem:[%s737 + $0x150] sm:$0xff]
      %v781 = vld [vmem:[%s737 + $0x158] sm:$0xff]
      %v782 = vld [vmem:[%s737 + $0x160] sm:$0xff]
      %v783 = vld [vmem:[%s737 + $0x168] sm:$0xff]
      %v784 = vld [vmem:[%s737 + $0x170] sm:$0xff]
      %v785 = vld [vmem:[%s737 + $0x178] sm:$0xff]
      %v834 = vunpack.c.l.b16 %v738
      %v835 = vunpack.c.h.b16 %v738
      %v836 = vunpack.c.l.b16 %v739
      %v837 = vunpack.c.h.b16 %v739
      %v838 = vunpack.c.l.b16 %v740
      %v839 = vunpack.c.h.b16 %v740
      %v840 = vunpack.c.l.b16 %v741
      %v841 = vunpack.c.h.b16 %v741
      %v842 = vunpack.c.l.b16 %v742
      %v843 = vunpack.c.h.b16 %v742
      %v844 = vunpack.c.l.b16 %v743
      %v845 = vunpack.c.h.b16 %v743
      %v846 = vunpack.c.l.b16 %v744
      %v847 = vunpack.c.h.b16 %v744
      %v848 = vunpack.c.l.b16 %v745
      %v849 = vunpack.c.h.b16 %v745
      %v850 = vunpack.c.l.b16 %v746
      %v851 = vunpack.c.h.b16 %v746
      %v852 = vunpack.c.l.b16 %v747
      %v853 = vunpack.c.h.b16 %v747
      %v854 = vunpack.c.l.b16 %v748
      %v855 = vunpack.c.h.b16 %v748
      %v856 = vunpack.c.l.b16 %v749
      %v857 = vunpack.c.h.b16 %v749
      %v858 = vunpack.c.l.b16 %v750
      %v859 = vunpack.c.h.b16 %v750
      %v860 = vunpack.c.l.b16 %v751
      %v861 = vunpack.c.h.b16 %v751
      %v862 = vunpack.c.l.b16 %v752
      %v863 = vunpack.c.h.b16 %v752
      %v864 = vunpack.c.l.b16 %v753
      %v865 = vunpack.c.h.b16 %v753
      %v866 = vunpack.c.l.b16 %v754
      %v867 = vunpack.c.h.b16 %v754
      %v868 = vunpack.c.l.b16 %v755
      %v869 = vunpack.c.h.b16 %v755
      %v870 = vunpack.c.l.b16 %v756
      %v871 = vunpack.c.h.b16 %v756
      %v872 = vunpack.c.l.b16 %v757
      %v873 = vunpack.c.h.b16 %v757
      %v874 = vunpack.c.l.b16 %v758
      %v875 = vunpack.c.h.b16 %v758
      %v876 = vunpack.c.l.b16 %v759
      %v877 = vunpack.c.h.b16 %v759
      %v878 = vunpack.c.l.b16 %v760
      %v879 = vunpack.c.h.b16 %v760
      %v880 = vunpack.c.l.b16 %v761
      %v881 = vunpack.c.h.b16 %v761
      %v882 = vunpack.c.l.b16 %v762
      %v883 = vunpack.c.h.b16 %v762
      %v884 = vunpack.c.l.b16 %v763
      %v885 = vunpack.c.h.b16 %v763
      %v886 = vunpack.c.l.b16 %v764
      %v887 = vunpack.c.h.b16 %v764
      %v888 = vunpack.c.l.b16 %v765
      %v889 = vunpack.c.h.b16 %v765
      %v890 = vunpack.c.l.b16 %v766
      %v891 = vunpack.c.h.b16 %v766
      %v892 = vunpack.c.l.b16 %v767
      %v893 = vunpack.c.h.b16 %v767
      %v894 = vunpack.c.l.b16 %v768
      %v895 = vunpack.c.h.b16 %v768
      %v896 = vunpack.c.l.b16 %v769
      %v897 = vunpack.c.h.b16 %v769
      %v898 = vunpack.c.l.b16 %v770
      %v899 = vunpack.c.h.b16 %v770
      %v900 = vunpack.c.l.b16 %v771
      %v901 = vunpack.c.h.b16 %v771
      %v902 = vunpack.c.l.b16 %v772
      %v903 = vunpack.c.h.b16 %v772
      %v904 = vunpack.c.l.b16 %v773
      %v905 = vunpack.c.h.b16 %v773
      %v906 = vunpack.c.l.b16 %v774
      %v907 = vunpack.c.h.b16 %v774
      %v908 = vunpack.c.l.b16 %v775
      %v909 = vunpack.c.h.b16 %v775
      %v910 = vunpack.c.l.b16 %v776
      %v911 = vunpack.c.h.b16 %v776
      %v912 = vunpack.c.l.b16 %v777
      %v913 = vunpack.c.h.b16 %v777
      %v914 = vunpack.c.l.b16 %v778
      %v915 = vunpack.c.h.b16 %v778
      %v916 = vunpack.c.l.b16 %v779
      %v917 = vunpack.c.h.b16 %v779
      %v918 = vunpack.c.l.b16 %v780
      %v919 = vunpack.c.h.b16 %v780
      %v920 = vunpack.c.l.b16 %v781
      %v921 = vunpack.c.h.b16 %v781
      %v922 = vunpack.c.l.b16 %v782
      %v923 = vunpack.c.h.b16 %v782
      %v924 = vunpack.c.l.b16 %v783
      %v925 = vunpack.c.h.b16 %v783
      %v926 = vunpack.c.l.b16 %v784
      %v927 = vunpack.c.h.b16 %v784
      %v928 = vunpack.c.l.b16 %v785
      %v929 = vunpack.c.h.b16 %v785
      %v930 = vpack.c.b16 %v836, %v834
      %v931 = vpack.c.b16 %v837, %v835
      %v932 = vpack.c.b16 %v840, %v838
      %v933 = vpack.c.b16 %v841, %v839
      %v934 = vpack.c.b16 %v844, %v842
      %v935 = vpack.c.b16 %v845, %v843
      %v936 = vpack.c.b16 %v848, %v846
      %v937 = vpack.c.b16 %v849, %v847
      %v938 = vpack.c.b16 %v852, %v850
      %v939 = vpack.c.b16 %v853, %v851
      %v940 = vpack.c.b16 %v856, %v854
      %v941 = vpack.c.b16 %v857, %v855
      %v942 = vpack.c.b16 %v860, %v858
      %v943 = vpack.c.b16 %v861, %v859
      %v944 = vpack.c.b16 %v864, %v862
      %v945 = vpack.c.b16 %v865, %v863
      %v946 = vpack.c.b16 %v868, %v866
      %v947 = vpack.c.b16 %v869, %v867
      %v948 = vpack.c.b16 %v872, %v870
      %v949 = vpack.c.b16 %v873, %v871
      %v950 = vpack.c.b16 %v876, %v874
      %v951 = vpack.c.b16 %v877, %v875
      %v952 = vpack.c.b16 %v880, %v878
      %v953 = vpack.c.b16 %v881, %v879
      %v954 = vpack.c.b16 %v884, %v882
      %v955 = vpack.c.b16 %v885, %v883
      %v956 = vpack.c.b16 %v888, %v886
      %v957 = vpack.c.b16 %v889, %v887
      %v958 = vpack.c.b16 %v892, %v890
      %v959 = vpack.c.b16 %v893, %v891
      %v960 = vpack.c.b16 %v896, %v894
      %v961 = vpack.c.b16 %v897, %v895
      %v962 = vpack.c.b16 %v900, %v898
      %v963 = vpack.c.b16 %v901, %v899
      %v964 = vpack.c.b16 %v904, %v902
      %v965 = vpack.c.b16 %v905, %v903
      %v966 = vpack.c.b16 %v908, %v906
      %v967 = vpack.c.b16 %v909, %v907
      %v968 = vpack.c.b16 %v912, %v910
      %v969 = vpack.c.b16 %v913, %v911
      %v970 = vpack.c.b16 %v916, %v914
      %v971 = vpack.c.b16 %v917, %v915
      %v972 = vpack.c.b16 %v920, %v918
      %v973 = vpack.c.b16 %v921, %v919
      %v974 = vpack.c.b16 %v924, %v922
      %v975 = vpack.c.b16 %v925, %v923
      %v976 = vpack.c.b16 %v928, %v926
      %v977 = vpack.c.b16 %v929, %v927
      %1026 = vmatprep.subr.bf16.mxu0 %v945
      %1027 = vmatpush1.bf16.msra.mxu0 %v944
      %1028 = vmatprep.subr.bf16.mxu0 %v943
      %1029 = vmatpush1.bf16.msra.mxu0 %v942
      %1030 = vmatprep.subr.bf16.mxu0 %v941
      %1031 = vmatpush1.bf16.msra.mxu0 %v940
      %1032 = vmatprep.subr.bf16.mxu0 %v939
      %1033 = vmatpush1.bf16.msra.mxu0 %v938
      %1034 = vmatprep.subr.bf16.mxu0 %v937
      %1035 = vmatpush1.bf16.msra.mxu0 %v936
      %1036 = vmatprep.subr.bf16.mxu0 %v935
      %1037 = vmatpush1.bf16.msra.mxu0 %v934
      %1038 = vmatprep.subr.bf16.mxu0 %v933
      %1039 = vmatpush1.bf16.msra.mxu0 %v932
      %1040 = vmatprep.subr.bf16.mxu0 %v931
      %1041 = vmatpush1.bf16.msra.mxu0 %v930
      %1042 = vmatprep.subr.bf16.mxu0 %v961
      %1043 = vmatpush2.bf16.msra.mxu0 %v960
      %1044 = vmatprep.subr.bf16.mxu0 %v959
      %1045 = vmatpush2.bf16.msra.mxu0 %v958
      %1046 = vmatprep.subr.bf16.mxu0 %v957
      %1047 = vmatpush2.bf16.msra.mxu0 %v956
      %1048 = vmatprep.subr.bf16.mxu0 %v955
      %1049 = vmatpush2.bf16.msra.mxu0 %v954
      %1050 = vmatprep.subr.bf16.mxu0 %v953
      %1051 = vmatpush2.bf16.msra.mxu0 %v952
      %1052 = vmatprep.subr.bf16.mxu0 %v951
      %1053 = vmatpush2.bf16.msra.mxu0 %v950
      %1054 = vmatprep.subr.bf16.mxu0 %v949
      %1055 = vmatpush2.bf16.msra.mxu0 %v948
      %1056 = vmatprep.subr.bf16.mxu0 %v947
      %1057 = vmatpush2.bf16.msra.mxu0 %v946
      %1058 = vmatprep.mubr.bf16.mxu0 %v645
      %1059 = vmatmul.mubr.bf16.gmra.mxu0 %v729
      %v1060 = vpop.f32.mrf.mxu0
      %v1061 = vadd.f32 0.0, %v1060
      %v1062 = vpop.f32.mrf.mxu0
      %v1063 = vadd.f32 0.0, %v1062
      %v1064 = vpop.f32.mrf.mxu0
      %v1065 = vadd.f32 0.0, %v1064
      %v1066 = vpop.f32.mrf.mxu0
      %v1067 = vadd.f32 0.0, %v1066
      %1068 = vmatprep.mubr.bf16.mxu0 %v646
      %1069 = vmatmul.mubr.bf16.gmra.mxu0 %v638
      %v1070 = vpop.f32.mrf.mxu0
      %v1071 = vadd.f32 0.0, %v1070
      %v1072 = vpop.f32.mrf.mxu0
      %v1073 = vadd.f32 0.0, %v1072
      %v1074 = vpop.f32.mrf.mxu0
      %v1075 = vadd.f32 0.0, %v1074
      %v1076 = vpop.f32.mrf.mxu0
      %v1077 = vadd.f32 0.0, %v1076
      %1078 = vmatprep.mubr.bf16.mxu0 %v647
      %1079 = vmatmul.mubr.bf16.gmra.mxu0 %v639
      %v1080 = vpop.f32.mrf.mxu0
      %v1081 = vadd.f32 0.0, %v1080
      %v1082 = vpop.f32.mrf.mxu0
      %v1083 = vadd.f32 0.0, %v1082
      %v1084 = vpop.f32.mrf.mxu0
      %v1085 = vadd.f32 0.0, %v1084
      %v1086 = vpop.f32.mrf.mxu0
      %v1087 = vadd.f32 0.0, %v1086
      %1088 = vmatprep.mubr.bf16.mxu0 %v648
      %1089 = vmatmul.mubr.bf16.gmra.mxu0 %v640
      %v1090 = vpop.f32.mrf.mxu0
      %v1091 = vadd.f32 0.0, %v1090
      %v1092 = vpop.f32.mrf.mxu0
      %v1093 = vadd.f32 0.0, %v1092
      %v1094 = vpop.f32.mrf.mxu0
      %v1095 = vadd.f32 0.0, %v1094
      %v1096 = vpop.f32.mrf.mxu0
      %v1097 = vadd.f32 0.0, %v1096
      %1098 = vmatprep.mubr.bf16.mxu0 %v649
      %1099 = vmatmul.mubr.bf16.gmra.mxu0 %v641
      %v1100 = vpop.f32.mrf.mxu0
      %v1101 = vadd.f32 0.0, %v1100
      %v1102 = vpop.f32.mrf.mxu0
      %v1103 = vadd.f32 0.0, %v1102
      %v1104 = vpop.f32.mrf.mxu0
      %v1105 = vadd.f32 0.0, %v1104
      %v1106 = vpop.f32.mrf.mxu0
      %v1107 = vadd.f32 0.0, %v1106
      %1108 = vmatprep.mubr.bf16.mxu0 %v650
      %1109 = vmatmul.mubr.bf16.gmra.mxu0 %v642
      %v1110 = vpop.f32.mrf.mxu0
      %v1111 = vadd.f32 0.0, %v1110
      %v1112 = vpop.f32.mrf.mxu0
      %v1113 = vadd.f32 0.0, %v1112
      %v1114 = vpop.f32.mrf.mxu0
      %v1115 = vadd.f32 0.0, %v1114
      %v1116 = vpop.f32.mrf.mxu0
      %v1117 = vadd.f32 0.0, %v1116
      %1118 = vmatprep.mubr.bf16.mxu0 %v651
      %1119 = vmatmul.mubr.bf16.gmra.mxu0 %v643
      %v1120 = vpop.f32.mrf.mxu0
      %v1121 = vadd.f32 0.0, %v1120
      %v1122 = vpop.f32.mrf.mxu0
      %v1123 = vadd.f32 0.0, %v1122
      %v1124 = vpop.f32.mrf.mxu0
      %v1125 = vadd.f32 0.0, %v1124
      %v1126 = vpop.f32.mrf.mxu0
      %v1127 = vadd.f32 0.0, %v1126
      %1128 = vmatprep.mubr.bf16.mxu0 %v731
      %1129 = vmatmul.mubr.bf16.gmra.mxu0 %v730
      %v1130 = vpop.f32.mrf.mxu0
      %v1131 = vadd.f32 0.0, %v1130
      %v1132 = vpop.f32.mrf.mxu0
      %v1133 = vadd.f32 0.0, %v1132
      %v1134 = vpop.f32.mrf.mxu0
      %v1135 = vadd.f32 0.0, %v1134
      %v1136 = vpop.f32.mrf.mxu0
      %v1137 = vadd.f32 0.0, %v1136
      %1138 = vdwg.mxu0
      %1139 = vmatprep.subr.bf16.mxu0 %v977
      %1140 = vmatpush1.bf16.msra.mxu0 %v976
      %1141 = vmatprep.subr.bf16.mxu0 %v975
      %1142 = vmatpush1.bf16.msra.mxu0 %v974
      %1143 = vmatprep.subr.bf16.mxu0 %v973
      %1144 = vmatpush1.bf16.msra.mxu0 %v972
      %1145 = vmatprep.subr.bf16.mxu0 %v971
      %1146 = vmatpush1.bf16.msra.mxu0 %v970
      %1147 = vmatprep.subr.bf16.mxu0 %v969
      %1148 = vmatpush1.bf16.msra.mxu0 %v968
      %1149 = vmatprep.subr.bf16.mxu0 %v967
      %1150 = vmatpush1.bf16.msra.mxu0 %v966
      %1151 = vmatprep.subr.bf16.mxu0 %v965
      %1152 = vmatpush1.bf16.msra.mxu0 %v964
      %1153 = vmatprep.subr.bf16.mxu0 %v963
      %1154 = vmatpush1.bf16.msra.mxu0 %v962
      %1155 = vmatprep.subr.bf16.mxu0 0
      %1156 = vmatpush2.bf16.msra.mxu0 0
      %1157 = vmatprep.subr.bf16.mxu0 0
      %1158 = vmatpush2.bf16.msra.mxu0 0
      %1159 = vmatprep.subr.bf16.mxu0 0
      %1160 = vmatpush2.bf16.msra.mxu0 0
      %1161 = vmatprep.subr.bf16.mxu0 0
      %1162 = vmatpush2.bf16.msra.mxu0 0
      %1163 = vmatprep.subr.bf16.mxu0 0
      %1164 = vmatpush2.bf16.msra.mxu0 0
      %1165 = vmatprep.subr.bf16.mxu0 0
      %1166 = vmatpush2.bf16.msra.mxu0 0
      %1167 = vmatprep.subr.bf16.mxu0 0
      %1168 = vmatpush2.bf16.msra.mxu0 0
      %1169 = vmatprep.subr.bf16.mxu0 0
      %1170 = vmatpush2.bf16.msra.mxu0 0
      %1171 = vmatprep.mubr.bf16.mxu0 0
      %1172 = vmatmul.mubr.bf16.gmra.mxu0 %v653
      %v1173 = vpop.f32.mrf.mxu0
      %v1174 = vadd.f32 %v1061, %v1173
      %v1175 = vpop.f32.mrf.mxu0
      %v1176 = vadd.f32 %v1063, %v1175
      %v1177 = vpop.f32.mrf.mxu0
      %v1178 = vadd.f32 %v1065, %v1177
      %v1179 = vpop.f32.mrf.mxu0
      %v1180 = vadd.f32 %v1067, %v1179
      %1181 = vmatprep.mubr.bf16.mxu0 0
      %1182 = vmatmul.mubr.bf16.gmra.mxu0 %v654
      %v1183 = vpop.f32.mrf.mxu0
      %v1184 = vadd.f32 %v1071, %v1183
      %v1185 = vpop.f32.mrf.mxu0
      %v1186 = vadd.f32 %v1073, %v1185
      %v1187 = vpop.f32.mrf.mxu0
      %v1188 = vadd.f32 %v1075, %v1187
      %v1189 = vpop.f32.mrf.mxu0
      %v1190 = vadd.f32 %v1077, %v1189
      %1191 = vmatprep.mubr.bf16.mxu0 0
      %1192 = vmatmul.mubr.bf16.gmra.mxu0 %v655
      %v1193 = vpop.f32.mrf.mxu0
      %v1194 = vadd.f32 %v1081, %v1193
      %v1195 = vpop.f32.mrf.mxu0
      %v1196 = vadd.f32 %v1083, %v1195
      %v1197 = vpop.f32.mrf.mxu0
      %v1198 = vadd.f32 %v1085, %v1197
      %v1199 = vpop.f32.mrf.mxu0
      %v1200 = vadd.f32 %v1087, %v1199
      %1201 = vmatprep.mubr.bf16.mxu0 0
      %1202 = vmatmul.mubr.bf16.gmra.mxu0 %v656
      %v1203 = vpop.f32.mrf.mxu0
      %v1204 = vadd.f32 %v1091, %v1203
      %v1205 = vpop.f32.mrf.mxu0
      %v1206 = vadd.f32 %v1093, %v1205
      %v1207 = vpop.f32.mrf.mxu0
      %v1208 = vadd.f32 %v1095, %v1207
      %v1209 = vpop.f32.mrf.mxu0
      %v1210 = vadd.f32 %v1097, %v1209
      %1211 = vmatprep.mubr.bf16.mxu0 0
      %1212 = vmatmul.mubr.bf16.gmra.mxu0 %v657
      %v1213 = vpop.f32.mrf.mxu0
      %v1214 = vadd.f32 %v1101, %v1213
      %v1215 = vpop.f32.mrf.mxu0
      %v1216 = vadd.f32 %v1103, %v1215
      %v1217 = vpop.f32.mrf.mxu0
      %v1218 = vadd.f32 %v1105, %v1217
      %v1219 = vpop.f32.mrf.mxu0
      %v1220 = vadd.f32 %v1107, %v1219
      %1221 = vmatprep.mubr.bf16.mxu0 0
      %1222 = vmatmul.mubr.bf16.gmra.mxu0 %v658
      %v1223 = vpop.f32.mrf.mxu0
      %v1224 = vadd.f32 %v1111, %v1223
      %v1225 = vpop.f32.mrf.mxu0
      %v1226 = vadd.f32 %v1113, %v1225
      %v1227 = vpop.f32.mrf.mxu0
      %v1228 = vadd.f32 %v1115, %v1227
      %v1229 = vpop.f32.mrf.mxu0
      %v1230 = vadd.f32 %v1117, %v1229
      %1231 = vmatprep.mubr.bf16.mxu0 0
      %1232 = vmatmul.mubr.bf16.gmra.mxu0 %v732
      %v1233 = vpop.f32.mrf.mxu0
      %v1234 = vadd.f32 %v1121, %v1233
      %v1235 = vpop.f32.mrf.mxu0
      %v1236 = vadd.f32 %v1123, %v1235
      %v1237 = vpop.f32.mrf.mxu0
      %v1238 = vadd.f32 %v1125, %v1237
      %v1239 = vpop.f32.mrf.mxu0
      %v1240 = vadd.f32 %v1127, %v1239
      %1241 = vmatprep.mubr.bf16.mxu0 0
      %1242 = vmatmul.mubr.bf16.gmra.mxu0 %v733
      %v1243 = vpop.f32.mrf.mxu0
      %v1244 = vadd.f32 %v1131, %v1243
      %v1245 = vpop.f32.mrf.mxu0
      %v1246 = vadd.f32 %v1133, %v1245
      %v1247 = vpop.f32.mrf.mxu0
      %v1248 = vadd.f32 %v1135, %v1247
      %v1249 = vpop.f32.mrf.mxu0
      %v1250 = vadd.f32 %v1137, %v1249
      %1251 = vdwg.mxu0
      %v1300 = vunpack.c.l.b16 %v665
      %v1301 = vunpack.c.h.b16 %v665
      %v1302 = vunpack.c.l.b16 %v666
      %v1303 = vunpack.c.h.b16 %v666
      %v1304 = vunpack.c.l.b16 %v667
      %v1305 = vunpack.c.h.b16 %v667
      %v1306 = vunpack.c.l.b16 %v668
      %v1307 = vunpack.c.h.b16 %v668
      %v1308 = vunpack.c.l.b16 %v669
      %v1309 = vunpack.c.h.b16 %v669
      %v1310 = vunpack.c.l.b16 %v670
      %v1311 = vunpack.c.h.b16 %v670
      %v1312 = vunpack.c.l.b16 %v671
      %v1313 = vunpack.c.h.b16 %v671
      %v1314 = vunpack.c.l.b16 %v672
      %v1315 = vunpack.c.h.b16 %v672
      %v1316 = vunpack.c.l.b16 %v673
      %v1317 = vunpack.c.h.b16 %v673
      %v1318 = vunpack.c.l.b16 %v674
      %v1319 = vunpack.c.h.b16 %v674
      %v1320 = vunpack.c.l.b16 %v675
      %v1321 = vunpack.c.h.b16 %v675
      %v1322 = vunpack.c.l.b16 %v676
      %v1323 = vunpack.c.h.b16 %v676
      %v1324 = vunpack.c.l.b16 %v677
      %v1325 = vunpack.c.h.b16 %v677
      %v1326 = vunpack.c.l.b16 %v678
      %v1327 = vunpack.c.h.b16 %v678
      %v1328 = vunpack.c.l.b16 %v679
      %v1329 = vunpack.c.h.b16 %v679
      %v1330 = vunpack.c.l.b16 %v680
      %v1331 = vunpack.c.h.b16 %v680
      %v1332 = vunpack.c.l.b16 %v681
      %v1333 = vunpack.c.h.b16 %v681
      %v1334 = vunpack.c.l.b16 %v682
      %v1335 = vunpack.c.h.b16 %v682
      %v1336 = vunpack.c.l.b16 %v683
      %v1337 = vunpack.c.h.b16 %v683
      %v1338 = vunpack.c.l.b16 %v684
      %v1339 = vunpack.c.h.b16 %v684
      %v1340 = vunpack.c.l.b16 %v685
      %v1341 = vunpack.c.h.b16 %v685
      %v1342 = vunpack.c.l.b16 %v686
      %v1343 = vunpack.c.h.b16 %v686
      %v1344 = vunpack.c.l.b16 %v687
      %v1345 = vunpack.c.h.b16 %v687
      %v1346 = vunpack.c.l.b16 %v688
      %v1347 = vunpack.c.h.b16 %v688
      %v1348 = vunpack.c.l.b16 %v689
      %v1349 = vunpack.c.h.b16 %v689
      %v1350 = vunpack.c.l.b16 %v690
      %v1351 = vunpack.c.h.b16 %v690
      %v1352 = vunpack.c.l.b16 %v691
      %v1353 = vunpack.c.h.b16 %v691
      %v1354 = vunpack.c.l.b16 %v692
      %v1355 = vunpack.c.h.b16 %v692
      %v1356 = vunpack.c.l.b16 %v693
      %v1357 = vunpack.c.h.b16 %v693
      %v1358 = vunpack.c.l.b16 %v694
      %v1359 = vunpack.c.h.b16 %v694
      %v1360 = vunpack.c.l.b16 %v695
      %v1361 = vunpack.c.h.b16 %v695
      %v1362 = vunpack.c.l.b16 %v696
      %v1363 = vunpack.c.h.b16 %v696
      %v1364 = vunpack.c.l.b16 %v697
      %v1365 = vunpack.c.h.b16 %v697
      %v1366 = vunpack.c.l.b16 %v698
      %v1367 = vunpack.c.h.b16 %v698
      %v1368 = vunpack.c.l.b16 %v699
      %v1369 = vunpack.c.h.b16 %v699
      %v1370 = vunpack.c.l.b16 %v700
      %v1371 = vunpack.c.h.b16 %v700
      %v1372 = vunpack.c.l.b16 %v701
      %v1373 = vunpack.c.h.b16 %v701
      %v1374 = vunpack.c.l.b16 %v702
      %v1375 = vunpack.c.h.b16 %v702
      %v1376 = vunpack.c.l.b16 %v703
      %v1377 = vunpack.c.h.b16 %v703
      %v1378 = vunpack.c.l.b16 %v704
      %v1379 = vunpack.c.h.b16 %v704
      %v1380 = vunpack.c.l.b16 %v705
      %v1381 = vunpack.c.h.b16 %v705
      %v1382 = vunpack.c.l.b16 %v706
      %v1383 = vunpack.c.h.b16 %v706
      %v1384 = vunpack.c.l.b16 %v707
      %v1385 = vunpack.c.h.b16 %v707
      %v1386 = vunpack.c.l.b16 %v708
      %v1387 = vunpack.c.h.b16 %v708
      %v1388 = vunpack.c.l.b16 %v709
      %v1389 = vunpack.c.h.b16 %v709
      %v1390 = vunpack.c.l.b16 %v710
      %v1391 = vunpack.c.h.b16 %v710
      %v1392 = vunpack.c.l.b16 %v711
      %v1393 = vunpack.c.h.b16 %v711
      %v1394 = vunpack.c.l.b16 %v712
      %v1395 = vunpack.c.h.b16 %v712
      %v1396 = vpack.c.b16 %v1302, %v1300
      %v1397 = vpack.c.b16 %v1303, %v1301
      %v1398 = vpack.c.b16 %v1306, %v1304
      %v1399 = vpack.c.b16 %v1307, %v1305
      %v1400 = vpack.c.b16 %v1310, %v1308
      %v1401 = vpack.c.b16 %v1311, %v1309
      %v1402 = vpack.c.b16 %v1314, %v1312
      %v1403 = vpack.c.b16 %v1315, %v1313
      %v1404 = vpack.c.b16 %v1318, %v1316
      %v1405 = vpack.c.b16 %v1319, %v1317
      %v1406 = vpack.c.b16 %v1322, %v1320
      %v1407 = vpack.c.b16 %v1323, %v1321
      %v1408 = vpack.c.b16 %v1326, %v1324
      %v1409 = vpack.c.b16 %v1327, %v1325
      %v1410 = vpack.c.b16 %v1330, %v1328
      %v1411 = vpack.c.b16 %v1331, %v1329
      %v1412 = vpack.c.b16 %v1334, %v1332
      %v1413 = vpack.c.b16 %v1335, %v1333
      %v1414 = vpack.c.b16 %v1338, %v1336
      %v1415 = vpack.c.b16 %v1339, %v1337
      %v1416 = vpack.c.b16 %v1342, %v1340
      %v1417 = vpack.c.b16 %v1343, %v1341
      %v1418 = vpack.c.b16 %v1346, %v1344
      %v1419 = vpack.c.b16 %v1347, %v1345
      %v1420 = vpack.c.b16 %v1350, %v1348
      %v1421 = vpack.c.b16 %v1351, %v1349
      %v1422 = vpack.c.b16 %v1354, %v1352
      %v1423 = vpack.c.b16 %v1355, %v1353
      %v1424 = vpack.c.b16 %v1358, %v1356
      %v1425 = vpack.c.b16 %v1359, %v1357
      %v1426 = vpack.c.b16 %v1362, %v1360
      %v1427 = vpack.c.b16 %v1363, %v1361
      %v1428 = vpack.c.b16 %v1366, %v1364
      %v1429 = vpack.c.b16 %v1367, %v1365
      %v1430 = vpack.c.b16 %v1370, %v1368
      %v1431 = vpack.c.b16 %v1371, %v1369
      %v1432 = vpack.c.b16 %v1374, %v1372
      %v1433 = vpack.c.b16 %v1375, %v1373
      %v1434 = vpack.c.b16 %v1378, %v1376
      %v1435 = vpack.c.b16 %v1379, %v1377
      %v1436 = vpack.c.b16 %v1382, %v1380
      %v1437 = vpack.c.b16 %v1383, %v1381
      %v1438 = vpack.c.b16 %v1386, %v1384
      %v1439 = vpack.c.b16 %v1387, %v1385
      %v1440 = vpack.c.b16 %v1390, %v1388
      %v1441 = vpack.c.b16 %v1391, %v1389
      %v1442 = vpack.c.b16 %v1394, %v1392
      %v1443 = vpack.c.b16 %v1395, %v1393
      %1492 = vmatprep.subr.bf16.mxu0 %v1411
      %1493 = vmatpush1.bf16.msra.mxu0 %v1410
      %1494 = vmatprep.subr.bf16.mxu0 %v1409
      %1495 = vmatpush1.bf16.msra.mxu0 %v1408
      %1496 = vmatprep.subr.bf16.mxu0 %v1407
      %1497 = vmatpush1.bf16.msra.mxu0 %v1406
      %1498 = vmatprep.subr.bf16.mxu0 %v1405
      %1499 = vmatpush1.bf16.msra.mxu0 %v1404
      %1500 = vmatprep.subr.bf16.mxu0 %v1403
      %1501 = vmatpush1.bf16.msra.mxu0 %v1402
      %1502 = vmatprep.subr.bf16.mxu0 %v1401
      %1503 = vmatpush1.bf16.msra.mxu0 %v1400
      %1504 = vmatprep.subr.bf16.mxu0 %v1399
      %1505 = vmatpush1.bf16.msra.mxu0 %v1398
      %1506 = vmatprep.subr.bf16.mxu0 %v1397
      %1507 = vmatpush1.bf16.msra.mxu0 %v1396
      %1508 = vmatprep.subr.bf16.mxu0 %v1427
      %1509 = vmatpush2.bf16.msra.mxu0 %v1426
      %1510 = vmatprep.subr.bf16.mxu0 %v1425
      %1511 = vmatpush2.bf16.msra.mxu0 %v1424
      %1512 = vmatprep.subr.bf16.mxu0 %v1423
      %1513 = vmatpush2.bf16.msra.mxu0 %v1422
      %1514 = vmatprep.subr.bf16.mxu0 %v1421
      %1515 = vmatpush2.bf16.msra.mxu0 %v1420
      %1516 = vmatprep.subr.bf16.mxu0 %v1419
      %1517 = vmatpush2.bf16.msra.mxu0 %v1418
      %1518 = vmatprep.subr.bf16.mxu0 %v1417
      %1519 = vmatpush2.bf16.msra.mxu0 %v1416
      %1520 = vmatprep.subr.bf16.mxu0 %v1415
      %1521 = vmatpush2.bf16.msra.mxu0 %v1414
      %1522 = vmatprep.subr.bf16.mxu0 %v1413
      %1523 = vmatpush2.bf16.msra.mxu0 %v1412
      %1524 = vmatprep.mubr.bf16.mxu0 %v644
      %1525 = vmatmul.mubr.bf16.gmra.mxu0 %v636
      %v1526 = vpop.f32.mrf.mxu0
      %v1527 = vadd.f32 %v1174, %v1526
      %v1528 = vpop.f32.mrf.mxu0
      %v1529 = vadd.f32 %v1176, %v1528
      %v1530 = vpop.f32.mrf.mxu0
      %v1531 = vadd.f32 %v1178, %v1530
      %v1532 = vpop.f32.mrf.mxu0
      %v1533 = vadd.f32 %v1180, %v1532
      %1534 = vmatprep.mubr.bf16.mxu0 %v645
      %1535 = vmatmul.mubr.bf16.gmra.mxu0 %v637
      %v1536 = vpop.f32.mrf.mxu0
      %v1537 = vadd.f32 %v1184, %v1536
      %v1538 = vpop.f32.mrf.mxu0
      %v1539 = vadd.f32 %v1186, %v1538
      %v1540 = vpop.f32.mrf.mxu0
      %v1541 = vadd.f32 %v1188, %v1540
      %v1542 = vpop.f32.mrf.mxu0
      %v1543 = vadd.f32 %v1190, %v1542
      %1544 = vmatprep.mubr.bf16.mxu0 %v646
      %1545 = vmatmul.mubr.bf16.gmra.mxu0 %v638
      %v1546 = vpop.f32.mrf.mxu0
      %v1547 = vadd.f32 %v1194, %v1546
      %v1548 = vpop.f32.mrf.mxu0
      %v1549 = vadd.f32 %v1196, %v1548
      %v1550 = vpop.f32.mrf.mxu0
      %v1551 = vadd.f32 %v1198, %v1550
      %v1552 = vpop.f32.mrf.mxu0
      %v1553 = vadd.f32 %v1200, %v1552
      %1554 = vmatprep.mubr.bf16.mxu0 %v647
      %1555 = vmatmul.mubr.bf16.gmra.mxu0 %v639
      %v1556 = vpop.f32.mrf.mxu0
      %v1557 = vadd.f32 %v1204, %v1556
      %v1558 = vpop.f32.mrf.mxu0
      %v1559 = vadd.f32 %v1206, %v1558
      %v1560 = vpop.f32.mrf.mxu0
      %v1561 = vadd.f32 %v1208, %v1560
      %v1562 = vpop.f32.mrf.mxu0
      %v1563 = vadd.f32 %v1210, %v1562
      %1564 = vmatprep.mubr.bf16.mxu0 %v648
      %1565 = vmatmul.mubr.bf16.gmra.mxu0 %v640
      %v1566 = vpop.f32.mrf.mxu0
      %v1567 = vadd.f32 %v1214, %v1566
      %v1568 = vpop.f32.mrf.mxu0
      %v1569 = vadd.f32 %v1216, %v1568
      %v1570 = vpop.f32.mrf.mxu0
      %v1571 = vadd.f32 %v1218, %v1570
      %v1572 = vpop.f32.mrf.mxu0
      %v1573 = vadd.f32 %v1220, %v1572
      %1574 = vmatprep.mubr.bf16.mxu0 %v649
      %1575 = vmatmul.mubr.bf16.gmra.mxu0 %v641
      %v1576 = vpop.f32.mrf.mxu0
      %v1577 = vadd.f32 %v1224, %v1576
      %v1578 = vpop.f32.mrf.mxu0
      %v1579 = vadd.f32 %v1226, %v1578
      %v1580 = vpop.f32.mrf.mxu0
      %v1581 = vadd.f32 %v1228, %v1580
      %v1582 = vpop.f32.mrf.mxu0
      %v1583 = vadd.f32 %v1230, %v1582
      %1584 = vmatprep.mubr.bf16.mxu0 %v650
      %1585 = vmatmul.mubr.bf16.gmra.mxu0 %v642
      %v1586 = vpop.f32.mrf.mxu0
      %v1587 = vadd.f32 %v1234, %v1586
      %v1588 = vpop.f32.mrf.mxu0
      %v1589 = vadd.f32 %v1236, %v1588
      %v1590 = vpop.f32.mrf.mxu0
      %v1591 = vadd.f32 %v1238, %v1590
      %v1592 = vpop.f32.mrf.mxu0
      %v1593 = vadd.f32 %v1240, %v1592
      %1594 = vmatprep.mubr.bf16.mxu0 %v651
      %1595 = vmatmul.mubr.bf16.gmra.mxu0 %v643
      %v1596 = vpop.f32.mrf.mxu0
      %v1597 = vadd.f32 %v1244, %v1596
      %v1598 = vpop.f32.mrf.mxu0
      %v1599 = vadd.f32 %v1246, %v1598
      %v1600 = vpop.f32.mrf.mxu0
      %v1601 = vadd.f32 %v1248, %v1600
      %v1602 = vpop.f32.mrf.mxu0
      %v1603 = vadd.f32 %v1250, %v1602
      %1604 = vdwg.mxu0
      %1605 = vmatprep.subr.bf16.mxu0 %v1443
      %1606 = vmatpush1.bf16.msra.mxu0 %v1442
      %1607 = vmatprep.subr.bf16.mxu0 %v1441
      %1608 = vmatpush1.bf16.msra.mxu0 %v1440
      %1609 = vmatprep.subr.bf16.mxu0 %v1439
      %1610 = vmatpush1.bf16.msra.mxu0 %v1438
      %1611 = vmatprep.subr.bf16.mxu0 %v1437
      %1612 = vmatpush1.bf16.msra.mxu0 %v1436
      %1613 = vmatprep.subr.bf16.mxu0 %v1435
      %1614 = vmatpush1.bf16.msra.mxu0 %v1434
      %1615 = vmatprep.subr.bf16.mxu0 %v1433
      %1616 = vmatpush1.bf16.msra.mxu0 %v1432
      %1617 = vmatprep.subr.bf16.mxu0 %v1431
      %1618 = vmatpush1.bf16.msra.mxu0 %v1430
      %1619 = vmatprep.subr.bf16.mxu0 %v1429
      %1620 = vmatpush1.bf16.msra.mxu0 %v1428
      %1621 = vmatprep.subr.bf16.mxu0 0
      %1622 = vmatpush2.bf16.msra.mxu0 0
      %1623 = vmatprep.subr.bf16.mxu0 0
      %1624 = vmatpush2.bf16.msra.mxu0 0
      %1625 = vmatprep.subr.bf16.mxu0 0
      %1626 = vmatpush2.bf16.msra.mxu0 0
      %1627 = vmatprep.subr.bf16.mxu0 0
      %1628 = vmatpush2.bf16.msra.mxu0 0
      %1629 = vmatprep.subr.bf16.mxu0 0
      %1630 = vmatpush2.bf16.msra.mxu0 0
      %1631 = vmatprep.subr.bf16.mxu0 0
      %1632 = vmatpush2.bf16.msra.mxu0 0
      %1633 = vmatprep.subr.bf16.mxu0 0
      %1634 = vmatpush2.bf16.msra.mxu0 0
      %1635 = vmatprep.subr.bf16.mxu0 0
      %1636 = vmatpush2.bf16.msra.mxu0 0
      %1637 = vmatprep.mubr.bf16.mxu0 0
      %1638 = vmatmul.mubr.bf16.gmra.mxu0 %v652
      %v1639 = vpop.f32.mrf.mxu0
      %v1640 = vadd.f32 %v1527, %v1639
      %v1641 = vpop.f32.mrf.mxu0
      %v1642 = vadd.f32 %v1529, %v1641
      %v1643 = vpop.f32.mrf.mxu0
      %v1644 = vadd.f32 %v1531, %v1643
      %v1645 = vpop.f32.mrf.mxu0
      %v1646 = vadd.f32 %v1533, %v1645
      %1647 = vmatprep.mubr.bf16.mxu0 0
      %1648 = vmatmul.mubr.bf16.gmra.mxu0 %v653
      %v1649 = vpop.f32.mrf.mxu0
      %v1650 = vadd.f32 %v1537, %v1649
      %v1651 = vpop.f32.mrf.mxu0
      %v1652 = vadd.f32 %v1539, %v1651
      %v1653 = vpop.f32.mrf.mxu0
      %v1654 = vadd.f32 %v1541, %v1653
      %v1655 = vpop.f32.mrf.mxu0
      %v1656 = vadd.f32 %v1543, %v1655
      %1657 = vmatprep.mubr.bf16.mxu0 0
      %1658 = vmatmul.mubr.bf16.gmra.mxu0 %v654
      %v1659 = vpop.f32.mrf.mxu0
      %v1660 = vadd.f32 %v1547, %v1659
      %v1661 = vpop.f32.mrf.mxu0
      %v1662 = vadd.f32 %v1549, %v1661
      %v1663 = vpop.f32.mrf.mxu0
      %v1664 = vadd.f32 %v1551, %v1663
      %v1665 = vpop.f32.mrf.mxu0
      %v1666 = vadd.f32 %v1553, %v1665
      %1667 = vmatprep.mubr.bf16.mxu0 0
      %1668 = vmatmul.mubr.bf16.gmra.mxu0 %v655
      %v1669 = vpop.f32.mrf.mxu0
      %v1670 = vadd.f32 %v1557, %v1669
      %v1671 = vpop.f32.mrf.mxu0
      %v1672 = vadd.f32 %v1559, %v1671
      %v1673 = vpop.f32.mrf.mxu0
      %v1674 = vadd.f32 %v1561, %v1673
      %v1675 = vpop.f32.mrf.mxu0
      %v1676 = vadd.f32 %v1563, %v1675
      %1677 = vmatprep.mubr.bf16.mxu0 0
      %1678 = vmatmul.mubr.bf16.gmra.mxu0 %v656
      %v1679 = vpop.f32.mrf.mxu0
      %v1680 = vadd.f32 %v1567, %v1679
      %v1681 = vpop.f32.mrf.mxu0
      %v1682 = vadd.f32 %v1569, %v1681
      %v1683 = vpop.f32.mrf.mxu0
      %v1684 = vadd.f32 %v1571, %v1683
      %v1685 = vpop.f32.mrf.mxu0
      %v1686 = vadd.f32 %v1573, %v1685
      %1687 = vmatprep.mubr.bf16.mxu0 0
      %1688 = vmatmul.mubr.bf16.gmra.mxu0 %v657
      %v1689 = vpop.f32.mrf.mxu0
      %v1690 = vadd.f32 %v1577, %v1689
      %v1691 = vpop.f32.mrf.mxu0
      %v1692 = vadd.f32 %v1579, %v1691
      %v1693 = vpop.f32.mrf.mxu0
      %v1694 = vadd.f32 %v1581, %v1693
      %v1695 = vpop.f32.mrf.mxu0
      %v1696 = vadd.f32 %v1583, %v1695
      %1697 = vmatprep.mubr.bf16.mxu0 0
      %1698 = vmatmul.mubr.bf16.gmra.mxu0 %v658
      %v1699 = vpop.f32.mrf.mxu0
      %v1700 = vadd.f32 %v1587, %v1699
      %v1701 = vpop.f32.mrf.mxu0
      %v1702 = vadd.f32 %v1589, %v1701
      %v1703 = vpop.f32.mrf.mxu0
      %v1704 = vadd.f32 %v1591, %v1703
      %v1705 = vpop.f32.mrf.mxu0
      %v1706 = vadd.f32 %v1593, %v1705
      %1707 = vmatprep.mubr.bf16.mxu0 0
      %1708 = vmatmul.mubr.bf16.gmra.mxu0 %v659
      %v1709 = vpop.f32.mrf.mxu0
      %v1710 = vadd.f32 %v1597, %v1709
      %v1711 = vpop.f32.mrf.mxu0
      %v1712 = vadd.f32 %v1599, %v1711
      %v1713 = vpop.f32.mrf.mxu0
      %v1714 = vadd.f32 %v1601, %v1713
      %v1715 = vpop.f32.mrf.mxu0
      %v1716 = vadd.f32 %v1603, %v1715
      %1717 = vdwg.mxu0
      %v1718 = vrot.slane %v521, 7
      %v1719 = vrot.slane %v522, 7
      %v1720 = vsel %vm546, %v1718, %v1719
      %v1721 = vsel %vm546, %v714, %v1718
      %v1722 = vsel %vm546, %v1719, %v534
      %v1723 = vrot.slane %v521, 1
      %v1724 = vrot.slane %v522, 1
      %v1725 = vsel %vm579, %v1723, %v1724
      %v1726 = vsel %vm579, %v719, %v1723
      %v1727 = vsel %vm579, %v1724, %v567
      %v1728 = vsel %vm598, 0.0, %v1722
      %v1729 = vsel %vm598, 0.0, %v1721
      %v1730 = vsel %vm599, 0.0, %v1720
      %v1731 = vsel %vm619, 0.0, %v1726
      %v1732 = vsel %vm618, 0.0, %v1725
      %v1733 = vsel %vm619, 0.0, %v1727
      %v1734 = vpack.c.bf16 %v605, %v1728
      %v1735 = vpack.c.bf16 %v1730, %v1729
      %v1736 = vpack.c.bf16 %v522, %v521
      %v1737 = vpack.c.bf16 %v1731, %v727
      %v1738 = vpack.c.bf16 %v1733, %v1732
      %s1739 = sadd.s32 %s660, 192
      %s1740 = sadd.s32 %s1739, %s661
      %s1741 = smul.addr %s1740, 4
      %s1742 = scalar_lea.vmem %s3, %s1741
      %v1743 = vld [vmem:[%s1742] sm:$0xff]
      %v1744 = vld [vmem:[%s1742 + $0x8] sm:$0xff]
      %v1745 = vld [vmem:[%s1742 + $0x10] sm:$0xff]
      %v1746 = vld [vmem:[%s1742 + $0x18] sm:$0xff]
      %v1747 = vld [vmem:[%s1742 + $0x20] sm:$0xff]
      %v1748 = vld [vmem:[%s1742 + $0x28] sm:$0xff]
      %v1749 = vld [vmem:[%s1742 + $0x30] sm:$0xff]
      %v1750 = vld [vmem:[%s1742 + $0x38] sm:$0xff]
      %v1751 = vld [vmem:[%s1742 + $0x40] sm:$0xff]
      %v1752 = vld [vmem:[%s1742 + $0x48] sm:$0xff]
      %v1753 = vld [vmem:[%s1742 + $0x50] sm:$0xff]
      %v1754 = vld [vmem:[%s1742 + $0x58] sm:$0xff]
      %v1755 = vld [vmem:[%s1742 + $0x60] sm:$0xff]
      %v1756 = vld [vmem:[%s1742 + $0x68] sm:$0xff]
      %v1757 = vld [vmem:[%s1742 + $0x70] sm:$0xff]
      %v1758 = vld [vmem:[%s1742 + $0x78] sm:$0xff]
      %v1759 = vld [vmem:[%s1742 + $0x80] sm:$0xff]
      %v1760 = vld [vmem:[%s1742 + $0x88] sm:$0xff]
      %v1761 = vld [vmem:[%s1742 + $0x90] sm:$0xff]
      %v1762 = vld [vmem:[%s1742 + $0x98] sm:$0xff]
      %v1763 = vld [vmem:[%s1742 + $0xa0] sm:$0xff]
      %v1764 = vld [vmem:[%s1742 + $0xa8] sm:$0xff]
      %v1765 = vld [vmem:[%s1742 + $0xb0] sm:$0xff]
      %v1766 = vld [vmem:[%s1742 + $0xb8] sm:$0xff]
      %v1767 = vld [vmem:[%s1742 + $0xc0] sm:$0xff]
      %v1768 = vld [vmem:[%s1742 + $0xc8] sm:$0xff]
      %v1769 = vld [vmem:[%s1742 + $0xd0] sm:$0xff]
      %v1770 = vld [vmem:[%s1742 + $0xd8] sm:$0xff]
      %v1771 = vld [vmem:[%s1742 + $0xe0] sm:$0xff]
      %v1772 = vld [vmem:[%s1742 + $0xe8] sm:$0xff]
      %v1773 = vld [vmem:[%s1742 + $0xf0] sm:$0xff]
      %v1774 = vld [vmem:[%s1742 + $0xf8] sm:$0xff]
      %v1775 = vld [vmem:[%s1742 + $0x100] sm:$0xff]
      %v1776 = vld [vmem:[%s1742 + $0x108] sm:$0xff]
      %v1777 = vld [vmem:[%s1742 + $0x110] sm:$0xff]
      %v1778 = vld [vmem:[%s1742 + $0x118] sm:$0xff]
      %v1779 = vld [vmem:[%s1742 + $0x120] sm:$0xff]
      %v1780 = vld [vmem:[%s1742 + $0x128] sm:$0xff]
      %v1781 = vld [vmem:[%s1742 + $0x130] sm:$0xff]
      %v1782 = vld [vmem:[%s1742 + $0x138] sm:$0xff]
      %v1783 = vld [vmem:[%s1742 + $0x140] sm:$0xff]
      %v1784 = vld [vmem:[%s1742 + $0x148] sm:$0xff]
      %v1785 = vld [vmem:[%s1742 + $0x150] sm:$0xff]
      %v1786 = vld [vmem:[%s1742 + $0x158] sm:$0xff]
      %v1787 = vld [vmem:[%s1742 + $0x160] sm:$0xff]
      %v1788 = vld [vmem:[%s1742 + $0x168] sm:$0xff]
      %v1789 = vld [vmem:[%s1742 + $0x170] sm:$0xff]
      %v1790 = vld [vmem:[%s1742 + $0x178] sm:$0xff]
      %v1839 = vunpack.c.l.b16 %v1743
      %v1840 = vunpack.c.h.b16 %v1743
      %v1841 = vunpack.c.l.b16 %v1744
      %v1842 = vunpack.c.h.b16 %v1744
      %v1843 = vunpack.c.l.b16 %v1745
      %v1844 = vunpack.c.h.b16 %v1745
      %v1845 = vunpack.c.l.b16 %v1746
      %v1846 = vunpack.c.h.b16 %v1746
      %v1847 = vunpack.c.l.b16 %v1747
      %v1848 = vunpack.c.h.b16 %v1747
      %v1849 = vunpack.c.l.b16 %v1748
      %v1850 = vunpack.c.h.b16 %v1748
      %v1851 = vunpack.c.l.b16 %v1749
      %v1852 = vunpack.c.h.b16 %v1749
      %v1853 = vunpack.c.l.b16 %v1750
      %v1854 = vunpack.c.h.b16 %v1750
      %v1855 = vunpack.c.l.b16 %v1751
      %v1856 = vunpack.c.h.b16 %v1751
      %v1857 = vunpack.c.l.b16 %v1752
      %v1858 = vunpack.c.h.b16 %v1752
      %v1859 = vunpack.c.l.b16 %v1753
      %v1860 = vunpack.c.h.b16 %v1753
      %v1861 = vunpack.c.l.b16 %v1754
      %v1862 = vunpack.c.h.b16 %v1754
      %v1863 = vunpack.c.l.b16 %v1755
      %v1864 = vunpack.c.h.b16 %v1755
      %v1865 = vunpack.c.l.b16 %v1756
      %v1866 = vunpack.c.h.b16 %v1756
      %v1867 = vunpack.c.l.b16 %v1757
      %v1868 = vunpack.c.h.b16 %v1757
      %v1869 = vunpack.c.l.b16 %v1758
      %v1870 = vunpack.c.h.b16 %v1758
      %v1871 = vunpack.c.l.b16 %v1759
      %v1872 = vunpack.c.h.b16 %v1759
      %v1873 = vunpack.c.l.b16 %v1760
      %v1874 = vunpack.c.h.b16 %v1760
      %v1875 = vunpack.c.l.b16 %v1761
      %v1876 = vunpack.c.h.b16 %v1761
      %v1877 = vunpack.c.l.b16 %v1762
      %v1878 = vunpack.c.h.b16 %v1762
      %v1879 = vunpack.c.l.b16 %v1763
      %v1880 = vunpack.c.h.b16 %v1763
      %v1881 = vunpack.c.l.b16 %v1764
      %v1882 = vunpack.c.h.b16 %v1764
      %v1883 = vunpack.c.l.b16 %v1765
      %v1884 = vunpack.c.h.b16 %v1765
      %v1885 = vunpack.c.l.b16 %v1766
      %v1886 = vunpack.c.h.b16 %v1766
      %v1887 = vunpack.c.l.b16 %v1767
      %v1888 = vunpack.c.h.b16 %v1767
      %v1889 = vunpack.c.l.b16 %v1768
      %v1890 = vunpack.c.h.b16 %v1768
      %v1891 = vunpack.c.l.b16 %v1769
      %v1892 = vunpack.c.h.b16 %v1769
      %v1893 = vunpack.c.l.b16 %v1770
      %v1894 = vunpack.c.h.b16 %v1770
      %v1895 = vunpack.c.l.b16 %v1771
      %v1896 = vunpack.c.h.b16 %v1771
      %v1897 = vunpack.c.l.b16 %v1772
      %v1898 = vunpack.c.h.b16 %v1772
      %v1899 = vunpack.c.l.b16 %v1773
      %v1900 = vunpack.c.h.b16 %v1773
      %v1901 = vunpack.c.l.b16 %v1774
      %v1902 = vunpack.c.h.b16 %v1774
      %v1903 = vunpack.c.l.b16 %v1775
      %v1904 = vunpack.c.h.b16 %v1775
      %v1905 = vunpack.c.l.b16 %v1776
      %v1906 = vunpack.c.h.b16 %v1776
      %v1907 = vunpack.c.l.b16 %v1777
      %v1908 = vunpack.c.h.b16 %v1777
      %v1909 = vunpack.c.l.b16 %v1778
      %v1910 = vunpack.c.h.b16 %v1778
      %v1911 = vunpack.c.l.b16 %v1779
      %v1912 = vunpack.c.h.b16 %v1779
      %v1913 = vunpack.c.l.b16 %v1780
      %v1914 = vunpack.c.h.b16 %v1780
      %v1915 = vunpack.c.l.b16 %v1781
      %v1916 = vunpack.c.h.b16 %v1781
      %v1917 = vunpack.c.l.b16 %v1782
      %v1918 = vunpack.c.h.b16 %v1782
      %v1919 = vunpack.c.l.b16 %v1783
      %v1920 = vunpack.c.h.b16 %v1783
      %v1921 = vunpack.c.l.b16 %v1784
      %v1922 = vunpack.c.h.b16 %v1784
      %v1923 = vunpack.c.l.b16 %v1785
      %v1924 = vunpack.c.h.b16 %v1785
      %v1925 = vunpack.c.l.b16 %v1786
      %v1926 = vunpack.c.h.b16 %v1786
      %v1927 = vunpack.c.l.b16 %v1787
      %v1928 = vunpack.c.h.b16 %v1787
      %v1929 = vunpack.c.l.b16 %v1788
      %v1930 = vunpack.c.h.b16 %v1788
      %v1931 = vunpack.c.l.b16 %v1789
      %v1932 = vunpack.c.h.b16 %v1789
      %v1933 = vunpack.c.l.b16 %v1790
      %v1934 = vunpack.c.h.b16 %v1790
      %v1935 = vpack.c.b16 %v1841, %v1839
      %v1936 = vpack.c.b16 %v1842, %v1840
      %v1937 = vpack.c.b16 %v1845, %v1843
      %v1938 = vpack.c.b16 %v1846, %v1844
      %v1939 = vpack.c.b16 %v1849, %v1847
      %v1940 = vpack.c.b16 %v1850, %v1848
      %v1941 = vpack.c.b16 %v1853, %v1851
      %v1942 = vpack.c.b16 %v1854, %v1852
      %v1943 = vpack.c.b16 %v1857, %v1855
      %v1944 = vpack.c.b16 %v1858, %v1856
      %v1945 = vpack.c.b16 %v1861, %v1859
      %v1946 = vpack.c.b16 %v1862, %v1860
      %v1947 = vpack.c.b16 %v1865, %v1863
      %v1948 = vpack.c.b16 %v1866, %v1864
      %v1949 = vpack.c.b16 %v1869, %v1867
      %v1950 = vpack.c.b16 %v1870, %v1868
      %v1951 = vpack.c.b16 %v1873, %v1871
      %v1952 = vpack.c.b16 %v1874, %v1872
      %v1953 = vpack.c.b16 %v1877, %v1875
      %v1954 = vpack.c.b16 %v1878, %v1876
      %v1955 = vpack.c.b16 %v1881, %v1879
      %v1956 = vpack.c.b16 %v1882, %v1880
      %v1957 = vpack.c.b16 %v1885, %v1883
      %v1958 = vpack.c.b16 %v1886, %v1884
      %v1959 = vpack.c.b16 %v1889, %v1887
      %v1960 = vpack.c.b16 %v1890, %v1888
      %v1961 = vpack.c.b16 %v1893, %v1891
      %v1962 = vpack.c.b16 %v1894, %v1892
      %v1963 = vpack.c.b16 %v1897, %v1895
      %v1964 = vpack.c.b16 %v1898, %v1896
      %v1965 = vpack.c.b16 %v1901, %v1899
      %v1966 = vpack.c.b16 %v1902, %v1900
      %v1967 = vpack.c.b16 %v1905, %v1903
      %v1968 = vpack.c.b16 %v1906, %v1904
      %v1969 = vpack.c.b16 %v1909, %v1907
      %v1970 = vpack.c.b16 %v1910, %v1908
      %v1971 = vpack.c.b16 %v1913, %v1911
      %v1972 = vpack.c.b16 %v1914, %v1912
      %v1973 = vpack.c.b16 %v1917, %v1915
      %v1974 = vpack.c.b16 %v1918, %v1916
      %v1975 = vpack.c.b16 %v1921, %v1919
      %v1976 = vpack.c.b16 %v1922, %v1920
      %v1977 = vpack.c.b16 %v1925, %v1923
      %v1978 = vpack.c.b16 %v1926, %v1924
      %v1979 = vpack.c.b16 %v1929, %v1927
      %v1980 = vpack.c.b16 %v1930, %v1928
      %v1981 = vpack.c.b16 %v1933, %v1931
      %v1982 = vpack.c.b16 %v1934, %v1932
      %2031 = vmatprep.subr.bf16.mxu0 %v1950
      %2032 = vmatpush1.bf16.msra.mxu0 %v1949
      %2033 = vmatprep.subr.bf16.mxu0 %v1948
      %2034 = vmatpush1.bf16.msra.mxu0 %v1947
      %2035 = vmatprep.subr.bf16.mxu0 %v1946
      %2036 = vmatpush1.bf16.msra.mxu0 %v1945
      %2037 = vmatprep.subr.bf16.mxu0 %v1944
      %2038 = vmatpush1.bf16.msra.mxu0 %v1943
      %2039 = vmatprep.subr.bf16.mxu0 %v1942
      %2040 = vmatpush1.bf16.msra.mxu0 %v1941
      %2041 = vmatprep.subr.bf16.mxu0 %v1940
      %2042 = vmatpush1.bf16.msra.mxu0 %v1939
      %2043 = vmatprep.subr.bf16.mxu0 %v1938
      %2044 = vmatpush1.bf16.msra.mxu0 %v1937
      %2045 = vmatprep.subr.bf16.mxu0 %v1936
      %2046 = vmatpush1.bf16.msra.mxu0 %v1935
      %2047 = vmatprep.subr.bf16.mxu0 %v1966
      %2048 = vmatpush2.bf16.msra.mxu0 %v1965
      %2049 = vmatprep.subr.bf16.mxu0 %v1964
      %2050 = vmatpush2.bf16.msra.mxu0 %v1963
      %2051 = vmatprep.subr.bf16.mxu0 %v1962
      %2052 = vmatpush2.bf16.msra.mxu0 %v1961
      %2053 = vmatprep.subr.bf16.mxu0 %v1960
      %2054 = vmatpush2.bf16.msra.mxu0 %v1959
      %2055 = vmatprep.subr.bf16.mxu0 %v1958
      %2056 = vmatpush2.bf16.msra.mxu0 %v1957
      %2057 = vmatprep.subr.bf16.mxu0 %v1956
      %2058 = vmatpush2.bf16.msra.mxu0 %v1955
      %2059 = vmatprep.subr.bf16.mxu0 %v1954
      %2060 = vmatpush2.bf16.msra.mxu0 %v1953
      %2061 = vmatprep.subr.bf16.mxu0 %v1952
      %2062 = vmatpush2.bf16.msra.mxu0 %v1951
      %2063 = vmatprep.mubr.bf16.mxu0 %v646
      %2064 = vmatmul.mubr.bf16.gmra.mxu0 %v1734
      %v2065 = vpop.f32.mrf.mxu0
      %v2066 = vadd.f32 0.0, %v2065
      %v2067 = vpop.f32.mrf.mxu0
      %v2068 = vadd.f32 0.0, %v2067
      %v2069 = vpop.f32.mrf.mxu0
      %v2070 = vadd.f32 0.0, %v2069
      %v2071 = vpop.f32.mrf.mxu0
      %v2072 = vadd.f32 0.0, %v2071
      %2073 = vmatprep.mubr.bf16.mxu0 %v647
      %2074 = vmatmul.mubr.bf16.gmra.mxu0 %v639
      %v2075 = vpop.f32.mrf.mxu0
      %v2076 = vadd.f32 0.0, %v2075
      %v2077 = vpop.f32.mrf.mxu0
      %v2078 = vadd.f32 0.0, %v2077
      %v2079 = vpop.f32.mrf.mxu0
      %v2080 = vadd.f32 0.0, %v2079
      %v2081 = vpop.f32.mrf.mxu0
      %v2082 = vadd.f32 0.0, %v2081
      %2083 = vmatprep.mubr.bf16.mxu0 %v648
      %2084 = vmatmul.mubr.bf16.gmra.mxu0 %v640
      %v2085 = vpop.f32.mrf.mxu0
      %v2086 = vadd.f32 0.0, %v2085
      %v2087 = vpop.f32.mrf.mxu0
      %v2088 = vadd.f32 0.0, %v2087
      %v2089 = vpop.f32.mrf.mxu0
      %v2090 = vadd.f32 0.0, %v2089
      %v2091 = vpop.f32.mrf.mxu0
      %v2092 = vadd.f32 0.0, %v2091
      %2093 = vmatprep.mubr.bf16.mxu0 %v649
      %2094 = vmatmul.mubr.bf16.gmra.mxu0 %v641
      %v2095 = vpop.f32.mrf.mxu0
      %v2096 = vadd.f32 0.0, %v2095
      %v2097 = vpop.f32.mrf.mxu0
      %v2098 = vadd.f32 0.0, %v2097
      %v2099 = vpop.f32.mrf.mxu0
      %v2100 = vadd.f32 0.0, %v2099
      %v2101 = vpop.f32.mrf.mxu0
      %v2102 = vadd.f32 0.0, %v2101
      %2103 = vmatprep.mubr.bf16.mxu0 %v650
      %2104 = vmatmul.mubr.bf16.gmra.mxu0 %v642
      %v2105 = vpop.f32.mrf.mxu0
      %v2106 = vadd.f32 0.0, %v2105
      %v2107 = vpop.f32.mrf.mxu0
      %v2108 = vadd.f32 0.0, %v2107
      %v2109 = vpop.f32.mrf.mxu0
      %v2110 = vadd.f32 0.0, %v2109
      %v2111 = vpop.f32.mrf.mxu0
      %v2112 = vadd.f32 0.0, %v2111
      %2113 = vmatprep.mubr.bf16.mxu0 %v651
      %2114 = vmatmul.mubr.bf16.gmra.mxu0 %v643
      %v2115 = vpop.f32.mrf.mxu0
      %v2116 = vadd.f32 0.0, %v2115
      %v2117 = vpop.f32.mrf.mxu0
      %v2118 = vadd.f32 0.0, %v2117
      %v2119 = vpop.f32.mrf.mxu0
      %v2120 = vadd.f32 0.0, %v2119
      %v2121 = vpop.f32.mrf.mxu0
      %v2122 = vadd.f32 0.0, %v2121
      %2123 = vmatprep.mubr.bf16.mxu0 %v731
      %2124 = vmatmul.mubr.bf16.gmra.mxu0 %v730
      %v2125 = vpop.f32.mrf.mxu0
      %v2126 = vadd.f32 0.0, %v2125
      %v2127 = vpop.f32.mrf.mxu0
      %v2128 = vadd.f32 0.0, %v2127
      %v2129 = vpop.f32.mrf.mxu0
      %v2130 = vadd.f32 0.0, %v2129
      %v2131 = vpop.f32.mrf.mxu0
      %v2132 = vadd.f32 0.0, %v2131
      %2133 = vmatprep.mubr.bf16.mxu0 %v1736
      %2134 = vmatmul.mubr.bf16.gmra.mxu0 %v1735
      %v2135 = vpop.f32.mrf.mxu0
      %v2136 = vadd.f32 0.0, %v2135
      %v2137 = vpop.f32.mrf.mxu0
      %v2138 = vadd.f32 0.0, %v2137
      %v2139 = vpop.f32.mrf.mxu0
      %v2140 = vadd.f32 0.0, %v2139
      %v2141 = vpop.f32.mrf.mxu0
      %v2142 = vadd.f32 0.0, %v2141
      %2143 = vdwg.mxu0
      %2144 = vmatprep.subr.bf16.mxu0 %v1982
      %2145 = vmatpush1.bf16.msra.mxu0 %v1981
      %2146 = vmatprep.subr.bf16.mxu0 %v1980
      %2147 = vmatpush1.bf16.msra.mxu0 %v1979
      %2148 = vmatprep.subr.bf16.mxu0 %v1978
      %2149 = vmatpush1.bf16.msra.mxu0 %v1977
      %2150 = vmatprep.subr.bf16.mxu0 %v1976
      %2151 = vmatpush1.bf16.msra.mxu0 %v1975
      %2152 = vmatprep.subr.bf16.mxu0 %v1974
      %2153 = vmatpush1.bf16.msra.mxu0 %v1973
      %2154 = vmatprep.subr.bf16.mxu0 %v1972
      %2155 = vmatpush1.bf16.msra.mxu0 %v1971
      %2156 = vmatprep.subr.bf16.mxu0 %v1970
      %2157 = vmatpush1.bf16.msra.mxu0 %v1969
      %2158 = vmatprep.subr.bf16.mxu0 %v1968
      %2159 = vmatpush1.bf16.msra.mxu0 %v1967
      %2160 = vmatprep.subr.bf16.mxu0 0
      %2161 = vmatpush2.bf16.msra.mxu0 0
      %2162 = vmatprep.subr.bf16.mxu0 0
      %2163 = vmatpush2.bf16.msra.mxu0 0
      %2164 = vmatprep.subr.bf16.mxu0 0
      %2165 = vmatpush2.bf16.msra.mxu0 0
      %2166 = vmatprep.subr.bf16.mxu0 0
      %2167 = vmatpush2.bf16.msra.mxu0 0
      %2168 = vmatprep.subr.bf16.mxu0 0
      %2169 = vmatpush2.bf16.msra.mxu0 0
      %2170 = vmatprep.subr.bf16.mxu0 0
      %2171 = vmatpush2.bf16.msra.mxu0 0
      %2172 = vmatprep.subr.bf16.mxu0 0
      %2173 = vmatpush2.bf16.msra.mxu0 0
      %2174 = vmatprep.subr.bf16.mxu0 0
      %2175 = vmatpush2.bf16.msra.mxu0 0
      %2176 = vmatprep.mubr.bf16.mxu0 0
      %2177 = vmatmul.mubr.bf16.gmra.mxu0 %v654
      %v2178 = vpop.f32.mrf.mxu0
      %v2179 = vadd.f32 %v2066, %v2178
      %v2180 = vpop.f32.mrf.mxu0
      %v2181 = vadd.f32 %v2068, %v2180
      %v2182 = vpop.f32.mrf.mxu0
      %v2183 = vadd.f32 %v2070, %v2182
      %v2184 = vpop.f32.mrf.mxu0
      %v2185 = vadd.f32 %v2072, %v2184
      %2186 = vmatprep.mubr.bf16.mxu0 0
      %2187 = vmatmul.mubr.bf16.gmra.mxu0 %v655
      %v2188 = vpop.f32.mrf.mxu0
      %v2189 = vadd.f32 %v2076, %v2188
      %v2190 = vpop.f32.mrf.mxu0
      %v2191 = vadd.f32 %v2078, %v2190
      %v2192 = vpop.f32.mrf.mxu0
      %v2193 = vadd.f32 %v2080, %v2192
      %v2194 = vpop.f32.mrf.mxu0
      %v2195 = vadd.f32 %v2082, %v2194
      %2196 = vmatprep.mubr.bf16.mxu0 0
      %2197 = vmatmul.mubr.bf16.gmra.mxu0 %v656
      %v2198 = vpop.f32.mrf.mxu0
      %v2199 = vadd.f32 %v2086, %v2198
      %v2200 = vpop.f32.mrf.mxu0
      %v2201 = vadd.f32 %v2088, %v2200
      %v2202 = vpop.f32.mrf.mxu0
      %v2203 = vadd.f32 %v2090, %v2202
      %v2204 = vpop.f32.mrf.mxu0
      %v2205 = vadd.f32 %v2092, %v2204
      %2206 = vmatprep.mubr.bf16.mxu0 0
      %2207 = vmatmul.mubr.bf16.gmra.mxu0 %v657
      %v2208 = vpop.f32.mrf.mxu0
      %v2209 = vadd.f32 %v2096, %v2208
      %v2210 = vpop.f32.mrf.mxu0
      %v2211 = vadd.f32 %v2098, %v2210
      %v2212 = vpop.f32.mrf.mxu0
      %v2213 = vadd.f32 %v2100, %v2212
      %v2214 = vpop.f32.mrf.mxu0
      %v2215 = vadd.f32 %v2102, %v2214
      %2216 = vmatprep.mubr.bf16.mxu0 0
      %2217 = vmatmul.mubr.bf16.gmra.mxu0 %v658
      %v2218 = vpop.f32.mrf.mxu0
      %v2219 = vadd.f32 %v2106, %v2218
      %v2220 = vpop.f32.mrf.mxu0
      %v2221 = vadd.f32 %v2108, %v2220
      %v2222 = vpop.f32.mrf.mxu0
      %v2223 = vadd.f32 %v2110, %v2222
      %v2224 = vpop.f32.mrf.mxu0
      %v2225 = vadd.f32 %v2112, %v2224
      %2226 = vmatprep.mubr.bf16.mxu0 0
      %2227 = vmatmul.mubr.bf16.gmra.mxu0 %v732
      %v2228 = vpop.f32.mrf.mxu0
      %v2229 = vadd.f32 %v2116, %v2228
      %v2230 = vpop.f32.mrf.mxu0
      %v2231 = vadd.f32 %v2118, %v2230
      %v2232 = vpop.f32.mrf.mxu0
      %v2233 = vadd.f32 %v2120, %v2232
      %v2234 = vpop.f32.mrf.mxu0
      %v2235 = vadd.f32 %v2122, %v2234
      %2236 = vmatprep.mubr.bf16.mxu0 0
      %2237 = vmatmul.mubr.bf16.gmra.mxu0 %v1737
      %v2238 = vpop.f32.mrf.mxu0
      %v2239 = vadd.f32 %v2126, %v2238
      %v2240 = vpop.f32.mrf.mxu0
      %v2241 = vadd.f32 %v2128, %v2240
      %v2242 = vpop.f32.mrf.mxu0
      %v2243 = vadd.f32 %v2130, %v2242
      %v2244 = vpop.f32.mrf.mxu0
      %v2245 = vadd.f32 %v2132, %v2244
      %2246 = vmatprep.mubr.bf16.mxu0 0
      %2247 = vmatmul.mubr.bf16.gmra.mxu0 %v1738
      %v2248 = vpop.f32.mrf.mxu0
      %v2249 = vadd.f32 %v2136, %v2248
      %v2250 = vpop.f32.mrf.mxu0
      %v2251 = vadd.f32 %v2138, %v2250
      %v2252 = vpop.f32.mrf.mxu0
      %v2253 = vadd.f32 %v2140, %v2252
      %v2254 = vpop.f32.mrf.mxu0
      %v2255 = vadd.f32 %v2142, %v2254
      %2256 = vdwg.mxu0
      %v2257 = vadd.f32 %v1640, %v2179
      %v2258 = vadd.f32 %v1642, %v2181
      %v2259 = vadd.f32 %v1644, %v2183
      %v2260 = vadd.f32 %v1646, %v2185
      %v2261 = vadd.f32 %v1650, %v2189
      %v2262 = vadd.f32 %v1652, %v2191
      %v2263 = vadd.f32 %v1654, %v2193
      %v2264 = vadd.f32 %v1656, %v2195
      %v2265 = vadd.f32 %v1660, %v2199
      %v2266 = vadd.f32 %v1662, %v2201
      %v2267 = vadd.f32 %v1664, %v2203
      %v2268 = vadd.f32 %v1666, %v2205
      %v2269 = vadd.f32 %v1670, %v2209
      %v2270 = vadd.f32 %v1672, %v2211
      %v2271 = vadd.f32 %v1674, %v2213
      %v2272 = vadd.f32 %v1676, %v2215
      %v2273 = vadd.f32 %v1680, %v2219
      %v2274 = vadd.f32 %v1682, %v2221
      %v2275 = vadd.f32 %v1684, %v2223
      %v2276 = vadd.f32 %v1686, %v2225
      %v2277 = vadd.f32 %v1690, %v2229
      %v2278 = vadd.f32 %v1692, %v2231
      %v2279 = vadd.f32 %v1694, %v2233
      %v2280 = vadd.f32 %v1696, %v2235
      %v2281 = vadd.f32 %v1700, %v2239
      %v2282 = vadd.f32 %v1702, %v2241
      %v2283 = vadd.f32 %v1704, %v2243
      %v2284 = vadd.f32 %v1706, %v2245
      %v2285 = vadd.f32 %v1710, %v2249
      %v2286 = vadd.f32 %v1712, %v2251
      %v2287 = vadd.f32 %v1714, %v2253
      %v2288 = vadd.f32 %v1716, %v2255
      %v2289 = vld [vmem:[%s452] sm:$0x3]
      %v2291 = vlaneseq
      %v2292 = vshrl.u32 %v2291, 7
      %v2293 = vsub.s32 0, %v2292
      %v2294 = vrot.slane %v2289, %v2293
      %v2295 = vlaneseq
      %v2296 = vshrl.u32 %v2295, 7
      %v2297 = vsub.s32 1, %v2296
      %v2298 = vrot.slane %v2289, %v2297
      %v2301 = vadd.f32 %v2294, %v2257
      %v2302 = vadd.f32 %v2298, %v2258
      %v2303 = vadd.f32 %v2294, %v2259
      %v2304 = vadd.f32 %v2298, %v2260
      %v2305 = vadd.f32 %v2294, %v2261
      %v2306 = vadd.f32 %v2298, %v2262
      %v2307 = vadd.f32 %v2294, %v2263
      %v2308 = vadd.f32 %v2298, %v2264
      %v2309 = vadd.f32 %v2294, %v2265
      %v2310 = vadd.f32 %v2298, %v2266
      %v2311 = vadd.f32 %v2294, %v2267
      %v2312 = vadd.f32 %v2298, %v2268
      %v2313 = vadd.f32 %v2294, %v2269
      %v2314 = vadd.f32 %v2298, %v2270
      %v2315 = vadd.f32 %v2294, %v2271
      %v2316 = vadd.f32 %v2298, %v2272
      %v2317 = vadd.f32 %v2294, %v2273
      %v2318 = vadd.f32 %v2298, %v2274
      %v2319 = vadd.f32 %v2294, %v2275
      %v2320 = vadd.f32 %v2298, %v2276
      %v2321 = vadd.f32 %v2294, %v2277
      %v2322 = vadd.f32 %v2298, %v2278
      %v2323 = vadd.f32 %v2294, %v2279
      %v2324 = vadd.f32 %v2298, %v2280
      %v2325 = vadd.f32 %v2294, %v2281
      %v2326 = vadd.f32 %v2298, %v2282
      %v2327 = vadd.f32 %v2294, %v2283
      %v2328 = vadd.f32 %v2298, %v2284
      %v2329 = vadd.f32 %v2294, %v2285
      %v2330 = vadd.f32 %v2298, %v2286
      %v2331 = vadd.f32 %v2294, %v2287
      %v2332 = vadd.f32 %v2298, %v2288
      %v2333 = vpack.c.bf16 %v2303, %v2301
      %v2334 = vpack.c.bf16 %v2304, %v2302
      %v2335 = vpack.c.bf16 %v2307, %v2305
      %v2336 = vpack.c.bf16 %v2308, %v2306
      %v2337 = vpack.c.bf16 %v2311, %v2309
      %v2338 = vpack.c.bf16 %v2312, %v2310
      %v2339 = vpack.c.bf16 %v2315, %v2313
      %v2340 = vpack.c.bf16 %v2316, %v2314
      %v2341 = vpack.c.bf16 %v2319, %v2317
      %v2342 = vpack.c.bf16 %v2320, %v2318
      %v2343 = vpack.c.bf16 %v2323, %v2321
      %v2344 = vpack.c.bf16 %v2324, %v2322
      %v2345 = vpack.c.bf16 %v2327, %v2325
      %v2346 = vpack.c.bf16 %v2328, %v2326
      %v2347 = vpack.c.bf16 %v2331, %v2329
      %v2348 = vpack.c.bf16 %v2332, %v2330
      %v2365 = vunpack.c.l.b16 %v2333
      %v2366 = vunpack.c.l.b16 %v2334
      %v2367 = vunpack.c.h.b16 %v2333
      %v2368 = vunpack.c.h.b16 %v2334
      %v2369 = vunpack.c.l.b16 %v2335
      %v2370 = vunpack.c.l.b16 %v2336
      %v2371 = vunpack.c.h.b16 %v2335
      %v2372 = vunpack.c.h.b16 %v2336
      %v2373 = vunpack.c.l.b16 %v2337
      %v2374 = vunpack.c.l.b16 %v2338
      %v2375 = vunpack.c.h.b16 %v2337
      %v2376 = vunpack.c.h.b16 %v2338
      %v2377 = vunpack.c.l.b16 %v2339
      %v2378 = vunpack.c.l.b16 %v2340
      %v2379 = vunpack.c.h.b16 %v2339
      %v2380 = vunpack.c.h.b16 %v2340
      %v2381 = vunpack.c.l.b16 %v2341
      %v2382 = vunpack.c.l.b16 %v2342
      %v2383 = vunpack.c.h.b16 %v2341
      %v2384 = vunpack.c.h.b16 %v2342
      %v2385 = vunpack.c.l.b16 %v2343
      %v2386 = vunpack.c.l.b16 %v2344
      %v2387 = vunpack.c.h.b16 %v2343
      %v2388 = vunpack.c.h.b16 %v2344
      %v2389 = vunpack.c.l.b16 %v2345
      %v2390 = vunpack.c.l.b16 %v2346
      %v2391 = vunpack.c.h.b16 %v2345
      %v2392 = vunpack.c.h.b16 %v2346
      %v2393 = vunpack.c.l.b16 %v2347
      %v2394 = vunpack.c.l.b16 %v2348
      %v2395 = vunpack.c.h.b16 %v2347
      %v2396 = vunpack.c.h.b16 %v2348
      %v2397 = vpack.c.b16 %v2366, %v2365
      %v2398 = vpack.c.b16 %v2368, %v2367
      %v2399 = vpack.c.b16 %v2370, %v2369
      %v2400 = vpack.c.b16 %v2372, %v2371
      %v2401 = vpack.c.b16 %v2374, %v2373
      %v2402 = vpack.c.b16 %v2376, %v2375
      %v2403 = vpack.c.b16 %v2378, %v2377
      %v2404 = vpack.c.b16 %v2380, %v2379
      %v2405 = vpack.c.b16 %v2382, %v2381
      %v2406 = vpack.c.b16 %v2384, %v2383
      %v2407 = vpack.c.b16 %v2386, %v2385
      %v2408 = vpack.c.b16 %v2388, %v2387
      %v2409 = vpack.c.b16 %v2390, %v2389
      %v2410 = vpack.c.b16 %v2392, %v2391
      %v2411 = vpack.c.b16 %v2394, %v2393
      %v2412 = vpack.c.b16 %v2396, %v2395
      %2429 = vst [vmem:[%s467] sm:$0xff] %v2397
      %2430 = vst [vmem:[%s467 + $0x8] sm:$0xff] %v2398
      %2431 = vst [vmem:[%s467 + $0x10] sm:$0xff] %v2399
      %2432 = vst [vmem:[%s467 + $0x18] sm:$0xff] %v2400
      %2433 = vst [vmem:[%s467 + $0x20] sm:$0xff] %v2401
      %2434 = vst [vmem:[%s467 + $0x28] sm:$0xff] %v2402
      %2435 = vst [vmem:[%s467 + $0x30] sm:$0xff] %v2403
      %2436 = vst [vmem:[%s467 + $0x38] sm:$0xff] %v2404
      %2437 = vst [vmem:[%s467 + $0x40] sm:$0xff] %v2405
      %2438 = vst [vmem:[%s467 + $0x48] sm:$0xff] %v2406
      %2439 = vst [vmem:[%s467 + $0x50] sm:$0xff] %v2407
      %2440 = vst [vmem:[%s467 + $0x58] sm:$0xff] %v2408
      %2441 = vst [vmem:[%s467 + $0x60] sm:$0xff] %v2409
      %2442 = vst [vmem:[%s467 + $0x68] sm:$0xff] %v2410
      %2443 = vst [vmem:[%s467 + $0x70] sm:$0xff] %v2411
      %2444 = vst [vmem:[%s467 + $0x78] sm:$0xff] %v2412
      %s2445 = smul.u32 8, %s23
      %s2446 = smul.u32 2, %s24
      %p2447 = scmp.lt.s32.totalorder %s22, 1
      %s2448 = scalar_select %p2447, %s22, 1
      %p2449 = scmp.lt.s32.totalorder %s2445, 15
      %s2450 = scalar_select %p2449, %s2445, 15
      %p2451 = scmp.lt.s32.totalorder %s2446, 1
      %s2452 = scalar_select %p2451, %s2446, 1
      %s2453 = smul.addr %s2450, 4
      %s2454 = sadd.s32 %s2452, %s2453
      %s2455 = smul.addr %s2448, 64
      %s2456 = sadd.s32 %s2454, %s2455
      %s2457 = smul.addr %s2456, 4
      %s2458 = scalar_lea.vmem %s5, %s2457
      // Predicated region
      $region41: #{spade_resblock_forward.24} parent=39 // pred_check
        %p2459 = pneg %p217
      $region42: #{spade_resblock_forward.24} parent=39 // pred_check_branch
        %2461 = sbr.rel (%p2459) target = $region44
      $region43: #{spade_resblock_forward.24} parent=39 // pred_region
        %s2462 = smul.u32 8, %s23
        %s2463 = smul.u32 2, %s24
      $region44: #{spade_resblock_forward.24} parent=39 // pred_fallthru
        _
    $region40: #{spade_resblock_forward.24} parent=5 // pred_fallthru
      _
    %p2464 = scmp.le.s32.totalorder 2, %s11
    // Predicated region
    $region45: #{spade_resblock_forward.24} parent=5 // pred_check
      %p2465 = pneg %p2464
    $region46: #{spade_resblock_forward.24} parent=5 // pred_check_branch
      %2467 = sbr.rel (%p2465) target = $region48
    $region47: #{spade_resblock_forward.24} parent=5 // pred_region
      %s2468 = ssub.s32 %s11, 2
      // Predicated region
      $region49: #{spade_resblock_forward.24} parent=47 // pred_check
        %p2469 = pneg %p223
      $region50: #{spade_resblock_forward.24} parent=47 // pred_check_branch
        %2471 = sbr.rel (%p2469) target = $region52
      $region51: #{spade_resblock_forward.24} parent=47 // pred_region
        %s2472 = smul.u32 8, %s27
        %s2473 = smul.u32 2, %s28
        %p2474 = scmp.lt.s32.totalorder %s26, 1
        %s2475 = scalar_select %p2474, %s26, 1
        %p2476 = scmp.lt.s32.totalorder %s2472, 15
        %s2477 = scalar_select %p2476, %s2472, 15
        %p2478 = scmp.lt.s32.totalorder %s2473, 1
        %s2479 = scalar_select %p2478, %s2473, 1
        %s2480 = smul.addr %s2477, 4
        %s2481 = sadd.s32 %s2479, %s2480
        %s2482 = smul.addr %s2475, 64
        %s2483 = sadd.s32 %s2481, %s2482
        %s2484 = smul.addr %s2483, 4
        %s2485 = scalar_lea.vmem %s5, %s2484
      $region52: #{spade_resblock_forward.24} parent=47 // pred_fallthru
        _
    $region48: #{spade_resblock_forward.24} parent=5 // pred_fallthru
      _
  $region6: #{spade_resblock_forward.24} parent=0 // loop_footer
    %s15 = sadd.s32 1, %s11
  $region7: #{spade_resblock_forward.24} parent=0 // loop_footer_branch
    %10 = sbr.rel target = $region3
  $region8: #{spade_resblock_forward.24} parent=0 // loop_exit
    _

// kernel: spade_resblock_forward.18
$region0: #{spade_resblock_forward.18}
  #allocation0 [shape = 'u32[]', space=smem, size = 0x4, offset = 0x4, fixed_abs, tag = 'smem constant byte address 0x4 - core index']
  #allocation1 [shape = 'u32[144,128]{1,0:T(1,128)}', space=vmem, size = 0x12000, scoped, tag = 'internal scratch']
  %s0 = inlined_call_operand.vmem [shape: bf16[2,16,16,128], index: 0, kind: input, shape index: {}, may-alias: {0,1,2}]
  %s1 = inlined_call_operand.vmem [shape: bf16[2,16,16,128], index: 1, kind: input, shape index: {}, may-alias: {0,1,2}]
  %s2 = inlined_call_operand.vmem [shape: bf16[2,16,16,128], index: 2, kind: input, shape index: {}, may-alias: {0,1,2}]
  %s3 = inlined_call_operand.vmem [shape: bf16[1,3,1,384,128], index: 3, kind: input, shape index: {}]
  %s4 = inlined_call_operand.vmem [shape: f32[1,128], index: 4, kind: input, shape index: {}]
  %s5 = inlined_call_operand.vmem [shape: bf16[2,16,16,128], index: 5, kind: output, shape index: {}]
  %s6 = sld [smem:[#allocation0]]
  $region53: #{spade_resblock_forward.18} parent=0
    _
  %s8 = ssub.s32 1, %s6
  %s9 = scalar_select 0, %s8, %s6
  loop: start=0, step=1, limit=6
  $region2: #{spade_resblock_forward.18} parent=0 // loop_pre_header
    _
  $region3: #{spade_resblock_forward.18} parent=0 // loop_header
    %s11 = sphi 0, %s15
    %p12 = scmp.ge.s32.totalorder %s11, 6
    %s18 = sphi 0, %s44
    %s19 = sphi 0, %s40
    %s20 = sphi 0, %s36
    %s21 = sphi 0, %s32
    %s22 = sphi 0, %s18
    %s23 = sphi 0, %s19
    %s24 = sphi 0, %s20
    %s25 = sphi 0, %s21
    %s26 = sphi 0, %s22
    %s27 = sphi 0, %s23
    %s28 = sphi 0, %s24
    %s29 = sphi 0, %s25
    %s51 = sphi 0, %s53
    %s54 = sphi 0, %s51
    %s55 = sphi 0, %s54
    %s71 = sphi 0, %s55
    %s89 = sphi 0, %s91
    %s92 = sphi 0, %s89
    %s93 = sphi 0, %s92
    %s109 = sphi 0, %s93
    %s127 = sphi 0, %s129
    %s130 = sphi 0, %s127
    %s131 = sphi 0, %s130
    %s147 = sphi 0, %s131
    %s151 = sphi 0, %s151
    %s153 = sphi 0, %s151
    %s154 = sphi 0, %s153
    %s168 = sphi 0, %s154
    %s174 = sphi 0, %s176
    %s177 = sphi 0, %s174
    %s178 = sphi 0, %s177
    %s194 = sphi 0, %s178
    %s204 = sphi 0, %s206
    %s207 = sphi 0, %s204
    %s208 = sphi 0, %s207
    %s224 = sphi 0, %s208
  $region4: #{spade_resblock_forward.18} parent=0 // loop_header_branch
    %14 = sbr.rel (%p12) target = $region8
  $region5: #{spade_resblock_forward.18} parent=0 // loop_body
    %s16 = ssub.s32 %s11, 1
    %s17 = ssub.s32 %s11, 2
    %s30 = sadd.s32 1, %s21
    %p31 = scmp.ge.s32.totalorder %s30, 1
    %s32 = scalar_select %p31, 0, %s30
    %s33 = sadd.s32 1, %s20
    %s34 = scalar_select %p31, %s33, %s20
    %p35 = scmp.ge.s32.totalorder %s34, 1
    %s36 = scalar_select %p35, 0, %s34
    %s37 = sadd.s32 1, %s19
    %s38 = scalar_select %p35, %s37, %s19
    %p39 = scmp.ge.s32.totalorder %s38, 2
    %s40 = scalar_select %p39, 0, %s38
    %s41 = sadd.s32 1, %s18
    %s42 = scalar_select %p39, %s41, %s18
    %p43 = scmp.ge.s32.totalorder %s42, 2
    %s44 = scalar_select %p43, 0, %s42
    %s45 = ssub.s32 %s18, %s44
    %s46 = ssub.s32 %s19, %s40
    %s47 = sor.u32 %s45, %s46
    %s48 = ssub.s32 %s21, %s32
    %s49 = sor.u32 %s47, %s48
    %p50 = scmp.eq.s32.totalorder %s49, 0
    %s52 = sadd.s32 %s51, 1
    %s53 = scalar_select %p50, %s51, %s52
    %p56 = pneg %p50
    %p57 = scmp.eq.s32.totalorder %s11, 3
    %p58 = por %p56, %p57
    %p59 = scmp.ne.s32.totalorder %s51, %s54
    %p60 = scmp.eq.s32.totalorder %s11, 0
    %p61 = por %p59, %p60
    %p62 = scmp.ne.s32.totalorder %s51, %s54
    %p63 = scmp.eq.s32.totalorder %s16, 3
    %p64 = por %p62, %p63
    %p65 = scmp.ne.s32.totalorder %s54, %s55
    %p66 = scmp.eq.s32.totalorder %s16, 0
    %p67 = por %p65, %p66
    %p68 = scmp.ne.s32.totalorder %s54, %s55
    %p69 = scmp.eq.s32.totalorder %s17, 3
    %p70 = por %p68, %p69
    %p72 = scmp.ne.s32.totalorder %s55, %s71
    %p73 = scmp.eq.s32.totalorder %s17, 0
    %p74 = por %p72, %p73
    %s75 = smul.u32 %s19, 8
    %s76 = ssub.s32 %s75, 1
    %p77 = scmp.gt.s32.totalorder %s76, 0
    %s78 = scalar_select %p77, %s76, 0
    %s79 = smul.u32 %s40, 8
    %s80 = ssub.s32 %s79, 1
    %p81 = scmp.gt.s32.totalorder %s80, 0
    %s82 = scalar_select %p81, %s80, 0
    %s83 = ssub.s32 %s18, %s44
    %s84 = ssub.s32 %s78, %s82
    %s85 = sor.u32 %s83, %s84
    %s86 = ssub.s32 %s21, %s32
    %s87 = sor.u32 %s85, %s86
    %p88 = scmp.eq.s32.totalorder %s87, 0
    %s90 = sadd.s32 %s89, 1
    %s91 = scalar_select %p88, %s89, %s90
    %p94 = pneg %p88
    %p95 = scmp.eq.s32.totalorder %s11, 3
    %p96 = por %p94, %p95
    %p97 = scmp.ne.s32.totalorder %s89, %s92
    %p98 = scmp.eq.s32.totalorder %s11, 0
    %p99 = por %p97, %p98
    %p100 = scmp.ne.s32.totalorder %s89, %s92
    %p101 = scmp.eq.s32.totalorder %s16, 3
    %p102 = por %p100, %p101
    %p103 = scmp.ne.s32.totalorder %s92, %s93
    %p104 = scmp.eq.s32.totalorder %s16, 0
    %p105 = por %p103, %p104
    %p106 = scmp.ne.s32.totalorder %s92, %s93
    %p107 = scmp.eq.s32.totalorder %s17, 3
    %p108 = por %p106, %p107
    %p110 = scmp.ne.s32.totalorder %s93, %s109
    %p111 = scmp.eq.s32.totalorder %s17, 0
    %p112 = por %p110, %p111
    %s113 = sadd.s32 %s19, 1
    %s114 = smul.u32 %s113, 8
    %p115 = scmp.lt.s32.totalorder %s114, 15
    %s116 = scalar_select %p115, %s114, 15
    %s117 = sadd.s32 %s40, 1
    %s118 = smul.u32 %s117, 8
    %p119 = scmp.lt.s32.totalorder %s118, 15
    %s120 = scalar_select %p119, %s118, 15
    %s121 = ssub.s32 %s18, %s44
    %s122 = ssub.s32 %s116, %s120
    %s123 = sor.u32 %s121, %s122
    %s124 = ssub.s32 %s21, %s32
    %s125 = sor.u32 %s123, %s124
    %p126 = scmp.eq.s32.totalorder %s125, 0
    %s128 = sadd.s32 %s127, 1
    %s129 = scalar_select %p126, %s127, %s128
    %p132 = pneg %p126
    %p133 = scmp.eq.s32.totalorder %s11, 3
    %p134 = por %p132, %p133
    %p135 = scmp.ne.s32.totalorder %s127, %s130
    %p136 = scmp.eq.s32.totalorder %s11, 0
    %p137 = por %p135, %p136
    %p138 = scmp.ne.s32.totalorder %s127, %s130
    %p139 = scmp.eq.s32.totalorder %s16, 3
    %p140 = por %p138, %p139
    %p141 = scmp.ne.s32.totalorder %s130, %s131
    %p142 = scmp.eq.s32.totalorder %s16, 0
    %p143 = por %p141, %p142
    %p144 = scmp.ne.s32.totalorder %s130, %s131
    %p145 = scmp.eq.s32.totalorder %s17, 3
    %p146 = por %p144, %p145
    %p148 = scmp.ne.s32.totalorder %s131, %s147
    %p149 = scmp.eq.s32.totalorder %s17, 0
    %p150 = por %p148, %p149
    %s152 = sadd.s32 %s151, 1
    %p155 = scmp.eq.s32.totalorder %s11, 3
    %p156 = scmp.ne.s32.totalorder %s151, %s153
    %p157 = scmp.eq.s32.totalorder %s11, 0
    %p158 = por %p156, %p157
    %p159 = scmp.ne.s32.totalorder %s151, %s153
    %p160 = scmp.eq.s32.totalorder %s16, 3
    %p161 = por %p159, %p160
    %p162 = scmp.ne.s32.totalorder %s153, %s154
    %p163 = scmp.eq.s32.totalorder %s16, 0
    %p164 = por %p162, %p163
    %p165 = scmp.ne.s32.totalorder %s153, %s154
    %p166 = scmp.eq.s32.totalorder %s17, 3
    %p167 = por %p165, %p166
    %p169 = scmp.ne.s32.totalorder %s154, %s168
    %p170 = scmp.eq.s32.totalorder %s17, 0
    %p171 = por %p169, %p170
    %s172 = ssub.s32 %s20, %s36
    %p173 = scmp.eq.s32.totalorder %s172, 0
    %s175 = sadd.s32 %s174, 1
    %s176 = scalar_select %p173, %s174, %s175
    %p179 = pneg %p173
    %p180 = scmp.eq.s32.totalorder %s11, 3
    %p181 = por %p179, %p180
    %p182 = scmp.ne.s32.totalorder %s174, %s177
    %p183 = scmp.eq.s32.totalorder %s11, 0
    %p184 = por %p182, %p183
    %p185 = scmp.ne.s32.totalorder %s174, %s177
    %p186 = scmp.eq.s32.totalorder %s16, 3
    %p187 = por %p185, %p186
    %p188 = scmp.ne.s32.totalorder %s177, %s178
    %p189 = scmp.eq.s32.totalorder %s16, 0
    %p190 = por %p188, %p189
    %p191 = scmp.ne.s32.totalorder %s177, %s178
    %p192 = scmp.eq.s32.totalorder %s17, 3
    %p193 = por %p191, %p192
    %p195 = scmp.ne.s32.totalorder %s178, %s194
    %p196 = scmp.eq.s32.totalorder %s17, 0
    %p197 = por %p195, %p196
    %s198 = ssub.s32 %s18, %s44
    %s199 = ssub.s32 %s19, %s40
    %s200 = sor.u32 %s198, %s199
    %s201 = ssub.s32 %s20, %s36
    %s202 = sor.u32 %s200, %s201
    %p203 = scmp.eq.s32.totalorder %s202, 0
    %s205 = sadd.s32 %s204, 1
    %s206 = scalar_select %p203, %s204, %s205
    %p209 = pneg %p203
    %p210 = scmp.eq.s32.totalorder %s11, 3
    %p211 = por %p209, %p210
    %p212 = scmp.ne.s32.totalorder %s204, %s207
    %p213 = scmp.eq.s32.totalorder %s11, 0
    %p214 = por %p212, %p213
    %p215 = scmp.ne.s32.totalorder %s204, %s207
    %p216 = scmp.eq.s32.totalorder %s16, 3
    %p217 = por %p215, %p216
    %p218 = scmp.ne.s32.totalorder %s207, %s208
    %p219 = scmp.eq.s32.totalorder %s16, 0
    %p220 = por %p218, %p219
    %p221 = scmp.ne.s32.totalorder %s207, %s208
    %p222 = scmp.eq.s32.totalorder %s17, 3
    %p223 = por %p221, %p222
    %p225 = scmp.ne.s32.totalorder %s208, %s224
    %p226 = scmp.eq.s32.totalorder %s17, 0
    %p227 = por %p225, %p226
    %p228 = scmp.le.s32.totalorder 1, %s11
    %p229 = scmp.lt.s32.totalorder %s11, 5
    %p230 = pnand %p228, %p229
    %p231 = pneg %p230
    // Predicated region
    $region9: #{spade_resblock_forward.18} parent=5 // pred_check
      _
    $region10: #{spade_resblock_forward.18} parent=5 // pred_check_branch
      %233 = sbr.rel (%p230) target = $region12
    $region11: #{spade_resblock_forward.18} parent=5 // pred_region
      %s234 = ssub.s32 %s11, 1
      // Predicated region
      $region13: #{spade_resblock_forward.18} parent=11 // pred_check
        %p235 = pneg %p164
      $region14: #{spade_resblock_forward.18} parent=11 // pred_check_branch
        %237 = sbr.rel (%p235) target = $region16
      $region15: #{spade_resblock_forward.18} parent=11 // pred_region
        _
      $region16: #{spade_resblock_forward.18} parent=11 // pred_fallthru
        _
      // Predicated region
      $region17: #{spade_resblock_forward.18} parent=11 // pred_check
        %p238 = pneg %p190
      $region18: #{spade_resblock_forward.18} parent=11 // pred_check_branch
        %240 = sbr.rel (%p238) target = $region20
      $region19: #{spade_resblock_forward.18} parent=11 // pred_region
        %p241 = scmp.lt.s32.totalorder %s24, 0
        %s242 = scalar_select %p241, %s24, 0
        %s243 = scalar_lea.vmem %s4, %s242
      $region20: #{spade_resblock_forward.18} parent=11 // pred_fallthru
        _
    $region12: #{spade_resblock_forward.18} parent=5 // pred_fallthru
      _
    %p244 = scmp.lt.s32.totalorder %s11, 4
    // Predicated region
    $region21: #{spade_resblock_forward.18} parent=5 // pred_check
      %p245 = pneg %p244
    $region22: #{spade_resblock_forward.18} parent=5 // pred_check_branch
      %247 = sbr.rel (%p245) target = $region24
    $region23: #{spade_resblock_forward.18} parent=5 // pred_region
      // Predicated region
      $region25: #{spade_resblock_forward.18} parent=23 // pred_check
        %p248 = pneg %p61
      $region26: #{spade_resblock_forward.18} parent=23 // pred_check_branch
        %250 = sbr.rel (%p248) target = $region28
      $region27: #{spade_resblock_forward.18} parent=23 // pred_region
        %s251 = smul.u32 8, %s19
        %p252 = scmp.lt.s32.totalorder %s18, 1
        %s253 = scalar_select %p252, %s18, 1
        %p254 = scmp.lt.s32.totalorder %s251, 15
        %s255 = scalar_select %p254, %s251, 15
        %p256 = scmp.lt.s32.totalorder %s21, 0
        %s257 = scalar_select %p256, %s21, 0
        %s258 = smul.addr %s255, 2
        %s259 = sadd.s32 %s257, %s258
        %s260 = smul.addr %s253, 32
        %s261 = sadd.s32 %s259, %s260
        %s262 = smul.addr %s261, 4
        %s263 = scalar_lea.vmem %s0, %s262
        %s264 = smul.u32 8, %s19
      $region28: #{spade_resblock_forward.18} parent=23 // pred_fallthru
        _
      // Predicated region
      $region29: #{spade_resblock_forward.18} parent=23 // pred_check
        %p265 = pneg %p99
      $region30: #{spade_resblock_forward.18} parent=23 // pred_check_branch
        %267 = sbr.rel (%p265) target = $region32
      $region31: #{spade_resblock_forward.18} parent=23 // pred_region
        %s268 = smul.u32 %s19, 8
        %s269 = ssub.s32 %s268, 1
        %p270 = scmp.gt.s32.totalorder %s269, 0
        %s271 = scalar_select %p270, %s269, 0
        %p272 = scmp.lt.s32.totalorder %s18, 1
        %s273 = scalar_select %p272, %s18, 1
        %p274 = scmp.lt.s32.totalorder %s271, 15
        %s275 = scalar_select %p274, %s271, 15
        %p276 = scmp.lt.s32.totalorder %s21, 0
        %s277 = scalar_select %p276, %s21, 0
        %s278 = smul.addr %s275, 2
        %s279 = sadd.s32 %s277, %s278
        %s280 = smul.addr %s273, 32
        %s281 = sadd.s32 %s279, %s280
        %s282 = smul.addr %s281, 4
        %s283 = scalar_lea.vmem %s1, %s282
        %s284 = smul.u32 %s19, 8
        %s285 = ssub.s32 %s284, 1
        %p286 = scmp.gt.s32.totalorder %s285, 0
        %s287 = scalar_select %p286, %s285, 0
      $region32: #{spade_resblock_forward.18} parent=23 // pred_fallthru
        _
      // Predicated region
      $region33: #{spade_resblock_forward.18} parent=23 // pred_check
        %p288 = pneg %p137
      $region34: #{spade_resblock_forward.18} parent=23 // pred_check_branch
        %290 = sbr.rel (%p288) target = $region36
      $region35: #{spade_resblock_forward.18} parent=23 // pred_region
        %s291 = sadd.s32 %s19, 1
        %s292 = smul.u32 %s291, 8
        %p293 = scmp.lt.s32.totalorder %s292, 15
        %s294 = scalar_select %p293, %s292, 15
        %p295 = scmp.lt.s32.totalorder %s18, 1
        %s296 = scalar_select %p295, %s18, 1
        %p297 = scmp.lt.s32.totalorder %s294, 15
        %s298 = scalar_select %p297, %s294, 15
        %p299 = scmp.lt.s32.totalorder %s21, 0
        %s300 = scalar_select %p299, %s21, 0
        %s301 = smul.addr %s298, 2
        %s302 = sadd.s32 %s300, %s301
        %s303 = smul.addr %s296, 32
        %s304 = sadd.s32 %s302, %s303
        %s305 = smul.addr %s304, 4
        %s306 = scalar_lea.vmem %s2, %s305
        %s307 = sadd.s32 %s19, 1
        %s308 = smul.u32 %s307, 8
        %p309 = scmp.lt.s32.totalorder %s308, 15
        %s310 = scalar_select %p309, %s308, 15
      $region36: #{spade_resblock_forward.18} parent=23 // pred_fallthru
        _
    $region24: #{spade_resblock_forward.18} parent=5 // pred_fallthru
      _
    %p311 = scmp.le.s32.totalorder 1, %s11
    %p312 = scmp.lt.s32.totalorder %s11, 5
    %p313 = pnand %p311, %p312
    %p314 = pneg %p313
    // Predicated region
    $region37: #{spade_resblock_forward.18} parent=5 // pred_check
      _
    $region38: #{spade_resblock_forward.18} parent=5 // pred_check_branch
      %316 = sbr.rel (%p313) target = $region40
    $region39: #{spade_resblock_forward.18} parent=5 // pred_region
      %s317 = ssub.s32 %s11, 1
      %s318 = smul.u32 8, %s23
      %p319 = scmp.lt.s32.totalorder %s22, 1
      %s320 = scalar_select %p319, %s22, 1
      %p321 = scmp.lt.s32.totalorder %s318, 15
      %s322 = scalar_select %p321, %s318, 15
      %p323 = scmp.lt.s32.totalorder %s25, 0
      %s324 = scalar_select %p323, %s25, 0
      %s325 = smul.addr %s322, 2
      %s326 = sadd.s32 %s324, %s325
      %s327 = smul.addr %s320, 32
      %s328 = sadd.s32 %s326, %s327
      %s329 = smul.addr %s328, 4
      %s330 = scalar_lea.vmem %s0, %s329
      %p331 = pneg %p67
      %p332 = pneg %p64
      %s333 = smul.u32 %s23, 8
      %s334 = ssub.s32 %s333, 1
      %p335 = scmp.gt.s32.totalorder %s334, 0
      %s336 = scalar_select %p335, %s334, 0
      %p337 = scmp.lt.s32.totalorder %s22, 1
      %s338 = scalar_select %p337, %s22, 1
      %p339 = scmp.lt.s32.totalorder %s336, 15
      %s340 = scalar_select %p339, %s336, 15
      %p341 = scmp.lt.s32.totalorder %s25, 0
      %s342 = scalar_select %p341, %s25, 0
      %s343 = smul.addr %s340, 2
      %s344 = sadd.s32 %s342, %s343
      %s345 = smul.addr %s338, 32
      %s346 = sadd.s32 %s344, %s345
      %s347 = smul.addr %s346, 4
      %s348 = scalar_lea.vmem %s1, %s347
      %p349 = pneg %p105
      %p350 = pneg %p102
      %s351 = sadd.s32 %s23, 1
      %s352 = smul.u32 %s351, 8
      %p353 = scmp.lt.s32.totalorder %s352, 15
      %s354 = scalar_select %p353, %s352, 15
      %p355 = scmp.lt.s32.totalorder %s22, 1
      %s356 = scalar_select %p355, %s22, 1
      %p357 = scmp.lt.s32.totalorder %s354, 15
      %s358 = scalar_select %p357, %s354, 15
      %p359 = scmp.lt.s32.totalorder %s25, 0
      %s360 = scalar_select %p359, %s25, 0
      %s361 = smul.addr %s358, 2
      %s362 = sadd.s32 %s360, %s361
      %s363 = smul.addr %s356, 32
      %s364 = sadd.s32 %s362, %s363
      %s365 = smul.addr %s364, 4
      %s366 = scalar_lea.vmem %s2, %s365
      %p367 = pneg %p143
      %p368 = pneg %p140
      %p369 = pneg %p164
      %p370 = pneg %p161
      %p371 = scmp.lt.s32.totalorder %s24, 0
      %s372 = scalar_select %p371, %s24, 0
      %s373 = scalar_lea.vmem %s4, %s372
      %p374 = pneg %p190
      %p375 = pneg %p187
      %p376 = pneg %p220
      %p377 = pneg %p217
      %s378 = smul.u32 8, %s23
      %p379 = scmp.lt.s32.totalorder %s22, 1
      %s380 = scalar_select %p379, %s22, 1
      %p381 = scmp.lt.s32.totalorder %s378, 15
      %s382 = scalar_select %p381, %s378, 15
      %p383 = scmp.lt.s32.totalorder %s24, 0
      %s384 = scalar_select %p383, %s24, 0
      %s385 = smul.addr %s382, 2
      %s386 = sadd.s32 %s384, %s385
      %s387 = smul.addr %s380, 32
      %s388 = sadd.s32 %s386, %s387
      %s389 = smul.addr %s388, 4
      %s390 = scalar_lea.vmem %s5, %s389
      %s391 = smul.u32 8, %s23
      %p392 = scmp.lt.s32.totalorder %s22, 1
      %s393 = scalar_select %p392, %s22, 1
      %p394 = scmp.lt.s32.totalorder %s391, 15
      %s395 = scalar_select %p394, %s391, 15
      %p396 = scmp.lt.s32.totalorder %s25, 0
      %s397 = scalar_select %p396, %s25, 0
      %s398 = smul.addr %s395, 2
      %s399 = sadd.s32 %s397, %s398
      %s400 = smul.addr %s393, 32
      %s401 = sadd.s32 %s399, %s400
      %s402 = smul.addr %s401, 4
      %s403 = scalar_lea.vmem %s0, %s402
      %s404 = smul.u32 8, %s23
      %s405 = smul.u32 %s23, 8
      %s406 = ssub.s32 %s405, 1
      %p407 = scmp.gt.s32.totalorder %s406, 0
      %s408 = scalar_select %p407, %s406, 0
      %p409 = scmp.lt.s32.totalorder %s22, 1
      %s410 = scalar_select %p409, %s22, 1
      %p411 = scmp.lt.s32.totalorder %s408, 15
      %s412 = scalar_select %p411, %s408, 15
      %p413 = scmp.lt.s32.totalorder %s25, 0
      %s414 = scalar_select %p413, %s25, 0
      %s415 = smul.addr %s412, 2
      %s416 = sadd.s32 %s414, %s415
      %s417 = smul.addr %s410, 32
      %s418 = sadd.s32 %s416, %s417
      %s419 = smul.addr %s418, 4
      %s420 = scalar_lea.vmem %s1, %s419
      %s421 = smul.u32 %s23, 8
      %s422 = ssub.s32 %s421, 1
      %p423 = scmp.gt.s32.totalorder %s422, 0
      %s424 = scalar_select %p423, %s422, 0
      %s425 = sadd.s32 %s23, 1
      %s426 = smul.u32 %s425, 8
      %p427 = scmp.lt.s32.totalorder %s426, 15
      %s428 = scalar_select %p427, %s426, 15
      %p429 = scmp.lt.s32.totalorder %s22, 1
      %s430 = scalar_select %p429, %s22, 1
      %p431 = scmp.lt.s32.totalorder %s428, 15
      %s432 = scalar_select %p431, %s428, 15
      %p433 = scmp.lt.s32.totalorder %s25, 0
      %s434 = scalar_select %p433, %s25, 0
      %s435 = smul.addr %s432, 2
      %s436 = sadd.s32 %s434, %s435
      %s437 = smul.addr %s430, 32
      %s438 = sadd.s32 %s436, %s437
      %s439 = smul.addr %s438, 4
      %s440 = scalar_lea.vmem %s2, %s439
      %s441 = sadd.s32 %s23, 1
      %s442 = smul.u32 %s441, 8
      %p443 = scmp.lt.s32.totalorder %s442, 15
      %s444 = scalar_select %p443, %s442, 15
      %p445 = scmp.lt.s32.totalorder %s24, 0
      %s446 = scalar_select %p445, %s24, 0
      %s447 = scalar_lea.vmem %s4, %s446
      %s448 = smul.u32 8, %s23
      %p449 = scmp.lt.s32.totalorder %s22, 1
      %s450 = scalar_select %p449, %s22, 1
      %p451 = scmp.lt.s32.totalorder %s448, 15
      %s452 = scalar_select %p451, %s448, 15
      %p453 = scmp.lt.s32.totalorder %s24, 0
      %s454 = scalar_select %p453, %s24, 0
      %s455 = smul.addr %s452, 2
      %s456 = sadd.s32 %s454, %s455
      %s457 = smul.addr %s450, 32
      %s458 = sadd.s32 %s456, %s457
      %s459 = smul.addr %s458, 4
      %s460 = scalar_lea.vmem %s5, %s459
      %s461 = smul.u32 8, %s23
      %v463 = vld [vmem:[%s403] sm:$0xf]
      %v464 = vld [vmem:[%s403 + $0x4] sm:$0xf]
      %v465 = vld [vmem:[%s403 + $0x8] sm:$0xf]
      %v466 = vld [vmem:[%s403 + $0xc] sm:$0xf]
      %v467 = vld [vmem:[%s403 + $0x10] sm:$0xf]
      %v468 = vld [vmem:[%s403 + $0x14] sm:$0xf]
      %v469 = vld [vmem:[%s403 + $0x18] sm:$0xf]
      %v470 = vld [vmem:[%s403 + $0x1c] sm:$0xf]
      %v471 = vld [vmem:[%s403 + $0x20] sm:$0xf]
      %v472 = vld [vmem:[%s403 + $0x24] sm:$0xf]
      %v473 = vld [vmem:[%s403 + $0x28] sm:$0xf]
      %v474 = vld [vmem:[%s403 + $0x2c] sm:$0xf]
      %v475 = vld [vmem:[%s403 + $0x30] sm:$0xf]
      %v476 = vld [vmem:[%s403 + $0x34] sm:$0xf]
      %v477 = vld [vmem:[%s403 + $0x38] sm:$0xf]
      %v478 = vld [vmem:[%s403 + $0x3c] sm:$0xf]
      %v479 = vunpack.c.l.bf16 %v463
      %v480 = vunpack.c.l.bf16 %v464
      %v481 = vunpack.c.l.bf16 %v465
      %v482 = vunpack.c.l.bf16 %v466
      %v483 = vunpack.c.l.bf16 %v467
      %v484 = vunpack.c.l.bf16 %v468
      %v485 = vunpack.c.l.bf16 %v469
      %v486 = vunpack.c.l.bf16 %v470
      %v487 = vunpack.c.l.bf16 %v471
      %v488 = vunpack.c.l.bf16 %v472
      %v489 = vunpack.c.l.bf16 %v473
      %v490 = vunpack.c.l.bf16 %v474
      %v491 = vunpack.c.l.bf16 %v475
      %v492 = vunpack.c.l.bf16 %v476
      %v493 = vunpack.c.l.bf16 %v477
      %v494 = vunpack.c.l.bf16 %v478
      %v495 = vld [vmem:[%s420] sm:$0xf]
      %v496 = vld [vmem:[%s420 + $0x4] sm:$0xf]
      %v497 = vunpack.c.l.bf16 %v495
      %v498 = vunpack.c.l.bf16 %v496
      %v499 = vld [vmem:[%s440] sm:$0xf]
      %v500 = vld [vmem:[%s440 + $0x4] sm:$0xf]
      %v501 = vunpack.c.l.bf16 %v499
      %v502 = vunpack.c.l.bf16 %v500
      %p503 = scmp.gt.s32.totalorder %s23, 0
      %s504 = scalar_select %p503, 1, 0
      %s505 = scvt.s32.f32 %s504
      %p506 = scmp.lt.s32.totalorder %s23, 1
      %s507 = scalar_select %p506, 1, 0
      %s508 = scvt.s32.f32 %s507
      %v509 = vstv %s505
      %v510 = vmul.f32 %v497, %v509
      %v511 = vmul.f32 %v498, %v509
      %s512 = ssub.f32 1.0, %s505
      %v513 = vstv %s512
      %v514 = vmul.f32 %v481, %v513
      %v515 = vmul.f32 %v482, %v513
      %v516 = vadd.f32 %v510, %v514
      %v517 = vadd.f32 %v511, %v515
      %v518 = vstv %s508
      %v519 = vmul.f32 %v501, %v518
      %v520 = vmul.f32 %v502, %v518
      %s521 = ssub.f32 1.0, %s508
      %v522 = vstv %s521
      %v523 = vmul.f32 %v491, %v522
      %v524 = vmul.f32 %v492, %v522
      %v525 = vadd.f32 %v519, %v523
      %v526 = vadd.f32 %v520, %v524
      %v527 = vlaneseq
      %v528 = vshrl.u32 %v527, 7
      %v529 = vadd.s32 %v528, 8
      %vm530 = vcmp.eq.s32.totalorder %v528, 0
      %vm531 = vcmp.eq.s32.totalorder %v529, 0
      %vm532 = vcmp.eq.s32.totalorder %v528, 15
      %vm533 = vcmp.eq.s32.totalorder %v529, 15
      %v534 = vrot.slane %v516, 7
      %v535 = vrot.slane %v517, 7
      %v536 = vrot.slane %v479, 7
      %v537 = vrot.slane %v480, 7
      %v538 = vrot.slane %v481, 7
      %v539 = vrot.slane %v482, 7
      %v540 = vrot.slane %v483, 7
      %v541 = vrot.slane %v484, 7
      %v542 = vrot.slane %v485, 7
      %v543 = vrot.slane %v486, 7
      %v544 = vrot.slane %v487, 7
      %v545 = vrot.slane %v488, 7
      %v546 = vrot.slane %v489, 7
      %v547 = vrot.slane %v490, 7
      %v548 = vrot.slane %v491, 7
      %v549 = vrot.slane %v492, 7
      %vm550 = vcmp.lt.s32.totalorder %v528, 1
      %v551 = vsel %vm550, %v548, %v549
      %v552 = vsel %vm550, %v547, %v548
      %v553 = vsel %vm550, %v546, %v547
      %v554 = vsel %vm550, %v545, %v546
      %v555 = vsel %vm550, %v544, %v545
      %v556 = vsel %vm550, %v543, %v544
      %v557 = vsel %vm550, %v542, %v543
      %v558 = vsel %vm550, %v541, %v542
      %v559 = vsel %vm550, %v540, %v541
      %v560 = vsel %vm550, %v539, %v540
      %v561 = vsel %vm550, %v538, %v539
      %v562 = vsel %vm550, %v537, %v538
      %v563 = vsel %vm550, %v536, %v537
      %v564 = vsel %vm550, %v535, %v536
      %v565 = vsel %vm550, %v534, %v535
      %v566 = vsel %vm550, %v549, %v534
      %v567 = vrot.slane %v516, 1
      %v568 = vrot.slane %v517, 1
      %v569 = vrot.slane %v479, 1
      %v570 = vrot.slane %v480, 1
      %v571 = vrot.slane %v481, 1
      %v572 = vrot.slane %v482, 1
      %v573 = vrot.slane %v483, 1
      %v574 = vrot.slane %v484, 1
      %v575 = vrot.slane %v485, 1
      %v576 = vrot.slane %v486, 1
      %v577 = vrot.slane %v487, 1
      %v578 = vrot.slane %v488, 1
      %v579 = vrot.slane %v489, 1
      %v580 = vrot.slane %v490, 1
      %v581 = vrot.slane %v491, 1
      %v582 = vrot.slane %v492, 1
      %vm583 = vcmp.lt.s32.totalorder %v528, 7
      %v584 = vsel %vm583, %v581, %v582
      %v585 = vsel %vm583, %v580, %v581
      %v586 = vsel %vm583, %v579, %v580
      %v587 = vsel %vm583, %v578, %v579
      %v588 = vsel %vm583, %v577, %v578
      %v589 = vsel %vm583, %v576, %v577
      %v590 = vsel %vm583, %v575, %v576
      %v591 = vsel %vm583, %v574, %v575
      %v592 = vsel %vm583, %v573, %v574
      %v593 = vsel %vm583, %v572, %v573
      %v594 = vsel %vm583, %v571, %v572
      %v595 = vsel %vm583, %v570, %v571
      %v596 = vsel %vm583, %v569, %v570
      %v597 = vsel %vm583, %v568, %v569
      %v598 = vsel %vm583, %v567, %v568
      %v599 = vsel %vm583, %v582, %v567
      %v600 = vsel %vm530, 1, 0
      %v601 = vsel %vm531, 1, 0
      %vm602 = vcmp.eq.s32.totalorder %v600, 1
      %vm603 = vcmp.eq.s32.totalorder %v601, 1
      %v604 = vsel %vm602, %v598, %v566
      %v605 = vsel %vm603, %v597, %v565
      %v606 = vsel %vm602, %v596, %v564
      %v607 = vsel %vm603, %v595, %v563
      %v608 = vsel %vm602, %v594, %v562
      %v609 = vsel %vm603, %v593, %v561
      %v610 = vsel %vm602, %v592, %v560
      %v611 = vsel %vm603, %v591, %v559
      %v612 = vsel %vm602, %v590, %v558
      %v613 = vsel %vm603, %v589, %v557
      %v614 = vsel %vm602, %v588, %v556
      %v615 = vsel %vm603, %v587, %v555
      %v616 = vsel %vm602, %v586, %v554
      %v617 = vsel %vm603, %v585, %v553
      %v618 = vsel %vm602, %v584, %v552
      %v619 = vsel %vm603, %v599, %v551
      %v620 = vsel %vm532, 1, 0
      %v621 = vsel %vm533, 1, 0
      %vm622 = vcmp.eq.s32.totalorder %v620, 1
      %vm623 = vcmp.eq.s32.totalorder %v621, 1
      %v624 = vsel %vm622, %v566, %v598
      %v625 = vsel %vm623, %v565, %v597
      %v626 = vsel %vm622, %v564, %v596
      %v627 = vsel %vm623, %v563, %v595
      %v628 = vsel %vm622, %v562, %v594
      %v629 = vsel %vm623, %v561, %v593
      %v630 = vsel %vm622, %v560, %v592
      %v631 = vsel %vm623, %v559, %v591
      %v632 = vsel %vm622, %v558, %v590
      %v633 = vsel %vm623, %v557, %v589
      %v634 = vsel %vm622, %v556, %v588
      %v635 = vsel %vm623, %v555, %v587
      %v636 = vsel %vm622, %v554, %v586
      %v637 = vsel %vm623, %v553, %v585
      %v638 = vsel %vm622, %v552, %v584
      %v639 = vsel %vm623, %v551, %v599
      %v640 = vpack.c.bf16 %v605, %v604
      %v641 = vpack.c.bf16 %v607, %v606
      %v642 = vpack.c.bf16 %v609, %v608
      %v643 = vpack.c.bf16 %v611, %v610
      %v644 = vpack.c.bf16 %v613, %v612
      %v645 = vpack.c.bf16 %v615, %v614
      %v646 = vpack.c.bf16 %v617, %v616
      %v647 = vpack.c.bf16 %v619, %v618
      %v648 = vpack.c.bf16 %v517, %v516
      %v649 = vpack.c.bf16 %v480, %v479
      %v650 = vpack.c.bf16 %v482, %v481
      %v651 = vpack.c.bf16 %v484, %v483
      %v652 = vpack.c.bf16 %v486, %v485
      %v653 = vpack.c.bf16 %v488, %v487
      %v654 = vpack.c.bf16 %v490, %v489
      %v655 = vpack.c.bf16 %v492, %v491
      %v656 = vpack.c.bf16 %v625, %v624
      %v657 = vpack.c.bf16 %v627, %v626
      %v658 = vpack.c.bf16 %v629, %v628
      %v659 = vpack.c.bf16 %v631, %v630
      %v660 = vpack.c.bf16 %v633, %v632
      %v661 = vpack.c.bf16 %v635, %v634
      %v662 = vpack.c.bf16 %v637, %v636
      %v663 = vpack.c.bf16 %v639, %v638
      %s664 = smul.u32 %s25, 48
      %s665 = smul.u32 %s24, 144
      %s666 = sadd.s32 %s664, %s665
      %s667 = smul.addr %s666, 4
      %s668 = scalar_lea.vmem %s3, %s667
      %v669 = vld [vmem:[%s668] sm:$0xf]
      %v670 = vld [vmem:[%s668 + $0x4] sm:$0xf]
      %v671 = vld [vmem:[%s668 + $0x8] sm:$0xf]
      %v672 = vld [vmem:[%s668 + $0xc] sm:$0xf]
      %v673 = vld [vmem:[%s668 + $0x10] sm:$0xf]
      %v674 = vld [vmem:[%s668 + $0x14] sm:$0xf]
      %v675 = vld [vmem:[%s668 + $0x18] sm:$0xf]
      %v676 = vld [vmem:[%s668 + $0x1c] sm:$0xf]
      %v677 = vld [vmem:[%s668 + $0x20] sm:$0xf]
      %v678 = vld [vmem:[%s668 + $0x24] sm:$0xf]
      %v679 = vld [vmem:[%s668 + $0x28] sm:$0xf]
      %v680 = vld [vmem:[%s668 + $0x2c] sm:$0xf]
      %v681 = vld [vmem:[%s668 + $0x30] sm:$0xf]
      %v682 = vld [vmem:[%s668 + $0x34] sm:$0xf]
      %v683 = vld [vmem:[%s668 + $0x38] sm:$0xf]
      %v684 = vld [vmem:[%s668 + $0x3c] sm:$0xf]
      %v685 = vld [vmem:[%s668 + $0x40] sm:$0xf]
      %v686 = vld [vmem:[%s668 + $0x44] sm:$0xf]
      %v687 = vld [vmem:[%s668 + $0x48] sm:$0xf]
      %v688 = vld [vmem:[%s668 + $0x4c] sm:$0xf]
      %v689 = vld [vmem:[%s668 + $0x50] sm:$0xf]
      %v690 = vld [vmem:[%s668 + $0x54] sm:$0xf]
      %v691 = vld [vmem:[%s668 + $0x58] sm:$0xf]
      %v692 = vld [vmem:[%s668 + $0x5c] sm:$0xf]
      %v693 = vld [vmem:[%s668 + $0x60] sm:$0xf]
      %v694 = vld [vmem:[%s668 + $0x64] sm:$0xf]
      %v695 = vld [vmem:[%s668 + $0x68] sm:$0xf]
      %v696 = vld [vmem:[%s668 + $0x6c] sm:$0xf]
      %v697 = vld [vmem:[%s668 + $0x70] sm:$0xf]
      %v698 = vld [vmem:[%s668 + $0x74] sm:$0xf]
      %v699 = vld [vmem:[%s668 + $0x78] sm:$0xf]
      %v700 = vld [vmem:[%s668 + $0x7c] sm:$0xf]
      %v701 = vld [vmem:[%s668 + $0x80] sm:$0xf]
      %v702 = vld [vmem:[%s668 + $0x84] sm:$0xf]
      %v703 = vld [vmem:[%s668 + $0x88] sm:$0xf]
      %v704 = vld [vmem:[%s668 + $0x8c] sm:$0xf]
      %v705 = vld [vmem:[%s668 + $0x90] sm:$0xf]
      %v706 = vld [vmem:[%s668 + $0x94] sm:$0xf]
      %v707 = vld [vmem:[%s668 + $0x98] sm:$0xf]
      %v708 = vld [vmem:[%s668 + $0x9c] sm:$0xf]
      %v709 = vld [vmem:[%s668 + $0xa0] sm:$0xf]
      %v710 = vld [vmem:[%s668 + $0xa4] sm:$0xf]
      %v711 = vld [vmem:[%s668 + $0xa8] sm:$0xf]
      %v712 = vld [vmem:[%s668 + $0xac] sm:$0xf]
      %v713 = vld [vmem:[%s668 + $0xb0] sm:$0xf]
      %v714 = vld [vmem:[%s668 + $0xb4] sm:$0xf]
      %v715 = vld [vmem:[%s668 + $0xb8] sm:$0xf]
      %v716 = vld [vmem:[%s668 + $0xbc] sm:$0xf]
      %v717 = vrot.slane %v493, 7
      %v718 = vrot.slane %v494, 7
      %v719 = vsel %vm550, %v717, %v718
      %v720 = vsel %vm550, %v549, %v717
      %v721 = vsel %vm550, %v718, %v536
      %v722 = vrot.slane %v493, 1
      %v723 = vrot.slane %v494, 1
      %v724 = vsel %vm583, %v722, %v723
      %v725 = vsel %vm583, %v582, %v722
      %v726 = vsel %vm583, %v723, %v569
      %v727 = vsel %vm602, %v596, %v721
      %v728 = vsel %vm603, %v725, %v551
      %v729 = vsel %vm602, %v724, %v720
      %v730 = vsel %vm603, %v726, %v719
      %v731 = vsel %vm622, %v721, %v596
      %v732 = vsel %vm623, %v551, %v725
      %v733 = vsel %vm622, %v720, %v724
      %v734 = vsel %vm623, %v719, %v726
      %v735 = vpack.c.bf16 %v607, %v727
      %v736 = vpack.c.bf16 %v728, %v618
      %v737 = vpack.c.bf16 %v730, %v729
      %v738 = vpack.c.bf16 %v494, %v493
      %v739 = vpack.c.bf16 %v627, %v731
      %v740 = vpack.c.bf16 %v732, %v638
      %v741 = vpack.c.bf16 %v734, %v733
      %s742 = sadd.s32 %s664, 48
      %s743 = sadd.s32 %s742, %s665
      %s744 = smul.addr %s743, 4
      %s745 = scalar_lea.vmem %s3, %s744
      %v746 = vld [vmem:[%s745] sm:$0xf]
      %v747 = vld [vmem:[%s745 + $0x4] sm:$0xf]
      %v748 = vld [vmem:[%s745 + $0x8] sm:$0xf]
      %v749 = vld [vmem:[%s745 + $0xc] sm:$0xf]
      %v750 = vld [vmem:[%s745 + $0x10] sm:$0xf]
      %v751 = vld [vmem:[%s745 + $0x14] sm:$0xf]
      %v752 = vld [vmem:[%s745 + $0x18] sm:$0xf]
      %v753 = vld [vmem:[%s745 + $0x1c] sm:$0xf]
      %v754 = vld [vmem:[%s745 + $0x20] sm:$0xf]
      %v755 = vld [vmem:[%s745 + $0x24] sm:$0xf]
      %v756 = vld [vmem:[%s745 + $0x28] sm:$0xf]
      %v757 = vld [vmem:[%s745 + $0x2c] sm:$0xf]
      %v758 = vld [vmem:[%s745 + $0x30] sm:$0xf]
      %v759 = vld [vmem:[%s745 + $0x34] sm:$0xf]
      %v760 = vld [vmem:[%s745 + $0x38] sm:$0xf]
      %v761 = vld [vmem:[%s745 + $0x3c] sm:$0xf]
      %v762 = vld [vmem:[%s745 + $0x40] sm:$0xf]
      %v763 = vld [vmem:[%s745 + $0x44] sm:$0xf]
      %v764 = vld [vmem:[%s745 + $0x48] sm:$0xf]
      %v765 = vld [vmem:[%s745 + $0x4c] sm:$0xf]
      %v766 = vld [vmem:[%s745 + $0x50] sm:$0xf]
      %v767 = vld [vmem:[%s745 + $0x54] sm:$0xf]
      %v768 = vld [vmem:[%s745 + $0x58] sm:$0xf]
      %v769 = vld [vmem:[%s745 + $0x5c] sm:$0xf]
      %v770 = vld [vmem:[%s745 + $0x60] sm:$0xf]
      %v771 = vld [vmem:[%s745 + $0x64] sm:$0xf]
      %v772 = vld [vmem:[%s745 + $0x68] sm:$0xf]
      %v773 = vld [vmem:[%s745 + $0x6c] sm:$0xf]
      %v774 = vld [vmem:[%s745 + $0x70] sm:$0xf]
      %v775 = vld [vmem:[%s745 + $0x74] sm:$0xf]
      %v776 = vld [vmem:[%s745 + $0x78] sm:$0xf]
      %v777 = vld [vmem:[%s745 + $0x7c] sm:$0xf]
      %v778 = vld [vmem:[%s745 + $0x80] sm:$0xf]
      %v779 = vld [vmem:[%s745 + $0x84] sm:$0xf]
      %v780 = vld [vmem:[%s745 + $0x88] sm:$0xf]
      %v781 = vld [vmem:[%s745 + $0x8c] sm:$0xf]
      %v782 = vld [vmem:[%s745 + $0x90] sm:$0xf]
      %v783 = vld [vmem:[%s745 + $0x94] sm:$0xf]
      %v784 = vld [vmem:[%s745 + $0x98] sm:$0xf]
      %v785 = vld [vmem:[%s745 + $0x9c] sm:$0xf]
      %v786 = vld [vmem:[%s745 + $0xa0] sm:$0xf]
      %v787 = vld [vmem:[%s745 + $0xa4] sm:$0xf]
      %v788 = vld [vmem:[%s745 + $0xa8] sm:$0xf]
      %v789 = vld [vmem:[%s745 + $0xac] sm:$0xf]
      %v790 = vld [vmem:[%s745 + $0xb0] sm:$0xf]
      %v791 = vld [vmem:[%s745 + $0xb4] sm:$0xf]
      %v792 = vld [vmem:[%s745 + $0xb8] sm:$0xf]
      %v793 = vld [vmem:[%s745 + $0xbc] sm:$0xf]
      %v842 = vunpack.c.l.b16 %v746
      %v843 = vunpack.c.l.b16 %v747
      %v844 = vunpack.c.l.b16 %v748
      %v845 = vunpack.c.l.b16 %v749
      %v846 = vunpack.c.l.b16 %v750
      %v847 = vunpack.c.l.b16 %v751
      %v848 = vunpack.c.l.b16 %v752
      %v849 = vunpack.c.l.b16 %v753
      %v850 = vunpack.c.l.b16 %v754
      %v851 = vunpack.c.l.b16 %v755
      %v852 = vunpack.c.l.b16 %v756
      %v853 = vunpack.c.l.b16 %v757
      %v854 = vunpack.c.l.b16 %v758
      %v855 = vunpack.c.l.b16 %v759
      %v856 = vunpack.c.l.b16 %v760
      %v857 = vunpack.c.l.b16 %v761
      %v858 = vunpack.c.l.b16 %v762
      %v859 = vunpack.c.l.b16 %v763
      %v860 = vunpack.c.l.b16 %v764
      %v861 = vunpack.c.l.b16 %v765
      %v862 = vunpack.c.l.b16 %v766
      %v863 = vunpack.c.l.b16 %v767
      %v864 = vunpack.c.l.b16 %v768
      %v865 = vunpack.c.l.b16 %v769
      %v866 = vunpack.c.l.b16 %v770
      %v867 = vunpack.c.l.b16 %v771
      %v868 = vunpack.c.l.b16 %v772
      %v869 = vunpack.c.l.b16 %v773
      %v870 = vunpack.c.l.b16 %v774
      %v871 = vunpack.c.l.b16 %v775
      %v872 = vunpack.c.l.b16 %v776
      %v873 = vunpack.c.l.b16 %v777
      %v874 = vunpack.c.l.b16 %v778
      %v875 = vunpack.c.l.b16 %v779
      %v876 = vunpack.c.l.b16 %v780
      %v877 = vunpack.c.l.b16 %v781
      %v878 = vunpack.c.l.b16 %v782
      %v879 = vunpack.c.l.b16 %v783
      %v880 = vunpack.c.l.b16 %v784
      %v881 = vunpack.c.l.b16 %v785
      %v882 = vunpack.c.l.b16 %v786
      %v883 = vunpack.c.l.b16 %v787
      %v884 = vunpack.c.l.b16 %v788
      %v885 = vunpack.c.l.b16 %v789
      %v886 = vunpack.c.l.b16 %v790
      %v887 = vunpack.c.l.b16 %v791
      %v888 = vunpack.c.l.b16 %v792
      %v889 = vunpack.c.l.b16 %v793
      %v890 = vpack.c.b16 %v843, %v842
      %v891 = vpack.c.b16 %v845, %v844
      %v892 = vpack.c.b16 %v847, %v846
      %v893 = vpack.c.b16 %v849, %v848
      %v894 = vpack.c.b16 %v851, %v850
      %v895 = vpack.c.b16 %v853, %v852
      %v896 = vpack.c.b16 %v855, %v854
      %v897 = vpack.c.b16 %v857, %v856
      %v898 = vpack.c.b16 %v859, %v858
      %v899 = vpack.c.b16 %v861, %v860
      %v900 = vpack.c.b16 %v863, %v862
      %v901 = vpack.c.b16 %v865, %v864
      %v902 = vpack.c.b16 %v867, %v866
      %v903 = vpack.c.b16 %v869, %v868
      %v904 = vpack.c.b16 %v871, %v870
      %v905 = vpack.c.b16 %v873, %v872
      %v906 = vpack.c.b16 %v875, %v874
      %v907 = vpack.c.b16 %v877, %v876
      %v908 = vpack.c.b16 %v879, %v878
      %v909 = vpack.c.b16 %v881, %v880
      %v910 = vpack.c.b16 %v883, %v882
      %v911 = vpack.c.b16 %v885, %v884
      %v912 = vpack.c.b16 %v887, %v886
      %v913 = vpack.c.b16 %v889, %v888
      %938 = vmatprep.subr.bf16.mxu0 0
      %939 = vmatpush1.bf16.msra.mxu0 %v897
      %940 = vmatprep.subr.bf16.mxu0 0
      %941 = vmatpush1.bf16.msra.mxu0 %v896
      %942 = vmatprep.subr.bf16.mxu0 0
      %943 = vmatpush1.bf16.msra.mxu0 %v895
      %944 = vmatprep.subr.bf16.mxu0 0
      %945 = vmatpush1.bf16.msra.mxu0 %v894
      %946 = vmatprep.subr.bf16.mxu0 0
      %947 = vmatpush1.bf16.msra.mxu0 %v893
      %948 = vmatprep.subr.bf16.mxu0 0
      %949 = vmatpush1.bf16.msra.mxu0 %v892
      %950 = vmatprep.subr.bf16.mxu0 0
      %951 = vmatpush1.bf16.msra.mxu0 %v891
      %952 = vmatprep.subr.bf16.mxu0 0
      %953 = vmatpush1.bf16.msra.mxu0 %v890
      %954 = vmatprep.subr.bf16.mxu0 0
      %955 = vmatpush2.bf16.msra.mxu0 %v905
      %956 = vmatprep.subr.bf16.mxu0 0
      %957 = vmatpush2.bf16.msra.mxu0 %v904
      %958 = vmatprep.subr.bf16.mxu0 0
      %959 = vmatpush2.bf16.msra.mxu0 %v903
      %960 = vmatprep.subr.bf16.mxu0 0
      %961 = vmatpush2.bf16.msra.mxu0 %v902
      %962 = vmatprep.subr.bf16.mxu0 0
      %963 = vmatpush2.bf16.msra.mxu0 %v901
      %964 = vmatprep.subr.bf16.mxu0 0
      %965 = vmatpush2.bf16.msra.mxu0 %v900
      %966 = vmatprep.subr.bf16.mxu0 0
      %967 = vmatpush2.bf16.msra.mxu0 %v899
      %968 = vmatprep.subr.bf16.mxu0 0
      %969 = vmatpush2.bf16.msra.mxu0 %v898
      %970 = vmatprep.mubr.bf16.mxu0 %v649
      %971 = vmatmul.mubr.bf16.gmra.mxu0 %v735
      %v972 = vpop.f32.mrf.mxu0
      %v973 = vadd.f32 0.0, %v972
      %v974 = vpop.f32.mrf.mxu0
      %v975 = vpop.f32.mrf.mxu0
      %v976 = vadd.f32 0.0, %v975
      %v977 = vpop.f32.mrf.mxu0
      %978 = vmatprep.mubr.bf16.mxu0 %v650
      %979 = vmatmul.mubr.bf16.gmra.mxu0 %v642
      %v980 = vpop.f32.mrf.mxu0
      %v981 = vadd.f32 0.0, %v980
      %v982 = vpop.f32.mrf.mxu0
      %v983 = vpop.f32.mrf.mxu0
      %v984 = vadd.f32 0.0, %v983
      %v985 = vpop.f32.mrf.mxu0
      %986 = vmatprep.mubr.bf16.mxu0 %v651
      %987 = vmatmul.mubr.bf16.gmra.mxu0 %v643
      %v988 = vpop.f32.mrf.mxu0
      %v989 = vadd.f32 0.0, %v988
      %v990 = vpop.f32.mrf.mxu0
      %v991 = vpop.f32.mrf.mxu0
      %v992 = vadd.f32 0.0, %v991
      %v993 = vpop.f32.mrf.mxu0
      %994 = vmatprep.mubr.bf16.mxu0 %v652
      %995 = vmatmul.mubr.bf16.gmra.mxu0 %v644
      %v996 = vpop.f32.mrf.mxu0
      %v997 = vadd.f32 0.0, %v996
      %v998 = vpop.f32.mrf.mxu0
      %v999 = vpop.f32.mrf.mxu0
      %v1000 = vadd.f32 0.0, %v999
      %v1001 = vpop.f32.mrf.mxu0
      %1002 = vmatprep.mubr.bf16.mxu0 %v653
      %1003 = vmatmul.mubr.bf16.gmra.mxu0 %v645
      %v1004 = vpop.f32.mrf.mxu0
      %v1005 = vadd.f32 0.0, %v1004
      %v1006 = vpop.f32.mrf.mxu0
      %v1007 = vpop.f32.mrf.mxu0
      %v1008 = vadd.f32 0.0, %v1007
      %v1009 = vpop.f32.mrf.mxu0
      %1010 = vmatprep.mubr.bf16.mxu0 %v654
      %1011 = vmatmul.mubr.bf16.gmra.mxu0 %v646
      %v1012 = vpop.f32.mrf.mxu0
      %v1013 = vadd.f32 0.0, %v1012
      %v1014 = vpop.f32.mrf.mxu0
      %v1015 = vpop.f32.mrf.mxu0
      %v1016 = vadd.f32 0.0, %v1015
      %v1017 = vpop.f32.mrf.mxu0
      %1018 = vmatprep.mubr.bf16.mxu0 %v655
      %1019 = vmatmul.mubr.bf16.gmra.mxu0 %v736
      %v1020 = vpop.f32.mrf.mxu0
      %v1021 = vadd.f32 0.0, %v1020
      %v1022 = vpop.f32.mrf.mxu0
      %v1023 = vpop.f32.mrf.mxu0
      %v1024 = vadd.f32 0.0, %v1023
      %v1025 = vpop.f32.mrf.mxu0
      %1026 = vmatprep.mubr.bf16.mxu0 %v738
      %1027 = vmatmul.mubr.bf16.gmra.mxu0 %v737
      %v1028 = vpop.f32.mrf.mxu0
      %v1029 = vadd.f32 0.0, %v1028
      %v1030 = vpop.f32.mrf.mxu0
      %v1031 = vpop.f32.mrf.mxu0
      %v1032 = vadd.f32 0.0, %v1031
      %v1033 = vpop.f32.mrf.mxu0
      %1034 = vdwg.mxu0
      %1035 = vmatprep.subr.bf16.mxu0 0
      %1036 = vmatpush1.bf16.msra.mxu0 %v913
      %1037 = vmatprep.subr.bf16.mxu0 0
      %1038 = vmatpush1.bf16.msra.mxu0 %v912
      %1039 = vmatprep.subr.bf16.mxu0 0
      %1040 = vmatpush1.bf16.msra.mxu0 %v911
      %1041 = vmatprep.subr.bf16.mxu0 0
      %1042 = vmatpush1.bf16.msra.mxu0 %v910
      %1043 = vmatprep.subr.bf16.mxu0 0
      %1044 = vmatpush1.bf16.msra.mxu0 %v909
      %1045 = vmatprep.subr.bf16.mxu0 0
      %1046 = vmatpush1.bf16.msra.mxu0 %v908
      %1047 = vmatprep.subr.bf16.mxu0 0
      %1048 = vmatpush1.bf16.msra.mxu0 %v907
      %1049 = vmatprep.subr.bf16.mxu0 0
      %1050 = vmatpush1.bf16.msra.mxu0 %v906
      %1051 = vmatprep.subr.bf16.mxu0 0
      %1052 = vmatpush2.bf16.msra.mxu0 0
      %1053 = vmatprep.subr.bf16.mxu0 0
      %1054 = vmatpush2.bf16.msra.mxu0 0
      %1055 = vmatprep.subr.bf16.mxu0 0
      %1056 = vmatpush2.bf16.msra.mxu0 0
      %1057 = vmatprep.subr.bf16.mxu0 0
      %1058 = vmatpush2.bf16.msra.mxu0 0
      %1059 = vmatprep.subr.bf16.mxu0 0
      %1060 = vmatpush2.bf16.msra.mxu0 0
      %1061 = vmatprep.subr.bf16.mxu0 0
      %1062 = vmatpush2.bf16.msra.mxu0 0
      %1063 = vmatprep.subr.bf16.mxu0 0
      %1064 = vmatpush2.bf16.msra.mxu0 0
      %1065 = vmatprep.subr.bf16.mxu0 0
      %1066 = vmatpush2.bf16.msra.mxu0 0
      %1067 = vmatprep.mubr.bf16.mxu0 0
      %1068 = vmatmul.mubr.bf16.gmra.mxu0 %v739
      %v1069 = vpop.f32.mrf.mxu0
      %v1070 = vadd.f32 %v973, %v1069
      %v1071 = vpop.f32.mrf.mxu0
      %v1072 = vpop.f32.mrf.mxu0
      %v1073 = vadd.f32 %v976, %v1072
      %v1074 = vpop.f32.mrf.mxu0
      %1075 = vmatprep.mubr.bf16.mxu0 0
      %1076 = vmatmul.mubr.bf16.gmra.mxu0 %v658
      %v1077 = vpop.f32.mrf.mxu0
      %v1078 = vadd.f32 %v981, %v1077
      %v1079 = vpop.f32.mrf.mxu0
      %v1080 = vpop.f32.mrf.mxu0
      %v1081 = vadd.f32 %v984, %v1080
      %v1082 = vpop.f32.mrf.mxu0
      %1083 = vmatprep.mubr.bf16.mxu0 0
      %1084 = vmatmul.mubr.bf16.gmra.mxu0 %v659
      %v1085 = vpop.f32.mrf.mxu0
      %v1086 = vadd.f32 %v989, %v1085
      %v1087 = vpop.f32.mrf.mxu0
      %v1088 = vpop.f32.mrf.mxu0
      %v1089 = vadd.f32 %v992, %v1088
      %v1090 = vpop.f32.mrf.mxu0
      %1091 = vmatprep.mubr.bf16.mxu0 0
      %1092 = vmatmul.mubr.bf16.gmra.mxu0 %v660
      %v1093 = vpop.f32.mrf.mxu0
      %v1094 = vadd.f32 %v997, %v1093
      %v1095 = vpop.f32.mrf.mxu0
      %v1096 = vpop.f32.mrf.mxu0
      %v1097 = vadd.f32 %v1000, %v1096
      %v1098 = vpop.f32.mrf.mxu0
      %1099 = vmatprep.mubr.bf16.mxu0 0
      %1100 = vmatmul.mubr.bf16.gmra.mxu0 %v661
      %v1101 = vpop.f32.mrf.mxu0
      %v1102 = vadd.f32 %v1005, %v1101
      %v1103 = vpop.f32.mrf.mxu0
      %v1104 = vpop.f32.mrf.mxu0
      %v1105 = vadd.f32 %v1008, %v1104
      %v1106 = vpop.f32.mrf.mxu0
      %1107 = vmatprep.mubr.bf16.mxu0 0
      %1108 = vmatmul.mubr.bf16.gmra.mxu0 %v662
      %v1109 = vpop.f32.mrf.mxu0
      %v1110 = vadd.f32 %v1013, %v1109
      %v1111 = vpop.f32.mrf.mxu0
      %v1112 = vpop.f32.mrf.mxu0
      %v1113 = vadd.f32 %v1016, %v1112
      %v1114 = vpop.f32.mrf.mxu0
      %1115 = vmatprep.mubr.bf16.mxu0 0
      %1116 = vmatmul.mubr.bf16.gmra.mxu0 %v740
      %v1117 = vpop.f32.mrf.mxu0
      %v1118 = vadd.f32 %v1021, %v1117
      %v1119 = vpop.f32.mrf.mxu0
      %v1120 = vpop.f32.mrf.mxu0
      %v1121 = vadd.f32 %v1024, %v1120
      %v1122 = vpop.f32.mrf.mxu0
      %1123 = vmatprep.mubr.bf16.mxu0 0
      %1124 = vmatmul.mubr.bf16.gmra.mxu0 %v741
      %v1125 = vpop.f32.mrf.mxu0
      %v1126 = vadd.f32 %v1029, %v1125
      %v1127 = vpop.f32.mrf.mxu0
      %v1128 = vpop.f32.mrf.mxu0
      %v1129 = vadd.f32 %v1032, %v1128
      %v1130 = vpop.f32.mrf.mxu0
      %1131 = vdwg.mxu0
      %v1180 = vunpack.c.l.b16 %v669
      %v1181 = vunpack.c.l.b16 %v670
      %v1182 = vunpack.c.l.b16 %v671
      %v1183 = vunpack.c.l.b16 %v672
      %v1184 = vunpack.c.l.b16 %v673
      %v1185 = vunpack.c.l.b16 %v674
      %v1186 = vunpack.c.l.b16 %v675
      %v1187 = vunpack.c.l.b16 %v676
      %v1188 = vunpack.c.l.b16 %v677
      %v1189 = vunpack.c.l.b16 %v678
      %v1190 = vunpack.c.l.b16 %v679
      %v1191 = vunpack.c.l.b16 %v680
      %v1192 = vunpack.c.l.b16 %v681
      %v1193 = vunpack.c.l.b16 %v682
      %v1194 = vunpack.c.l.b16 %v683
      %v1195 = vunpack.c.l.b16 %v684
      %v1196 = vunpack.c.l.b16 %v685
      %v1197 = vunpack.c.l.b16 %v686
      %v1198 = vunpack.c.l.b16 %v687
      %v1199 = vunpack.c.l.b16 %v688
      %v1200 = vunpack.c.l.b16 %v689
      %v1201 = vunpack.c.l.b16 %v690
      %v1202 = vunpack.c.l.b16 %v691
      %v1203 = vunpack.c.l.b16 %v692
      %v1204 = vunpack.c.l.b16 %v693
      %v1205 = vunpack.c.l.b16 %v694
      %v1206 = vunpack.c.l.b16 %v695
      %v1207 = vunpack.c.l.b16 %v696
      %v1208 = vunpack.c.l.b16 %v697
      %v1209 = vunpack.c.l.b16 %v698
      %v1210 = vunpack.c.l.b16 %v699
      %v1211 = vunpack.c.l.b16 %v700
      %v1212 = vunpack.c.l.b16 %v701
      %v1213 = vunpack.c.l.b16 %v702
      %v1214 = vunpack.c.l.b16 %v703
      %v1215 = vunpack.c.l.b16 %v704
      %v1216 = vunpack.c.l.b16 %v705
      %v1217 = vunpack.c.l.b16 %v706
      %v1218 = vunpack.c.l.b16 %v707
      %v1219 = vunpack.c.l.b16 %v708
      %v1220 = vunpack.c.l.b16 %v709
      %v1221 = vunpack.c.l.b16 %v710
      %v1222 = vunpack.c.l.b16 %v711
      %v1223 = vunpack.c.l.b16 %v712
      %v1224 = vunpack.c.l.b16 %v713
      %v1225 = vunpack.c.l.b16 %v714
      %v1226 = vunpack.c.l.b16 %v715
      %v1227 = vunpack.c.l.b16 %v716
      %v1228 = vpack.c.b16 %v1181, %v1180
      %v1229 = vpack.c.b16 %v1183, %v1182
      %v1230 = vpack.c.b16 %v1185, %v1184
      %v1231 = vpack.c.b16 %v1187, %v1186
      %v1232 = vpack.c.b16 %v1189, %v1188
      %v1233 = vpack.c.b16 %v1191, %v1190
      %v1234 = vpack.c.b16 %v1193, %v1192
      %v1235 = vpack.c.b16 %v1195, %v1194
      %v1236 = vpack.c.b16 %v1197, %v1196
      %v1237 = vpack.c.b16 %v1199, %v1198
      %v1238 = vpack.c.b16 %v1201, %v1200
      %v1239 = vpack.c.b16 %v1203, %v1202
      %v1240 = vpack.c.b16 %v1205, %v1204
      %v1241 = vpack.c.b16 %v1207, %v1206
      %v1242 = vpack.c.b16 %v1209, %v1208
      %v1243 = vpack.c.b16 %v1211, %v1210
      %v1244 = vpack.c.b16 %v1213, %v1212
      %v1245 = vpack.c.b16 %v1215, %v1214
      %v1246 = vpack.c.b16 %v1217, %v1216
      %v1247 = vpack.c.b16 %v1219, %v1218
      %v1248 = vpack.c.b16 %v1221, %v1220
      %v1249 = vpack.c.b16 %v1223, %v1222
      %v1250 = vpack.c.b16 %v1225, %v1224
      %v1251 = vpack.c.b16 %v1227, %v1226
      %1276 = vmatprep.subr.bf16.mxu0 0
      %1277 = vmatpush1.bf16.msra.mxu0 %v1235
      %1278 = vmatprep.subr.bf16.mxu0 0
      %1279 = vmatpush1.bf16.msra.mxu0 %v1234
      %1280 = vmatprep.subr.bf16.mxu0 0
      %1281 = vmatpush1.bf16.msra.mxu0 %v1233
      %1282 = vmatprep.subr.bf16.mxu0 0
      %1283 = vmatpush1.bf16.msra.mxu0 %v1232
      %1284 = vmatprep.subr.bf16.mxu0 0
      %1285 = vmatpush1.bf16.msra.mxu0 %v1231
      %1286 = vmatprep.subr.bf16.mxu0 0
      %1287 = vmatpush1.bf16.msra.mxu0 %v1230
      %1288 = vmatprep.subr.bf16.mxu0 0
      %1289 = vmatpush1.bf16.msra.mxu0 %v1229
      %1290 = vmatprep.subr.bf16.mxu0 0
      %1291 = vmatpush1.bf16.msra.mxu0 %v1228
      %1292 = vmatprep.subr.bf16.mxu0 0
      %1293 = vmatpush2.bf16.msra.mxu0 %v1243
      %1294 = vmatprep.subr.bf16.mxu0 0
      %1295 = vmatpush2.bf16.msra.mxu0 %v1242
      %1296 = vmatprep.subr.bf16.mxu0 0
      %1297 = vmatpush2.bf16.msra.mxu0 %v1241
      %1298 = vmatprep.subr.bf16.mxu0 0
      %1299 = vmatpush2.bf16.msra.mxu0 %v1240
      %1300 = vmatprep.subr.bf16.mxu0 0
      %1301 = vmatpush2.bf16.msra.mxu0 %v1239
      %1302 = vmatprep.subr.bf16.mxu0 0
      %1303 = vmatpush2.bf16.msra.mxu0 %v1238
      %1304 = vmatprep.subr.bf16.mxu0 0
      %1305 = vmatpush2.bf16.msra.mxu0 %v1237
      %1306 = vmatprep.subr.bf16.mxu0 0
      %1307 = vmatpush2.bf16.msra.mxu0 %v1236
      %1308 = vmatprep.mubr.bf16.mxu0 %v648
      %1309 = vmatmul.mubr.bf16.gmra.mxu0 %v640
      %v1310 = vpop.f32.mrf.mxu0
      %v1311 = vadd.f32 %v1070, %v1310
      %v1312 = vpop.f32.mrf.mxu0
      %v1313 = vpop.f32.mrf.mxu0
      %v1314 = vadd.f32 %v1073, %v1313
      %v1315 = vpop.f32.mrf.mxu0
      %1316 = vmatprep.mubr.bf16.mxu0 %v649
      %1317 = vmatmul.mubr.bf16.gmra.mxu0 %v641
      %v1318 = vpop.f32.mrf.mxu0
      %v1319 = vadd.f32 %v1078, %v1318
      %v1320 = vpop.f32.mrf.mxu0
      %v1321 = vpop.f32.mrf.mxu0
      %v1322 = vadd.f32 %v1081, %v1321
      %v1323 = vpop.f32.mrf.mxu0
      %1324 = vmatprep.mubr.bf16.mxu0 %v650
      %1325 = vmatmul.mubr.bf16.gmra.mxu0 %v642
      %v1326 = vpop.f32.mrf.mxu0
      %v1327 = vadd.f32 %v1086, %v1326
      %v1328 = vpop.f32.mrf.mxu0
      %v1329 = vpop.f32.mrf.mxu0
      %v1330 = vadd.f32 %v1089, %v1329
      %v1331 = vpop.f32.mrf.mxu0
      %1332 = vmatprep.mubr.bf16.mxu0 %v651
      %1333 = vmatmul.mubr.bf16.gmra.mxu0 %v643
      %v1334 = vpop.f32.mrf.mxu0
      %v1335 = vadd.f32 %v1094, %v1334
      %v1336 = vpop.f32.mrf.mxu0
      %v1337 = vpop.f32.mrf.mxu0
      %v1338 = vadd.f32 %v1097, %v1337
      %v1339 = vpop.f32.mrf.mxu0
      %1340 = vmatprep.mubr.bf16.mxu0 %v652
      %1341 = vmatmul.mubr.bf16.gmra.mxu0 %v644
      %v1342 = vpop.f32.mrf.mxu0
      %v1343 = vadd.f32 %v1102, %v1342
      %v1344 = vpop.f32.mrf.mxu0
      %v1345 = vpop.f32.mrf.mxu0
      %v1346 = vadd.f32 %v1105, %v1345
      %v1347 = vpop.f32.mrf.mxu0
      %1348 = vmatprep.mubr.bf16.mxu0 %v653
      %1349 = vmatmul.mubr.bf16.gmra.mxu0 %v645
      %v1350 = vpop.f32.mrf.mxu0
      %v1351 = vadd.f32 %v1110, %v1350
      %v1352 = vpop.f32.mrf.mxu0
      %v1353 = vpop.f32.mrf.mxu0
      %v1354 = vadd.f32 %v1113, %v1353
      %v1355 = vpop.f32.mrf.mxu0
      %1356 = vmatprep.mubr.bf16.mxu0 %v654
      %1357 = vmatmul.mubr.bf16.gmra.mxu0 %v646
      %v1358 = vpop.f32.mrf.mxu0
      %v1359 = vadd.f32 %v1118, %v1358
      %v1360 = vpop.f32.mrf.mxu0
      %v1361 = vpop.f32.mrf.mxu0
      %v1362 = vadd.f32 %v1121, %v1361
      %v1363 = vpop.f32.mrf.mxu0
      %1364 = vmatprep.mubr.bf16.mxu0 %v655
      %1365 = vmatmul.mubr.bf16.gmra.mxu0 %v647
      %v1366 = vpop.f32.mrf.mxu0
      %v1367 = vadd.f32 %v1126, %v1366
      %v1368 = vpop.f32.mrf.mxu0
      %v1369 = vpop.f32.mrf.mxu0
      %v1370 = vadd.f32 %v1129, %v1369
      %v1371 = vpop.f32.mrf.mxu0
      %1372 = vdwg.mxu0
      %1373 = vmatprep.subr.bf16.mxu0 0
      %1374 = vmatpush1.bf16.msra.mxu0 %v1251
      %1375 = vmatprep.subr.bf16.mxu0 0
      %1376 = vmatpush1.bf16.msra.mxu0 %v1250
      %1377 = vmatprep.subr.bf16.mxu0 0
      %1378 = vmatpush1.bf16.msra.mxu0 %v1249
      %1379 = vmatprep.subr.bf16.mxu0 0
      %1380 = vmatpush1.bf16.msra.mxu0 %v1248
      %1381 = vmatprep.subr.bf16.mxu0 0
      %1382 = vmatpush1.bf16.msra.mxu0 %v1247
      %1383 = vmatprep.subr.bf16.mxu0 0
      %1384 = vmatpush1.bf16.msra.mxu0 %v1246
      %1385 = vmatprep.subr.bf16.mxu0 0
      %1386 = vmatpush1.bf16.msra.mxu0 %v1245
      %1387 = vmatprep.subr.bf16.mxu0 0
      %1388 = vmatpush1.bf16.msra.mxu0 %v1244
      %1389 = vmatprep.subr.bf16.mxu0 0
      %1390 = vmatpush2.bf16.msra.mxu0 0
      %1391 = vmatprep.subr.bf16.mxu0 0
      %1392 = vmatpush2.bf16.msra.mxu0 0
      %1393 = vmatprep.subr.bf16.mxu0 0
      %1394 = vmatpush2.bf16.msra.mxu0 0
      %1395 = vmatprep.subr.bf16.mxu0 0
      %1396 = vmatpush2.bf16.msra.mxu0 0
      %1397 = vmatprep.subr.bf16.mxu0 0
      %1398 = vmatpush2.bf16.msra.mxu0 0
      %1399 = vmatprep.subr.bf16.mxu0 0
      %1400 = vmatpush2.bf16.msra.mxu0 0
      %1401 = vmatprep.subr.bf16.mxu0 0
      %1402 = vmatpush2.bf16.msra.mxu0 0
      %1403 = vmatprep.subr.bf16.mxu0 0
      %1404 = vmatpush2.bf16.msra.mxu0 0
      %1405 = vmatprep.mubr.bf16.mxu0 0
      %1406 = vmatmul.mubr.bf16.gmra.mxu0 %v656
      %v1407 = vpop.f32.mrf.mxu0
      %v1408 = vadd.f32 %v1311, %v1407
      %v1409 = vpop.f32.mrf.mxu0
      %v1410 = vpop.f32.mrf.mxu0
      %v1411 = vadd.f32 %v1314, %v1410
      %v1412 = vpop.f32.mrf.mxu0
      %1413 = vmatprep.mubr.bf16.mxu0 0
      %1414 = vmatmul.mubr.bf16.gmra.mxu0 %v657
      %v1415 = vpop.f32.mrf.mxu0
      %v1416 = vadd.f32 %v1319, %v1415
      %v1417 = vpop.f32.mrf.mxu0
      %v1418 = vpop.f32.mrf.mxu0
      %v1419 = vadd.f32 %v1322, %v1418
      %v1420 = vpop.f32.mrf.mxu0
      %1421 = vmatprep.mubr.bf16.mxu0 0
      %1422 = vmatmul.mubr.bf16.gmra.mxu0 %v658
      %v1423 = vpop.f32.mrf.mxu0
      %v1424 = vadd.f32 %v1327, %v1423
      %v1425 = vpop.f32.mrf.mxu0
      %v1426 = vpop.f32.mrf.mxu0
      %v1427 = vadd.f32 %v1330, %v1426
      %v1428 = vpop.f32.mrf.mxu0
      %1429 = vmatprep.mubr.bf16.mxu0 0
      %1430 = vmatmul.mubr.bf16.gmra.mxu0 %v659
      %v1431 = vpop.f32.mrf.mxu0
      %v1432 = vadd.f32 %v1335, %v1431
      %v1433 = vpop.f32.mrf.mxu0
      %v1434 = vpop.f32.mrf.mxu0
      %v1435 = vadd.f32 %v1338, %v1434
      %v1436 = vpop.f32.mrf.mxu0
      %1437 = vmatprep.mubr.bf16.mxu0 0
      %1438 = vmatmul.mubr.bf16.gmra.mxu0 %v660
      %v1439 = vpop.f32.mrf.mxu0
      %v1440 = vadd.f32 %v1343, %v1439
      %v1441 = vpop.f32.mrf.mxu0
      %v1442 = vpop.f32.mrf.mxu0
      %v1443 = vadd.f32 %v1346, %v1442
      %v1444 = vpop.f32.mrf.mxu0
      %1445 = vmatprep.mubr.bf16.mxu0 0
      %1446 = vmatmul.mubr.bf16.gmra.mxu0 %v661
      %v1447 = vpop.f32.mrf.mxu0
      %v1448 = vadd.f32 %v1351, %v1447
      %v1449 = vpop.f32.mrf.mxu0
      %v1450 = vpop.f32.mrf.mxu0
      %v1451 = vadd.f32 %v1354, %v1450
      %v1452 = vpop.f32.mrf.mxu0
      %1453 = vmatprep.mubr.bf16.mxu0 0
      %1454 = vmatmul.mubr.bf16.gmra.mxu0 %v662
      %v1455 = vpop.f32.mrf.mxu0
      %v1456 = vadd.f32 %v1359, %v1455
      %v1457 = vpop.f32.mrf.mxu0
      %v1458 = vpop.f32.mrf.mxu0
      %v1459 = vadd.f32 %v1362, %v1458
      %v1460 = vpop.f32.mrf.mxu0
      %1461 = vmatprep.mubr.bf16.mxu0 0
      %1462 = vmatmul.mubr.bf16.gmra.mxu0 %v663
      %v1463 = vpop.f32.mrf.mxu0
      %v1464 = vadd.f32 %v1367, %v1463
      %v1465 = vpop.f32.mrf.mxu0
      %v1466 = vpop.f32.mrf.mxu0
      %v1467 = vadd.f32 %v1370, %v1466
      %v1468 = vpop.f32.mrf.mxu0
      %1469 = vdwg.mxu0
      %v1470 = vrot.slane %v525, 7
      %v1471 = vrot.slane %v526, 7
      %v1472 = vsel %vm550, %v1470, %v1471
      %v1473 = vsel %vm550, %v718, %v1470
      %v1474 = vsel %vm550, %v1471, %v538
      %v1475 = vrot.slane %v525, 1
      %v1476 = vrot.slane %v526, 1
      %v1477 = vsel %vm583, %v1475, %v1476
      %v1478 = vsel %vm583, %v723, %v1475
      %v1479 = vsel %vm583, %v1476, %v571
      %v1480 = vsel %vm602, %v594, %v1474
      %v1481 = vsel %vm603, %v1478, %v719
      %v1482 = vsel %vm602, %v1477, %v1473
      %v1483 = vsel %vm603, %v1479, %v1472
      %v1484 = vsel %vm622, %v1474, %v594
      %v1485 = vsel %vm623, %v719, %v1478
      %v1486 = vsel %vm622, %v1473, %v1477
      %v1487 = vsel %vm623, %v1472, %v1479
      %v1488 = vpack.c.bf16 %v609, %v1480
      %v1489 = vpack.c.bf16 %v1481, %v729
      %v1490 = vpack.c.bf16 %v1483, %v1482
      %v1491 = vpack.c.bf16 %v526, %v525
      %v1492 = vpack.c.bf16 %v629, %v1484
      %v1493 = vpack.c.bf16 %v1485, %v733
      %v1494 = vpack.c.bf16 %v1487, %v1486
      %s1495 = sadd.s32 %s664, 96
      %s1496 = sadd.s32 %s1495, %s665
      %s1497 = smul.addr %s1496, 4
      %s1498 = scalar_lea.vmem %s3, %s1497
      %v1499 = vld [vmem:[%s1498] sm:$0xf]
      %v1500 = vld [vmem:[%s1498 + $0x4] sm:$0xf]
      %v1501 = vld [vmem:[%s1498 + $0x8] sm:$0xf]
      %v1502 = vld [vmem:[%s1498 + $0xc] sm:$0xf]
      %v1503 = vld [vmem:[%s1498 + $0x10] sm:$0xf]
      %v1504 = vld [vmem:[%s1498 + $0x14] sm:$0xf]
      %v1505 = vld [vmem:[%s1498 + $0x18] sm:$0xf]
      %v1506 = vld [vmem:[%s1498 + $0x1c] sm:$0xf]
      %v1507 = vld [vmem:[%s1498 + $0x20] sm:$0xf]
      %v1508 = vld [vmem:[%s1498 + $0x24] sm:$0xf]
      %v1509 = vld [vmem:[%s1498 + $0x28] sm:$0xf]
      %v1510 = vld [vmem:[%s1498 + $0x2c] sm:$0xf]
      %v1511 = vld [vmem:[%s1498 + $0x30] sm:$0xf]
      %v1512 = vld [vmem:[%s1498 + $0x34] sm:$0xf]
      %v1513 = vld [vmem:[%s1498 + $0x38] sm:$0xf]
      %v1514 = vld [vmem:[%s1498 + $0x3c] sm:$0xf]
      %v1515 = vld [vmem:[%s1498 + $0x40] sm:$0xf]
      %v1516 = vld [vmem:[%s1498 + $0x44] sm:$0xf]
      %v1517 = vld [vmem:[%s1498 + $0x48] sm:$0xf]
      %v1518 = vld [vmem:[%s1498 + $0x4c] sm:$0xf]
      %v1519 = vld [vmem:[%s1498 + $0x50] sm:$0xf]
      %v1520 = vld [vmem:[%s1498 + $0x54] sm:$0xf]
      %v1521 = vld [vmem:[%s1498 + $0x58] sm:$0xf]
      %v1522 = vld [vmem:[%s1498 + $0x5c] sm:$0xf]
      %v1523 = vld [vmem:[%s1498 + $0x60] sm:$0xf]
      %v1524 = vld [vmem:[%s1498 + $0x64] sm:$0xf]
      %v1525 = vld [vmem:[%s1498 + $0x68] sm:$0xf]
      %v1526 = vld [vmem:[%s1498 + $0x6c] sm:$0xf]
      %v1527 = vld [vmem:[%s1498 + $0x70] sm:$0xf]
      %v1528 = vld [vmem:[%s1498 + $0x74] sm:$0xf]
      %v1529 = vld [vmem:[%s1498 + $0x78] sm:$0xf]
      %v1530 = vld [vmem:[%s1498 + $0x7c] sm:$0xf]
      %v1531 = vld [vmem:[%s1498 + $0x80] sm:$0xf]
      %v1532 = vld [vmem:[%s1498 + $0x84] sm:$0xf]
      %v1533 = vld [vmem:[%s1498 + $0x88] sm:$0xf]
      %v1534 = vld [vmem:[%s1498 + $0x8c] sm:$0xf]
      %v1535 = vld [vmem:[%s1498 + $0x90] sm:$0xf]
      %v1536 = vld [vmem:[%s1498 + $0x94] sm:$0xf]
      %v1537 = vld [vmem:[%s1498 + $0x98] sm:$0xf]
      %v1538 = vld [vmem:[%s1498 + $0x9c] sm:$0xf]
      %v1539 = vld [vmem:[%s1498 + $0xa0] sm:$0xf]
      %v1540 = vld [vmem:[%s1498 + $0xa4] sm:$0xf]
      %v1541 = vld [vmem:[%s1498 + $0xa8] sm:$0xf]
      %v1542 = vld [vmem:[%s1498 + $0xac] sm:$0xf]
      %v1543 = vld [vmem:[%s1498 + $0xb0] sm:$0xf]
      %v1544 = vld [vmem:[%s1498 + $0xb4] sm:$0xf]
      %v1545 = vld [vmem:[%s1498 + $0xb8] sm:$0xf]
      %v1546 = vld [vmem:[%s1498 + $0xbc] sm:$0xf]
      %v1595 = vunpack.c.l.b16 %v1499
      %v1596 = vunpack.c.l.b16 %v1500
      %v1597 = vunpack.c.l.b16 %v1501
      %v1598 = vunpack.c.l.b16 %v1502
      %v1599 = vunpack.c.l.b16 %v1503
      %v1600 = vunpack.c.l.b16 %v1504
      %v1601 = vunpack.c.l.b16 %v1505
      %v1602 = vunpack.c.l.b16 %v1506
      %v1603 = vunpack.c.l.b16 %v1507
      %v1604 = vunpack.c.l.b16 %v1508
      %v1605 = vunpack.c.l.b16 %v1509
      %v1606 = vunpack.c.l.b16 %v1510
      %v1607 = vunpack.c.l.b16 %v1511
      %v1608 = vunpack.c.l.b16 %v1512
      %v1609 = vunpack.c.l.b16 %v1513
      %v1610 = vunpack.c.l.b16 %v1514
      %v1611 = vunpack.c.l.b16 %v1515
      %v1612 = vunpack.c.l.b16 %v1516
      %v1613 = vunpack.c.l.b16 %v1517
      %v1614 = vunpack.c.l.b16 %v1518
      %v1615 = vunpack.c.l.b16 %v1519
      %v1616 = vunpack.c.l.b16 %v1520
      %v1617 = vunpack.c.l.b16 %v1521
      %v1618 = vunpack.c.l.b16 %v1522
      %v1619 = vunpack.c.l.b16 %v1523
      %v1620 = vunpack.c.l.b16 %v1524
      %v1621 = vunpack.c.l.b16 %v1525
      %v1622 = vunpack.c.l.b16 %v1526
      %v1623 = vunpack.c.l.b16 %v1527
      %v1624 = vunpack.c.l.b16 %v1528
      %v1625 = vunpack.c.l.b16 %v1529
      %v1626 = vunpack.c.l.b16 %v1530
      %v1627 = vunpack.c.l.b16 %v1531
      %v1628 = vunpack.c.l.b16 %v1532
      %v1629 = vunpack.c.l.b16 %v1533
      %v1630 = vunpack.c.l.b16 %v1534
      %v1631 = vunpack.c.l.b16 %v1535
      %v1632 = vunpack.c.l.b16 %v1536
      %v1633 = vunpack.c.l.b16 %v1537
      %v1634 = vunpack.c.l.b16 %v1538
      %v1635 = vunpack.c.l.b16 %v1539
      %v1636 = vunpack.c.l.b16 %v1540
      %v1637 = vunpack.c.l.b16 %v1541
      %v1638 = vunpack.c.l.b16 %v1542
      %v1639 = vunpack.c.l.b16 %v1543
      %v1640 = vunpack.c.l.b16 %v1544
      %v1641 = vunpack.c.l.b16 %v1545
      %v1642 = vunpack.c.l.b16 %v1546
      %v1643 = vpack.c.b16 %v1596, %v1595
      %v1644 = vpack.c.b16 %v1598, %v1597
      %v1645 = vpack.c.b16 %v1600, %v1599
      %v1646 = vpack.c.b16 %v1602, %v1601
      %v1647 = vpack.c.b16 %v1604, %v1603
      %v1648 = vpack.c.b16 %v1606, %v1605
      %v1649 = vpack.c.b16 %v1608, %v1607
      %v1650 = vpack.c.b16 %v1610, %v1609
      %v1651 = vpack.c.b16 %v1612, %v1611
      %v1652 = vpack.c.b16 %v1614, %v1613
      %v1653 = vpack.c.b16 %v1616, %v1615
      %v1654 = vpack.c.b16 %v1618, %v1617
      %v1655 = vpack.c.b16 %v1620, %v1619
      %v1656 = vpack.c.b16 %v1622, %v1621
      %v1657 = vpack.c.b16 %v1624, %v1623
      %v1658 = vpack.c.b16 %v1626, %v1625
      %v1659 = vpack.c.b16 %v1628, %v1627
      %v1660 = vpack.c.b16 %v1630, %v1629
      %v1661 = vpack.c.b16 %v1632, %v1631
      %v1662 = vpack.c.b16 %v1634, %v1633
      %v1663 = vpack.c.b16 %v1636, %v1635
      %v1664 = vpack.c.b16 %v1638, %v1637
      %v1665 = vpack.c.b16 %v1640, %v1639
      %v1666 = vpack.c.b16 %v1642, %v1641
      %1691 = vmatprep.subr.bf16.mxu0 0
      %1692 = vmatpush1.bf16.msra.mxu0 %v1650
      %1693 = vmatprep.subr.bf16.mxu0 0
      %1694 = vmatpush1.bf16.msra.mxu0 %v1649
      %1695 = vmatprep.subr.bf16.mxu0 0
      %1696 = vmatpush1.bf16.msra.mxu0 %v1648
      %1697 = vmatprep.subr.bf16.mxu0 0
      %1698 = vmatpush1.bf16.msra.mxu0 %v1647
      %1699 = vmatprep.subr.bf16.mxu0 0
      %1700 = vmatpush1.bf16.msra.mxu0 %v1646
      %1701 = vmatprep.subr.bf16.mxu0 0
      %1702 = vmatpush1.bf16.msra.mxu0 %v1645
      %1703 = vmatprep.subr.bf16.mxu0 0
      %1704 = vmatpush1.bf16.msra.mxu0 %v1644
      %1705 = vmatprep.subr.bf16.mxu0 0
      %1706 = vmatpush1.bf16.msra.mxu0 %v1643
      %1707 = vmatprep.subr.bf16.mxu0 0
      %1708 = vmatpush2.bf16.msra.mxu0 %v1658
      %1709 = vmatprep.subr.bf16.mxu0 0
      %1710 = vmatpush2.bf16.msra.mxu0 %v1657
      %1711 = vmatprep.subr.bf16.mxu0 0
      %1712 = vmatpush2.bf16.msra.mxu0 %v1656
      %1713 = vmatprep.subr.bf16.mxu0 0
      %1714 = vmatpush2.bf16.msra.mxu0 %v1655
      %1715 = vmatprep.subr.bf16.mxu0 0
      %1716 = vmatpush2.bf16.msra.mxu0 %v1654
      %1717 = vmatprep.subr.bf16.mxu0 0
      %1718 = vmatpush2.bf16.msra.mxu0 %v1653
      %1719 = vmatprep.subr.bf16.mxu0 0
      %1720 = vmatpush2.bf16.msra.mxu0 %v1652
      %1721 = vmatprep.subr.bf16.mxu0 0
      %1722 = vmatpush2.bf16.msra.mxu0 %v1651
      %1723 = vmatprep.mubr.bf16.mxu0 %v650
      %1724 = vmatmul.mubr.bf16.gmra.mxu0 %v1488
      %v1725 = vpop.f32.mrf.mxu0
      %v1726 = vadd.f32 0.0, %v1725
      %v1727 = vpop.f32.mrf.mxu0
      %v1728 = vpop.f32.mrf.mxu0
      %v1729 = vadd.f32 0.0, %v1728
      %v1730 = vpop.f32.mrf.mxu0
      %1731 = vmatprep.mubr.bf16.mxu0 %v651
      %1732 = vmatmul.mubr.bf16.gmra.mxu0 %v643
      %v1733 = vpop.f32.mrf.mxu0
      %v1734 = vadd.f32 0.0, %v1733
      %v1735 = vpop.f32.mrf.mxu0
      %v1736 = vpop.f32.mrf.mxu0
      %v1737 = vadd.f32 0.0, %v1736
      %v1738 = vpop.f32.mrf.mxu0
      %1739 = vmatprep.mubr.bf16.mxu0 %v652
      %1740 = vmatmul.mubr.bf16.gmra.mxu0 %v644
      %v1741 = vpop.f32.mrf.mxu0
      %v1742 = vadd.f32 0.0, %v1741
      %v1743 = vpop.f32.mrf.mxu0
      %v1744 = vpop.f32.mrf.mxu0
      %v1745 = vadd.f32 0.0, %v1744
      %v1746 = vpop.f32.mrf.mxu0
      %1747 = vmatprep.mubr.bf16.mxu0 %v653
      %1748 = vmatmul.mubr.bf16.gmra.mxu0 %v645
      %v1749 = vpop.f32.mrf.mxu0
      %v1750 = vadd.f32 0.0, %v1749
      %v1751 = vpop.f32.mrf.mxu0
      %v1752 = vpop.f32.mrf.mxu0
      %v1753 = vadd.f32 0.0, %v1752
      %v1754 = vpop.f32.mrf.mxu0
      %1755 = vmatprep.mubr.bf16.mxu0 %v654
      %1756 = vmatmul.mubr.bf16.gmra.mxu0 %v646
      %v1757 = vpop.f32.mrf.mxu0
      %v1758 = vadd.f32 0.0, %v1757
      %v1759 = vpop.f32.mrf.mxu0
      %v1760 = vpop.f32.mrf.mxu0
      %v1761 = vadd.f32 0.0, %v1760
      %v1762 = vpop.f32.mrf.mxu0
      %1763 = vmatprep.mubr.bf16.mxu0 %v655
      %1764 = vmatmul.mubr.bf16.gmra.mxu0 %v736
      %v1765 = vpop.f32.mrf.mxu0
      %v1766 = vadd.f32 0.0, %v1765
      %v1767 = vpop.f32.mrf.mxu0
      %v1768 = vpop.f32.mrf.mxu0
      %v1769 = vadd.f32 0.0, %v1768
      %v1770 = vpop.f32.mrf.mxu0
      %1771 = vmatprep.mubr.bf16.mxu0 %v738
      %1772 = vmatmul.mubr.bf16.gmra.mxu0 %v1489
      %v1773 = vpop.f32.mrf.mxu0
      %v1774 = vadd.f32 0.0, %v1773
      %v1775 = vpop.f32.mrf.mxu0
      %v1776 = vpop.f32.mrf.mxu0
      %v1777 = vadd.f32 0.0, %v1776
      %v1778 = vpop.f32.mrf.mxu0
      %1779 = vmatprep.mubr.bf16.mxu0 %v1491
      %1780 = vmatmul.mubr.bf16.gmra.mxu0 %v1490
      %v1781 = vpop.f32.mrf.mxu0
      %v1782 = vadd.f32 0.0, %v1781
      %v1783 = vpop.f32.mrf.mxu0
      %v1784 = vpop.f32.mrf.mxu0
      %v1785 = vadd.f32 0.0, %v1784
      %v1786 = vpop.f32.mrf.mxu0
      %1787 = vdwg.mxu0
      %1788 = vmatprep.subr.bf16.mxu0 0
      %1789 = vmatpush1.bf16.msra.mxu0 %v1666
      %1790 = vmatprep.subr.bf16.mxu0 0
      %1791 = vmatpush1.bf16.msra.mxu0 %v1665
      %1792 = vmatprep.subr.bf16.mxu0 0
      %1793 = vmatpush1.bf16.msra.mxu0 %v1664
      %1794 = vmatprep.subr.bf16.mxu0 0
      %1795 = vmatpush1.bf16.msra.mxu0 %v1663
      %1796 = vmatprep.subr.bf16.mxu0 0
      %1797 = vmatpush1.bf16.msra.mxu0 %v1662
      %1798 = vmatprep.subr.bf16.mxu0 0
      %1799 = vmatpush1.bf16.msra.mxu0 %v1661
      %1800 = vmatprep.subr.bf16.mxu0 0
      %1801 = vmatpush1.bf16.msra.mxu0 %v1660
      %1802 = vmatprep.subr.bf16.mxu0 0
      %1803 = vmatpush1.bf16.msra.mxu0 %v1659
      %1804 = vmatprep.subr.bf16.mxu0 0
      %1805 = vmatpush2.bf16.msra.mxu0 0
      %1806 = vmatprep.subr.bf16.mxu0 0
      %1807 = vmatpush2.bf16.msra.mxu0 0
      %1808 = vmatprep.subr.bf16.mxu0 0
      %1809 = vmatpush2.bf16.msra.mxu0 0
      %1810 = vmatprep.subr.bf16.mxu0 0
      %1811 = vmatpush2.bf16.msra.mxu0 0
      %1812 = vmatprep.subr.bf16.mxu0 0
      %1813 = vmatpush2.bf16.msra.mxu0 0
      %1814 = vmatprep.subr.bf16.mxu0 0
      %1815 = vmatpush2.bf16.msra.mxu0 0
      %1816 = vmatprep.subr.bf16.mxu0 0
      %1817 = vmatpush2.bf16.msra.mxu0 0
      %1818 = vmatprep.subr.bf16.mxu0 0
      %1819 = vmatpush2.bf16.msra.mxu0 0
      %1820 = vmatprep.mubr.bf16.mxu0 0
      %1821 = vmatmul.mubr.bf16.gmra.mxu0 %v1492
      %v1822 = vpop.f32.mrf.mxu0
      %v1823 = vadd.f32 %v1726, %v1822
      %v1824 = vpop.f32.mrf.mxu0
      %v1825 = vpop.f32.mrf.mxu0
      %v1826 = vadd.f32 %v1729, %v1825
      %v1827 = vpop.f32.mrf.mxu0
      %1828 = vmatprep.mubr.bf16.mxu0 0
      %1829 = vmatmul.mubr.bf16.gmra.mxu0 %v659
      %v1830 = vpop.f32.mrf.mxu0
      %v1831 = vadd.f32 %v1734, %v1830
      %v1832 = vpop.f32.mrf.mxu0
      %v1833 = vpop.f32.mrf.mxu0
      %v1834 = vadd.f32 %v1737, %v1833
      %v1835 = vpop.f32.mrf.mxu0
      %1836 = vmatprep.mubr.bf16.mxu0 0
      %1837 = vmatmul.mubr.bf16.gmra.mxu0 %v660
      %v1838 = vpop.f32.mrf.mxu0
      %v1839 = vadd.f32 %v1742, %v1838
      %v1840 = vpop.f32.mrf.mxu0
      %v1841 = vpop.f32.mrf.mxu0
      %v1842 = vadd.f32 %v1745, %v1841
      %v1843 = vpop.f32.mrf.mxu0
      %1844 = vmatprep.mubr.bf16.mxu0 0
      %1845 = vmatmul.mubr.bf16.gmra.mxu0 %v661
      %v1846 = vpop.f32.mrf.mxu0
      %v1847 = vadd.f32 %v1750, %v1846
      %v1848 = vpop.f32.mrf.mxu0
      %v1849 = vpop.f32.mrf.mxu0
      %v1850 = vadd.f32 %v1753, %v1849
      %v1851 = vpop.f32.mrf.mxu0
      %1852 = vmatprep.mubr.bf16.mxu0 0
      %1853 = vmatmul.mubr.bf16.gmra.mxu0 %v662
      %v1854 = vpop.f32.mrf.mxu0
      %v1855 = vadd.f32 %v1758, %v1854
      %v1856 = vpop.f32.mrf.mxu0
      %v1857 = vpop.f32.mrf.mxu0
      %v1858 = vadd.f32 %v1761, %v1857
      %v1859 = vpop.f32.mrf.mxu0
      %1860 = vmatprep.mubr.bf16.mxu0 0
      %1861 = vmatmul.mubr.bf16.gmra.mxu0 %v740
      %v1862 = vpop.f32.mrf.mxu0
      %v1863 = vadd.f32 %v1766, %v1862
      %v1864 = vpop.f32.mrf.mxu0
      %v1865 = vpop.f32.mrf.mxu0
      %v1866 = vadd.f32 %v1769, %v1865
      %v1867 = vpop.f32.mrf.mxu0
      %1868 = vmatprep.mubr.bf16.mxu0 0
      %1869 = vmatmul.mubr.bf16.gmra.mxu0 %v1493
      %v1870 = vpop.f32.mrf.mxu0
      %v1871 = vadd.f32 %v1774, %v1870
      %v1872 = vpop.f32.mrf.mxu0
      %v1873 = vpop.f32.mrf.mxu0
      %v1874 = vadd.f32 %v1777, %v1873
      %v1875 = vpop.f32.mrf.mxu0
      %1876 = vmatprep.mubr.bf16.mxu0 0
      %1877 = vmatmul.mubr.bf16.gmra.mxu0 %v1494
      %v1878 = vpop.f32.mrf.mxu0
      %v1879 = vadd.f32 %v1782, %v1878
      %v1880 = vpop.f32.mrf.mxu0
      %v1881 = vpop.f32.mrf.mxu0
      %v1882 = vadd.f32 %v1785, %v1881
      %v1883 = vpop.f32.mrf.mxu0
      %1884 = vdwg.mxu0
      %v1885 = vadd.f32 %v1408, %v1823
      %v1886 = vadd.f32 %v1411, %v1826
      %v1887 = vadd.f32 %v1416, %v1831
      %v1888 = vadd.f32 %v1419, %v1834
      %v1889 = vadd.f32 %v1424, %v1839
      %v1890 = vadd.f32 %v1427, %v1842
      %v1891 = vadd.f32 %v1432, %v1847
      %v1892 = vadd.f32 %v1435, %v1850
      %v1893 = vadd.f32 %v1440, %v1855
      %v1894 = vadd.f32 %v1443, %v1858
      %v1895 = vadd.f32 %v1448, %v1863
      %v1896 = vadd.f32 %v1451, %v1866
      %v1897 = vadd.f32 %v1456, %v1871
      %v1898 = vadd.f32 %v1459, %v1874
      %v1899 = vadd.f32 %v1464, %v1879
      %v1900 = vadd.f32 %v1467, %v1882
      %v1901 = vld [vmem:[%s447] sm:$0x1]
      %v1903 = vlaneseq
      %v1904 = vshrl.u32 %v1903, 7
      %v1905 = vsub.s32 0, %v1904
      %v1906 = vrot.slane %v1901, %v1905
      %v1908 = vadd.f32 %v1906, %v1885
      %v1909 = vadd.f32 %v1906, %v1886
      %v1910 = vadd.f32 %v1906, %v1887
      %v1911 = vadd.f32 %v1906, %v1888
      %v1912 = vadd.f32 %v1906, %v1889
      %v1913 = vadd.f32 %v1906, %v1890
      %v1914 = vadd.f32 %v1906, %v1891
      %v1915 = vadd.f32 %v1906, %v1892
      %v1916 = vadd.f32 %v1906, %v1893
      %v1917 = vadd.f32 %v1906, %v1894
      %v1918 = vadd.f32 %v1906, %v1895
      %v1919 = vadd.f32 %v1906, %v1896
      %v1920 = vadd.f32 %v1906, %v1897
      %v1921 = vadd.f32 %v1906, %v1898
      %v1922 = vadd.f32 %v1906, %v1899
      %v1923 = vadd.f32 %v1906, %v1900
      %v1924 = vpack.c.bf16 %v1909, %v1908
      %v1925 = vpack.c.bf16 %v1911, %v1910
      %v1926 = vpack.c.bf16 %v1913, %v1912
      %v1927 = vpack.c.bf16 %v1915, %v1914
      %v1928 = vpack.c.bf16 %v1917, %v1916
      %v1929 = vpack.c.bf16 %v1919, %v1918
      %v1930 = vpack.c.bf16 %v1921, %v1920
      %v1931 = vpack.c.bf16 %v1923, %v1922
      %v1940 = vunpack.c.l.b16 %v1924
      %v1941 = vunpack.c.h.b16 %v1924
      %v1942 = vunpack.c.l.b16 %v1925
      %v1943 = vunpack.c.h.b16 %v1925
      %v1944 = vunpack.c.l.b16 %v1926
      %v1945 = vunpack.c.h.b16 %v1926
      %v1946 = vunpack.c.l.b16 %v1927
      %v1947 = vunpack.c.h.b16 %v1927
      %v1948 = vunpack.c.l.b16 %v1928
      %v1949 = vunpack.c.h.b16 %v1928
      %v1950 = vunpack.c.l.b16 %v1929
      %v1951 = vunpack.c.h.b16 %v1929
      %v1952 = vunpack.c.l.b16 %v1930
      %v1953 = vunpack.c.h.b16 %v1930
      %v1954 = vunpack.c.l.b16 %v1931
      %v1955 = vunpack.c.h.b16 %v1931
      %v1956 = vpack.c.b16 %v1940, %v1940
      %v1957 = vpack.c.b16 %v1941, %v1941
      %v1958 = vpack.c.b16 %v1942, %v1942
      %v1959 = vpack.c.b16 %v1943, %v1943
      %v1960 = vpack.c.b16 %v1944, %v1944
      %v1961 = vpack.c.b16 %v1945, %v1945
      %v1962 = vpack.c.b16 %v1946, %v1946
      %v1963 = vpack.c.b16 %v1947, %v1947
      %v1964 = vpack.c.b16 %v1948, %v1948
      %v1965 = vpack.c.b16 %v1949, %v1949
      %v1966 = vpack.c.b16 %v1950, %v1950
      %v1967 = vpack.c.b16 %v1951, %v1951
      %v1968 = vpack.c.b16 %v1952, %v1952
      %v1969 = vpack.c.b16 %v1953, %v1953
      %v1970 = vpack.c.b16 %v1954, %v1954
      %v1971 = vpack.c.b16 %v1955, %v1955
      %1988 = vst [vmem:[%s460] sm:$0xf] %v1956
      %1989 = vst [vmem:[%s460 + $0x4] sm:$0xf] %v1957
      %1990 = vst [vmem:[%s460 + $0x8] sm:$0xf] %v1958
      %1991 = vst [vmem:[%s460 + $0xc] sm:$0xf] %v1959
      %1992 = vst [vmem:[%s460 + $0x10] sm:$0xf] %v1960
      %1993 = vst [vmem:[%s460 + $0x14] sm:$0xf] %v1961
      %1994 = vst [vmem:[%s460 + $0x18] sm:$0xf] %v1962
      %1995 = vst [vmem:[%s460 + $0x1c] sm:$0xf] %v1963
      %1996 = vst [vmem:[%s460 + $0x20] sm:$0xf] %v1964
      %1997 = vst [vmem:[%s460 + $0x24] sm:$0xf] %v1965
      %1998 = vst [vmem:[%s460 + $0x28] sm:$0xf] %v1966
      %1999 = vst [vmem:[%s460 + $0x2c] sm:$0xf] %v1967
      %2000 = vst [vmem:[%s460 + $0x30] sm:$0xf] %v1968
      %2001 = vst [vmem:[%s460 + $0x34] sm:$0xf] %v1969
      %2002 = vst [vmem:[%s460 + $0x38] sm:$0xf] %v1970
      %2003 = vst [vmem:[%s460 + $0x3c] sm:$0xf] %v1971
      %s2004 = smul.u32 8, %s23
      %p2005 = scmp.lt.s32.totalorder %s22, 1
      %s2006 = scalar_select %p2005, %s22, 1
      %p2007 = scmp.lt.s32.totalorder %s2004, 15
      %s2008 = scalar_select %p2007, %s2004, 15
      %p2009 = scmp.lt.s32.totalorder %s24, 0
      %s2010 = scalar_select %p2009, %s24, 0
      %s2011 = smul.addr %s2008, 2
      %s2012 = sadd.s32 %s2010, %s2011
      %s2013 = smul.addr %s2006, 32
      %s2014 = sadd.s32 %s2012, %s2013
      %s2015 = smul.addr %s2014, 4
      %s2016 = scalar_lea.vmem %s5, %s2015
      // Predicated region
      $region41: #{spade_resblock_forward.18} parent=39 // pred_check
        %p2017 = pneg %p217
      $region42: #{spade_resblock_forward.18} parent=39 // pred_check_branch
        %2019 = sbr.rel (%p2017) target = $region44
      $region43: #{spade_resblock_forward.18} parent=39 // pred_region
        %s2020 = smul.u32 8, %s23
      $region44: #{spade_resblock_forward.18} parent=39 // pred_fallthru
        _
    $region40: #{spade_resblock_forward.18} parent=5 // pred_fallthru
      _
    %p2021 = scmp.le.s32.totalorder 2, %s11
    // Predicated region
    $region45: #{spade_resblock_forward.18} parent=5 // pred_check
      %p2022 = pneg %p2021
    $region46: #{spade_resblock_forward.18} parent=5 // pred_check_branch
      %2024 = sbr.rel (%p2022) target = $region48
    $region47: #{spade_resblock_forward.18} parent=5 // pred_region
      %s2025 = ssub.s32 %s11, 2
      // Predicated region
      $region49: #{spade_resblock_forward.18} parent=47 // pred_check
        %p2026 = pneg %p223
      $region50: #{spade_resblock_forward.18} parent=47 // pred_check_branch
        %2028 = sbr.rel (%p2026) target = $region52
      $region51: #{spade_resblock_forward.18} parent=47 // pred_region
        %s2029 = smul.u32 8, %s27
        %p2030 = scmp.lt.s32.totalorder %s26, 1
        %s2031 = scalar_select %p2030, %s26, 1
        %p2032 = scmp.lt.s32.totalorder %s2029, 15
        %s2033 = scalar_select %p2032, %s2029, 15
        %p2034 = scmp.lt.s32.totalorder %s28, 0
        %s2035 = scalar_select %p2034, %s28, 0
        %s2036 = smul.addr %s2033, 2
        %s2037 = sadd.s32 %s2035, %s2036
        %s2038 = smul.addr %s2031, 32
        %s2039 = sadd.s32 %s2037, %s2038
        %s2040 = smul.addr %s2039, 4
        %s2041 = scalar_lea.vmem %s5, %s2040
      $region52: #{spade_resblock_forward.18} parent=47 // pred_fallthru
        _
    $region48: #{spade_resblock_forward.18} parent=5 // pred_fallthru
      _
  $region6: #{spade_resblock_forward.18} parent=0 // loop_footer
    %s15 = sadd.s32 1, %s11
  $region7: #{spade_resblock_forward.18} parent=0 // loop_footer_branch
    %10 = sbr.rel target = $region3
  $region8: #{spade_resblock_forward.18} parent=0 // loop_exit
    _

// kernel: spade_resblock_forward.26
$region0: #{spade_resblock_forward.26}
  #allocation0 [shape = 'u32[]', space=smem, size = 0x4, offset = 0x4, fixed_abs, tag = 'smem constant byte address 0x4 - core index']
  #allocation1 [shape = 'u32[144,128]{1,0:T(1,128)}', space=vmem, size = 0x12000, scoped, tag = 'internal scratch']
  %s0 = inlined_call_operand.vmem [shape: bf16[2,16,16,128], index: 0, kind: input, shape index: {}, may-alias: {0,1,2}]
  %s1 = inlined_call_operand.vmem [shape: bf16[2,16,16,128], index: 1, kind: input, shape index: {}, may-alias: {0,1,2}]
  %s2 = inlined_call_operand.vmem [shape: bf16[2,16,16,128], index: 2, kind: input, shape index: {}, may-alias: {0,1,2}]
  %s3 = inlined_call_operand.vmem [shape: bf16[1,3,1,384,128], index: 3, kind: input, shape index: {}]
  %s4 = inlined_call_operand.vmem [shape: f32[1,128], index: 4, kind: input, shape index: {}]
  %s5 = inlined_call_operand.vmem [shape: bf16[2,16,16,128], index: 5, kind: input, shape index: {}]
  %s6 = inlined_call_operand.vmem [shape: bf16[128,128], index: 6, kind: input, shape index: {}]
  %s7 = inlined_call_operand.vmem [shape: f32[2,16,16,128], index: 7, kind: output, shape index: {}]
  %s8 = sld [smem:[#allocation0]]
  $region61: #{spade_resblock_forward.26} parent=0
    _
  %s10 = ssub.s32 1, %s8
  %s11 = scalar_select 0, %s10, %s8
  loop: start=0, step=1, limit=6
  $region2: #{spade_resblock_forward.26} parent=0 // loop_pre_header
    _
  $region3: #{spade_resblock_forward.26} parent=0 // loop_header
    %s13 = sphi 0, %s17
    %p14 = scmp.ge.s32.totalorder %s13, 6
    %s20 = sphi 0, %s46
    %s21 = sphi 0, %s42
    %s22 = sphi 0, %s38
    %s23 = sphi 0, %s34
    %s24 = sphi 0, %s20
    %s25 = sphi 0, %s21
    %s26 = sphi 0, %s22
    %s27 = sphi 0, %s23
    %s28 = sphi 0, %s24
    %s29 = sphi 0, %s25
    %s30 = sphi 0, %s26
    %s31 = sphi 0, %s27
    %s53 = sphi 0, %s55
    %s56 = sphi 0, %s53
    %s57 = sphi 0, %s56
    %s73 = sphi 0, %s57
    %s91 = sphi 0, %s93
    %s94 = sphi 0, %s91
    %s95 = sphi 0, %s94
    %s111 = sphi 0, %s95
    %s129 = sphi 0, %s131
    %s132 = sphi 0, %s129
    %s133 = sphi 0, %s132
    %s149 = sphi 0, %s133
    %s153 = sphi 0, %s153
    %s155 = sphi 0, %s153
    %s156 = sphi 0, %s155
    %s170 = sphi 0, %s156
    %s176 = sphi 0, %s178
    %s179 = sphi 0, %s176
    %s180 = sphi 0, %s179
    %s196 = sphi 0, %s180
    %s204 = sphi 0, %s206
    %s207 = sphi 0, %s204
    %s208 = sphi 0, %s207
    %s224 = sphi 0, %s208
    %s230 = sphi 0, %s232
    %s233 = sphi 0, %s230
    %s234 = sphi 0, %s233
    %s250 = sphi 0, %s234
    %s260 = sphi 0, %s262
    %s263 = sphi 0, %s260
    %s264 = sphi 0, %s263
    %s280 = sphi 0, %s264
  $region4: #{spade_resblock_forward.26} parent=0 // loop_header_branch
    %16 = sbr.rel (%p14) target = $region8
  $region5: #{spade_resblock_forward.26} parent=0 // loop_body
    %s18 = ssub.s32 %s13, 1
    %s19 = ssub.s32 %s13, 2
    %s32 = sadd.s32 1, %s23
    %p33 = scmp.ge.s32.totalorder %s32, 1
    %s34 = scalar_select %p33, 0, %s32
    %s35 = sadd.s32 1, %s22
    %s36 = scalar_select %p33, %s35, %s22
    %p37 = scmp.ge.s32.totalorder %s36, 1
    %s38 = scalar_select %p37, 0, %s36
    %s39 = sadd.s32 1, %s21
    %s40 = scalar_select %p37, %s39, %s21
    %p41 = scmp.ge.s32.totalorder %s40, 2
    %s42 = scalar_select %p41, 0, %s40
    %s43 = sadd.s32 1, %s20
    %s44 = scalar_select %p41, %s43, %s20
    %p45 = scmp.ge.s32.totalorder %s44, 2
    %s46 = scalar_select %p45, 0, %s44
    %s47 = ssub.s32 %s20, %s46
    %s48 = ssub.s32 %s21, %s42
    %s49 = sor.u32 %s47, %s48
    %s50 = ssub.s32 %s23, %s34
    %s51 = sor.u32 %s49, %s50
    %p52 = scmp.eq.s32.totalorder %s51, 0
    %s54 = sadd.s32 %s53, 1
    %s55 = scalar_select %p52, %s53, %s54
    %p58 = pneg %p52
    %p59 = scmp.eq.s32.totalorder %s13, 3
    %p60 = por %p58, %p59
    %p61 = scmp.ne.s32.totalorder %s53, %s56
    %p62 = scmp.eq.s32.totalorder %s13, 0
    %p63 = por %p61, %p62
    %p64 = scmp.ne.s32.totalorder %s53, %s56
    %p65 = scmp.eq.s32.totalorder %s18, 3
    %p66 = por %p64, %p65
    %p67 = scmp.ne.s32.totalorder %s56, %s57
    %p68 = scmp.eq.s32.totalorder %s18, 0
    %p69 = por %p67, %p68
    %p70 = scmp.ne.s32.totalorder %s56, %s57
    %p71 = scmp.eq.s32.totalorder %s19, 3
    %p72 = por %p70, %p71
    %p74 = scmp.ne.s32.totalorder %s57, %s73
    %p75 = scmp.eq.s32.totalorder %s19, 0
    %p76 = por %p74, %p75
    %s77 = smul.u32 %s21, 8
    %s78 = ssub.s32 %s77, 1
    %p79 = scmp.gt.s32.totalorder %s78, 0
    %s80 = scalar_select %p79, %s78, 0
    %s81 = smul.u32 %s42, 8
    %s82 = ssub.s32 %s81, 1
    %p83 = scmp.gt.s32.totalorder %s82, 0
    %s84 = scalar_select %p83, %s82, 0
    %s85 = ssub.s32 %s20, %s46
    %s86 = ssub.s32 %s80, %s84
    %s87 = sor.u32 %s85, %s86
    %s88 = ssub.s32 %s23, %s34
    %s89 = sor.u32 %s87, %s88
    %p90 = scmp.eq.s32.totalorder %s89, 0
    %s92 = sadd.s32 %s91, 1
    %s93 = scalar_select %p90, %s91, %s92
    %p96 = pneg %p90
    %p97 = scmp.eq.s32.totalorder %s13, 3
    %p98 = por %p96, %p97
    %p99 = scmp.ne.s32.totalorder %s91, %s94
    %p100 = scmp.eq.s32.totalorder %s13, 0
    %p101 = por %p99, %p100
    %p102 = scmp.ne.s32.totalorder %s91, %s94
    %p103 = scmp.eq.s32.totalorder %s18, 3
    %p104 = por %p102, %p103
    %p105 = scmp.ne.s32.totalorder %s94, %s95
    %p106 = scmp.eq.s32.totalorder %s18, 0
    %p107 = por %p105, %p106
    %p108 = scmp.ne.s32.totalorder %s94, %s95
    %p109 = scmp.eq.s32.totalorder %s19, 3
    %p110 = por %p108, %p109
    %p112 = scmp.ne.s32.totalorder %s95, %s111
    %p113 = scmp.eq.s32.totalorder %s19, 0
    %p114 = por %p112, %p113
    %s115 = sadd.s32 %s21, 1
    %s116 = smul.u32 %s115, 8
    %p117 = scmp.lt.s32.totalorder %s116, 15
    %s118 = scalar_select %p117, %s116, 15
    %s119 = sadd.s32 %s42, 1
    %s120 = smul.u32 %s119, 8
    %p121 = scmp.lt.s32.totalorder %s120, 15
    %s122 = scalar_select %p121, %s120, 15
    %s123 = ssub.s32 %s20, %s46
    %s124 = ssub.s32 %s118, %s122
    %s125 = sor.u32 %s123, %s124
    %s126 = ssub.s32 %s23, %s34
    %s127 = sor.u32 %s125, %s126
    %p128 = scmp.eq.s32.totalorder %s127, 0
    %s130 = sadd.s32 %s129, 1
    %s131 = scalar_select %p128, %s129, %s130
    %p134 = pneg %p128
    %p135 = scmp.eq.s32.totalorder %s13, 3
    %p136 = por %p134, %p135
    %p137 = scmp.ne.s32.totalorder %s129, %s132
    %p138 = scmp.eq.s32.totalorder %s13, 0
    %p139 = por %p137, %p138
    %p140 = scmp.ne.s32.totalorder %s129, %s132
    %p141 = scmp.eq.s32.totalorder %s18, 3
    %p142 = por %p140, %p141
    %p143 = scmp.ne.s32.totalorder %s132, %s133
    %p144 = scmp.eq.s32.totalorder %s18, 0
    %p145 = por %p143, %p144
    %p146 = scmp.ne.s32.totalorder %s132, %s133
    %p147 = scmp.eq.s32.totalorder %s19, 3
    %p148 = por %p146, %p147
    %p150 = scmp.ne.s32.totalorder %s133, %s149
    %p151 = scmp.eq.s32.totalorder %s19, 0
    %p152 = por %p150, %p151
    %s154 = sadd.s32 %s153, 1
    %p157 = scmp.eq.s32.totalorder %s13, 3
    %p158 = scmp.ne.s32.totalorder %s153, %s155
    %p159 = scmp.eq.s32.totalorder %s13, 0
    %p160 = por %p158, %p159
    %p161 = scmp.ne.s32.totalorder %s153, %s155
    %p162 = scmp.eq.s32.totalorder %s18, 3
    %p163 = por %p161, %p162
    %p164 = scmp.ne.s32.totalorder %s155, %s156
    %p165 = scmp.eq.s32.totalorder %s18, 0
    %p166 = por %p164, %p165
    %p167 = scmp.ne.s32.totalorder %s155, %s156
    %p168 = scmp.eq.s32.totalorder %s19, 3
    %p169 = por %p167, %p168
    %p171 = scmp.ne.s32.totalorder %s156, %s170
    %p172 = scmp.eq.s32.totalorder %s19, 0
    %p173 = por %p171, %p172
    %s174 = ssub.s32 %s22, %s38
    %p175 = scmp.eq.s32.totalorder %s174, 0
    %s177 = sadd.s32 %s176, 1
    %s178 = scalar_select %p175, %s176, %s177
    %p181 = pneg %p175
    %p182 = scmp.eq.s32.totalorder %s13, 3
    %p183 = por %p181, %p182
    %p184 = scmp.ne.s32.totalorder %s176, %s179
    %p185 = scmp.eq.s32.totalorder %s13, 0
    %p186 = por %p184, %p185
    %p187 = scmp.ne.s32.totalorder %s176, %s179
    %p188 = scmp.eq.s32.totalorder %s18, 3
    %p189 = por %p187, %p188
    %p190 = scmp.ne.s32.totalorder %s179, %s180
    %p191 = scmp.eq.s32.totalorder %s18, 0
    %p192 = por %p190, %p191
    %p193 = scmp.ne.s32.totalorder %s179, %s180
    %p194 = scmp.eq.s32.totalorder %s19, 3
    %p195 = por %p193, %p194
    %p197 = scmp.ne.s32.totalorder %s180, %s196
    %p198 = scmp.eq.s32.totalorder %s19, 0
    %p199 = por %p197, %p198
    %s200 = ssub.s32 %s20, %s46
    %s201 = ssub.s32 %s21, %s42
    %s202 = sor.u32 %s200, %s201
    %p203 = scmp.eq.s32.totalorder %s202, 0
    %s205 = sadd.s32 %s204, 1
    %s206 = scalar_select %p203, %s204, %s205
    %p209 = pneg %p203
    %p210 = scmp.eq.s32.totalorder %s13, 3
    %p211 = por %p209, %p210
    %p212 = scmp.ne.s32.totalorder %s204, %s207
    %p213 = scmp.eq.s32.totalorder %s13, 0
    %p214 = por %p212, %p213
    %p215 = scmp.ne.s32.totalorder %s204, %s207
    %p216 = scmp.eq.s32.totalorder %s18, 3
    %p217 = por %p215, %p216
    %p218 = scmp.ne.s32.totalorder %s207, %s208
    %p219 = scmp.eq.s32.totalorder %s18, 0
    %p220 = por %p218, %p219
    %p221 = scmp.ne.s32.totalorder %s207, %s208
    %p222 = scmp.eq.s32.totalorder %s19, 3
    %p223 = por %p221, %p222
    %p225 = scmp.ne.s32.totalorder %s208, %s224
    %p226 = scmp.eq.s32.totalorder %s19, 0
    %p227 = por %p225, %p226
    %s228 = ssub.s32 %s22, %s38
    %p229 = scmp.eq.s32.totalorder %s228, 0
    %s231 = sadd.s32 %s230, 1
    %s232 = scalar_select %p229, %s230, %s231
    %p235 = pneg %p229
    %p236 = scmp.eq.s32.totalorder %s13, 3
    %p237 = por %p235, %p236
    %p238 = scmp.ne.s32.totalorder %s230, %s233
    %p239 = scmp.eq.s32.totalorder %s13, 0
    %p240 = por %p238, %p239
    %p241 = scmp.ne.s32.totalorder %s230, %s233
    %p242 = scmp.eq.s32.totalorder %s18, 3
    %p243 = por %p241, %p242
    %p244 = scmp.ne.s32.totalorder %s233, %s234
    %p245 = scmp.eq.s32.totalorder %s18, 0
    %p246 = por %p244, %p245
    %p247 = scmp.ne.s32.totalorder %s233, %s234
    %p248 = scmp.eq.s32.totalorder %s19, 3
    %p249 = por %p247, %p248
    %p251 = scmp.ne.s32.totalorder %s234, %s250
    %p252 = scmp.eq.s32.totalorder %s19, 0
    %p253 = por %p251, %p252
    %s254 = ssub.s32 %s20, %s46
    %s255 = ssub.s32 %s21, %s42
    %s256 = sor.u32 %s254, %s255
    %s257 = ssub.s32 %s22, %s38
    %s258 = sor.u32 %s256, %s257
    %p259 = scmp.eq.s32.totalorder %s258, 0
    %s261 = sadd.s32 %s260, 1
    %s262 = scalar_select %p259, %s260, %s261
    %p265 = pneg %p259
    %p266 = scmp.eq.s32.totalorder %s13, 3
    %p267 = por %p265, %p266
    %p268 = scmp.ne.s32.totalorder %s260, %s263
    %p269 = scmp.eq.s32.totalorder %s13, 0
    %p270 = por %p268, %p269
    %p271 = scmp.ne.s32.totalorder %s260, %s263
    %p272 = scmp.eq.s32.totalorder %s18, 3
    %p273 = por %p271, %p272
    %p274 = scmp.ne.s32.totalorder %s263, %s264
    %p275 = scmp.eq.s32.totalorder %s18, 0
    %p276 = por %p274, %p275
    %p277 = scmp.ne.s32.totalorder %s263, %s264
    %p278 = scmp.eq.s32.totalorder %s19, 3
    %p279 = por %p277, %p278
    %p281 = scmp.ne.s32.totalorder %s264, %s280
    %p282 = scmp.eq.s32.totalorder %s19, 0
    %p283 = por %p281, %p282
    %p284 = scmp.le.s32.totalorder 1, %s13
    %p285 = scmp.lt.s32.totalorder %s13, 5
    %p286 = pnand %p284, %p285
    %p287 = pneg %p286
    // Predicated region
    $region9: #{spade_resblock_forward.26} parent=5 // pred_check
      _
    $region10: #{spade_resblock_forward.26} parent=5 // pred_check_branch
      %289 = sbr.rel (%p286) target = $region12
    $region11: #{spade_resblock_forward.26} parent=5 // pred_region
      %s290 = ssub.s32 %s13, 1
      // Predicated region
      $region13: #{spade_resblock_forward.26} parent=11 // pred_check
        %p291 = pneg %p166
      $region14: #{spade_resblock_forward.26} parent=11 // pred_check_branch
        %293 = sbr.rel (%p291) target = $region16
      $region15: #{spade_resblock_forward.26} parent=11 // pred_region
        _
      $region16: #{spade_resblock_forward.26} parent=11 // pred_fallthru
        _
      // Predicated region
      $region17: #{spade_resblock_forward.26} parent=11 // pred_check
        %p294 = pneg %p192
      $region18: #{spade_resblock_forward.26} parent=11 // pred_check_branch
        %296 = sbr.rel (%p294) target = $region20
      $region19: #{spade_resblock_forward.26} parent=11 // pred_region
        %p297 = scmp.lt.s32.totalorder %s26, 0
        %s298 = scalar_select %p297, %s26, 0
        %s299 = scalar_lea.vmem %s4, %s298
      $region20: #{spade_resblock_forward.26} parent=11 // pred_fallthru
        _
      // Predicated region
      $region21: #{spade_resblock_forward.26} parent=11 // pred_check
        %p300 = pneg %p246
      $region22: #{spade_resblock_forward.26} parent=11 // pred_check_branch
        %302 = sbr.rel (%p300) target = $region24
      $region23: #{spade_resblock_forward.26} parent=11 // pred_region
        %p303 = scmp.lt.s32.totalorder %s26, 0
        %s304 = scalar_select %p303, %s26, 0
        %s305 = smul.addr %s304, 4
        %s306 = scalar_lea.vmem %s6, %s305
      $region24: #{spade_resblock_forward.26} parent=11 // pred_fallthru
        _
    $region12: #{spade_resblock_forward.26} parent=5 // pred_fallthru
      _
    %p307 = scmp.lt.s32.totalorder %s13, 4
    // Predicated region
    $region25: #{spade_resblock_forward.26} parent=5 // pred_check
      %p308 = pneg %p307
    $region26: #{spade_resblock_forward.26} parent=5 // pred_check_branch
      %310 = sbr.rel (%p308) target = $region28
    $region27: #{spade_resblock_forward.26} parent=5 // pred_region
      // Predicated region
      $region29: #{spade_resblock_forward.26} parent=27 // pred_check
        %p311 = pneg %p63
      $region30: #{spade_resblock_forward.26} parent=27 // pred_check_branch
        %313 = sbr.rel (%p311) target = $region32
      $region31: #{spade_resblock_forward.26} parent=27 // pred_region
        %s314 = smul.u32 8, %s21
        %p315 = scmp.lt.s32.totalorder %s20, 1
        %s316 = scalar_select %p315, %s20, 1
        %p317 = scmp.lt.s32.totalorder %s314, 15
        %s318 = scalar_select %p317, %s314, 15
        %p319 = scmp.lt.s32.totalorder %s23, 0
        %s320 = scalar_select %p319, %s23, 0
        %s321 = smul.addr %s318, 2
        %s322 = sadd.s32 %s320, %s321
        %s323 = smul.addr %s316, 32
        %s324 = sadd.s32 %s322, %s323
        %s325 = smul.addr %s324, 4
        %s326 = scalar_lea.vmem %s0, %s325
        %s327 = smul.u32 8, %s21
      $region32: #{spade_resblock_forward.26} parent=27 // pred_fallthru
        _
      // Predicated region
      $region33: #{spade_resblock_forward.26} parent=27 // pred_check
        %p328 = pneg %p101
      $region34: #{spade_resblock_forward.26} parent=27 // pred_check_branch
        %330 = sbr.rel (%p328) target = $region36
      $region35: #{spade_resblock_forward.26} parent=27 // pred_region
        %s331 = smul.u32 %s21, 8
        %s332 = ssub.s32 %s331, 1
        %p333 = scmp.gt.s32.totalorder %s332, 0
        %s334 = scalar_select %p333, %s332, 0
        %p335 = scmp.lt.s32.totalorder %s20, 1
        %s336 = scalar_select %p335, %s20, 1
        %p337 = scmp.lt.s32.totalorder %s334, 15
        %s338 = scalar_select %p337, %s334, 15
        %p339 = scmp.lt.s32.totalorder %s23, 0
        %s340 = scalar_select %p339, %s23, 0
        %s341 = smul.addr %s338, 2
        %s342 = sadd.s32 %s340, %s341
        %s343 = smul.addr %s336, 32
        %s344 = sadd.s32 %s342, %s343
        %s345 = smul.addr %s344, 4
        %s346 = scalar_lea.vmem %s1, %s345
        %s347 = smul.u32 %s21, 8
        %s348 = ssub.s32 %s347, 1
        %p349 = scmp.gt.s32.totalorder %s348, 0
        %s350 = scalar_select %p349, %s348, 0
      $region36: #{spade_resblock_forward.26} parent=27 // pred_fallthru
        _
      // Predicated region
      $region37: #{spade_resblock_forward.26} parent=27 // pred_check
        %p351 = pneg %p139
      $region38: #{spade_resblock_forward.26} parent=27 // pred_check_branch
        %353 = sbr.rel (%p351) target = $region40
      $region39: #{spade_resblock_forward.26} parent=27 // pred_region
        %s354 = sadd.s32 %s21, 1
        %s355 = smul.u32 %s354, 8
        %p356 = scmp.lt.s32.totalorder %s355, 15
        %s357 = scalar_select %p356, %s355, 15
        %p358 = scmp.lt.s32.totalorder %s20, 1
        %s359 = scalar_select %p358, %s20, 1
        %p360 = scmp.lt.s32.totalorder %s357, 15
        %s361 = scalar_select %p360, %s357, 15
        %p362 = scmp.lt.s32.totalorder %s23, 0
        %s363 = scalar_select %p362, %s23, 0
        %s364 = smul.addr %s361, 2
        %s365 = sadd.s32 %s363, %s364
        %s366 = smul.addr %s359, 32
        %s367 = sadd.s32 %s365, %s366
        %s368 = smul.addr %s367, 4
        %s369 = scalar_lea.vmem %s2, %s368
        %s370 = sadd.s32 %s21, 1
        %s371 = smul.u32 %s370, 8
        %p372 = scmp.lt.s32.totalorder %s371, 15
        %s373 = scalar_select %p372, %s371, 15
      $region40: #{spade_resblock_forward.26} parent=27 // pred_fallthru
        _
      // Predicated region
      $region41: #{spade_resblock_forward.26} parent=27 // pred_check
        %p374 = pneg %p214
      $region42: #{spade_resblock_forward.26} parent=27 // pred_check_branch
        %376 = sbr.rel (%p374) target = $region44
      $region43: #{spade_resblock_forward.26} parent=27 // pred_region
        %s377 = smul.u32 8, %s21
        %p378 = scmp.lt.s32.totalorder %s20, 1
        %s379 = scalar_select %p378, %s20, 1
        %p380 = scmp.lt.s32.totalorder %s377, 15
        %s381 = scalar_select %p380, %s377, 15
        %s382 = smul.addr %s381, 2
        %s383 = smul.addr %s379, 32
        %s384 = sadd.s32 %s382, %s383
        %s385 = smul.addr %s384, 4
        %s386 = scalar_lea.vmem %s5, %s385
        %s387 = smul.u32 8, %s21
      $region44: #{spade_resblock_forward.26} parent=27 // pred_fallthru
        _
    $region28: #{spade_resblock_forward.26} parent=5 // pred_fallthru
      _
    %p388 = scmp.le.s32.totalorder 1, %s13
    %p389 = scmp.lt.s32.totalorder %s13, 5
    %p390 = pnand %p388, %p389
    %p391 = pneg %p390
    // Predicated region
    $region45: #{spade_resblock_forward.26} parent=5 // pred_check
      _
    $region46: #{spade_resblock_forward.26} parent=5 // pred_check_branch
      %393 = sbr.rel (%p390) target = $region48
    $region47: #{spade_resblock_forward.26} parent=5 // pred_region
      %s394 = ssub.s32 %s13, 1
      %s395 = smul.u32 8, %s25
      %p396 = scmp.lt.s32.totalorder %s24, 1
      %s397 = scalar_select %p396, %s24, 1
      %p398 = scmp.lt.s32.totalorder %s395, 15
      %s399 = scalar_select %p398, %s395, 15
      %p400 = scmp.lt.s32.totalorder %s27, 0
      %s401 = scalar_select %p400, %s27, 0
      %s402 = smul.addr %s399, 2
      %s403 = sadd.s32 %s401, %s402
      %s404 = smul.addr %s397, 32
      %s405 = sadd.s32 %s403, %s404
      %s406 = smul.addr %s405, 4
      %s407 = scalar_lea.vmem %s0, %s406
      %p408 = pneg %p69
      %p409 = pneg %p66
      %s410 = smul.u32 %s25, 8
      %s411 = ssub.s32 %s410, 1
      %p412 = scmp.gt.s32.totalorder %s411, 0
      %s413 = scalar_select %p412, %s411, 0
      %p414 = scmp.lt.s32.totalorder %s24, 1
      %s415 = scalar_select %p414, %s24, 1
      %p416 = scmp.lt.s32.totalorder %s413, 15
      %s417 = scalar_select %p416, %s413, 15
      %p418 = scmp.lt.s32.totalorder %s27, 0
      %s419 = scalar_select %p418, %s27, 0
      %s420 = smul.addr %s417, 2
      %s421 = sadd.s32 %s419, %s420
      %s422 = smul.addr %s415, 32
      %s423 = sadd.s32 %s421, %s422
      %s424 = smul.addr %s423, 4
      %s425 = scalar_lea.vmem %s1, %s424
      %p426 = pneg %p107
      %p427 = pneg %p104
      %s428 = sadd.s32 %s25, 1
      %s429 = smul.u32 %s428, 8
      %p430 = scmp.lt.s32.totalorder %s429, 15
      %s431 = scalar_select %p430, %s429, 15
      %p432 = scmp.lt.s32.totalorder %s24, 1
      %s433 = scalar_select %p432, %s24, 1
      %p434 = scmp.lt.s32.totalorder %s431, 15
      %s435 = scalar_select %p434, %s431, 15
      %p436 = scmp.lt.s32.totalorder %s27, 0
      %s437 = scalar_select %p436, %s27, 0
      %s438 = smul.addr %s435, 2
      %s439 = sadd.s32 %s437, %s438
      %s440 = smul.addr %s433, 32
      %s441 = sadd.s32 %s439, %s440
      %s442 = smul.addr %s441, 4
      %s443 = scalar_lea.vmem %s2, %s442
      %p444 = pneg %p145
      %p445 = pneg %p142
      %p446 = pneg %p166
      %p447 = pneg %p163
      %p448 = scmp.lt.s32.totalorder %s26, 0
      %s449 = scalar_select %p448, %s26, 0
      %s450 = scalar_lea.vmem %s4, %s449
      %p451 = pneg %p192
      %p452 = pneg %p189
      %s453 = smul.u32 8, %s25
      %p454 = scmp.lt.s32.totalorder %s24, 1
      %s455 = scalar_select %p454, %s24, 1
      %p456 = scmp.lt.s32.totalorder %s453, 15
      %s457 = scalar_select %p456, %s453, 15
      %s458 = smul.addr %s457, 2
      %s459 = smul.addr %s455, 32
      %s460 = sadd.s32 %s458, %s459
      %s461 = smul.addr %s460, 4
      %s462 = scalar_lea.vmem %s5, %s461
      %p463 = pneg %p220
      %p464 = pneg %p217
      %p465 = scmp.lt.s32.totalorder %s26, 0
      %s466 = scalar_select %p465, %s26, 0
      %s467 = smul.addr %s466, 4
      %s468 = scalar_lea.vmem %s6, %s467
      %p469 = pneg %p246
      %p470 = pneg %p243
      %p471 = pneg %p276
      %p472 = pneg %p273
      %s473 = smul.u32 8, %s25
      %p474 = scmp.lt.s32.totalorder %s24, 1
      %s475 = scalar_select %p474, %s24, 1
      %p476 = scmp.lt.s32.totalorder %s473, 15
      %s477 = scalar_select %p476, %s473, 15
      %p478 = scmp.lt.s32.totalorder %s26, 0
      %s479 = scalar_select %p478, %s26, 0
      %s480 = smul.addr %s477, 2
      %s481 = sadd.s32 %s479, %s480
      %s482 = smul.addr %s475, 32
      %s483 = sadd.s32 %s481, %s482
      %s484 = smul.addr %s483, 8
      %s485 = scalar_lea.vmem %s7, %s484
      %s486 = smul.u32 8, %s25
      %p487 = scmp.lt.s32.totalorder %s24, 1
      %s488 = scalar_select %p487, %s24, 1
      %p489 = scmp.lt.s32.totalorder %s486, 15
      %s490 = scalar_select %p489, %s486, 15
      %p491 = scmp.lt.s32.totalorder %s27, 0
      %s492 = scalar_select %p491, %s27, 0
      %s493 = smul.addr %s490, 2
      %s494 = sadd.s32 %s492, %s493
      %s495 = smul.addr %s488, 32
      %s496 = sadd.s32 %s494, %s495
      %s497 = smul.addr %s496, 4
      %s498 = scalar_lea.vmem %s0, %s497
      %s499 = smul.u32 8, %s25
      %s500 = smul.u32 %s25, 8
      %s501 = ssub.s32 %s500, 1
      %p502 = scmp.gt.s32.totalorder %s501, 0
      %s503 = scalar_select %p502, %s501, 0
      %p504 = scmp.lt.s32.totalorder %s24, 1
      %s505 = scalar_select %p504, %s24, 1
      %p506 = scmp.lt.s32.totalorder %s503, 15
      %s507 = scalar_select %p506, %s503, 15
      %p508 = scmp.lt.s32.totalorder %s27, 0
      %s509 = scalar_select %p508, %s27, 0
      %s510 = smul.addr %s507, 2
      %s511 = sadd.s32 %s509, %s510
      %s512 = smul.addr %s505, 32
      %s513 = sadd.s32 %s511, %s512
      %s514 = smul.addr %s513, 4
      %s515 = scalar_lea.vmem %s1, %s514
      %s516 = smul.u32 %s25, 8
      %s517 = ssub.s32 %s516, 1
      %p518 = scmp.gt.s32.totalorder %s517, 0
      %s519 = scalar_select %p518, %s517, 0
      %s520 = sadd.s32 %s25, 1
      %s521 = smul.u32 %s520, 8
      %p522 = scmp.lt.s32.totalorder %s521, 15
      %s523 = scalar_select %p522, %s521, 15
      %p524 = scmp.lt.s32.totalorder %s24, 1
      %s525 = scalar_select %p524, %s24, 1
      %p526 = scmp.lt.s32.totalorder %s523, 15
      %s527 = scalar_select %p526, %s523, 15
      %p528 = scmp.lt.s32.totalorder %s27, 0
      %s529 = scalar_select %p528, %s27, 0
      %s530 = smul.addr %s527, 2
      %s531 = sadd.s32 %s529, %s530
      %s532 = smul.addr %s525, 32
      %s533 = sadd.s32 %s531, %s532
      %s534 = smul.addr %s533, 4
      %s535 = scalar_lea.vmem %s2, %s534
      %s536 = sadd.s32 %s25, 1
      %s537 = smul.u32 %s536, 8
      %p538 = scmp.lt.s32.totalorder %s537, 15
      %s539 = scalar_select %p538, %s537, 15
      %p540 = scmp.lt.s32.totalorder %s26, 0
      %s541 = scalar_select %p540, %s26, 0
      %s542 = scalar_lea.vmem %s4, %s541
      %s543 = smul.u32 8, %s25
      %p544 = scmp.lt.s32.totalorder %s24, 1
      %s545 = scalar_select %p544, %s24, 1
      %p546 = scmp.lt.s32.totalorder %s543, 15
      %s547 = scalar_select %p546, %s543, 15
      %s548 = smul.addr %s547, 2
      %s549 = smul.addr %s545, 32
      %s550 = sadd.s32 %s548, %s549
      %s551 = smul.addr %s550, 4
      %s552 = scalar_lea.vmem %s5, %s551
      %s553 = smul.u32 8, %s25
      %p554 = scmp.lt.s32.totalorder %s26, 0
      %s555 = scalar_select %p554, %s26, 0
      %s556 = smul.addr %s555, 4
      %s557 = scalar_lea.vmem %s6, %s556
      %s558 = smul.u32 8, %s25
      %p559 = scmp.lt.s32.totalorder %s24, 1
      %s560 = scalar_select %p559, %s24, 1
      %p561 = scmp.lt.s32.totalorder %s558, 15
      %s562 = scalar_select %p561, %s558, 15
      %p563 = scmp.lt.s32.totalorder %s26, 0
      %s564 = scalar_select %p563, %s26, 0
      %s565 = smul.addr %s562, 2
      %s566 = sadd.s32 %s564, %s565
      %s567 = smul.addr %s560, 32
      %s568 = sadd.s32 %s566, %s567
      %s569 = smul.addr %s568, 8
      %s570 = scalar_lea.vmem %s7, %s569
      %s571 = smul.u32 8, %s25
      %v573 = vld [vmem:[%s498] sm:$0xf]
      %v574 = vld [vmem:[%s498 + $0x4] sm:$0xf]
      %v575 = vld [vmem:[%s498 + $0x8] sm:$0xf]
      %v576 = vld [vmem:[%s498 + $0xc] sm:$0xf]
      %v577 = vld [vmem:[%s498 + $0x10] sm:$0xf]
      %v578 = vld [vmem:[%s498 + $0x14] sm:$0xf]
      %v579 = vld [vmem:[%s498 + $0x18] sm:$0xf]
      %v580 = vld [vmem:[%s498 + $0x1c] sm:$0xf]
      %v581 = vld [vmem:[%s498 + $0x20] sm:$0xf]
      %v582 = vld [vmem:[%s498 + $0x24] sm:$0xf]
      %v583 = vld [vmem:[%s498 + $0x28] sm:$0xf]
      %v584 = vld [vmem:[%s498 + $0x2c] sm:$0xf]
      %v585 = vld [vmem:[%s498 + $0x30] sm:$0xf]
      %v586 = vld [vmem:[%s498 + $0x34] sm:$0xf]
      %v587 = vld [vmem:[%s498 + $0x38] sm:$0xf]
      %v588 = vld [vmem:[%s498 + $0x3c] sm:$0xf]
      %v589 = vunpack.c.l.bf16 %v573
      %v590 = vunpack.c.l.bf16 %v574
      %v591 = vunpack.c.l.bf16 %v575
      %v592 = vunpack.c.l.bf16 %v576
      %v593 = vunpack.c.l.bf16 %v577
      %v594 = vunpack.c.l.bf16 %v578
      %v595 = vunpack.c.l.bf16 %v579
      %v596 = vunpack.c.l.bf16 %v580
      %v597 = vunpack.c.l.bf16 %v581
      %v598 = vunpack.c.l.bf16 %v582
      %v599 = vunpack.c.l.bf16 %v583
      %v600 = vunpack.c.l.bf16 %v584
      %v601 = vunpack.c.l.bf16 %v585
      %v602 = vunpack.c.l.bf16 %v586
      %v603 = vunpack.c.l.bf16 %v587
      %v604 = vunpack.c.l.bf16 %v588
      %v605 = vld [vmem:[%s515] sm:$0xf]
      %v606 = vld [vmem:[%s515 + $0x4] sm:$0xf]
      %v607 = vunpack.c.l.bf16 %v605
      %v608 = vunpack.c.l.bf16 %v606
      %v609 = vld [vmem:[%s535] sm:$0xf]
      %v610 = vld [vmem:[%s535 + $0x4] sm:$0xf]
      %v611 = vunpack.c.l.bf16 %v609
      %v612 = vunpack.c.l.bf16 %v610
      %p613 = scmp.gt.s32.totalorder %s25, 0
      %s614 = scalar_select %p613, 1, 0
      %s615 = scvt.s32.f32 %s614
      %p616 = scmp.lt.s32.totalorder %s25, 1
      %s617 = scalar_select %p616, 1, 0
      %s618 = scvt.s32.f32 %s617
      %v619 = vstv %s615
      %v620 = vmul.f32 %v607, %v619
      %v621 = vmul.f32 %v608, %v619
      %s622 = ssub.f32 1.0, %s615
      %v623 = vstv %s622
      %v624 = vmul.f32 %v591, %v623
      %v625 = vmul.f32 %v592, %v623
      %v626 = vadd.f32 %v620, %v624
      %v627 = vadd.f32 %v621, %v625
      %v628 = vstv %s618
      %v629 = vmul.f32 %v611, %v628
      %v630 = vmul.f32 %v612, %v628
      %s631 = ssub.f32 1.0, %s618
      %v632 = vstv %s631
      %v633 = vmul.f32 %v601, %v632
      %v634 = vmul.f32 %v602, %v632
      %v635 = vadd.f32 %v629, %v633
      %v636 = vadd.f32 %v630, %v634
      %v637 = vlaneseq
      %v638 = vshrl.u32 %v637, 7
      %v639 = vadd.s32 %v638, 8
      %vm640 = vcmp.eq.s32.totalorder %v638, 0
      %vm641 = vcmp.eq.s32.totalorder %v639, 0
      %vm642 = vcmp.eq.s32.totalorder %v638, 15
      %vm643 = vcmp.eq.s32.totalorder %v639, 15
      %v644 = vrot.slane %v626, 7
      %v645 = vrot.slane %v627, 7
      %v646 = vrot.slane %v589, 7
      %v647 = vrot.slane %v590, 7
      %v648 = vrot.slane %v591, 7
      %v649 = vrot.slane %v592, 7
      %v650 = vrot.slane %v593, 7
      %v651 = vrot.slane %v594, 7
      %v652 = vrot.slane %v595, 7
      %v653 = vrot.slane %v596, 7
      %v654 = vrot.slane %v597, 7
      %v655 = vrot.slane %v598, 7
      %v656 = vrot.slane %v599, 7
      %v657 = vrot.slane %v600, 7
      %v658 = vrot.slane %v601, 7
      %v659 = vrot.slane %v602, 7
      %vm660 = vcmp.lt.s32.totalorder %v638, 1
      %v661 = vsel %vm660, %v658, %v659
      %v662 = vsel %vm660, %v657, %v658
      %v663 = vsel %vm660, %v656, %v657
      %v664 = vsel %vm660, %v655, %v656
      %v665 = vsel %vm660, %v654, %v655
      %v666 = vsel %vm660, %v653, %v654
      %v667 = vsel %vm660, %v652, %v653
      %v668 = vsel %vm660, %v651, %v652
      %v669 = vsel %vm660, %v650, %v651
      %v670 = vsel %vm660, %v649, %v650
      %v671 = vsel %vm660, %v648, %v649
      %v672 = vsel %vm660, %v647, %v648
      %v673 = vsel %vm660, %v646, %v647
      %v674 = vsel %vm660, %v645, %v646
      %v675 = vsel %vm660, %v644, %v645
      %v676 = vsel %vm660, %v659, %v644
      %v677 = vrot.slane %v626, 1
      %v678 = vrot.slane %v627, 1
      %v679 = vrot.slane %v589, 1
      %v680 = vrot.slane %v590, 1
      %v681 = vrot.slane %v591, 1
      %v682 = vrot.slane %v592, 1
      %v683 = vrot.slane %v593, 1
      %v684 = vrot.slane %v594, 1
      %v685 = vrot.slane %v595, 1
      %v686 = vrot.slane %v596, 1
      %v687 = vrot.slane %v597, 1
      %v688 = vrot.slane %v598, 1
      %v689 = vrot.slane %v599, 1
      %v690 = vrot.slane %v600, 1
      %v691 = vrot.slane %v601, 1
      %v692 = vrot.slane %v602, 1
      %vm693 = vcmp.lt.s32.totalorder %v638, 7
      %v694 = vsel %vm693, %v691, %v692
      %v695 = vsel %vm693, %v690, %v691
      %v696 = vsel %vm693, %v689, %v690
      %v697 = vsel %vm693, %v688, %v689
      %v698 = vsel %vm693, %v687, %v688
      %v699 = vsel %vm693, %v686, %v687
      %v700 = vsel %vm693, %v685, %v686
      %v701 = vsel %vm693, %v684, %v685
      %v702 = vsel %vm693, %v683, %v684
      %v703 = vsel %vm693, %v682, %v683
      %v704 = vsel %vm693, %v681, %v682
      %v705 = vsel %vm693, %v680, %v681
      %v706 = vsel %vm693, %v679, %v680
      %v707 = vsel %vm693, %v678, %v679
      %v708 = vsel %vm693, %v677, %v678
      %v709 = vsel %vm693, %v692, %v677
      %v710 = vsel %vm640, 1, 0
      %v711 = vsel %vm641, 1, 0
      %vm712 = vcmp.eq.s32.totalorder %v710, 1
      %vm713 = vcmp.eq.s32.totalorder %v711, 1
      %v714 = vsel %vm712, %v708, %v676
      %v715 = vsel %vm713, %v707, %v675
      %v716 = vsel %vm712, %v706, %v674
      %v717 = vsel %vm713, %v705, %v673
      %v718 = vsel %vm712, %v704, %v672
      %v719 = vsel %vm713, %v703, %v671
      %v720 = vsel %vm712, %v702, %v670
      %v721 = vsel %vm713, %v701, %v669
      %v722 = vsel %vm712, %v700, %v668
      %v723 = vsel %vm713, %v699, %v667
      %v724 = vsel %vm712, %v698, %v666
      %v725 = vsel %vm713, %v697, %v665
      %v726 = vsel %vm712, %v696, %v664
      %v727 = vsel %vm713, %v695, %v663
      %v728 = vsel %vm712, %v694, %v662
      %v729 = vsel %vm713, %v709, %v661
      %v730 = vsel %vm642, 1, 0
      %v731 = vsel %vm643, 1, 0
      %vm732 = vcmp.eq.s32.totalorder %v730, 1
      %vm733 = vcmp.eq.s32.totalorder %v731, 1
      %v734 = vsel %vm732, %v676, %v708
      %v735 = vsel %vm733, %v675, %v707
      %v736 = vsel %vm732, %v674, %v706
      %v737 = vsel %vm733, %v673, %v705
      %v738 = vsel %vm732, %v672, %v704
      %v739 = vsel %vm733, %v671, %v703
      %v740 = vsel %vm732, %v670, %v702
      %v741 = vsel %vm733, %v669, %v701
      %v742 = vsel %vm732, %v668, %v700
      %v743 = vsel %vm733, %v667, %v699
      %v744 = vsel %vm732, %v666, %v698
      %v745 = vsel %vm733, %v665, %v697
      %v746 = vsel %vm732, %v664, %v696
      %v747 = vsel %vm733, %v663, %v695
      %v748 = vsel %vm732, %v662, %v694
      %v749 = vsel %vm733, %v661, %v709
      %v750 = vpack.c.bf16 %v715, %v714
      %v751 = vpack.c.bf16 %v717, %v716
      %v752 = vpack.c.bf16 %v719, %v718
      %v753 = vpack.c.bf16 %v721, %v720
      %v754 = vpack.c.bf16 %v723, %v722
      %v755 = vpack.c.bf16 %v725, %v724
      %v756 = vpack.c.bf16 %v727, %v726
      %v757 = vpack.c.bf16 %v729, %v728
      %v758 = vpack.c.bf16 %v627, %v626
      %v759 = vpack.c.bf16 %v590, %v589
      %v760 = vpack.c.bf16 %v592, %v591
      %v761 = vpack.c.bf16 %v594, %v593
      %v762 = vpack.c.bf16 %v596, %v595
      %v763 = vpack.c.bf16 %v598, %v597
      %v764 = vpack.c.bf16 %v600, %v599
      %v765 = vpack.c.bf16 %v602, %v601
      %v766 = vpack.c.bf16 %v735, %v734
      %v767 = vpack.c.bf16 %v737, %v736
      %v768 = vpack.c.bf16 %v739, %v738
      %v769 = vpack.c.bf16 %v741, %v740
      %v770 = vpack.c.bf16 %v743, %v742
      %v771 = vpack.c.bf16 %v745, %v744
      %v772 = vpack.c.bf16 %v747, %v746
      %v773 = vpack.c.bf16 %v749, %v748
      %s774 = smul.u32 %s27, 48
      %s775 = smul.u32 %s26, 144
      %s776 = sadd.s32 %s774, %s775
      %s777 = smul.addr %s776, 4
      %s778 = scalar_lea.vmem %s3, %s777
      %v779 = vld [vmem:[%s778] sm:$0xf]
      %v780 = vld [vmem:[%s778 + $0x4] sm:$0xf]
      %v781 = vld [vmem:[%s778 + $0x8] sm:$0xf]
      %v782 = vld [vmem:[%s778 + $0xc] sm:$0xf]
      %v783 = vld [vmem:[%s778 + $0x10] sm:$0xf]
      %v784 = vld [vmem:[%s778 + $0x14] sm:$0xf]
      %v785 = vld [vmem:[%s778 + $0x18] sm:$0xf]
      %v786 = vld [vmem:[%s778 + $0x1c] sm:$0xf]
      %v787 = vld [vmem:[%s778 + $0x20] sm:$0xf]
      %v788 = vld [vmem:[%s778 + $0x24] sm:$0xf]
      %v789 = vld [vmem:[%s778 + $0x28] sm:$0xf]
      %v790 = vld [vmem:[%s778 + $0x2c] sm:$0xf]
      %v791 = vld [vmem:[%s778 + $0x30] sm:$0xf]
      %v792 = vld [vmem:[%s778 + $0x34] sm:$0xf]
      %v793 = vld [vmem:[%s778 + $0x38] sm:$0xf]
      %v794 = vld [vmem:[%s778 + $0x3c] sm:$0xf]
      %v795 = vld [vmem:[%s778 + $0x40] sm:$0xf]
      %v796 = vld [vmem:[%s778 + $0x44] sm:$0xf]
      %v797 = vld [vmem:[%s778 + $0x48] sm:$0xf]
      %v798 = vld [vmem:[%s778 + $0x4c] sm:$0xf]
      %v799 = vld [vmem:[%s778 + $0x50] sm:$0xf]
      %v800 = vld [vmem:[%s778 + $0x54] sm:$0xf]
      %v801 = vld [vmem:[%s778 + $0x58] sm:$0xf]
      %v802 = vld [vmem:[%s778 + $0x5c] sm:$0xf]
      %v803 = vld [vmem:[%s778 + $0x60] sm:$0xf]
      %v804 = vld [vmem:[%s778 + $0x64] sm:$0xf]
      %v805 = vld [vmem:[%s778 + $0x68] sm:$0xf]
      %v806 = vld [vmem:[%s778 + $0x6c] sm:$0xf]
      %v807 = vld [vmem:[%s778 + $0x70] sm:$0xf]
      %v808 = vld [vmem:[%s778 + $0x74] sm:$0xf]
      %v809 = vld [vmem:[%s778 + $0x78] sm:$0xf]
      %v810 = vld [vmem:[%s778 + $0x7c] sm:$0xf]
      %v811 = vld [vmem:[%s778 + $0x80] sm:$0xf]
      %v812 = vld [vmem:[%s778 + $0x84] sm:$0xf]
      %v813 = vld [vmem:[%s778 + $0x88] sm:$0xf]
      %v814 = vld [vmem:[%s778 + $0x8c] sm:$0xf]
      %v815 = vld [vmem:[%s778 + $0x90] sm:$0xf]
      %v816 = vld [vmem:[%s778 + $0x94] sm:$0xf]
      %v817 = vld [vmem:[%s778 + $0x98] sm:$0xf]
      %v818 = vld [vmem:[%s778 + $0x9c] sm:$0xf]
      %v819 = vld [vmem:[%s778 + $0xa0] sm:$0xf]
      %v820 = vld [vmem:[%s778 + $0xa4] sm:$0xf]
      %v821 = vld [vmem:[%s778 + $0xa8] sm:$0xf]
      %v822 = vld [vmem:[%s778 + $0xac] sm:$0xf]
      %v823 = vld [vmem:[%s778 + $0xb0] sm:$0xf]
      %v824 = vld [vmem:[%s778 + $0xb4] sm:$0xf]
      %v825 = vld [vmem:[%s778 + $0xb8] sm:$0xf]
      %v826 = vld [vmem:[%s778 + $0xbc] sm:$0xf]
      %v827 = vrot.slane %v603, 7
      %v828 = vrot.slane %v604, 7
      %v829 = vsel %vm660, %v827, %v828
      %v830 = vsel %vm660, %v659, %v827
      %v831 = vsel %vm660, %v828, %v646
      %v832 = vrot.slane %v603, 1
      %v833 = vrot.slane %v604, 1
      %v834 = vsel %vm693, %v832, %v833
      %v835 = vsel %vm693, %v692, %v832
      %v836 = vsel %vm693, %v833, %v679
      %v837 = vsel %vm712, %v706, %v831
      %v838 = vsel %vm713, %v835, %v661
      %v839 = vsel %vm712, %v834, %v830
      %v840 = vsel %vm713, %v836, %v829
      %v841 = vsel %vm732, %v831, %v706
      %v842 = vsel %vm733, %v661, %v835
      %v843 = vsel %vm732, %v830, %v834
      %v844 = vsel %vm733, %v829, %v836
      %v845 = vpack.c.bf16 %v717, %v837
      %v846 = vpack.c.bf16 %v838, %v728
      %v847 = vpack.c.bf16 %v840, %v839
      %v848 = vpack.c.bf16 %v604, %v603
      %v849 = vpack.c.bf16 %v737, %v841
      %v850 = vpack.c.bf16 %v842, %v748
      %v851 = vpack.c.bf16 %v844, %v843
      %s852 = sadd.s32 %s774, 48
      %s853 = sadd.s32 %s852, %s775
      %s854 = smul.addr %s853, 4
      %s855 = scalar_lea.vmem %s3, %s854
      %v856 = vld [vmem:[%s855] sm:$0xf]
      %v857 = vld [vmem:[%s855 + $0x4] sm:$0xf]
      %v858 = vld [vmem:[%s855 + $0x8] sm:$0xf]
      %v859 = vld [vmem:[%s855 + $0xc] sm:$0xf]
      %v860 = vld [vmem:[%s855 + $0x10] sm:$0xf]
      %v861 = vld [vmem:[%s855 + $0x14] sm:$0xf]
      %v862 = vld [vmem:[%s855 + $0x18] sm:$0xf]
      %v863 = vld [vmem:[%s855 + $0x1c] sm:$0xf]
      %v864 = vld [vmem:[%s855 + $0x20] sm:$0xf]
      %v865 = vld [vmem:[%s855 + $0x24] sm:$0xf]
      %v866 = vld [vmem:[%s855 + $0x28] sm:$0xf]
      %v867 = vld [vmem:[%s855 + $0x2c] sm:$0xf]
      %v868 = vld [vmem:[%s855 + $0x30] sm:$0xf]
      %v869 = vld [vmem:[%s855 + $0x34] sm:$0xf]
      %v870 = vld [vmem:[%s855 + $0x38] sm:$0xf]
      %v871 = vld [vmem:[%s855 + $0x3c] sm:$0xf]
      %v872 = vld [vmem:[%s855 + $0x40] sm:$0xf]
      %v873 = vld [vmem:[%s855 + $0x44] sm:$0xf]
      %v874 = vld [vmem:[%s855 + $0x48] sm:$0xf]
      %v875 = vld [vmem:[%s855 + $0x4c] sm:$0xf]
      %v876 = vld [vmem:[%s855 + $0x50] sm:$0xf]
      %v877 = vld [vmem:[%s855 + $0x54] sm:$0xf]
      %v878 = vld [vmem:[%s855 + $0x58] sm:$0xf]
      %v879 = vld [vmem:[%s855 + $0x5c] sm:$0xf]
      %v880 = vld [vmem:[%s855 + $0x60] sm:$0xf]
      %v881 = vld [vmem:[%s855 + $0x64] sm:$0xf]
      %v882 = vld [vmem:[%s855 + $0x68] sm:$0xf]
      %v883 = vld [vmem:[%s855 + $0x6c] sm:$0xf]
      %v884 = vld [vmem:[%s855 + $0x70] sm:$0xf]
      %v885 = vld [vmem:[%s855 + $0x74] sm:$0xf]
      %v886 = vld [vmem:[%s855 + $0x78] sm:$0xf]
      %v887 = vld [vmem:[%s855 + $0x7c] sm:$0xf]
      %v888 = vld [vmem:[%s855 + $0x80] sm:$0xf]
      %v889 = vld [vmem:[%s855 + $0x84] sm:$0xf]
      %v890 = vld [vmem:[%s855 + $0x88] sm:$0xf]
      %v891 = vld [vmem:[%s855 + $0x8c] sm:$0xf]
      %v892 = vld [vmem:[%s855 + $0x90] sm:$0xf]
      %v893 = vld [vmem:[%s855 + $0x94] sm:$0xf]
      %v894 = vld [vmem:[%s855 + $0x98] sm:$0xf]
      %v895 = vld [vmem:[%s855 + $0x9c] sm:$0xf]
      %v896 = vld [vmem:[%s855 + $0xa0] sm:$0xf]
      %v897 = vld [vmem:[%s855 + $0xa4] sm:$0xf]
      %v898 = vld [vmem:[%s855 + $0xa8] sm:$0xf]
      %v899 = vld [vmem:[%s855 + $0xac] sm:$0xf]
      %v900 = vld [vmem:[%s855 + $0xb0] sm:$0xf]
      %v901 = vld [vmem:[%s855 + $0xb4] sm:$0xf]
      %v902 = vld [vmem:[%s855 + $0xb8] sm:$0xf]
      %v903 = vld [vmem:[%s855 + $0xbc] sm:$0xf]
      %v952 = vunpack.c.l.b16 %v856
      %v953 = vunpack.c.l.b16 %v857
      %v954 = vunpack.c.l.b16 %v858
      %v955 = vunpack.c.l.b16 %v859
      %v956 = vunpack.c.l.b16 %v860
      %v957 = vunpack.c.l.b16 %v861
      %v958 = vunpack.c.l.b16 %v862
      %v959 = vunpack.c.l.b16 %v863
      %v960 = vunpack.c.l.b16 %v864
      %v961 = vunpack.c.l.b16 %v865
      %v962 = vunpack.c.l.b16 %v866
      %v963 = vunpack.c.l.b16 %v867
      %v964 = vunpack.c.l.b16 %v868
      %v965 = vunpack.c.l.b16 %v869
      %v966 = vunpack.c.l.b16 %v870
      %v967 = vunpack.c.l.b16 %v871
      %v968 = vunpack.c.l.b16 %v872
      %v969 = vunpack.c.l.b16 %v873
      %v970 = vunpack.c.l.b16 %v874
      %v971 = vunpack.c.l.b16 %v875
      %v972 = vunpack.c.l.b16 %v876
      %v973 = vunpack.c.l.b16 %v877
      %v974 = vunpack.c.l.b16 %v878
      %v975 = vunpack.c.l.b16 %v879
      %v976 = vunpack.c.l.b16 %v880
      %v977 = vunpack.c.l.b16 %v881
      %v978 = vunpack.c.l.b16 %v882
      %v979 = vunpack.c.l.b16 %v883
      %v980 = vunpack.c.l.b16 %v884
      %v981 = vunpack.c.l.b16 %v885
      %v982 = vunpack.c.l.b16 %v886
      %v983 = vunpack.c.l.b16 %v887
      %v984 = vunpack.c.l.b16 %v888
      %v985 = vunpack.c.l.b16 %v889
      %v986 = vunpack.c.l.b16 %v890
      %v987 = vunpack.c.l.b16 %v891
      %v988 = vunpack.c.l.b16 %v892
      %v989 = vunpack.c.l.b16 %v893
      %v990 = vunpack.c.l.b16 %v894
      %v991 = vunpack.c.l.b16 %v895
      %v992 = vunpack.c.l.b16 %v896
      %v993 = vunpack.c.l.b16 %v897
      %v994 = vunpack.c.l.b16 %v898
      %v995 = vunpack.c.l.b16 %v899
      %v996 = vunpack.c.l.b16 %v900
      %v997 = vunpack.c.l.b16 %v901
      %v998 = vunpack.c.l.b16 %v902
      %v999 = vunpack.c.l.b16 %v903
      %v1000 = vpack.c.b16 %v953, %v952
      %v1001 = vpack.c.b16 %v955, %v954
      %v1002 = vpack.c.b16 %v957, %v956
      %v1003 = vpack.c.b16 %v959, %v958
      %v1004 = vpack.c.b16 %v961, %v960
      %v1005 = vpack.c.b16 %v963, %v962
      %v1006 = vpack.c.b16 %v965, %v964
      %v1007 = vpack.c.b16 %v967, %v966
      %v1008 = vpack.c.b16 %v969, %v968
      %v1009 = vpack.c.b16 %v971, %v970
      %v1010 = vpack.c.b16 %v973, %v972
      %v1011 = vpack.c.b16 %v975, %v974
      %v1012 = vpack.c.b16 %v977, %v976
      %v1013 = vpack.c.b16 %v979, %v978
      %v1014 = vpack.c.b16 %v981, %v980
      %v1015 = vpack.c.b16 %v983, %v982
      %v1016 = vpack.c.b16 %v985, %v984
      %v1017 = vpack.c.b16 %v987, %v986
      %v1018 = vpack.c.b16 %v989, %v988
      %v1019 = vpack.c.b16 %v991, %v990
      %v1020 = vpack.c.b16 %v993, %v992
      %v1021 = vpack.c.b16 %v995, %v994
      %v1022 = vpack.c.b16 %v997, %v996
      %v1023 = vpack.c.b16 %v999, %v998
      %1048 = vmatprep.subr.bf16.mxu0 0
      %1049 = vmatpush1.bf16.msra.mxu0 %v1007
      %1050 = vmatprep.subr.bf16.mxu0 0
      %1051 = vmatpush1.bf16.msra.mxu0 %v1006
      %1052 = vmatprep.subr.bf16.mxu0 0
      %1053 = vmatpush1.bf16.msra.mxu0 %v1005
      %1054 = vmatprep.subr.bf16.mxu0 0
      %1055 = vmatpush1.bf16.msra.mxu0 %v1004
      %1056 = vmatprep.subr.bf16.mxu0 0
      %1057 = vmatpush1.bf16.msra.mxu0 %v1003
      %1058 = vmatprep.subr.bf16.mxu0 0
      %1059 = vmatpush1.bf16.msra.mxu0 %v1002
      %1060 = vmatprep.subr.bf16.mxu0 0
      %1061 = vmatpush1.bf16.msra.mxu0 %v1001
      %1062 = vmatprep.subr.bf16.mxu0 0
      %1063 = vmatpush1.bf16.msra.mxu0 %v1000
      %1064 = vmatprep.subr.bf16.mxu0 0
      %1065 = vmatpush2.bf16.msra.mxu0 %v1015
      %1066 = vmatprep.subr.bf16.mxu0 0
      %1067 = vmatpush2.bf16.msra.mxu0 %v1014
      %1068 = vmatprep.subr.bf16.mxu0 0
      %1069 = vmatpush2.bf16.msra.mxu0 %v1013
      %1070 = vmatprep.subr.bf16.mxu0 0
      %1071 = vmatpush2.bf16.msra.mxu0 %v1012
      %1072 = vmatprep.subr.bf16.mxu0 0
      %1073 = vmatpush2.bf16.msra.mxu0 %v1011
      %1074 = vmatprep.subr.bf16.mxu0 0
      %1075 = vmatpush2.bf16.msra.mxu0 %v1010
      %1076 = vmatprep.subr.bf16.mxu0 0
      %1077 = vmatpush2.bf16.msra.mxu0 %v1009
      %1078 = vmatprep.subr.bf16.mxu0 0
      %1079 = vmatpush2.bf16.msra.mxu0 %v1008
      %1080 = vmatprep.mubr.bf16.mxu0 %v759
      %1081 = vmatmul.mubr.bf16.gmra.mxu0 %v845
      %v1082 = vpop.f32.mrf.mxu0
      %v1083 = vadd.f32 0.0, %v1082
      %v1084 = vpop.f32.mrf.mxu0
      %v1085 = vpop.f32.mrf.mxu0
      %v1086 = vadd.f32 0.0, %v1085
      %v1087 = vpop.f32.mrf.mxu0
      %1088 = vmatprep.mubr.bf16.mxu0 %v760
      %1089 = vmatmul.mubr.bf16.gmra.mxu0 %v752
      %v1090 = vpop.f32.mrf.mxu0
      %v1091 = vadd.f32 0.0, %v1090
      %v1092 = vpop.f32.mrf.mxu0
      %v1093 = vpop.f32.mrf.mxu0
      %v1094 = vadd.f32 0.0, %v1093
      %v1095 = vpop.f32.mrf.mxu0
      %1096 = vmatprep.mubr.bf16.mxu0 %v761
      %1097 = vmatmul.mubr.bf16.gmra.mxu0 %v753
      %v1098 = vpop.f32.mrf.mxu0
      %v1099 = vadd.f32 0.0, %v1098
      %v1100 = vpop.f32.mrf.mxu0
      %v1101 = vpop.f32.mrf.mxu0
      %v1102 = vadd.f32 0.0, %v1101
      %v1103 = vpop.f32.mrf.mxu0
      %1104 = vmatprep.mubr.bf16.mxu0 %v762
      %1105 = vmatmul.mubr.bf16.gmra.mxu0 %v754
      %v1106 = vpop.f32.mrf.mxu0
      %v1107 = vadd.f32 0.0, %v1106
      %v1108 = vpop.f32.mrf.mxu0
      %v1109 = vpop.f32.mrf.mxu0
      %v1110 = vadd.f32 0.0, %v1109
      %v1111 = vpop.f32.mrf.mxu0
      %1112 = vmatprep.mubr.bf16.mxu0 %v763
      %1113 = vmatmul.mubr.bf16.gmra.mxu0 %v755
      %v1114 = vpop.f32.mrf.mxu0
      %v1115 = vadd.f32 0.0, %v1114
      %v1116 = vpop.f32.mrf.mxu0
      %v1117 = vpop.f32.mrf.mxu0
      %v1118 = vadd.f32 0.0, %v1117
      %v1119 = vpop.f32.mrf.mxu0
      %1120 = vmatprep.mubr.bf16.mxu0 %v764
      %1121 = vmatmul.mubr.bf16.gmra.mxu0 %v756
      %v1122 = vpop.f32.mrf.mxu0
      %v1123 = vadd.f32 0.0, %v1122
      %v1124 = vpop.f32.mrf.mxu0
      %v1125 = vpop.f32.mrf.mxu0
      %v1126 = vadd.f32 0.0, %v1125
      %v1127 = vpop.f32.mrf.mxu0
      %1128 = vmatprep.mubr.bf16.mxu0 %v765
      %1129 = vmatmul.mubr.bf16.gmra.mxu0 %v846
      %v1130 = vpop.f32.mrf.mxu0
      %v1131 = vadd.f32 0.0, %v1130
      %v1132 = vpop.f32.mrf.mxu0
      %v1133 = vpop.f32.mrf.mxu0
      %v1134 = vadd.f32 0.0, %v1133
      %v1135 = vpop.f32.mrf.mxu0
      %1136 = vmatprep.mubr.bf16.mxu0 %v848
      %1137 = vmatmul.mubr.bf16.gmra.mxu0 %v847
      %v1138 = vpop.f32.mrf.mxu0
      %v1139 = vadd.f32 0.0, %v1138
      %v1140 = vpop.f32.mrf.mxu0
      %v1141 = vpop.f32.mrf.mxu0
      %v1142 = vadd.f32 0.0, %v1141
      %v1143 = vpop.f32.mrf.mxu0
      %1144 = vdwg.mxu0
      %1145 = vmatprep.subr.bf16.mxu0 0
      %1146 = vmatpush1.bf16.msra.mxu0 %v1023
      %1147 = vmatprep.subr.bf16.mxu0 0
      %1148 = vmatpush1.bf16.msra.mxu0 %v1022
      %1149 = vmatprep.subr.bf16.mxu0 0
      %1150 = vmatpush1.bf16.msra.mxu0 %v1021
      %1151 = vmatprep.subr.bf16.mxu0 0
      %1152 = vmatpush1.bf16.msra.mxu0 %v1020
      %1153 = vmatprep.subr.bf16.mxu0 0
      %1154 = vmatpush1.bf16.msra.mxu0 %v1019
      %1155 = vmatprep.subr.bf16.mxu0 0
      %1156 = vmatpush1.bf16.msra.mxu0 %v1018
      %1157 = vmatprep.subr.bf16.mxu0 0
      %1158 = vmatpush1.bf16.msra.mxu0 %v1017
      %1159 = vmatprep.subr.bf16.mxu0 0
      %1160 = vmatpush1.bf16.msra.mxu0 %v1016
      %1161 = vmatprep.subr.bf16.mxu0 0
      %1162 = vmatpush2.bf16.msra.mxu0 0
      %1163 = vmatprep.subr.bf16.mxu0 0
      %1164 = vmatpush2.bf16.msra.mxu0 0
      %1165 = vmatprep.subr.bf16.mxu0 0
      %1166 = vmatpush2.bf16.msra.mxu0 0
      %1167 = vmatprep.subr.bf16.mxu0 0
      %1168 = vmatpush2.bf16.msra.mxu0 0
      %1169 = vmatprep.subr.bf16.mxu0 0
      %1170 = vmatpush2.bf16.msra.mxu0 0
      %1171 = vmatprep.subr.bf16.mxu0 0
      %1172 = vmatpush2.bf16.msra.mxu0 0
      %1173 = vmatprep.subr.bf16.mxu0 0
      %1174 = vmatpush2.bf16.msra.mxu0 0
      %1175 = vmatprep.subr.bf16.mxu0 0
      %1176 = vmatpush2.bf16.msra.mxu0 0
      %1177 = vmatprep.mubr.bf16.mxu0 0
      %1178 = vmatmul.mubr.bf16.gmra.mxu0 %v849
      %v1179 = vpop.f32.mrf.mxu0
      %v1180 = vadd.f32 %v1083, %v1179
      %v1181 = vpop.f32.mrf.mxu0
      %v1182 = vpop.f32.mrf.mxu0
      %v1183 = vadd.f32 %v1086, %v1182
      %v1184 = vpop.f32.mrf.mxu0
      %1185 = vmatprep.mubr.bf16.mxu0 0
      %1186 = vmatmul.mubr.bf16.gmra.mxu0 %v768
      %v1187 = vpop.f32.mrf.mxu0
      %v1188 = vadd.f32 %v1091, %v1187
      %v1189 = vpop.f32.mrf.mxu0
      %v1190 = vpop.f32.mrf.mxu0
      %v1191 = vadd.f32 %v1094, %v1190
      %v1192 = vpop.f32.mrf.mxu0
      %1193 = vmatprep.mubr.bf16.mxu0 0
      %1194 = vmatmul.mubr.bf16.gmra.mxu0 %v769
      %v1195 = vpop.f32.mrf.mxu0
      %v1196 = vadd.f32 %v1099, %v1195
      %v1197 = vpop.f32.mrf.mxu0
      %v1198 = vpop.f32.mrf.mxu0
      %v1199 = vadd.f32 %v1102, %v1198
      %v1200 = vpop.f32.mrf.mxu0
      %1201 = vmatprep.mubr.bf16.mxu0 0
      %1202 = vmatmul.mubr.bf16.gmra.mxu0 %v770
      %v1203 = vpop.f32.mrf.mxu0
      %v1204 = vadd.f32 %v1107, %v1203
      %v1205 = vpop.f32.mrf.mxu0
      %v1206 = vpop.f32.mrf.mxu0
      %v1207 = vadd.f32 %v1110, %v1206
      %v1208 = vpop.f32.mrf.mxu0
      %1209 = vmatprep.mubr.bf16.mxu0 0
      %1210 = vmatmul.mubr.bf16.gmra.mxu0 %v771
      %v1211 = vpop.f32.mrf.mxu0
      %v1212 = vadd.f32 %v1115, %v1211
      %v1213 = vpop.f32.mrf.mxu0
      %v1214 = vpop.f32.mrf.mxu0
      %v1215 = vadd.f32 %v1118, %v1214
      %v1216 = vpop.f32.mrf.mxu0
      %1217 = vmatprep.mubr.bf16.mxu0 0
      %1218 = vmatmul.mubr.bf16.gmra.mxu0 %v772
      %v1219 = vpop.f32.mrf.mxu0
      %v1220 = vadd.f32 %v1123, %v1219
      %v1221 = vpop.f32.mrf.mxu0
      %v1222 = vpop.f32.mrf.mxu0
      %v1223 = vadd.f32 %v1126, %v1222
      %v1224 = vpop.f32.mrf.mxu0
      %1225 = vmatprep.mubr.bf16.mxu0 0
      %1226 = vmatmul.mubr.bf16.gmra.mxu0 %v850
      %v1227 = vpop.f32.mrf.mxu0
      %v1228 = vadd.f32 %v1131, %v1227
      %v1229 = vpop.f32.mrf.mxu0
      %v1230 = vpop.f32.mrf.mxu0
      %v1231 = vadd.f32 %v1134, %v1230
      %v1232 = vpop.f32.mrf.mxu0
      %1233 = vmatprep.mubr.bf16.mxu0 0
      %1234 = vmatmul.mubr.bf16.gmra.mxu0 %v851
      %v1235 = vpop.f32.mrf.mxu0
      %v1236 = vadd.f32 %v1139, %v1235
      %v1237 = vpop.f32.mrf.mxu0
      %v1238 = vpop.f32.mrf.mxu0
      %v1239 = vadd.f32 %v1142, %v1238
      %v1240 = vpop.f32.mrf.mxu0
      %1241 = vdwg.mxu0
      %v1290 = vunpack.c.l.b16 %v779
      %v1291 = vunpack.c.l.b16 %v780
      %v1292 = vunpack.c.l.b16 %v781
      %v1293 = vunpack.c.l.b16 %v782
      %v1294 = vunpack.c.l.b16 %v783
      %v1295 = vunpack.c.l.b16 %v784
      %v1296 = vunpack.c.l.b16 %v785
      %v1297 = vunpack.c.l.b16 %v786
      %v1298 = vunpack.c.l.b16 %v787
      %v1299 = vunpack.c.l.b16 %v788
      %v1300 = vunpack.c.l.b16 %v789
      %v1301 = vunpack.c.l.b16 %v790
      %v1302 = vunpack.c.l.b16 %v791
      %v1303 = vunpack.c.l.b16 %v792
      %v1304 = vunpack.c.l.b16 %v793
      %v1305 = vunpack.c.l.b16 %v794
      %v1306 = vunpack.c.l.b16 %v795
      %v1307 = vunpack.c.l.b16 %v796
      %v1308 = vunpack.c.l.b16 %v797
      %v1309 = vunpack.c.l.b16 %v798
      %v1310 = vunpack.c.l.b16 %v799
      %v1311 = vunpack.c.l.b16 %v800
      %v1312 = vunpack.c.l.b16 %v801
      %v1313 = vunpack.c.l.b16 %v802
      %v1314 = vunpack.c.l.b16 %v803
      %v1315 = vunpack.c.l.b16 %v804
      %v1316 = vunpack.c.l.b16 %v805
      %v1317 = vunpack.c.l.b16 %v806
      %v1318 = vunpack.c.l.b16 %v807
      %v1319 = vunpack.c.l.b16 %v808
      %v1320 = vunpack.c.l.b16 %v809
      %v1321 = vunpack.c.l.b16 %v810
      %v1322 = vunpack.c.l.b16 %v811
      %v1323 = vunpack.c.l.b16 %v812
      %v1324 = vunpack.c.l.b16 %v813
      %v1325 = vunpack.c.l.b16 %v814
      %v1326 = vunpack.c.l.b16 %v815
      %v1327 = vunpack.c.l.b16 %v816
      %v1328 = vunpack.c.l.b16 %v817
      %v1329 = vunpack.c.l.b16 %v818
      %v1330 = vunpack.c.l.b16 %v819
      %v1331 = vunpack.c.l.b16 %v820
      %v1332 = vunpack.c.l.b16 %v821
      %v1333 = vunpack.c.l.b16 %v822
      %v1334 = vunpack.c.l.b16 %v823
      %v1335 = vunpack.c.l.b16 %v824
      %v1336 = vunpack.c.l.b16 %v825
      %v1337 = vunpack.c.l.b16 %v826
      %v1338 = vpack.c.b16 %v1291, %v1290
      %v1339 = vpack.c.b16 %v1293, %v1292
      %v1340 = vpack.c.b16 %v1295, %v1294
      %v1341 = vpack.c.b16 %v1297, %v1296
      %v1342 = vpack.c.b16 %v1299, %v1298
      %v1343 = vpack.c.b16 %v1301, %v1300
      %v1344 = vpack.c.b16 %v1303, %v1302
      %v1345 = vpack.c.b16 %v1305, %v1304
      %v1346 = vpack.c.b16 %v1307, %v1306
      %v1347 = vpack.c.b16 %v1309, %v1308
      %v1348 = vpack.c.b16 %v1311, %v1310
      %v1349 = vpack.c.b16 %v1313, %v1312
      %v1350 = vpack.c.b16 %v1315, %v1314
      %v1351 = vpack.c.b16 %v1317, %v1316
      %v1352 = vpack.c.b16 %v1319, %v1318
      %v1353 = vpack.c.b16 %v1321, %v1320
      %v1354 = vpack.c.b16 %v1323, %v1322
      %v1355 = vpack.c.b16 %v1325, %v1324
      %v1356 = vpack.c.b16 %v1327, %v1326
      %v1357 = vpack.c.b16 %v1329, %v1328
      %v1358 = vpack.c.b16 %v1331, %v1330
      %v1359 = vpack.c.b16 %v1333, %v1332
      %v1360 = vpack.c.b16 %v1335, %v1334
      %v1361 = vpack.c.b16 %v1337, %v1336
      %1386 = vmatprep.subr.bf16.mxu0 0
      %1387 = vmatpush1.bf16.msra.mxu0 %v1345
      %1388 = vmatprep.subr.bf16.mxu0 0
      %1389 = vmatpush1.bf16.msra.mxu0 %v1344
      %1390 = vmatprep.subr.bf16.mxu0 0
      %1391 = vmatpush1.bf16.msra.mxu0 %v1343
      %1392 = vmatprep.subr.bf16.mxu0 0
      %1393 = vmatpush1.bf16.msra.mxu0 %v1342
      %1394 = vmatprep.subr.bf16.mxu0 0
      %1395 = vmatpush1.bf16.msra.mxu0 %v1341
      %1396 = vmatprep.subr.bf16.mxu0 0
      %1397 = vmatpush1.bf16.msra.mxu0 %v1340
      %1398 = vmatprep.subr.bf16.mxu0 0
      %1399 = vmatpush1.bf16.msra.mxu0 %v1339
      %1400 = vmatprep.subr.bf16.mxu0 0
      %1401 = vmatpush1.bf16.msra.mxu0 %v1338
      %1402 = vmatprep.subr.bf16.mxu0 0
      %1403 = vmatpush2.bf16.msra.mxu0 %v1353
      %1404 = vmatprep.subr.bf16.mxu0 0
      %1405 = vmatpush2.bf16.msra.mxu0 %v1352
      %1406 = vmatprep.subr.bf16.mxu0 0
      %1407 = vmatpush2.bf16.msra.mxu0 %v1351
      %1408 = vmatprep.subr.bf16.mxu0 0
      %1409 = vmatpush2.bf16.msra.mxu0 %v1350
      %1410 = vmatprep.subr.bf16.mxu0 0
      %1411 = vmatpush2.bf16.msra.mxu0 %v1349
      %1412 = vmatprep.subr.bf16.mxu0 0
      %1413 = vmatpush2.bf16.msra.mxu0 %v1348
      %1414 = vmatprep.subr.bf16.mxu0 0
      %1415 = vmatpush2.bf16.msra.mxu0 %v1347
      %1416 = vmatprep.subr.bf16.mxu0 0
      %1417 = vmatpush2.bf16.msra.mxu0 %v1346
      %1418 = vmatprep.mubr.bf16.mxu0 %v758
      %1419 = vmatmul.mubr.bf16.gmra.mxu0 %v750
      %v1420 = vpop.f32.mrf.mxu0
      %v1421 = vadd.f32 %v1180, %v1420
      %v1422 = vpop.f32.mrf.mxu0
      %v1423 = vpop.f32.mrf.mxu0
      %v1424 = vadd.f32 %v1183, %v1423
      %v1425 = vpop.f32.mrf.mxu0
      %1426 = vmatprep.mubr.bf16.mxu0 %v759
      %1427 = vmatmul.mubr.bf16.gmra.mxu0 %v751
      %v1428 = vpop.f32.mrf.mxu0
      %v1429 = vadd.f32 %v1188, %v1428
      %v1430 = vpop.f32.mrf.mxu0
      %v1431 = vpop.f32.mrf.mxu0
      %v1432 = vadd.f32 %v1191, %v1431
      %v1433 = vpop.f32.mrf.mxu0
      %1434 = vmatprep.mubr.bf16.mxu0 %v760
      %1435 = vmatmul.mubr.bf16.gmra.mxu0 %v752
      %v1436 = vpop.f32.mrf.mxu0
      %v1437 = vadd.f32 %v1196, %v1436
      %v1438 = vpop.f32.mrf.mxu0
      %v1439 = vpop.f32.mrf.mxu0
      %v1440 = vadd.f32 %v1199, %v1439
      %v1441 = vpop.f32.mrf.mxu0
      %1442 = vmatprep.mubr.bf16.mxu0 %v761
      %1443 = vmatmul.mubr.bf16.gmra.mxu0 %v753
      %v1444 = vpop.f32.mrf.mxu0
      %v1445 = vadd.f32 %v1204, %v1444
      %v1446 = vpop.f32.mrf.mxu0
      %v1447 = vpop.f32.mrf.mxu0
      %v1448 = vadd.f32 %v1207, %v1447
      %v1449 = vpop.f32.mrf.mxu0
      %1450 = vmatprep.mubr.bf16.mxu0 %v762
      %1451 = vmatmul.mubr.bf16.gmra.mxu0 %v754
      %v1452 = vpop.f32.mrf.mxu0
      %v1453 = vadd.f32 %v1212, %v1452
      %v1454 = vpop.f32.mrf.mxu0
      %v1455 = vpop.f32.mrf.mxu0
      %v1456 = vadd.f32 %v1215, %v1455
      %v1457 = vpop.f32.mrf.mxu0
      %1458 = vmatprep.mubr.bf16.mxu0 %v763
      %1459 = vmatmul.mubr.bf16.gmra.mxu0 %v755
      %v1460 = vpop.f32.mrf.mxu0
      %v1461 = vadd.f32 %v1220, %v1460
      %v1462 = vpop.f32.mrf.mxu0
      %v1463 = vpop.f32.mrf.mxu0
      %v1464 = vadd.f32 %v1223, %v1463
      %v1465 = vpop.f32.mrf.mxu0
      %1466 = vmatprep.mubr.bf16.mxu0 %v764
      %1467 = vmatmul.mubr.bf16.gmra.mxu0 %v756
      %v1468 = vpop.f32.mrf.mxu0
      %v1469 = vadd.f32 %v1228, %v1468
      %v1470 = vpop.f32.mrf.mxu0
      %v1471 = vpop.f32.mrf.mxu0
      %v1472 = vadd.f32 %v1231, %v1471
      %v1473 = vpop.f32.mrf.mxu0
      %1474 = vmatprep.mubr.bf16.mxu0 %v765
      %1475 = vmatmul.mubr.bf16.gmra.mxu0 %v757
      %v1476 = vpop.f32.mrf.mxu0
      %v1477 = vadd.f32 %v1236, %v1476
      %v1478 = vpop.f32.mrf.mxu0
      %v1479 = vpop.f32.mrf.mxu0
      %v1480 = vadd.f32 %v1239, %v1479
      %v1481 = vpop.f32.mrf.mxu0
      %1482 = vdwg.mxu0
      %1483 = vmatprep.subr.bf16.mxu0 0
      %1484 = vmatpush1.bf16.msra.mxu0 %v1361
      %1485 = vmatprep.subr.bf16.mxu0 0
      %1486 = vmatpush1.bf16.msra.mxu0 %v1360
      %1487 = vmatprep.subr.bf16.mxu0 0
      %1488 = vmatpush1.bf16.msra.mxu0 %v1359
      %1489 = vmatprep.subr.bf16.mxu0 0
      %1490 = vmatpush1.bf16.msra.mxu0 %v1358
      %1491 = vmatprep.subr.bf16.mxu0 0
      %1492 = vmatpush1.bf16.msra.mxu0 %v1357
      %1493 = vmatprep.subr.bf16.mxu0 0
      %1494 = vmatpush1.bf16.msra.mxu0 %v1356
      %1495 = vmatprep.subr.bf16.mxu0 0
      %1496 = vmatpush1.bf16.msra.mxu0 %v1355
      %1497 = vmatprep.subr.bf16.mxu0 0
      %1498 = vmatpush1.bf16.msra.mxu0 %v1354
      %1499 = vmatprep.subr.bf16.mxu0 0
      %1500 = vmatpush2.bf16.msra.mxu0 0
      %1501 = vmatprep.subr.bf16.mxu0 0
      %1502 = vmatpush2.bf16.msra.mxu0 0
      %1503 = vmatprep.subr.bf16.mxu0 0
      %1504 = vmatpush2.bf16.msra.mxu0 0
      %1505 = vmatprep.subr.bf16.mxu0 0
      %1506 = vmatpush2.bf16.msra.mxu0 0
      %1507 = vmatprep.subr.bf16.mxu0 0
      %1508 = vmatpush2.bf16.msra.mxu0 0
      %1509 = vmatprep.subr.bf16.mxu0 0
      %1510 = vmatpush2.bf16.msra.mxu0 0
      %1511 = vmatprep.subr.bf16.mxu0 0
      %1512 = vmatpush2.bf16.msra.mxu0 0
      %1513 = vmatprep.subr.bf16.mxu0 0
      %1514 = vmatpush2.bf16.msra.mxu0 0
      %1515 = vmatprep.mubr.bf16.mxu0 0
      %1516 = vmatmul.mubr.bf16.gmra.mxu0 %v766
      %v1517 = vpop.f32.mrf.mxu0
      %v1518 = vadd.f32 %v1421, %v1517
      %v1519 = vpop.f32.mrf.mxu0
      %v1520 = vpop.f32.mrf.mxu0
      %v1521 = vadd.f32 %v1424, %v1520
      %v1522 = vpop.f32.mrf.mxu0
      %1523 = vmatprep.mubr.bf16.mxu0 0
      %1524 = vmatmul.mubr.bf16.gmra.mxu0 %v767
      %v1525 = vpop.f32.mrf.mxu0
      %v1526 = vadd.f32 %v1429, %v1525
      %v1527 = vpop.f32.mrf.mxu0
      %v1528 = vpop.f32.mrf.mxu0
      %v1529 = vadd.f32 %v1432, %v1528
      %v1530 = vpop.f32.mrf.mxu0
      %1531 = vmatprep.mubr.bf16.mxu0 0
      %1532 = vmatmul.mubr.bf16.gmra.mxu0 %v768
      %v1533 = vpop.f32.mrf.mxu0
      %v1534 = vadd.f32 %v1437, %v1533
      %v1535 = vpop.f32.mrf.mxu0
      %v1536 = vpop.f32.mrf.mxu0
      %v1537 = vadd.f32 %v1440, %v1536
      %v1538 = vpop.f32.mrf.mxu0
      %1539 = vmatprep.mubr.bf16.mxu0 0
      %1540 = vmatmul.mubr.bf16.gmra.mxu0 %v769
      %v1541 = vpop.f32.mrf.mxu0
      %v1542 = vadd.f32 %v1445, %v1541
      %v1543 = vpop.f32.mrf.mxu0
      %v1544 = vpop.f32.mrf.mxu0
      %v1545 = vadd.f32 %v1448, %v1544
      %v1546 = vpop.f32.mrf.mxu0
      %1547 = vmatprep.mubr.bf16.mxu0 0
      %1548 = vmatmul.mubr.bf16.gmra.mxu0 %v770
      %v1549 = vpop.f32.mrf.mxu0
      %v1550 = vadd.f32 %v1453, %v1549
      %v1551 = vpop.f32.mrf.mxu0
      %v1552 = vpop.f32.mrf.mxu0
      %v1553 = vadd.f32 %v1456, %v1552
      %v1554 = vpop.f32.mrf.mxu0
      %1555 = vmatprep.mubr.bf16.mxu0 0
      %1556 = vmatmul.mubr.bf16.gmra.mxu0 %v771
      %v1557 = vpop.f32.mrf.mxu0
      %v1558 = vadd.f32 %v1461, %v1557
      %v1559 = vpop.f32.mrf.mxu0
      %v1560 = vpop.f32.mrf.mxu0
      %v1561 = vadd.f32 %v1464, %v1560
      %v1562 = vpop.f32.mrf.mxu0
      %1563 = vmatprep.mubr.bf16.mxu0 0
      %1564 = vmatmul.mubr.bf16.gmra.mxu0 %v772
      %v1565 = vpop.f32.mrf.mxu0
      %v1566 = vadd.f32 %v1469, %v1565
      %v1567 = vpop.f32.mrf.mxu0
      %v1568 = vpop.f32.mrf.mxu0
      %v1569 = vadd.f32 %v1472, %v1568
      %v1570 = vpop.f32.mrf.mxu0
      %1571 = vmatprep.mubr.bf16.mxu0 0
      %1572 = vmatmul.mubr.bf16.gmra.mxu0 %v773
      %v1573 = vpop.f32.mrf.mxu0
      %v1574 = vadd.f32 %v1477, %v1573
      %v1575 = vpop.f32.mrf.mxu0
      %v1576 = vpop.f32.mrf.mxu0
      %v1577 = vadd.f32 %v1480, %v1576
      %v1578 = vpop.f32.mrf.mxu0
      %1579 = vdwg.mxu0
      %v1580 = vrot.slane %v635, 7
      %v1581 = vrot.slane %v636, 7
      %v1582 = vsel %vm660, %v1580, %v1581
      %v1583 = vsel %vm660, %v828, %v1580
      %v1584 = vsel %vm660, %v1581, %v648
      %v1585 = vrot.slane %v635, 1
      %v1586 = vrot.slane %v636, 1
      %v1587 = vsel %vm693, %v1585, %v1586
      %v1588 = vsel %vm693, %v833, %v1585
      %v1589 = vsel %vm693, %v1586, %v681
      %v1590 = vsel %vm712, %v704, %v1584
      %v1591 = vsel %vm713, %v1588, %v829
      %v1592 = vsel %vm712, %v1587, %v1583
      %v1593 = vsel %vm713, %v1589, %v1582
      %v1594 = vsel %vm732, %v1584, %v704
      %v1595 = vsel %vm733, %v829, %v1588
      %v1596 = vsel %vm732, %v1583, %v1587
      %v1597 = vsel %vm733, %v1582, %v1589
      %v1598 = vpack.c.bf16 %v719, %v1590
      %v1599 = vpack.c.bf16 %v1591, %v839
      %v1600 = vpack.c.bf16 %v1593, %v1592
      %v1601 = vpack.c.bf16 %v636, %v635
      %v1602 = vpack.c.bf16 %v739, %v1594
      %v1603 = vpack.c.bf16 %v1595, %v843
      %v1604 = vpack.c.bf16 %v1597, %v1596
      %s1605 = sadd.s32 %s774, 96
      %s1606 = sadd.s32 %s1605, %s775
      %s1607 = smul.addr %s1606, 4
      %s1608 = scalar_lea.vmem %s3, %s1607
      %v1609 = vld [vmem:[%s1608] sm:$0xf]
      %v1610 = vld [vmem:[%s1608 + $0x4] sm:$0xf]
      %v1611 = vld [vmem:[%s1608 + $0x8] sm:$0xf]
      %v1612 = vld [vmem:[%s1608 + $0xc] sm:$0xf]
      %v1613 = vld [vmem:[%s1608 + $0x10] sm:$0xf]
      %v1614 = vld [vmem:[%s1608 + $0x14] sm:$0xf]
      %v1615 = vld [vmem:[%s1608 + $0x18] sm:$0xf]
      %v1616 = vld [vmem:[%s1608 + $0x1c] sm:$0xf]
      %v1617 = vld [vmem:[%s1608 + $0x20] sm:$0xf]
      %v1618 = vld [vmem:[%s1608 + $0x24] sm:$0xf]
      %v1619 = vld [vmem:[%s1608 + $0x28] sm:$0xf]
      %v1620 = vld [vmem:[%s1608 + $0x2c] sm:$0xf]
      %v1621 = vld [vmem:[%s1608 + $0x30] sm:$0xf]
      %v1622 = vld [vmem:[%s1608 + $0x34] sm:$0xf]
      %v1623 = vld [vmem:[%s1608 + $0x38] sm:$0xf]
      %v1624 = vld [vmem:[%s1608 + $0x3c] sm:$0xf]
      %v1625 = vld [vmem:[%s1608 + $0x40] sm:$0xf]
      %v1626 = vld [vmem:[%s1608 + $0x44] sm:$0xf]
      %v1627 = vld [vmem:[%s1608 + $0x48] sm:$0xf]
      %v1628 = vld [vmem:[%s1608 + $0x4c] sm:$0xf]
      %v1629 = vld [vmem:[%s1608 + $0x50] sm:$0xf]
      %v1630 = vld [vmem:[%s1608 + $0x54] sm:$0xf]
      %v1631 = vld [vmem:[%s1608 + $0x58] sm:$0xf]
      %v1632 = vld [vmem:[%s1608 + $0x5c] sm:$0xf]
      %v1633 = vld [vmem:[%s1608 + $0x60] sm:$0xf]
      %v1634 = vld [vmem:[%s1608 + $0x64] sm:$0xf]
      %v1635 = vld [vmem:[%s1608 + $0x68] sm:$0xf]
      %v1636 = vld [vmem:[%s1608 + $0x6c] sm:$0xf]
      %v1637 = vld [vmem:[%s1608 + $0x70] sm:$0xf]
      %v1638 = vld [vmem:[%s1608 + $0x74] sm:$0xf]
      %v1639 = vld [vmem:[%s1608 + $0x78] sm:$0xf]
      %v1640 = vld [vmem:[%s1608 + $0x7c] sm:$0xf]
      %v1641 = vld [vmem:[%s1608 + $0x80] sm:$0xf]
      %v1642 = vld [vmem:[%s1608 + $0x84] sm:$0xf]
      %v1643 = vld [vmem:[%s1608 + $0x88] sm:$0xf]
      %v1644 = vld [vmem:[%s1608 + $0x8c] sm:$0xf]
      %v1645 = vld [vmem:[%s1608 + $0x90] sm:$0xf]
      %v1646 = vld [vmem:[%s1608 + $0x94] sm:$0xf]
      %v1647 = vld [vmem:[%s1608 + $0x98] sm:$0xf]
      %v1648 = vld [vmem:[%s1608 + $0x9c] sm:$0xf]
      %v1649 = vld [vmem:[%s1608 + $0xa0] sm:$0xf]
      %v1650 = vld [vmem:[%s1608 + $0xa4] sm:$0xf]
      %v1651 = vld [vmem:[%s1608 + $0xa8] sm:$0xf]
      %v1652 = vld [vmem:[%s1608 + $0xac] sm:$0xf]
      %v1653 = vld [vmem:[%s1608 + $0xb0] sm:$0xf]
      %v1654 = vld [vmem:[%s1608 + $0xb4] sm:$0xf]
      %v1655 = vld [vmem:[%s1608 + $0xb8] sm:$0xf]
      %v1656 = vld [vmem:[%s1608 + $0xbc] sm:$0xf]
      %v1705 = vunpack.c.l.b16 %v1609
      %v1706 = vunpack.c.l.b16 %v1610
      %v1707 = vunpack.c.l.b16 %v1611
      %v1708 = vunpack.c.l.b16 %v1612
      %v1709 = vunpack.c.l.b16 %v1613
      %v1710 = vunpack.c.l.b16 %v1614
      %v1711 = vunpack.c.l.b16 %v1615
      %v1712 = vunpack.c.l.b16 %v1616
      %v1713 = vunpack.c.l.b16 %v1617
      %v1714 = vunpack.c.l.b16 %v1618
      %v1715 = vunpack.c.l.b16 %v1619
      %v1716 = vunpack.c.l.b16 %v1620
      %v1717 = vunpack.c.l.b16 %v1621
      %v1718 = vunpack.c.l.b16 %v1622
      %v1719 = vunpack.c.l.b16 %v1623
      %v1720 = vunpack.c.l.b16 %v1624
      %v1721 = vunpack.c.l.b16 %v1625
      %v1722 = vunpack.c.l.b16 %v1626
      %v1723 = vunpack.c.l.b16 %v1627
      %v1724 = vunpack.c.l.b16 %v1628
      %v1725 = vunpack.c.l.b16 %v1629
      %v1726 = vunpack.c.l.b16 %v1630
      %v1727 = vunpack.c.l.b16 %v1631
      %v1728 = vunpack.c.l.b16 %v1632
      %v1729 = vunpack.c.l.b16 %v1633
      %v1730 = vunpack.c.l.b16 %v1634
      %v1731 = vunpack.c.l.b16 %v1635
      %v1732 = vunpack.c.l.b16 %v1636
      %v1733 = vunpack.c.l.b16 %v1637
      %v1734 = vunpack.c.l.b16 %v1638
      %v1735 = vunpack.c.l.b16 %v1639
      %v1736 = vunpack.c.l.b16 %v1640
      %v1737 = vunpack.c.l.b16 %v1641
      %v1738 = vunpack.c.l.b16 %v1642
      %v1739 = vunpack.c.l.b16 %v1643
      %v1740 = vunpack.c.l.b16 %v1644
      %v1741 = vunpack.c.l.b16 %v1645
      %v1742 = vunpack.c.l.b16 %v1646
      %v1743 = vunpack.c.l.b16 %v1647
      %v1744 = vunpack.c.l.b16 %v1648
      %v1745 = vunpack.c.l.b16 %v1649
      %v1746 = vunpack.c.l.b16 %v1650
      %v1747 = vunpack.c.l.b16 %v1651
      %v1748 = vunpack.c.l.b16 %v1652
      %v1749 = vunpack.c.l.b16 %v1653
      %v1750 = vunpack.c.l.b16 %v1654
      %v1751 = vunpack.c.l.b16 %v1655
      %v1752 = vunpack.c.l.b16 %v1656
      %v1753 = vpack.c.b16 %v1706, %v1705
      %v1754 = vpack.c.b16 %v1708, %v1707
      %v1755 = vpack.c.b16 %v1710, %v1709
      %v1756 = vpack.c.b16 %v1712, %v1711
      %v1757 = vpack.c.b16 %v1714, %v1713
      %v1758 = vpack.c.b16 %v1716, %v1715
      %v1759 = vpack.c.b16 %v1718, %v1717
      %v1760 = vpack.c.b16 %v1720, %v1719
      %v1761 = vpack.c.b16 %v1722, %v1721
      %v1762 = vpack.c.b16 %v1724, %v1723
      %v1763 = vpack.c.b16 %v1726, %v1725
      %v1764 = vpack.c.b16 %v1728, %v1727
      %v1765 = vpack.c.b16 %v1730, %v1729
      %v1766 = vpack.c.b16 %v1732, %v1731
      %v1767 = vpack.c.b16 %v1734, %v1733
      %v1768 = vpack.c.b16 %v1736, %v1735
      %v1769 = vpack.c.b16 %v1738, %v1737
      %v1770 = vpack.c.b16 %v1740, %v1739
      %v1771 = vpack.c.b16 %v1742, %v1741
      %v1772 = vpack.c.b16 %v1744, %v1743
      %v1773 = vpack.c.b16 %v1746, %v1745
      %v1774 = vpack.c.b16 %v1748, %v1747
      %v1775 = vpack.c.b16 %v1750, %v1749
      %v1776 = vpack.c.b16 %v1752, %v1751
      %1801 = vmatprep.subr.bf16.mxu0 0
      %1802 = vmatpush1.bf16.msra.mxu0 %v1760
      %1803 = vmatprep.subr.bf16.mxu0 0
      %1804 = vmatpush1.bf16.msra.mxu0 %v1759
      %1805 = vmatprep.subr.bf16.mxu0 0
      %1806 = vmatpush1.bf16.msra.mxu0 %v1758
      %1807 = vmatprep.subr.bf16.mxu0 0
      %1808 = vmatpush1.bf16.msra.mxu0 %v1757
      %1809 = vmatprep.subr.bf16.mxu0 0
      %1810 = vmatpush1.bf16.msra.mxu0 %v1756
      %1811 = vmatprep.subr.bf16.mxu0 0
      %1812 = vmatpush1.bf16.msra.mxu0 %v1755
      %1813 = vmatprep.subr.bf16.mxu0 0
      %1814 = vmatpush1.bf16.msra.mxu0 %v1754
      %1815 = vmatprep.subr.bf16.mxu0 0
      %1816 = vmatpush1.bf16.msra.mxu0 %v1753
      %1817 = vmatprep.subr.bf16.mxu0 0
      %1818 = vmatpush2.bf16.msra.mxu0 %v1768
      %1819 = vmatprep.subr.bf16.mxu0 0
      %1820 = vmatpush2.bf16.msra.mxu0 %v1767
      %1821 = vmatprep.subr.bf16.mxu0 0
      %1822 = vmatpush2.bf16.msra.mxu0 %v1766
      %1823 = vmatprep.subr.bf16.mxu0 0
      %1824 = vmatpush2.bf16.msra.mxu0 %v1765
      %1825 = vmatprep.subr.bf16.mxu0 0
      %1826 = vmatpush2.bf16.msra.mxu0 %v1764
      %1827 = vmatprep.subr.bf16.mxu0 0
      %1828 = vmatpush2.bf16.msra.mxu0 %v1763
      %1829 = vmatprep.subr.bf16.mxu0 0
      %1830 = vmatpush2.bf16.msra.mxu0 %v1762
      %1831 = vmatprep.subr.bf16.mxu0 0
      %1832 = vmatpush2.bf16.msra.mxu0 %v1761
      %1833 = vmatprep.mubr.bf16.mxu0 %v760
      %1834 = vmatmul.mubr.bf16.gmra.mxu0 %v1598
      %v1835 = vpop.f32.mrf.mxu0
      %v1836 = vadd.f32 0.0, %v1835
      %v1837 = vpop.f32.mrf.mxu0
      %v1838 = vpop.f32.mrf.mxu0
      %v1839 = vadd.f32 0.0, %v1838
      %v1840 = vpop.f32.mrf.mxu0
      %1841 = vmatprep.mubr.bf16.mxu0 %v761
      %1842 = vmatmul.mubr.bf16.gmra.mxu0 %v753
      %v1843 = vpop.f32.mrf.mxu0
      %v1844 = vadd.f32 0.0, %v1843
      %v1845 = vpop.f32.mrf.mxu0
      %v1846 = vpop.f32.mrf.mxu0
      %v1847 = vadd.f32 0.0, %v1846
      %v1848 = vpop.f32.mrf.mxu0
      %1849 = vmatprep.mubr.bf16.mxu0 %v762
      %1850 = vmatmul.mubr.bf16.gmra.mxu0 %v754
      %v1851 = vpop.f32.mrf.mxu0
      %v1852 = vadd.f32 0.0, %v1851
      %v1853 = vpop.f32.mrf.mxu0
      %v1854 = vpop.f32.mrf.mxu0
      %v1855 = vadd.f32 0.0, %v1854
      %v1856 = vpop.f32.mrf.mxu0
      %1857 = vmatprep.mubr.bf16.mxu0 %v763
      %1858 = vmatmul.mubr.bf16.gmra.mxu0 %v755
      %v1859 = vpop.f32.mrf.mxu0
      %v1860 = vadd.f32 0.0, %v1859
      %v1861 = vpop.f32.mrf.mxu0
      %v1862 = vpop.f32.mrf.mxu0
      %v1863 = vadd.f32 0.0, %v1862
      %v1864 = vpop.f32.mrf.mxu0
      %1865 = vmatprep.mubr.bf16.mxu0 %v764
      %1866 = vmatmul.mubr.bf16.gmra.mxu0 %v756
      %v1867 = vpop.f32.mrf.mxu0
      %v1868 = vadd.f32 0.0, %v1867
      %v1869 = vpop.f32.mrf.mxu0
      %v1870 = vpop.f32.mrf.mxu0
      %v1871 = vadd.f32 0.0, %v1870
      %v1872 = vpop.f32.mrf.mxu0
      %1873 = vmatprep.mubr.bf16.mxu0 %v765
      %1874 = vmatmul.mubr.bf16.gmra.mxu0 %v846
      %v1875 = vpop.f32.mrf.mxu0
      %v1876 = vadd.f32 0.0, %v1875
      %v1877 = vpop.f32.mrf.mxu0
      %v1878 = vpop.f32.mrf.mxu0
      %v1879 = vadd.f32 0.0, %v1878
      %v1880 = vpop.f32.mrf.mxu0
      %1881 = vmatprep.mubr.bf16.mxu0 %v848
      %1882 = vmatmul.mubr.bf16.gmra.mxu0 %v1599
      %v1883 = vpop.f32.mrf.mxu0
      %v1884 = vadd.f32 0.0, %v1883
      %v1885 = vpop.f32.mrf.mxu0
      %v1886 = vpop.f32.mrf.mxu0
      %v1887 = vadd.f32 0.0, %v1886
      %v1888 = vpop.f32.mrf.mxu0
      %1889 = vmatprep.mubr.bf16.mxu0 %v1601
      %1890 = vmatmul.mubr.bf16.gmra.mxu0 %v1600
      %v1891 = vpop.f32.mrf.mxu0
      %v1892 = vadd.f32 0.0, %v1891
      %v1893 = vpop.f32.mrf.mxu0
      %v1894 = vpop.f32.mrf.mxu0
      %v1895 = vadd.f32 0.0, %v1894
      %v1896 = vpop.f32.mrf.mxu0
      %1897 = vdwg.mxu0
      %1898 = vmatprep.subr.bf16.mxu0 0
      %1899 = vmatpush1.bf16.msra.mxu0 %v1776
      %1900 = vmatprep.subr.bf16.mxu0 0
      %1901 = vmatpush1.bf16.msra.mxu0 %v1775
      %1902 = vmatprep.subr.bf16.mxu0 0
      %1903 = vmatpush1.bf16.msra.mxu0 %v1774
      %1904 = vmatprep.subr.bf16.mxu0 0
      %1905 = vmatpush1.bf16.msra.mxu0 %v1773
      %1906 = vmatprep.subr.bf16.mxu0 0
      %1907 = vmatpush1.bf16.msra.mxu0 %v1772
      %1908 = vmatprep.subr.bf16.mxu0 0
      %1909 = vmatpush1.bf16.msra.mxu0 %v1771
      %1910 = vmatprep.subr.bf16.mxu0 0
      %1911 = vmatpush1.bf16.msra.mxu0 %v1770
      %1912 = vmatprep.subr.bf16.mxu0 0
      %1913 = vmatpush1.bf16.msra.mxu0 %v1769
      %1914 = vmatprep.subr.bf16.mxu0 0
      %1915 = vmatpush2.bf16.msra.mxu0 0
      %1916 = vmatprep.subr.bf16.mxu0 0
      %1917 = vmatpush2.bf16.msra.mxu0 0
      %1918 = vmatprep.subr.bf16.mxu0 0
      %1919 = vmatpush2.bf16.msra.mxu0 0
      %1920 = vmatprep.subr.bf16.mxu0 0
      %1921 = vmatpush2.bf16.msra.mxu0 0
      %1922 = vmatprep.subr.bf16.mxu0 0
      %1923 = vmatpush2.bf16.msra.mxu0 0
      %1924 = vmatprep.subr.bf16.mxu0 0
      %1925 = vmatpush2.bf16.msra.mxu0 0
      %1926 = vmatprep.subr.bf16.mxu0 0
      %1927 = vmatpush2.bf16.msra.mxu0 0
      %1928 = vmatprep.subr.bf16.mxu0 0
      %1929 = vmatpush2.bf16.msra.mxu0 0
      %1930 = vmatprep.mubr.bf16.mxu0 0
      %1931 = vmatmul.mubr.bf16.gmra.mxu0 %v1602
      %v1932 = vpop.f32.mrf.mxu0
      %v1933 = vadd.f32 %v1836, %v1932
      %v1934 = vpop.f32.mrf.mxu0
      %v1935 = vpop.f32.mrf.mxu0
      %v1936 = vadd.f32 %v1839, %v1935
      %v1937 = vpop.f32.mrf.mxu0
      %1938 = vmatprep.mubr.bf16.mxu0 0
      %1939 = vmatmul.mubr.bf16.gmra.mxu0 %v769
      %v1940 = vpop.f32.mrf.mxu0
      %v1941 = vadd.f32 %v1844, %v1940
      %v1942 = vpop.f32.mrf.mxu0
      %v1943 = vpop.f32.mrf.mxu0
      %v1944 = vadd.f32 %v1847, %v1943
      %v1945 = vpop.f32.mrf.mxu0
      %1946 = vmatprep.mubr.bf16.mxu0 0
      %1947 = vmatmul.mubr.bf16.gmra.mxu0 %v770
      %v1948 = vpop.f32.mrf.mxu0
      %v1949 = vadd.f32 %v1852, %v1948
      %v1950 = vpop.f32.mrf.mxu0
      %v1951 = vpop.f32.mrf.mxu0
      %v1952 = vadd.f32 %v1855, %v1951
      %v1953 = vpop.f32.mrf.mxu0
      %1954 = vmatprep.mubr.bf16.mxu0 0
      %1955 = vmatmul.mubr.bf16.gmra.mxu0 %v771
      %v1956 = vpop.f32.mrf.mxu0
      %v1957 = vadd.f32 %v1860, %v1956
      %v1958 = vpop.f32.mrf.mxu0
      %v1959 = vpop.f32.mrf.mxu0
      %v1960 = vadd.f32 %v1863, %v1959
      %v1961 = vpop.f32.mrf.mxu0
      %1962 = vmatprep.mubr.bf16.mxu0 0
      %1963 = vmatmul.mubr.bf16.gmra.mxu0 %v772
      %v1964 = vpop.f32.mrf.mxu0
      %v1965 = vadd.f32 %v1868, %v1964
      %v1966 = vpop.f32.mrf.mxu0
      %v1967 = vpop.f32.mrf.mxu0
      %v1968 = vadd.f32 %v1871, %v1967
      %v1969 = vpop.f32.mrf.mxu0
      %1970 = vmatprep.mubr.bf16.mxu0 0
      %1971 = vmatmul.mubr.bf16.gmra.mxu0 %v850
      %v1972 = vpop.f32.mrf.mxu0
      %v1973 = vadd.f32 %v1876, %v1972
      %v1974 = vpop.f32.mrf.mxu0
      %v1975 = vpop.f32.mrf.mxu0
      %v1976 = vadd.f32 %v1879, %v1975
      %v1977 = vpop.f32.mrf.mxu0
      %1978 = vmatprep.mubr.bf16.mxu0 0
      %1979 = vmatmul.mubr.bf16.gmra.mxu0 %v1603
      %v1980 = vpop.f32.mrf.mxu0
      %v1981 = vadd.f32 %v1884, %v1980
      %v1982 = vpop.f32.mrf.mxu0
      %v1983 = vpop.f32.mrf.mxu0
      %v1984 = vadd.f32 %v1887, %v1983
      %v1985 = vpop.f32.mrf.mxu0
      %1986 = vmatprep.mubr.bf16.mxu0 0
      %1987 = vmatmul.mubr.bf16.gmra.mxu0 %v1604
      %v1988 = vpop.f32.mrf.mxu0
      %v1989 = vadd.f32 %v1892, %v1988
      %v1990 = vpop.f32.mrf.mxu0
      %v1991 = vpop.f32.mrf.mxu0
      %v1992 = vadd.f32 %v1895, %v1991
      %v1993 = vpop.f32.mrf.mxu0
      %1994 = vdwg.mxu0
      %v1995 = vadd.f32 %v1518, %v1933
      %v1996 = vadd.f32 %v1521, %v1936
      %v1997 = vadd.f32 %v1526, %v1941
      %v1998 = vadd.f32 %v1529, %v1944
      %v1999 = vadd.f32 %v1534, %v1949
      %v2000 = vadd.f32 %v1537, %v1952
      %v2001 = vadd.f32 %v1542, %v1957
      %v2002 = vadd.f32 %v1545, %v1960
      %v2003 = vadd.f32 %v1550, %v1965
      %v2004 = vadd.f32 %v1553, %v1968
      %v2005 = vadd.f32 %v1558, %v1973
      %v2006 = vadd.f32 %v1561, %v1976
      %v2007 = vadd.f32 %v1566, %v1981
      %v2008 = vadd.f32 %v1569, %v1984
      %v2009 = vadd.f32 %v1574, %v1989
      %v2010 = vadd.f32 %v1577, %v1992
      %v2011 = vld [vmem:[%s542] sm:$0x1]
      %v2012 = vld [vmem:[%s552] sm:$0xf]
      %v2013 = vld [vmem:[%s552 + $0x4] sm:$0xf]
      %v2014 = vld [vmem:[%s552 + $0x8] sm:$0xf]
      %v2015 = vld [vmem:[%s552 + $0xc] sm:$0xf]
      %v2016 = vld [vmem:[%s552 + $0x10] sm:$0xf]
      %v2017 = vld [vmem:[%s552 + $0x14] sm:$0xf]
      %v2018 = vld [vmem:[%s552 + $0x18] sm:$0xf]
      %v2019 = vld [vmem:[%s552 + $0x1c] sm:$0xf]
      %v2020 = vld [vmem:[%s552 + $0x20] sm:$0xf]
      %v2021 = vld [vmem:[%s552 + $0x24] sm:$0xf]
      %v2022 = vld [vmem:[%s552 + $0x28] sm:$0xf]
      %v2023 = vld [vmem:[%s552 + $0x2c] sm:$0xf]
      %v2024 = vld [vmem:[%s552 + $0x30] sm:$0xf]
      %v2025 = vld [vmem:[%s552 + $0x34] sm:$0xf]
      %v2026 = vld [vmem:[%s552 + $0x38] sm:$0xf]
      %v2027 = vld [vmem:[%s552 + $0x3c] sm:$0xf]
      %v2028 = vld [vmem:[%s557] sm:$0xf]
      %v2029 = vld [vmem:[%s557 + $0x4] sm:$0xf]
      %v2030 = vld [vmem:[%s557 + $0x8] sm:$0xf]
      %v2031 = vld [vmem:[%s557 + $0xc] sm:$0xf]
      %v2032 = vld [vmem:[%s557 + $0x10] sm:$0xf]
      %v2033 = vld [vmem:[%s557 + $0x14] sm:$0xf]
      %v2034 = vld [vmem:[%s557 + $0x18] sm:$0xf]
      %v2035 = vld [vmem:[%s557 + $0x1c] sm:$0xf]
      %v2036 = vld [vmem:[%s557 + $0x20] sm:$0xf]
      %v2037 = vld [vmem:[%s557 + $0x24] sm:$0xf]
      %v2038 = vld [vmem:[%s557 + $0x28] sm:$0xf]
      %v2039 = vld [vmem:[%s557 + $0x2c] sm:$0xf]
      %v2040 = vld [vmem:[%s557 + $0x30] sm:$0xf]
      %v2041 = vld [vmem:[%s557 + $0x34] sm:$0xf]
      %v2042 = vld [vmem:[%s557 + $0x38] sm:$0xf]
      %v2043 = vld [vmem:[%s557 + $0x3c] sm:$0xf]
      %v2060 = vunpack.c.l.b16 %v2012
      %v2061 = vunpack.c.l.b16 %v2013
      %v2062 = vunpack.c.l.b16 %v2014
      %v2063 = vunpack.c.l.b16 %v2015
      %v2064 = vunpack.c.l.b16 %v2016
      %v2065 = vunpack.c.l.b16 %v2017
      %v2066 = vunpack.c.l.b16 %v2018
      %v2067 = vunpack.c.l.b16 %v2019
      %v2068 = vunpack.c.l.b16 %v2020
      %v2069 = vunpack.c.l.b16 %v2021
      %v2070 = vunpack.c.l.b16 %v2022
      %v2071 = vunpack.c.l.b16 %v2023
      %v2072 = vunpack.c.l.b16 %v2024
      %v2073 = vunpack.c.l.b16 %v2025
      %v2074 = vunpack.c.l.b16 %v2026
      %v2075 = vunpack.c.l.b16 %v2027
      %v2076 = vpack.c.b16 %v2061, %v2060
      %v2077 = vpack.c.b16 %v2063, %v2062
      %v2078 = vpack.c.b16 %v2065, %v2064
      %v2079 = vpack.c.b16 %v2067, %v2066
      %v2080 = vpack.c.b16 %v2069, %v2068
      %v2081 = vpack.c.b16 %v2071, %v2070
      %v2082 = vpack.c.b16 %v2073, %v2072
      %v2083 = vpack.c.b16 %v2075, %v2074
      %v2108 = vunpack.c.l.b16 %v2028
      %v2109 = vunpack.c.l.b16 %v2029
      %v2110 = vunpack.c.l.b16 %v2030
      %v2111 = vunpack.c.l.b16 %v2031
      %v2112 = vunpack.c.l.b16 %v2032
      %v2113 = vunpack.c.l.b16 %v2033
      %v2114 = vunpack.c.l.b16 %v2034
      %v2115 = vunpack.c.l.b16 %v2035
      %v2116 = vunpack.c.l.b16 %v2036
      %v2117 = vunpack.c.l.b16 %v2037
      %v2118 = vunpack.c.l.b16 %v2038
      %v2119 = vunpack.c.l.b16 %v2039
      %v2120 = vunpack.c.l.b16 %v2040
      %v2121 = vunpack.c.l.b16 %v2041
      %v2122 = vunpack.c.l.b16 %v2042
      %v2123 = vunpack.c.l.b16 %v2043
      %v2124 = vpack.c.b16 %v2109, %v2108
      %v2125 = vpack.c.b16 %v2111, %v2110
      %v2126 = vpack.c.b16 %v2113, %v2112
      %v2127 = vpack.c.b16 %v2115, %v2114
      %v2128 = vpack.c.b16 %v2117, %v2116
      %v2129 = vpack.c.b16 %v2119, %v2118
      %v2130 = vpack.c.b16 %v2121, %v2120
      %v2131 = vpack.c.b16 %v2123, %v2122
      %2140 = vmatprep.subr.bf16.mxu0 0
      %2141 = vmatpush1.bf16.msra.mxu0 %v2131
      %2142 = vmatprep.subr.bf16.mxu0 0
      %2143 = vmatpush1.bf16.msra.mxu0 %v2130
      %2144 = vmatprep.subr.bf16.mxu0 0
      %2145 = vmatpush1.bf16.msra.mxu0 %v2129
      %2146 = vmatprep.subr.bf16.mxu0 0
      %2147 = vmatpush1.bf16.msra.mxu0 %v2128
      %2148 = vmatprep.subr.bf16.mxu0 0
      %2149 = vmatpush1.bf16.msra.mxu0 %v2127
      %2150 = vmatprep.subr.bf16.mxu0 0
      %2151 = vmatpush1.bf16.msra.mxu0 %v2126
      %2152 = vmatprep.subr.bf16.mxu0 0
      %2153 = vmatpush1.bf16.msra.mxu0 %v2125
      %2154 = vmatprep.subr.bf16.mxu0 0
      %2155 = vmatpush1.bf16.msra.mxu0 %v2124
      %2156 = vmatprep.subr.bf16.mxu0 0
      %2157 = vmatpush2.bf16.msra.mxu0 0
      %2158 = vmatprep.subr.bf16.mxu0 0
      %2159 = vmatpush2.bf16.msra.mxu0 0
      %2160 = vmatprep.subr.bf16.mxu0 0
      %2161 = vmatpush2.bf16.msra.mxu0 0
      %2162 = vmatprep.subr.bf16.mxu0 0
      %2163 = vmatpush2.bf16.msra.mxu0 0
      %2164 = vmatprep.subr.bf16.mxu0 0
      %2165 = vmatpush2.bf16.msra.mxu0 0
      %2166 = vmatprep.subr.bf16.mxu0 0
      %2167 = vmatpush2.bf16.msra.mxu0 0
      %2168 = vmatprep.subr.bf16.mxu0 0
      %2169 = vmatpush2.bf16.msra.mxu0 0
      %2170 = vmatprep.subr.bf16.mxu0 0
      %2171 = vmatpush2.bf16.msra.mxu0 0
      %2172 = vmatprep.mubr.bf16.mxu0 0
      %2173 = vmatmul.mubr.bf16.gmra.mxu0 %v2076
      %v2174 = vpop.f32.mrf.mxu0
      %v2175 = vadd.f32 0.0, %v2174
      %v2176 = vpop.f32.mrf.mxu0
      %v2177 = vpop.f32.mrf.mxu0
      %v2178 = vadd.f32 0.0, %v2177
      %v2179 = vpop.f32.mrf.mxu0
      %2180 = vmatprep.mubr.bf16.mxu0 0
      %2181 = vmatmul.mubr.bf16.gmra.mxu0 %v2077
      %v2182 = vpop.f32.mrf.mxu0
      %v2183 = vadd.f32 0.0, %v2182
      %v2184 = vpop.f32.mrf.mxu0
      %v2185 = vpop.f32.mrf.mxu0
      %v2186 = vadd.f32 0.0, %v2185
      %v2187 = vpop.f32.mrf.mxu0
      %2188 = vmatprep.mubr.bf16.mxu0 0
      %2189 = vmatmul.mubr.bf16.gmra.mxu0 %v2078
      %v2190 = vpop.f32.mrf.mxu0
      %v2191 = vadd.f32 0.0, %v2190
      %v2192 = vpop.f32.mrf.mxu0
      %v2193 = vpop.f32.mrf.mxu0
      %v2194 = vadd.f32 0.0, %v2193
      %v2195 = vpop.f32.mrf.mxu0
      %2196 = vmatprep.mubr.bf16.mxu0 0
      %2197 = vmatmul.mubr.bf16.gmra.mxu0 %v2079
      %v2198 = vpop.f32.mrf.mxu0
      %v2199 = vadd.f32 0.0, %v2198
      %v2200 = vpop.f32.mrf.mxu0
      %v2201 = vpop.f32.mrf.mxu0
      %v2202 = vadd.f32 0.0, %v2201
      %v2203 = vpop.f32.mrf.mxu0
      %2204 = vmatprep.mubr.bf16.mxu0 0
      %2205 = vmatmul.mubr.bf16.gmra.mxu0 %v2080
      %v2206 = vpop.f32.mrf.mxu0
      %v2207 = vadd.f32 0.0, %v2206
      %v2208 = vpop.f32.mrf.mxu0
      %v2209 = vpop.f32.mrf.mxu0
      %v2210 = vadd.f32 0.0, %v2209
      %v2211 = vpop.f32.mrf.mxu0
      %2212 = vmatprep.mubr.bf16.mxu0 0
      %2213 = vmatmul.mubr.bf16.gmra.mxu0 %v2081
      %v2214 = vpop.f32.mrf.mxu0
      %v2215 = vadd.f32 0.0, %v2214
      %v2216 = vpop.f32.mrf.mxu0
      %v2217 = vpop.f32.mrf.mxu0
      %v2218 = vadd.f32 0.0, %v2217
      %v2219 = vpop.f32.mrf.mxu0
      %2220 = vmatprep.mubr.bf16.mxu0 0
      %2221 = vmatmul.mubr.bf16.gmra.mxu0 %v2082
      %v2222 = vpop.f32.mrf.mxu0
      %v2223 = vadd.f32 0.0, %v2222
      %v2224 = vpop.f32.mrf.mxu0
      %v2225 = vpop.f32.mrf.mxu0
      %v2226 = vadd.f32 0.0, %v2225
      %v2227 = vpop.f32.mrf.mxu0
      %2228 = vmatprep.mubr.bf16.mxu0 0
      %2229 = vmatmul.mubr.bf16.gmra.mxu0 %v2083
      %v2230 = vpop.f32.mrf.mxu0
      %v2231 = vadd.f32 0.0, %v2230
      %v2232 = vpop.f32.mrf.mxu0
      %v2233 = vpop.f32.mrf.mxu0
      %v2234 = vadd.f32 0.0, %v2233
      %v2235 = vpop.f32.mrf.mxu0
      %2236 = vdwg.mxu0
      %v2238 = vlaneseq
      %v2239 = vshrl.u32 %v2238, 7
      %v2240 = vsub.s32 0, %v2239
      %v2241 = vrot.slane %v2011, %v2240
      %v2243 = vadd.f32 %v2241, %v2175
      %v2244 = vadd.f32 %v2241, %v2178
      %v2245 = vadd.f32 %v2241, %v2183
      %v2246 = vadd.f32 %v2241, %v2186
      %v2247 = vadd.f32 %v2241, %v2191
      %v2248 = vadd.f32 %v2241, %v2194
      %v2249 = vadd.f32 %v2241, %v2199
      %v2250 = vadd.f32 %v2241, %v2202
      %v2251 = vadd.f32 %v2241, %v2207
      %v2252 = vadd.f32 %v2241, %v2210
      %v2253 = vadd.f32 %v2241, %v2215
      %v2254 = vadd.f32 %v2241, %v2218
      %v2255 = vadd.f32 %v2241, %v2223
      %v2256 = vadd.f32 %v2241, %v2226
      %v2257 = vadd.f32 %v2241, %v2231
      %v2258 = vadd.f32 %v2241, %v2234
      %v2259 = vadd.f32 %v2243, %v1995
      %v2260 = vadd.f32 %v2244, %v1996
      %v2261 = vadd.f32 %v2245, %v1997
      %v2262 = vadd.f32 %v2246, %v1998
      %v2263 = vadd.f32 %v2247, %v1999
      %v2264 = vadd.f32 %v2248, %v2000
      %v2265 = vadd.f32 %v2249, %v2001
      %v2266 = vadd.f32 %v2250, %v2002
      %v2267 = vadd.f32 %v2251, %v2003
      %v2268 = vadd.f32 %v2252, %v2004
      %v2269 = vadd.f32 %v2253, %v2005
      %v2270 = vadd.f32 %v2254, %v2006
      %v2271 = vadd.f32 %v2255, %v2007
      %v2272 = vadd.f32 %v2256, %v2008
      %v2273 = vadd.f32 %v2257, %v2009
      %v2274 = vadd.f32 %v2258, %v2010
      %2275 = vst [vmem:[%s570] sm:$0xff] %v2259
      %2276 = vst [vmem:[%s570 + $0x8] sm:$0xff] %v2260
      %2277 = vst [vmem:[%s570 + $0x10] sm:$0xff] %v2261
      %2278 = vst [vmem:[%s570 + $0x18] sm:$0xff] %v2262
      %2279 = vst [vmem:[%s570 + $0x20] sm:$0xff] %v2263
      %2280 = vst [vmem:[%s570 + $0x28] sm:$0xff] %v2264
      %2281 = vst [vmem:[%s570 + $0x30] sm:$0xff] %v2265
      %2282 = vst [vmem:[%s570 + $0x38] sm:$0xff] %v2266
      %2283 = vst [vmem:[%s570 + $0x40] sm:$0xff] %v2267
      %2284 = vst [vmem:[%s570 + $0x48] sm:$0xff] %v2268
      %2285 = vst [vmem:[%s570 + $0x50] sm:$0xff] %v2269
      %2286 = vst [vmem:[%s570 + $0x58] sm:$0xff] %v2270
      %2287 = vst [vmem:[%s570 + $0x60] sm:$0xff] %v2271
      %2288 = vst [vmem:[%s570 + $0x68] sm:$0xff] %v2272
      %2289 = vst [vmem:[%s570 + $0x70] sm:$0xff] %v2273
      %2290 = vst [vmem:[%s570 + $0x78] sm:$0xff] %v2274
      %s2291 = smul.u32 8, %s25
      %p2292 = scmp.lt.s32.totalorder %s24, 1
      %s2293 = scalar_select %p2292, %s24, 1
      %p2294 = scmp.lt.s32.totalorder %s2291, 15
      %s2295 = scalar_select %p2294, %s2291, 15
      %p2296 = scmp.lt.s32.totalorder %s26, 0
      %s2297 = scalar_select %p2296, %s26, 0
      %s2298 = smul.addr %s2295, 2
      %s2299 = sadd.s32 %s2297, %s2298
      %s2300 = smul.addr %s2293, 32
      %s2301 = sadd.s32 %s2299, %s2300
      %s2302 = smul.addr %s2301, 8
      %s2303 = scalar_lea.vmem %s7, %s2302
      // Predicated region
      $region49: #{spade_resblock_forward.26} parent=47 // pred_check
        %p2304 = pneg %p273
      $region50: #{spade_resblock_forward.26} parent=47 // pred_check_branch
        %2306 = sbr.rel (%p2304) target = $region52
      $region51: #{spade_resblock_forward.26} parent=47 // pred_region
        %s2307 = smul.u32 8, %s25
      $region52: #{spade_resblock_forward.26} parent=47 // pred_fallthru
        _
    $region48: #{spade_resblock_forward.26} parent=5 // pred_fallthru
      _
    %p2308 = scmp.le.s32.totalorder 2, %s13
    // Predicated region
    $region53: #{spade_resblock_forward.26} parent=5 // pred_check
      %p2309 = pneg %p2308
    $region54: #{spade_resblock_forward.26} parent=5 // pred_check_branch
      %2311 = sbr.rel (%p2309) target = $region56
    $region55: #{spade_resblock_forward.26} parent=5 // pred_region
      %s2312 = ssub.s32 %s13, 2
      // Predicated region
      $region57: #{spade_resblock_forward.26} parent=55 // pred_check
        %p2313 = pneg %p279
      $region58: #{spade_resblock_forward.26} parent=55 // pred_check_branch
        %2315 = sbr.rel (%p2313) target = $region60
      $region59: #{spade_resblock_forward.26} parent=55 // pred_region
        %s2316 = smul.u32 8, %s29
        %p2317 = scmp.lt.s32.totalorder %s28, 1
        %s2318 = scalar_select %p2317, %s28, 1
        %p2319 = scmp.lt.s32.totalorder %s2316, 15
        %s2320 = scalar_select %p2319, %s2316, 15
        %p2321 = scmp.lt.s32.totalorder %s30, 0
        %s2322 = scalar_select %p2321, %s30, 0
        %s2323 = smul.addr %s2320, 2
        %s2324 = sadd.s32 %s2322, %s2323
        %s2325 = smul.addr %s2318, 32
        %s2326 = sadd.s32 %s2324, %s2325
        %s2327 = smul.addr %s2326, 8
        %s2328 = scalar_lea.vmem %s7, %s2327
      $region60: #{spade_resblock_forward.26} parent=55 // pred_fallthru
        _
    $region56: #{spade_resblock_forward.26} parent=5 // pred_fallthru
      _
  $region6: #{spade_resblock_forward.26} parent=0 // loop_footer
    %s17 = sadd.s32 1, %s13
  $region7: #{spade_resblock_forward.26} parent=0 // loop_footer_branch
    %12 = sbr.rel target = $region3
  $region8: #{spade_resblock_forward.26} parent=0 // loop_exit
    _

</llo_original>
